<compile_context>
chip_gen: v6e
topology: v6e:2x2x1
jax: 0.10.0
libtpu: 0.0.40
codegen_flags: <defaults>
</compile_context>

<pallas_src>
import functools

import jax
import jax.numpy as jnp
from jax.experimental import pallas as pl
from jax.experimental.pallas import tpu as pltpu

VMEM_LIMIT = 48 * 1024 * 1024   # scoped VMEM: safe on v7x (64 MiB phys), roomy on v5e/v6e
ROW_TILE = 512                  # row tile (multiple of 8) for row-tiled kernels
LANE = 128


def _round_up(x, m):
    return (x + m - 1) // m * m


def _row_tile(m, tm=ROW_TILE):
    tm = min(tm, _round_up(m, 8))
    return tm, _round_up(m, tm)


def _pad_axis(a, axis, new_size):
    if a.shape[axis] == new_size:
        return a
    pad = [(0, 0)] * a.ndim
    pad[axis] = (0, new_size - a.shape[axis])
    return jnp.pad(a, pad)


# ----------------------------- fused linear --------------------------------

def _linear_kernel(x_ref, w_ref, b_ref, o_ref):
    # x: (TM, K) f32, w: (K, N) bf16 (pre-cast), b: (1, N) f32
    o_ref[...] = jnp.dot(x_ref[...].astype(jnp.bfloat16), w_ref[...],
                         preferred_element_type=jnp.float32) + b_ref[...]


def pallas_linear(x2d, w_bf16, b):
    M, K = x2d.shape
    N = w_bf16.shape[1]
    TM, Mp = _row_tile(M)
    if Mp != M:
        x2d = jnp.pad(x2d, ((0, Mp - M), (0, 0)))
    out = pl.pallas_call(
        _linear_kernel,
        out_shape=jax.ShapeDtypeStruct((Mp, N), jnp.float32),
        grid=(Mp // TM,),
        in_specs=[
            pl.BlockSpec((TM, K), lambda i: (i, 0)),
            pl.BlockSpec((K, N), lambda i: (0, 0)),
            pl.BlockSpec((1, N), lambda i: (0, 0)),
        ],
        out_specs=pl.BlockSpec((TM, N), lambda i: (i, 0)),
        compiler_params=pltpu.CompilerParams(
            dimension_semantics=("parallel",), vmem_limit_bytes=VMEM_LIMIT),
    )(x2d, w_bf16, b.reshape(1, N).astype(jnp.float32))
    return out[:M] if Mp != M else out


# ----------------------------- highway layer -------------------------------

def _highway_kernel(x_ref, w_ref, b_ref, o_ref):
    # x: (TM, H) f32, w: (H, 2H) bf16 = [transform | gate], b: (1, 2H) f32
    x = x_ref[...]
    H = x.shape[-1]
    tg = jnp.dot(x.astype(jnp.bfloat16), w_ref[...],
                 preferred_element_type=jnp.float32) + b_ref[...]
    t = jax.nn.relu(tg[:, :H])
    g = jax.nn.sigmoid(tg[:, H:])
    o_ref[...] = g * t + (1.0 - g) * x


def pallas_highway_layer(x2d, w_cat_bf16, b_cat):
    M, H = x2d.shape
    TM, Mp = _row_tile(M)
    if Mp != M:
        x2d = jnp.pad(x2d, ((0, Mp - M), (0, 0)))
    out = pl.pallas_call(
        _highway_kernel,
        out_shape=jax.ShapeDtypeStruct((Mp, H), jnp.float32),
        grid=(Mp // TM,),
        in_specs=[
            pl.BlockSpec((TM, H), lambda i: (i, 0)),
            pl.BlockSpec((H, 2 * H), lambda i: (0, 0)),
            pl.BlockSpec((1, 2 * H), lambda i: (0, 0)),
        ],
        out_specs=pl.BlockSpec((TM, H), lambda i: (i, 0)),
        compiler_params=pltpu.CompilerParams(
            dimension_semantics=("parallel",), vmem_limit_bytes=VMEM_LIMIT),
    )(x2d, w_cat_bf16, b_cat)
    return out[:M] if Mp != M else out


# -------------------- fused char CNN (conv + relu + max) -------------------

def _char_cnn_kernel(c_ref, w_ref, b_ref, o_ref):
    # c: (TM, Lch, E) bf16   w: (K, E, Eo) bf16   b: (1, Eo) f32   o: (TM, Eo) f32
    TM, Lch, E = c_ref.shape
    K = w_ref.shape[0]
    Eo = w_ref.shape[2]
    Wout = Lch - K + 1
    c2d = c_ref[...].reshape(TM * Lch, E)
    # conv as K big matmuls (all char positions at once), then shifted adds
    z = [jnp.dot(c2d, w_ref[k], preferred_element_type=jnp.float32)
             .reshape(TM, Lch, Eo) for k in range(K)]
    bias = b_ref[...]
    best = None
    for wpos in range(Wout):
        acc = bias
        for k in range(K):
            acc = acc + z[k][:, wpos + k, :]
        y = jax.nn.relu(acc)
        best = y if best is None else jnp.maximum(best, y)   # max-over-chars
    o_ref[...] = best


def pallas_char_cnn(c_flat_bf16, w_stack_bf16, b):
    M, Lch, E = c_flat_bf16.shape
    K, _, Eo = w_stack_bf16.shape
    TM, Mp = _row_tile(M)
    if Mp != M:
        c_flat_bf16 = jnp.pad(c_flat_bf16, ((0, Mp - M), (0, 0), (0, 0)))
    out = pl.pallas_call(
        _char_cnn_kernel,
        out_shape=jax.ShapeDtypeStruct((Mp, Eo), jnp.float32),
        grid=(Mp // TM,),
        in_specs=[
            pl.BlockSpec((TM, Lch, E), lambda i: (i, 0, 0)),
            pl.BlockSpec((K, E, Eo), lambda i: (0, 0, 0)),
            pl.BlockSpec((1, Eo), lambda i: (0, 0)),
        ],
        out_specs=pl.BlockSpec((TM, Eo), lambda i: (i, 0)),
        compiler_params=pltpu.CompilerParams(
            dimension_semantics=("parallel",), vmem_limit_bytes=VMEM_LIMIT),
    )(c_flat_bf16, w_stack_bf16, b.reshape(1, Eo).astype(jnp.float32))
    return out[:M] if Mp != M else out


# -------------------------- BiLSTM recurrence -------------------------------

def _bilstm_step_kernel(gf_ref, gb_ref, whf_ref, whb_ref, hf_out, hb_out,
                        hf, cf, hb, cb):
    t = pl.program_id(0)

    @pl.when(t == 0)
    def _():
        hf[...] = jnp.zeros_like(hf)
        cf[...] = jnp.zeros_like(cf)
        hb[...] = jnp.zeros_like(hb)
        cb[...] = jnp.zeros_like(cb)

    def step(g_in, w_ref, h, c):
        H = h.shape[-1]
        g = g_in + jnp.dot(h[...].astype(jnp.bfloat16), w_ref[...],
                           preferred_element_type=jnp.float32)
        i = jax.nn.sigmoid(g[:, :H])              # PyTorch gate order i,f,g,o
        f = jax.nn.sigmoid(g[:, H:2 * H])
        gg = jnp.tanh(g[:, 2 * H:3 * H])
        o = jax.nn.sigmoid(g[:, 3 * H:])
        c_new = f * c[...] + i * gg
        h_new = o * jnp.tanh(c_new)
        c[...] = c_new
        h[...] = h_new
        return h_new

    hf_out[0] = step(gf_ref[0], whf_ref, hf, cf)
    hb_out[0] = step(gb_ref[0], whb_ref, hb, cb)


def pallas_bilstm(gates_t, w_hh_f_bf16, w_hh_b_bf16, H):
    """gates_t: (L, B, 8H) f32, [:4H]=fwd, [4H:]=bwd gates. Returns h_f, h_b (L,B,H)."""
    L, B, _ = gates_t.shape
    assert (4 * H) % LANE == 0, "pad hidden_size to a multiple of 32 (e.g. 100 -> 128)"
    hf, hb = pl.pallas_call(
        _bilstm_step_kernel,
        out_shape=(jax.ShapeDtypeStruct((L, B, H), jnp.float32),
                   jax.ShapeDtypeStruct((L, B, H), jnp.float32)),
        grid=(L,),
        in_specs=[
            pl.BlockSpec((1, B, 4 * H), lambda t: (t, 0, 0)),          # fwd gates
            pl.BlockSpec((1, B, 4 * H), lambda t: (L - 1 - t, 0, 1)),  # bwd gates, reversed
            pl.BlockSpec((H, 4 * H), lambda t: (0, 0)),                # W_hh fwd (VMEM-resident)
            pl.BlockSpec((H, 4 * H), lambda t: (0, 0)),                # W_hh bwd (VMEM-resident)
        ],
        out_specs=(pl.BlockSpec((1, B, H), lambda t: (t, 0, 0)),
                   pl.BlockSpec((1, B, H), lambda t: (L - 1 - t, 0, 0))),
        scratch_shapes=[pltpu.VMEM((B, H), jnp.float32)] * 4,          # h_f, c_f, h_b, c_b
        compiler_params=pltpu.CompilerParams(
            dimension_semantics=("arbitrary",), vmem_limit_bytes=VMEM_LIMIT),
    )(gates_t, gates_t, w_hh_f_bf16, w_hh_b_bf16)
    return hf, hb


def bilstm_layer(x, lp, H):
    B, L, D = x.shape
    # fused fwd+bwd input projection, time-major so the recurrence reads (1,B,4H) blocks
    xt = jnp.swapaxes(x, 0, 1).reshape(L * B, D)
    gates = pallas_linear(xt, lp["w_ih_cat"], lp["b_cat"]).reshape(L, B, 8 * H)
    h_f, h_b = pallas_bilstm(gates, lp["w_hh_fwd_t"], lp["w_hh_bwd_t"], H)
    h = jnp.concatenate([h_f, h_b], axis=-1)         # (L, B, 2H)
    return jnp.swapaxes(h, 0, 1)                     # (B, L, 2H)


def rnn_encoder(x, layers_p, H):
    for lp in layers_p:
        x = bilstm_layer(x, lp, H)
    return x


# ---------------------------- BiDAF attention ------------------------------

def _bidaf_attention_kernel(c_ref, q_ref, cm_ref, qm_ref,
                            cw_ref, qw_ref, cqw_ref, bias_ref, watt_ref,
                            att_ref, attlog_ref):
    c = c_ref[0]                                    # (Lc, D) f32
    q = q_ref[0]                                    # (Lq, D) f32
    cb = c.astype(jnp.bfloat16)
    qb = q.astype(jnp.bfloat16)

    # trilinear similarity  s = c.cw + q.qw + (c*cqw).q + bias        (Lc, Lq)
    s0 = jnp.sum(c * cw_ref[...], axis=-1, keepdims=True)             # (Lc, 1)
    s1 = jax.lax.dot_general(qw_ref[...].astype(jnp.bfloat16), qb,
                             (((1,), (1,)), ((), ())),
                             preferred_element_type=jnp.float32)       # (1, Lq)
    s2 = jax.lax.dot_general((c * cqw_ref[...]).astype(jnp.bfloat16), qb,
                             (((1,), (1,)), ((), ())),
                             preferred_element_type=jnp.float32)       # (Lc, Lq)
    s = s2 + s0 + s1 + bias_ref[...]

    # masked softmax over the question axis (additive mask, f32, EUP reciprocal)
    sq = s + qm_ref[0]                                                 # (1, Lq) bcast
    m1 = jnp.max(sq, axis=1, keepdims=True)
    e1 = jnp.exp(sq - m1)
    s1p = e1 * pl.reciprocal(jnp.sum(e1, axis=1, keepdims=True), approx=True)

    # masked softmax over the context axis
    sc = s + cm_ref[0]                                                 # (Lc, 1) bcast
    m2 = jnp.max(sc, axis=0, keepdims=True)
    e2 = jnp.exp(sc - m2)
    s2p = e2 * pl.reciprocal(jnp.sum(e2, axis=0, keepdims=True), approx=True)

    # context-to-query, and q2c chain reassociated (transpose folded into contraction)
    s1pb = s1p.astype(jnp.bfloat16)
    a = jnp.dot(s1pb, qb, preferred_element_type=jnp.float32)          # (Lc, D)
    t = jax.lax.dot_general(s2p.astype(jnp.bfloat16), cb,
                            (((0,), (0,)), ((), ())),
                            preferred_element_type=jnp.float32)        # (Lq, D)
    b2c = jnp.dot(s1pb, t.astype(jnp.bfloat16),
                  preferred_element_type=jnp.float32)                  # (Lc, D)

    cat = jnp.concatenate([c, a, c * a, c * b2c], axis=-1)             # (Lc, 4D)
    att_ref[0] = cat
    # start/end att-side logit rows (stacked (2,4D) weight) while cat is in VMEM
    attlog_ref[0] = jax.lax.dot_general(watt_ref[...], cat.astype(jnp.bfloat16),
                                        (((1,), (1,)), ((), ())),
                                        preferred_element_type=jnp.float32)  # (2, Lc)


def pallas_bidaf_attention(c, q, c_mask_add, q_mask_add, cw, qw, cqw, bias, watt_bf16):
    B, Lc, D = c.shape
    Lq = q.shape[1]
    att, att_logits = pl.pallas_call(
        _bidaf_attention_kernel,
        out_shape=(jax.ShapeDtypeStruct((B, Lc, 4 * D), jnp.float32),
                   jax.ShapeDtypeStruct((B, 2, Lc), jnp.float32)),
        grid=(B,),
        in_specs=[
            pl.BlockSpec((1, Lc, D), lambda b: (b, 0, 0)),
            pl.BlockSpec((1, Lq, D), lambda b: (b, 0, 0)),
            pl.BlockSpec((1, Lc, 1), lambda b: (b, 0, 0)),
            pl.BlockSpec((1, 1, Lq), lambda b: (b, 0, 0)),
            pl.BlockSpec((1, D), lambda b: (0, 0)),
            pl.BlockSpec((1, D), lambda b: (0, 0)),
            pl.BlockSpec((1, D), lambda b: (0, 0)),
            pl.BlockSpec((1, 1), lambda b: (0, 0)),
            pl.BlockSpec((2, 4 * D), lambda b: (0, 0)),
        ],
        out_specs=(pl.BlockSpec((1, Lc, 4 * D), lambda b: (b, 0, 0)),
                   pl.BlockSpec((1, 2, Lc), lambda b: (b, 0, 0))),
        compiler_params=pltpu.CompilerParams(
            dimension_semantics=("parallel",), vmem_limit_bytes=VMEM_LIMIT),
    )(c, q, c_mask_add, q_mask_add, cw, qw, cqw, bias, watt_bf16)
    return att, att_logits


# ------------------ fused output head (logits + log-softmax) ---------------

def _output_head_kernel(attlog_ref, mod_ref, mod2_ref, mask_ref,
                        w1m_ref, w2m_ref, b_ref, lp_ref):
    mod = mod_ref[0].astype(jnp.bfloat16)            # (Lc, 2H)
    mod2 = mod2_ref[0].astype(jnp.bfloat16)          # (Lc, 2H)
    madd = mask_ref[0]                               # (1, Lc) additive mask
    attlog = attlog_ref[0]                           # (2, Lc) precomputed att-side rows
    b = b_ref[...]                                   # (2, 1)

    def rowdot(w_ref, x):                            # (1, K) x (Lc, K) -> (1, Lc)
        return jax.lax.dot_general(w_ref[...], x, (((1,), (1,)), ((), ())),
                                   preferred_element_type=jnp.float32)

    logit1 = attlog[0:1] + rowdot(w1m_ref, mod) + b[0:1] + madd
    logit2 = attlog[1:2] + rowdot(w2m_ref, mod2) + b[1:2] + madd
    logits = jnp.concatenate([logit1, logit2], axis=0)              # (2, Lc)

    m = jnp.max(logits, axis=-1, keepdims=True)                     # exact log-softmax
    lp_ref[0] = logits - (m + jnp.log(jnp.sum(jnp.exp(logits - m),
                                              axis=-1, keepdims=True)))


def pallas_output_head(att_logits, mod, mod2, mask_add, w1m_bf16, w2m_bf16, b_stack):
    B, Lc, D2 = mod.shape
    mask3 = mask_add.reshape(B, 1, Lc)
    lp = pl.pallas_call(
        _output_head_kernel,
        out_shape=jax.ShapeDtypeStruct((B, 2, Lc), jnp.float32),
        grid=(B,),
        in_specs=[
            pl.BlockSpec((1, 2, Lc), lambda b: (b, 0, 0)),
            pl.BlockSpec((1, Lc, D2), lambda b: (b, 0, 0)),
            pl.BlockSpec((1, Lc, D2), lambda b: (b, 0, 0)),
            pl.BlockSpec((1, 1, Lc), lambda b: (b, 0, 0)),
            pl.BlockSpec((1, D2), lambda b: (0, 0)),
            pl.BlockSpec((1, D2), lambda b: (0, 0)),
            pl.BlockSpec((2, 1), lambda b: (0, 0)),
        ],
        out_specs=pl.BlockSpec((1, 2, Lc), lambda b: (b, 0, 0)),
        compiler_params=pltpu.CompilerParams(
            dimension_semantics=("parallel",), vmem_limit_bytes=VMEM_LIMIT),
    )(att_logits, mod, mod2, mask3, w1m_bf16, w2m_bf16, b_stack)
    return lp[:, 0, :], lp[:, 1, :]


# ------------------------------- JAX glue ----------------------------------

def embed(p, w_idxs, c_idxs, H):
    B, L = w_idxs.shape
    Lch = c_idxs.shape[-1]
    Ep = p["char_embed"].shape[1]
    w_emb = p["word_vectors"][w_idxs].reshape(B * L, -1)         # (B*L, Wp) f32
    c_emb = p["char_embed"][c_idxs].reshape(B * L, Lch, Ep)      # (B*L, Lch, Ep) bf16
    # fused char Conv1d(k=3) + ReLU + max-over-chars
    char_vec = pallas_char_cnn(c_emb, p["char_conv_w"], p["char_conv_b"])
    cat = jnp.concatenate([w_emb, char_vec], axis=-1)            # (B*L, Wp+Ep)
    x = pallas_linear(cat, p["proj_w"], p["proj_b"])             # (B*L, H)
    for hw in p["hwy"]:
        x = pallas_highway_layer(x, hw["w_cat"], hw["b_cat"])
    return x.reshape(B, L, H)


def bidaf_forward(params, cw_idxs, qw_idxs, cc_idxs, qc_idxs, H):
    NEG = jnp.float32(-1e30)
    c_maskf = (cw_idxs != 0).astype(jnp.float32)
    q_maskf = (qw_idxs != 0).astype(jnp.float32)
    c_mask_add = (1.0 - c_maskf) * NEG               # additive masks
    q_mask_add = (1.0 - q_maskf) * NEG

    c_emb = embed(params["emb"], cw_idxs, cc_idxs, H)            # (B, Lc, H)
    q_emb = embed(params["emb"], qw_idxs, qc_idxs, H)            # (B, Lq, H)
    c_enc = rnn_encoder(c_emb, params["enc"], H)                 # (B, Lc, 2H)
    q_enc = rnn_encoder(q_emb, params["enc"], H)                 # (B, Lq, 2H)

    at = params["att"]
    op = params["out"]
    att, att_logits = pallas_bidaf_attention(
        c_enc, q_enc, c_mask_add[:, :, None], q_mask_add[:, None, :],
        at["c_w"], at["q_w"], at["cq_w"], at["bias"], op["w_att_stack"])

    mod = rnn_encoder(att, params["mod"], H)                     # (B, Lc, 2H)
    mod2 = rnn_encoder(mod, op["rnn"], H)                        # (B, Lc, 2H)
    log_p1, log_p2 = pallas_output_head(
        att_logits, mod, mod2, c_mask_add, op["w_mod1"], op["w_mod2"], op["b_stack"])
    return log_p1, log_p2


# ----------------------------- parameter init ------------------------------

def _init_params(key, vocab_w, vocab_c, word_emb, char_emb, H, char_k=3):
    assert H % 32 == 0, "pad hidden_size to a multiple of 32 (e.g. 100 -> 128)"
    keys = iter(jax.random.split(key, 128))
    Wp = _round_up(word_emb, LANE)      # 200 -> 256 (lane-dense embed matmuls)
    Ep = _round_up(char_emb, LANE)      # 200 -> 256

    def nrm(shape, s=0.1):
        return s * jax.random.normal(next(keys), shape, dtype=jnp.float32)

    def bilstm(in_size):
        w_ih_f = nrm((in_size, 4 * H))       # pre-transposed (D, 4H)
        w_ih_b = nrm((in_size, 4 * H))
        return dict(
            w_ih_cat=jnp.concatenate([w_ih_f, w_ih_b], axis=1).astype(jnp.bfloat16),
            b_cat=jnp.concatenate([nrm((4 * H,), 0.05), nrm((4 * H,), 0.05)]),
            w_hh_fwd_t=nrm((H, 4 * H)).astype(jnp.bfloat16),
            w_hh_bwd_t=nrm((H, 4 * H)).astype(jnp.bfloat16),
        )

    def highway():
        return dict(
            w_cat=jnp.concatenate([nrm((H, H)), nrm((H, H))],
                                  axis=1).astype(jnp.bfloat16),        # (H, 2H)
            b_cat=jnp.concatenate([nrm((1, H), 0.05), nrm((1, H), 0.05)], axis=1),
        )

    # feature-padded embedding / projection weights (zero pads keep 200-dim semantics)
    word_vectors = _pad_axis(nrm((vocab_w, word_emb), 0.5), 1, Wp)
    char_embed = _pad_axis(nrm((vocab_c, char_emb), 0.5), 1, Ep).astype(jnp.bfloat16)
    conv_w = _pad_axis(_pad_axis(nrm((char_k, char_emb, char_emb)), 1, Ep), 2, Ep)
    proj_w = jnp.concatenate([_pad_axis(nrm((word_emb, H)), 0, Wp),
                              _pad_axis(nrm((char_emb, H)), 0, Ep)], axis=0)

    return dict(
        emb=dict(
            word_vectors=word_vectors,
            char_embed=char_embed,
            char_conv_w=conv_w.astype(jnp.bfloat16),     # (K, Ep, Ep)
            char_conv_b=_pad_axis(nrm((char_emb,), 0.05), 0, Ep),
            proj_w=proj_w.astype(jnp.bfloat16),          # (Wp+Ep, H)
            proj_b=jnp.zeros((H,), jnp.float32),         # bias-free projection
            hwy=[highway() for _ in range(2)],
        ),
        enc=[bilstm(H)],
        att=dict(c_w=nrm((1, 2 * H)), q_w=nrm((1, 2 * H)),
                 cq_w=nrm((1, 2 * H)), bias=jnp.zeros((1, 1), jnp.float32)),
        mod=[bilstm(8 * H), bilstm(2 * H)],
        out=dict(
            w_att_stack=jnp.concatenate([nrm((1, 8 * H)), nrm((1, 8 * H))],
                                        axis=0).astype(jnp.bfloat16),  # (2, 8H)
            w_mod1=nrm((1, 2 * H)).astype(jnp.bfloat16),
            w_mod2=nrm((1, 2 * H)).astype(jnp.bfloat16),
            b_stack=jnp.concatenate([nrm((1, 1), 0.05), nrm((1, 1), 0.05)], axis=0),
            rnn=[bilstm(2 * H)],
        ),
    )


# ---------------------------------- main ------------------------------------

if __name__ == "__main__":
    B, Lc, Lq, Lch = 2, 16, 8, 8
    H = 32
    WORD_VOCAB, CHAR_VOCAB = 50, 30
    WORD_EMB = CHAR_EMB = 200   # hard-coded in the PyTorch module __init__

    key = jax.random.PRNGKey(0)
    k_par, k1, k2, k3, k4 = jax.random.split(key, 5)
    params = _init_params(k_par, WORD_VOCAB, CHAR_VOCAB, WORD_EMB, CHAR_EMB, H)

    # indices >= 1 so both masks are all-True (full-length sequences).
    cw_idxs = jax.random.randint(k1, (B, Lc), 1, WORD_VOCAB)
    qw_idxs = jax.random.randint(k2, (B, Lq), 1, WORD_VOCAB)
    cc_idxs = jax.random.randint(k3, (B, Lc, Lch), 1, CHAR_VOCAB)
    qc_idxs = jax.random.randint(k4, (B, Lq, Lch), 1, CHAR_VOCAB)

    fwd = jax.jit(functools.partial(bidaf_forward, H=H))
    log_p1, log_p2 = fwd(params, cw_idxs, qw_idxs, cc_idxs, qc_idxs)
    jax.block_until_ready((log_p1, log_p2))

    assert log_p1.shape == (B, Lc) and log_p2.shape == (B, Lc)
    assert bool(jnp.all(jnp.isfinite(log_p1))) and bool(jnp.all(jnp.isfinite(log_p2)))
    # each row of exp(log_p) should sum to 1
    assert bool(jnp.allclose(jnp.sum(jnp.exp(log_p1), axis=-1), 1.0, atol=1e-4))
    assert bool(jnp.allclose(jnp.sum(jnp.exp(log_p2), axis=-1), 1.0, atol=1e-4))
    print("KERNEL_OK")
</pallas_src>

<mosaic_0001>
module attributes {stable_mosaic.version = 11 : i64} {
  func.func @_char_cnn_kernel(%arg0: i32, %arg1: memref<32x8x256xbf16, #tpu.memory_space<vmem>>, %arg2: memref<3x256x256xbf16, #tpu.memory_space<vmem>>, %arg3: memref<1x256xf32, #tpu.memory_space<vmem>>, %arg4: memref<32x256xf32, #tpu.memory_space<vmem>>) attributes {dimension_semantics = [#tpu.dimension_semantics<parallel>], iteration_bounds = array<i64: 1>, scalar_prefetch = 0 : i64, scratch_operands = 0 : i64, tpu.core_type = #tpu.core_type<tc>, window_params = [{transform_indices = @transform_0, window_bounds = array<i64: 32, 8, 256>}, {pipeline_mode = #tpu.pipeline_mode<synchronous>, transform_indices = @transform_1, window_bounds = array<i64: 3, 256, 256>}, {pipeline_mode = #tpu.pipeline_mode<synchronous>, transform_indices = @transform_2, window_bounds = array<i64: 1, 256>}, {transform_indices = @transform_3, window_bounds = array<i64: 32, 256>}]} {
    %c0 = arith.constant 0 : index
    %c0_0 = arith.constant 0 : index
    %c0_1 = arith.constant 0 : index
    %0 = vector.load %arg1[%c0, %c0_0, %c0_1] : memref<32x8x256xbf16, #tpu.memory_space<vmem>>, vector<32x8x256xbf16>
    %1 = vector.shape_cast %0 : vector<32x8x256xbf16> to vector<256x256xbf16>
    %c0_2 = arith.constant 0 : index
    %c0_3 = arith.constant 0 : index
    %c0_4 = arith.constant 0 : index
    %2 = vector.load %arg2[%c0_2, %c0_3, %c0_4] : memref<3x256x256xbf16, #tpu.memory_space<vmem>>, vector<1x256x256xbf16>
    %3 = vector.shape_cast %2 : vector<1x256x256xbf16> to vector<256x256xbf16>
    %cst = arith.constant dense<0.000000e+00> : vector<256x256xf32>
    %4 = tpu.matmul %1, %3, %cst {dimension_numbers = #tpu.dot_dimension_numbers<[1], [0], [0], [1], [0, 0, 1, 1], [], []>} : vector<256x256xbf16>, vector<256x256xbf16>, vector<256x256xf32> -> vector<256x256xf32>
    %5 = vector.shape_cast %4 : vector<256x256xf32> to vector<32x8x256xf32>
    %c1 = arith.constant 1 : index
    %c0_5 = arith.constant 0 : index
    %c0_6 = arith.constant 0 : index
    %6 = vector.load %arg2[%c1, %c0_5, %c0_6] : memref<3x256x256xbf16, #tpu.memory_space<vmem>>, vector<1x256x256xbf16>
    %7 = vector.shape_cast %6 : vector<1x256x256xbf16> to vector<256x256xbf16>
    %cst_7 = arith.constant dense<0.000000e+00> : vector<256x256xf32>
    %8 = tpu.matmul %1, %7, %cst_7 {dimension_numbers = #tpu.dot_dimension_numbers<[1], [0], [0], [1], [0, 0, 1, 1], [], []>} : vector<256x256xbf16>, vector<256x256xbf16>, vector<256x256xf32> -> vector<256x256xf32>
    %9 = vector.shape_cast %8 : vector<256x256xf32> to vector<32x8x256xf32>
    %c2 = arith.constant 2 : index
    %c0_8 = arith.constant 0 : index
    %c0_9 = arith.constant 0 : index
    %10 = vector.load %arg2[%c2, %c0_8, %c0_9] : memref<3x256x256xbf16, #tpu.memory_space<vmem>>, vector<1x256x256xbf16>
    %11 = vector.shape_cast %10 : vector<1x256x256xbf16> to vector<256x256xbf16>
    %cst_10 = arith.constant dense<0.000000e+00> : vector<256x256xf32>
    %12 = tpu.matmul %1, %11, %cst_10 {dimension_numbers = #tpu.dot_dimension_numbers<[1], [0], [0], [1], [0, 0, 1, 1], [], []>} : vector<256x256xbf16>, vector<256x256xbf16>, vector<256x256xf32> -> vector<256x256xf32>
    %13 = vector.shape_cast %12 : vector<256x256xf32> to vector<32x8x256xf32>
    %c0_11 = arith.constant 0 : index
    %c0_12 = arith.constant 0 : index
    %14 = vector.load %arg3[%c0_11, %c0_12] : memref<1x256xf32, #tpu.memory_space<vmem>>, vector<1x256xf32>
    %15 = vector.extract_strided_slice %5 {offsets = [0, 0, 0], sizes = [32, 1, 256], strides = [1, 1, 1]} : vector<32x8x256xf32> to vector<32x1x256xf32>
    %16 = vector.shape_cast %15 : vector<32x1x256xf32> to vector<32x256xf32>
    %17 = vector.broadcast %14 : vector<1x256xf32> to vector<32x256xf32>
    %18 = arith.addf %17, %16 : vector<32x256xf32>
    %19 = vector.extract_strided_slice %9 {offsets = [0, 1, 0], sizes = [32, 1, 256], strides = [1, 1, 1]} : vector<32x8x256xf32> to vector<32x1x256xf32>
    %20 = vector.shape_cast %19 : vector<32x1x256xf32> to vector<32x256xf32>
    %21 = arith.addf %18, %20 : vector<32x256xf32>
    %22 = vector.extract_strided_slice %13 {offsets = [0, 2, 0], sizes = [32, 1, 256], strides = [1, 1, 1]} : vector<32x8x256xf32> to vector<32x1x256xf32>
    %23 = vector.shape_cast %22 : vector<32x1x256xf32> to vector<32x256xf32>
    %24 = arith.addf %21, %23 : vector<32x256xf32>
    %cst_13 = arith.constant 0.000000e+00 : f32
    %25 = vector.broadcast %cst_13 : f32 to vector<32x256xf32>
    %26 = arith.maximumf %24, %25 : vector<32x256xf32>
    %27 = vector.extract_strided_slice %5 {offsets = [0, 1, 0], sizes = [32, 1, 256], strides = [1, 1, 1]} : vector<32x8x256xf32> to vector<32x1x256xf32>
    %28 = vector.shape_cast %27 : vector<32x1x256xf32> to vector<32x256xf32>
    %29 = vector.broadcast %14 : vector<1x256xf32> to vector<32x256xf32>
    %30 = arith.addf %29, %28 : vector<32x256xf32>
    %31 = vector.extract_strided_slice %9 {offsets = [0, 2, 0], sizes = [32, 1, 256], strides = [1, 1, 1]} : vector<32x8x256xf32> to vector<32x1x256xf32>
    %32 = vector.shape_cast %31 : vector<32x1x256xf32> to vector<32x256xf32>
    %33 = arith.addf %30, %32 : vector<32x256xf32>
    %34 = vector.extract_strided_slice %13 {offsets = [0, 3, 0], sizes = [32, 1, 256], strides = [1, 1, 1]} : vector<32x8x256xf32> to vector<32x1x256xf32>
    %35 = vector.shape_cast %34 : vector<32x1x256xf32> to vector<32x256xf32>
    %36 = arith.addf %33, %35 : vector<32x256xf32>
    %cst_14 = arith.constant 0.000000e+00 : f32
    %37 = vector.broadcast %cst_14 : f32 to vector<32x256xf32>
    %38 = arith.maximumf %36, %37 : vector<32x256xf32>
    %39 = arith.maximumf %26, %38 : vector<32x256xf32>
    %40 = vector.extract_strided_slice %5 {offsets = [0, 2, 0], sizes = [32, 1, 256], strides = [1, 1, 1]} : vector<32x8x256xf32> to vector<32x1x256xf32>
    %41 = vector.shape_cast %40 : vector<32x1x256xf32> to vector<32x256xf32>
    %42 = vector.broadcast %14 : vector<1x256xf32> to vector<32x256xf32>
    %43 = arith.addf %42, %41 : vector<32x256xf32>
    %44 = vector.extract_strided_slice %9 {offsets = [0, 3, 0], sizes = [32, 1, 256], strides = [1, 1, 1]} : vector<32x8x256xf32> to vector<32x1x256xf32>
    %45 = vector.shape_cast %44 : vector<32x1x256xf32> to vector<32x256xf32>
    %46 = arith.addf %43, %45 : vector<32x256xf32>
    %47 = vector.extract_strided_slice %13 {offsets = [0, 4, 0], sizes = [32, 1, 256], strides = [1, 1, 1]} : vector<32x8x256xf32> to vector<32x1x256xf32>
    %48 = vector.shape_cast %47 : vector<32x1x256xf32> to vector<32x256xf32>
    %49 = arith.addf %46, %48 : vector<32x256xf32>
    %cst_15 = arith.constant 0.000000e+00 : f32
    %50 = vector.broadcast %cst_15 : f32 to vector<32x256xf32>
    %51 = arith.maximumf %49, %50 : vector<32x256xf32>
    %52 = arith.maximumf %39, %51 : vector<32x256xf32>
    %53 = vector.extract_strided_slice %5 {offsets = [0, 3, 0], sizes = [32, 1, 256], strides = [1, 1, 1]} : vector<32x8x256xf32> to vector<32x1x256xf32>
    %54 = vector.shape_cast %53 : vector<32x1x256xf32> to vector<32x256xf32>
    %55 = vector.broadcast %14 : vector<1x256xf32> to vector<32x256xf32>
    %56 = arith.addf %55, %54 : vector<32x256xf32>
    %57 = vector.extract_strided_slice %9 {offsets = [0, 4, 0], sizes = [32, 1, 256], strides = [1, 1, 1]} : vector<32x8x256xf32> to vector<32x1x256xf32>
    %58 = vector.shape_cast %57 : vector<32x1x256xf32> to vector<32x256xf32>
    %59 = arith.addf %56, %58 : vector<32x256xf32>
    %60 = vector.extract_strided_slice %13 {offsets = [0, 5, 0], sizes = [32, 1, 256], strides = [1, 1, 1]} : vector<32x8x256xf32> to vector<32x1x256xf32>
    %61 = vector.shape_cast %60 : vector<32x1x256xf32> to vector<32x256xf32>
    %62 = arith.addf %59, %61 : vector<32x256xf32>
    %cst_16 = arith.constant 0.000000e+00 : f32
    %63 = vector.broadcast %cst_16 : f32 to vector<32x256xf32>
    %64 = arith.maximumf %62, %63 : vector<32x256xf32>
    %65 = arith.maximumf %52, %64 : vector<32x256xf32>
    %66 = vector.extract_strided_slice %5 {offsets = [0, 4, 0], sizes = [32, 1, 256], strides = [1, 1, 1]} : vector<32x8x256xf32> to vector<32x1x256xf32>
    %67 = vector.shape_cast %66 : vector<32x1x256xf32> to vector<32x256xf32>
    %68 = vector.broadcast %14 : vector<1x256xf32> to vector<32x256xf32>
    %69 = arith.addf %68, %67 : vector<32x256xf32>
    %70 = vector.extract_strided_slice %9 {offsets = [0, 5, 0], sizes = [32, 1, 256], strides = [1, 1, 1]} : vector<32x8x256xf32> to vector<32x1x256xf32>
    %71 = vector.shape_cast %70 : vector<32x1x256xf32> to vector<32x256xf32>
    %72 = arith.addf %69, %71 : vector<32x256xf32>
    %73 = vector.extract_strided_slice %13 {offsets = [0, 6, 0], sizes = [32, 1, 256], strides = [1, 1, 1]} : vector<32x8x256xf32> to vector<32x1x256xf32>
    %74 = vector.shape_cast %73 : vector<32x1x256xf32> to vector<32x256xf32>
    %75 = arith.addf %72, %74 : vector<32x256xf32>
    %cst_17 = arith.constant 0.000000e+00 : f32
    %76 = vector.broadcast %cst_17 : f32 to vector<32x256xf32>
    %77 = arith.maximumf %75, %76 : vector<32x256xf32>
    %78 = arith.maximumf %65, %77 : vector<32x256xf32>
    %79 = vector.extract_strided_slice %5 {offsets = [0, 5, 0], sizes = [32, 1, 256], strides = [1, 1, 1]} : vector<32x8x256xf32> to vector<32x1x256xf32>
    %80 = vector.shape_cast %79 : vector<32x1x256xf32> to vector<32x256xf32>
    %81 = vector.broadcast %14 : vector<1x256xf32> to vector<32x256xf32>
    %82 = arith.addf %81, %80 : vector<32x256xf32>
    %83 = vector.extract_strided_slice %9 {offsets = [0, 6, 0], sizes = [32, 1, 256], strides = [1, 1, 1]} : vector<32x8x256xf32> to vector<32x1x256xf32>
    %84 = vector.shape_cast %83 : vector<32x1x256xf32> to vector<32x256xf32>
    %85 = arith.addf %82, %84 : vector<32x256xf32>
    %86 = vector.extract_strided_slice %13 {offsets = [0, 7, 0], sizes = [32, 1, 256], strides = [1, 1, 1]} : vector<32x8x256xf32> to vector<32x1x256xf32>
    %87 = vector.shape_cast %86 : vector<32x1x256xf32> to vector<32x256xf32>
    %88 = arith.addf %85, %87 : vector<32x256xf32>
    %cst_18 = arith.constant 0.000000e+00 : f32
    %89 = vector.broadcast %cst_18 : f32 to vector<32x256xf32>
    %90 = arith.maximumf %88, %89 : vector<32x256xf32>
    %91 = arith.maximumf %78, %90 : vector<32x256xf32>
    %c0_19 = arith.constant 0 : index
    %c0_20 = arith.constant 0 : index
    %92 = vector.load %arg4[%c0_19, %c0_20] : memref<32x256xf32, #tpu.memory_space<vmem>>, vector<32x256xf32>
    tpu.vector_store %arg4[%c0_19, %c0_20], %91 {strides = array<i32>} : memref<32x256xf32, #tpu.memory_space<vmem>>, vector<32x256xf32>,
    return
  }
  func.func @transform_0(%arg0: i32) -> (i32, i32, i32) {
    %c0_i32 = arith.constant 0 : i32
    %c0_i32_0 = arith.constant 0 : i32
    %c0_i32_1 = arith.constant 0 : i32
    return %arg0, %c0_i32, %c0_i32_0 : i32, i32, i32
  }
  func.func @transform_1(%arg0: i32) -> (i32, i32, i32) {
    %c0_i32 = arith.constant 0 : i32
    %c0_i32_0 = arith.constant 0 : i32
    %c0_i32_1 = arith.constant 0 : i32
    %c0_i32_2 = arith.constant 0 : i32
    return %c0_i32, %c0_i32_0, %c0_i32_1 : i32, i32, i32
  }
  func.func @transform_2(%arg0: i32) -> (i32, i32) {
    %c0_i32 = arith.constant 0 : i32
    %c0_i32_0 = arith.constant 0 : i32
    %c0_i32_1 = arith.constant 0 : i32
    return %c0_i32, %c0_i32_0 : i32, i32
  }
  func.func @transform_3(%arg0: i32) -> (i32, i32) {
    %c0_i32 = arith.constant 0 : i32
    %c0_i32_0 = arith.constant 0 : i32
    return %arg0, %c0_i32 : i32, i32
  }
}

module attributes {stable_mosaic.version = 11 : i64} {
  func.func @_linear_kernel(%arg0: i32, %arg1: memref<32x512xf32, #tpu.memory_space<vmem>>, %arg2: memref<512x32xbf16, #tpu.memory_space<vmem>>, %arg3: memref<1x32xf32, #tpu.memory_space<vmem>>, %arg4: memref<32x32xf32, #tpu.memory_space<vmem>>) attributes {dimension_semantics = [#tpu.dimension_semantics<parallel>], iteration_bounds = array<i64: 1>, scalar_prefetch = 0 : i64, scratch_operands = 0 : i64, tpu.core_type = #tpu.core_type<tc>, window_params = [{transform_indices = @transform_0, window_bounds = array<i64: 32, 512>}, {pipeline_mode = #tpu.pipeline_mode<synchronous>, transform_indices = @transform_1, window_bounds = array<i64: 512, 32>}, {pipeline_mode = #tpu.pipeline_mode<synchronous>, transform_indices = @transform_2, window_bounds = array<i64: 1, 32>}, {transform_indices = @transform_3, window_bounds = array<i64: 32, 32>}]} {
    %c0 = arith.constant 0 : index
    %c0_0 = arith.constant 0 : index
    %0 = vector.load %arg1[%c0, %c0_0] : memref<32x512xf32, #tpu.memory_space<vmem>>, vector<32x512xf32>
    %1 = arith.truncf %0 : vector<32x512xf32> to vector<32x512xbf16>
    %c0_1 = arith.constant 0 : index
    %c0_2 = arith.constant 0 : index
    %2 = vector.load %arg2[%c0_1, %c0_2] : memref<512x32xbf16, #tpu.memory_space<vmem>>, vector<512x32xbf16>
    %cst = arith.constant dense<0.000000e+00> : vector<32x32xf32>
    %3 = tpu.matmul %1, %2, %cst {dimension_numbers = #tpu.dot_dimension_numbers<[1], [0], [0], [1], [0, 0, 1, 1], [], []>} : vector<32x512xbf16>, vector<512x32xbf16>, vector<32x32xf32> -> vector<32x32xf32>
    %c0_3 = arith.constant 0 : index
    %c0_4 = arith.constant 0 : index
    %4 = vector.load %arg3[%c0_3, %c0_4] : memref<1x32xf32, #tpu.memory_space<vmem>>, vector<1x32xf32>
    %5 = vector.broadcast %4 : vector<1x32xf32> to vector<32x32xf32>
    %6 = arith.addf %3, %5 : vector<32x32xf32>
    %c0_5 = arith.constant 0 : index
    %c0_6 = arith.constant 0 : index
    %7 = vector.load %arg4[%c0_5, %c0_6] : memref<32x32xf32, #tpu.memory_space<vmem>>, vector<32x32xf32>
    tpu.vector_store %arg4[%c0_5, %c0_6], %6 {strides = array<i32>} : memref<32x32xf32, #tpu.memory_space<vmem>>, vector<32x32xf32>,
    return
  }
  func.func @transform_0(%arg0: i32) -> (i32, i32) {
    %c0_i32 = arith.constant 0 : i32
    %c0_i32_0 = arith.constant 0 : i32
    return %arg0, %c0_i32 : i32, i32
  }
  func.func @transform_1(%arg0: i32) -> (i32, i32) {
    %c0_i32 = arith.constant 0 : i32
    %c0_i32_0 = arith.constant 0 : i32
    %c0_i32_1 = arith.constant 0 : i32
    return %c0_i32, %c0_i32_0 : i32, i32
  }
  func.func @transform_2(%arg0: i32) -> (i32, i32) {
    %c0_i32 = arith.constant 0 : i32
    %c0_i32_0 = arith.constant 0 : i32
    %c0_i32_1 = arith.constant 0 : i32
    return %c0_i32, %c0_i32_0 : i32, i32
  }
  func.func @transform_3(%arg0: i32) -> (i32, i32) {
    %c0_i32 = arith.constant 0 : i32
    %c0_i32_0 = arith.constant 0 : i32
    return %arg0, %c0_i32 : i32, i32
  }
}

module attributes {stable_mosaic.version = 11 : i64} {
  func.func @_highway_kernel(%arg0: i32, %arg1: memref<32x32xf32, #tpu.memory_space<vmem>>, %arg2: memref<32x64xbf16, #tpu.memory_space<vmem>>, %arg3: memref<1x64xf32, #tpu.memory_space<vmem>>, %arg4: memref<32x32xf32, #tpu.memory_space<vmem>>) attributes {dimension_semantics = [#tpu.dimension_semantics<parallel>], iteration_bounds = array<i64: 1>, scalar_prefetch = 0 : i64, scratch_operands = 0 : i64, tpu.core_type = #tpu.core_type<tc>, window_params = [{transform_indices = @transform_0, window_bounds = array<i64: 32, 32>}, {pipeline_mode = #tpu.pipeline_mode<synchronous>, transform_indices = @transform_1, window_bounds = array<i64: 32, 64>}, {pipeline_mode = #tpu.pipeline_mode<synchronous>, transform_indices = @transform_2, window_bounds = array<i64: 1, 64>}, {transform_indices = @transform_3, window_bounds = array<i64: 32, 32>}]} {
    %c0 = arith.constant 0 : index
    %c0_0 = arith.constant 0 : index
    %0 = vector.load %arg1[%c0, %c0_0] : memref<32x32xf32, #tpu.memory_space<vmem>>, vector<32x32xf32>
    %1 = arith.truncf %0 : vector<32x32xf32> to vector<32x32xbf16>
    %c0_1 = arith.constant 0 : index
    %c0_2 = arith.constant 0 : index
    %2 = vector.load %arg2[%c0_1, %c0_2] : memref<32x64xbf16, #tpu.memory_space<vmem>>, vector<32x64xbf16>
    %cst = arith.constant dense<0.000000e+00> : vector<32x64xf32>
    %3 = tpu.matmul %1, %2, %cst {dimension_numbers = #tpu.dot_dimension_numbers<[1], [0], [0], [1], [0, 0, 1, 1], [], []>} : vector<32x32xbf16>, vector<32x64xbf16>, vector<32x64xf32> -> vector<32x64xf32>
    %c0_3 = arith.constant 0 : index
    %c0_4 = arith.constant 0 : index
    %4 = vector.load %arg3[%c0_3, %c0_4] : memref<1x64xf32, #tpu.memory_space<vmem>>, vector<1x64xf32>
    %5 = vector.broadcast %4 : vector<1x64xf32> to vector<32x64xf32>
    %6 = arith.addf %3, %5 : vector<32x64xf32>
    %7 = vector.extract_strided_slice %6 {offsets = [0, 0], sizes = [32, 32], strides = [1, 1]} : vector<32x64xf32> to vector<32x32xf32>
    %cst_5 = arith.constant 0.000000e+00 : f32
    %8 = vector.broadcast %cst_5 : f32 to vector<32x32xf32>
    %9 = arith.maximumf %7, %8 : vector<32x32xf32>
    %10 = vector.extract_strided_slice %6 {offsets = [0, 32], sizes = [32, 32], strides = [1, 1]} : vector<32x64xf32> to vector<32x32xf32>
    %11 = arith.negf %10 : vector<32x32xf32>
    %12 = math.exp %11 : vector<32x32xf32>
    %cst_6 = arith.constant 1.000000e+00 : f32
    %13 = vector.broadcast %cst_6 : f32 to vector<32x32xf32>
    %14 = arith.addf %13, %12 : vector<32x32xf32>
    %15 = arith.divf %13, %14 : vector<32x32xf32>
    %16 = arith.mulf %15, %9 : vector<32x32xf32>
    %cst_7 = arith.constant 1.000000e+00 : f32
    %17 = vector.broadcast %cst_7 : f32 to vector<32x32xf32>
    %18 = arith.subf %17, %15 : vector<32x32xf32>
    %19 = arith.mulf %18, %0 : vector<32x32xf32>
    %20 = arith.addf %16, %19 : vector<32x32xf32>
    %c0_8 = arith.constant 0 : index
    %c0_9 = arith.constant 0 : index
    %21 = vector.load %arg4[%c0_8, %c0_9] : memref<32x32xf32, #tpu.memory_space<vmem>>, vector<32x32xf32>
    tpu.vector_store %arg4[%c0_8, %c0_9], %20 {strides = array<i32>} : memref<32x32xf32, #tpu.memory_space<vmem>>, vector<32x32xf32>,
    return
  }
  func.func @transform_0(%arg0: i32) -> (i32, i32) {
    %c0_i32 = arith.constant 0 : i32
    %c0_i32_0 = arith.constant 0 : i32
    return %arg0, %c0_i32 : i32, i32
  }
  func.func @transform_1(%arg0: i32) -> (i32, i32) {
    %c0_i32 = arith.constant 0 : i32
    %c0_i32_0 = arith.constant 0 : i32
    %c0_i32_1 = arith.constant 0 : i32
    return %c0_i32, %c0_i32_0 : i32, i32
  }
  func.func @transform_2(%arg0: i32) -> (i32, i32) {
    %c0_i32 = arith.constant 0 : i32
    %c0_i32_0 = arith.constant 0 : i32
    %c0_i32_1 = arith.constant 0 : i32
    return %c0_i32, %c0_i32_0 : i32, i32
  }
  func.func @transform_3(%arg0: i32) -> (i32, i32) {
    %c0_i32 = arith.constant 0 : i32
    %c0_i32_0 = arith.constant 0 : i32
    return %arg0, %c0_i32 : i32, i32
  }
}

module attributes {stable_mosaic.version = 11 : i64} {
  func.func @_linear_kernel(%arg0: i32, %arg1: memref<32x32xf32, #tpu.memory_space<vmem>>, %arg2: memref<32x256xbf16, #tpu.memory_space<vmem>>, %arg3: memref<1x256xf32, #tpu.memory_space<vmem>>, %arg4: memref<32x256xf32, #tpu.memory_space<vmem>>) attributes {dimension_semantics = [#tpu.dimension_semantics<parallel>], iteration_bounds = array<i64: 1>, scalar_prefetch = 0 : i64, scratch_operands = 0 : i64, tpu.core_type = #tpu.core_type<tc>, window_params = [{transform_indices = @transform_0, window_bounds = array<i64: 32, 32>}, {pipeline_mode = #tpu.pipeline_mode<synchronous>, transform_indices = @transform_1, window_bounds = array<i64: 32, 256>}, {pipeline_mode = #tpu.pipeline_mode<synchronous>, transform_indices = @transform_2, window_bounds = array<i64: 1, 256>}, {transform_indices = @transform_3, window_bounds = array<i64: 32, 256>}]} {
    %c0 = arith.constant 0 : index
    %c0_0 = arith.constant 0 : index
    %0 = vector.load %arg1[%c0, %c0_0] : memref<32x32xf32, #tpu.memory_space<vmem>>, vector<32x32xf32>
    %1 = arith.truncf %0 : vector<32x32xf32> to vector<32x32xbf16>
    %c0_1 = arith.constant 0 : index
    %c0_2 = arith.constant 0 : index
    %2 = vector.load %arg2[%c0_1, %c0_2] : memref<32x256xbf16, #tpu.memory_space<vmem>>, vector<32x256xbf16>
    %cst = arith.constant dense<0.000000e+00> : vector<32x256xf32>
    %3 = tpu.matmul %1, %2, %cst {dimension_numbers = #tpu.dot_dimension_numbers<[1], [0], [0], [1], [0, 0, 1, 1], [], []>} : vector<32x32xbf16>, vector<32x256xbf16>, vector<32x256xf32> -> vector<32x256xf32>
    %c0_3 = arith.constant 0 : index
    %c0_4 = arith.constant 0 : index
    %4 = vector.load %arg3[%c0_3, %c0_4] : memref<1x256xf32, #tpu.memory_space<vmem>>, vector<1x256xf32>
    %5 = vector.broadcast %4 : vector<1x256xf32> to vector<32x256xf32>
    %6 = arith.addf %3, %5 : vector<32x256xf32>
    %c0_5 = arith.constant 0 : index
    %c0_6 = arith.constant 0 : index
    %7 = vector.load %arg4[%c0_5, %c0_6] : memref<32x256xf32, #tpu.memory_space<vmem>>, vector<32x256xf32>
    tpu.vector_store %arg4[%c0_5, %c0_6], %6 {strides = array<i32>} : memref<32x256xf32, #tpu.memory_space<vmem>>, vector<32x256xf32>,
    return
  }
  func.func @transform_0(%arg0: i32) -> (i32, i32) {
    %c0_i32 = arith.constant 0 : i32
    %c0_i32_0 = arith.constant 0 : i32
    return %arg0, %c0_i32 : i32, i32
  }
  func.func @transform_1(%arg0: i32) -> (i32, i32) {
    %c0_i32 = arith.constant 0 : i32
    %c0_i32_0 = arith.constant 0 : i32
    %c0_i32_1 = arith.constant 0 : i32
    return %c0_i32, %c0_i32_0 : i32, i32
  }
  func.func @transform_2(%arg0: i32) -> (i32, i32) {
    %c0_i32 = arith.constant 0 : i32
    %c0_i32_0 = arith.constant 0 : i32
    %c0_i32_1 = arith.constant 0 : i32
    return %c0_i32, %c0_i32_0 : i32, i32
  }
  func.func @transform_3(%arg0: i32) -> (i32, i32) {
    %c0_i32 = arith.constant 0 : i32
    %c0_i32_0 = arith.constant 0 : i32
    return %arg0, %c0_i32 : i32, i32
  }
}

module attributes {stable_mosaic.version = 11 : i64} {
  func.func @_bilstm_step_kernel(%arg0: i32, %arg1: memref<1x2x128xf32, #tpu.memory_space<vmem>>, %arg2: memref<1x2x128xf32, #tpu.memory_space<vmem>>, %arg3: memref<32x128xbf16, #tpu.memory_space<vmem>>, %arg4: memref<32x128xbf16, #tpu.memory_space<vmem>>, %arg5: memref<1x2x32xf32, #tpu.memory_space<vmem>>, %arg6: memref<1x2x32xf32, #tpu.memory_space<vmem>>, %arg7: memref<2x32xf32, #tpu.memory_space<vmem>>, %arg8: memref<2x32xf32, #tpu.memory_space<vmem>>, %arg9: memref<2x32xf32, #tpu.memory_space<vmem>>, %arg10: memref<2x32xf32, #tpu.memory_space<vmem>>) attributes {dimension_semantics = [#tpu.dimension_semantics<arbitrary>], iteration_bounds = array<i64: 16>, scalar_prefetch = 0 : i64, scratch_operands = 4 : i64, tpu.core_type = #tpu.core_type<tc>, window_params = [{transform_indices = @transform_0, window_bounds = array<i64: 1, 2, 128>}, {transform_indices = @transform_1, window_bounds = array<i64: 1, 2, 128>}, {pipeline_mode = #tpu.pipeline_mode<synchronous>, transform_indices = @transform_2, window_bounds = array<i64: 32, 128>}, {pipeline_mode = #tpu.pipeline_mode<synchronous>, transform_indices = @transform_3, window_bounds = array<i64: 32, 128>}, {transform_indices = @transform_4, window_bounds = array<i64: 1, 2, 32>}, {transform_indices = @transform_5, window_bounds = array<i64: 1, 2, 32>}]} {
    %c0_i32 = arith.constant 0 : i32
    %0 = arith.cmpi eq, %arg0, %c0_i32 : i32
    %1 = arith.extui %0 : i1 to i32
    %c0_i32_0 = arith.constant 0 : i32
    %2 = arith.cmpi ne, %1, %c0_i32_0 : i32
    scf.if %2 {
      %cst_39 = arith.constant 0.000000e+00 : f32
      %79 = vector.broadcast %cst_39 : f32 to vector<2x32xf32>
      %c0_40 = arith.constant 0 : index
      %c0_41 = arith.constant 0 : index
      %80 = vector.load %arg7[%c0_40, %c0_41] : memref<2x32xf32, #tpu.memory_space<vmem>>, vector<2x32xf32>
      tpu.vector_store %arg7[%c0_40, %c0_41], %79 {strides = array<i32>} : memref<2x32xf32, #tpu.memory_space<vmem>>, vector<2x32xf32>,
      %cst_42 = arith.constant 0.000000e+00 : f32
      %81 = vector.broadcast %cst_42 : f32 to vector<2x32xf32>
      %c0_43 = arith.constant 0 : index
      %c0_44 = arith.constant 0 : index
      %82 = vector.load %arg8[%c0_43, %c0_44] : memref<2x32xf32, #tpu.memory_space<vmem>>, vector<2x32xf32>
      tpu.vector_store %arg8[%c0_43, %c0_44], %81 {strides = array<i32>} : memref<2x32xf32, #tpu.memory_space<vmem>>, vector<2x32xf32>,
      %cst_45 = arith.constant 0.000000e+00 : f32
      %83 = vector.broadcast %cst_45 : f32 to vector<2x32xf32>
      %c0_46 = arith.constant 0 : index
      %c0_47 = arith.constant 0 : index
      %84 = vector.load %arg9[%c0_46, %c0_47] : memref<2x32xf32, #tpu.memory_space<vmem>>, vector<2x32xf32>
      tpu.vector_store %arg9[%c0_46, %c0_47], %83 {strides = array<i32>} : memref<2x32xf32, #tpu.memory_space<vmem>>, vector<2x32xf32>,
      %cst_48 = arith.constant 0.000000e+00 : f32
      %85 = vector.broadcast %cst_48 : f32 to vector<2x32xf32>
      %c0_49 = arith.constant 0 : index
      %c0_50 = arith.constant 0 : index
      %86 = vector.load %arg10[%c0_49, %c0_50] : memref<2x32xf32, #tpu.memory_space<vmem>>, vector<2x32xf32>
      tpu.vector_store %arg10[%c0_49, %c0_50], %85 {strides = array<i32>} : memref<2x32xf32, #tpu.memory_space<vmem>>, vector<2x32xf32>,
    } else {
    }
    %c0 = arith.constant 0 : index
    %c0_1 = arith.constant 0 : index
    %c0_2 = arith.constant 0 : index
    %3 = vector.load %arg1[%c0, %c0_1, %c0_2] : memref<1x2x128xf32, #tpu.memory_space<vmem>>, vector<1x2x128xf32>
    %4 = vector.shape_cast %3 : vector<1x2x128xf32> to vector<2x128xf32>
    %c0_3 = arith.constant 0 : index
    %c0_4 = arith.constant 0 : index
    %5 = vector.load %arg7[%c0_3, %c0_4] : memref<2x32xf32, #tpu.memory_space<vmem>>, vector<2x32xf32>
    %6 = arith.truncf %5 : vector<2x32xf32> to vector<2x32xbf16>
    %c0_5 = arith.constant 0 : index
    %c0_6 = arith.constant 0 : index
    %7 = vector.load %arg3[%c0_5, %c0_6] : memref<32x128xbf16, #tpu.memory_space<vmem>>, vector<32x128xbf16>
    %cst = arith.constant dense<0.000000e+00> : vector<2x128xf32>
    %8 = tpu.matmul %6, %7, %cst {dimension_numbers = #tpu.dot_dimension_numbers<[1], [0], [0], [1], [0, 0, 1, 1], [], []>} : vector<2x32xbf16>, vector<32x128xbf16>, vector<2x128xf32> -> vector<2x128xf32>
    %9 = arith.addf %4, %8 : vector<2x128xf32>
    %10 = vector.extract_strided_slice %9 {offsets = [0, 0], sizes = [2, 32], strides = [1, 1]} : vector<2x128xf32> to vector<2x32xf32>
    %11 = arith.negf %10 : vector<2x32xf32>
    %12 = math.exp %11 : vector<2x32xf32>
    %cst_7 = arith.constant 1.000000e+00 : f32
    %13 = vector.broadcast %cst_7 : f32 to vector<2x32xf32>
    %14 = arith.addf %13, %12 : vector<2x32xf32>
    %15 = arith.divf %13, %14 : vector<2x32xf32>
    %16 = vector.extract_strided_slice %9 {offsets = [0, 32], sizes = [2, 32], strides = [1, 1]} : vector<2x128xf32> to vector<2x32xf32>
    %17 = arith.negf %16 : vector<2x32xf32>
    %18 = math.exp %17 : vector<2x32xf32>
    %cst_8 = arith.constant 1.000000e+00 : f32
    %19 = vector.broadcast %cst_8 : f32 to vector<2x32xf32>
    %20 = arith.addf %19, %18 : vector<2x32xf32>
    %21 = arith.divf %19, %20 : vector<2x32xf32>
    %22 = vector.extract_strided_slice %9 {offsets = [0, 64], sizes = [2, 32], strides = [1, 1]} : vector<2x128xf32> to vector<2x32xf32>
    %23 = math.tanh %22 : vector<2x32xf32>
    %24 = vector.extract_strided_slice %9 {offsets = [0, 96], sizes = [2, 32], strides = [1, 1]} : vector<2x128xf32> to vector<2x32xf32>
    %25 = arith.negf %24 : vector<2x32xf32>
    %26 = math.exp %25 : vector<2x32xf32>
    %cst_9 = arith.constant 1.000000e+00 : f32
    %27 = vector.broadcast %cst_9 : f32 to vector<2x32xf32>
    %28 = arith.addf %27, %26 : vector<2x32xf32>
    %29 = arith.divf %27, %28 : vector<2x32xf32>
    %c0_10 = arith.constant 0 : index
    %c0_11 = arith.constant 0 : index
    %30 = vector.load %arg8[%c0_10, %c0_11] : memref<2x32xf32, #tpu.memory_space<vmem>>, vector<2x32xf32>
    %31 = arith.mulf %21, %30 : vector<2x32xf32>
    %32 = arith.mulf %15, %23 : vector<2x32xf32>
    %33 = arith.addf %31, %32 : vector<2x32xf32>
    %34 = math.tanh %33 : vector<2x32xf32>
    %35 = arith.mulf %29, %34 : vector<2x32xf32>
    %c0_12 = arith.constant 0 : index
    %c0_13 = arith.constant 0 : index
    %36 = vector.load %arg8[%c0_12, %c0_13] : memref<2x32xf32, #tpu.memory_space<vmem>>, vector<2x32xf32>
    tpu.vector_store %arg8[%c0_12, %c0_13], %33 {strides = array<i32>} : memref<2x32xf32, #tpu.memory_space<vmem>>, vector<2x32xf32>,
    %c0_14 = arith.constant 0 : index
    %c0_15 = arith.constant 0 : index
    %37 = vector.load %arg7[%c0_14, %c0_15] : memref<2x32xf32, #tpu.memory_space<vmem>>, vector<2x32xf32>
    tpu.vector_store %arg7[%c0_14, %c0_15], %35 {strides = array<i32>} : memref<2x32xf32, #tpu.memory_space<vmem>>, vector<2x32xf32>,
    %c0_16 = arith.constant 0 : index
    %c0_17 = arith.constant 0 : index
    %c0_18 = arith.constant 0 : index
    %38 = vector.load %arg5[%c0_16, %c0_17, %c0_18] : memref<1x2x32xf32, #tpu.memory_space<vmem>>, vector<1x2x32xf32>
    %39 = vector.shape_cast %38 : vector<1x2x32xf32> to vector<2x32xf32>
    %40 = vector.shape_cast %35 : vector<2x32xf32> to vector<1x2x32xf32>
    tpu.vector_store %arg5[%c0_16, %c0_17, %c0_18], %40 {strides = array<i32>} : memref<1x2x32xf32, #tpu.memory_space<vmem>>, vector<1x2x32xf32>,
    %c0_19 = arith.constant 0 : index
    %c0_20 = arith.constant 0 : index
    %c0_21 = arith.constant 0 : index
    %41 = vector.load %arg2[%c0_19, %c0_20, %c0_21] : memref<1x2x128xf32, #tpu.memory_space<vmem>>, vector<1x2x128xf32>
    %42 = vector.shape_cast %41 : vector<1x2x128xf32> to vector<2x128xf32>
    %c0_22 = arith.constant 0 : index
    %c0_23 = arith.constant 0 : index
    %43 = vector.load %arg9[%c0_22, %c0_23] : memref<2x32xf32, #tpu.memory_space<vmem>>, vector<2x32xf32>
    %44 = arith.truncf %43 : vector<2x32xf32> to vector<2x32xbf16>
    %c0_24 = arith.constant 0 : index
    %c0_25 = arith.constant 0 : index
    %45 = vector.load %arg4[%c0_24, %c0_25] : memref<32x128xbf16, #tpu.memory_space<vmem>>, vector<32x128xbf16>
    %cst_26 = arith.constant dense<0.000000e+00> : vector<2x128xf32>
    %46 = tpu.matmul %44, %45, %cst_26 {dimension_numbers = #tpu.dot_dimension_numbers<[1], [0], [0], [1], [0, 0, 1, 1], [], []>} : vector<2x32xbf16>, vector<32x128xbf16>, vector<2x128xf32> -> vector<2x128xf32>
    %47 = arith.addf %42, %46 : vector<2x128xf32>
    %48 = vector.extract_strided_slice %47 {offsets = [0, 0], sizes = [2, 32], strides = [1, 1]} : vector<2x128xf32> to vector<2x32xf32>
    %49 = arith.negf %48 : vector<2x32xf32>
    %50 = math.exp %49 : vector<2x32xf32>
    %cst_27 = arith.constant 1.000000e+00 : f32
    %51 = vector.broadcast %cst_27 : f32 to vector<2x32xf32>
    %52 = arith.addf %51, %50 : vector<2x32xf32>
    %53 = arith.divf %51, %52 : vector<2x32xf32>
    %54 = vector.extract_strided_slice %47 {offsets = [0, 32], sizes = [2, 32], strides = [1, 1]} : vector<2x128xf32> to vector<2x32xf32>
    %55 = arith.negf %54 : vector<2x32xf32>
    %56 = math.exp %55 : vector<2x32xf32>
    %cst_28 = arith.constant 1.000000e+00 : f32
    %57 = vector.broadcast %cst_28 : f32 to vector<2x32xf32>
    %58 = arith.addf %57, %56 : vector<2x32xf32>
    %59 = arith.divf %57, %58 : vector<2x32xf32>
    %60 = vector.extract_strided_slice %47 {offsets = [0, 64], sizes = [2, 32], strides = [1, 1]} : vector<2x128xf32> to vector<2x32xf32>
    %61 = math.tanh %60 : vector<2x32xf32>
    %62 = vector.extract_strided_slice %47 {offsets = [0, 96], sizes = [2, 32], strides = [1, 1]} : vector<2x128xf32> to vector<2x32xf32>
    %63 = arith.negf %62 : vector<2x32xf32>
    %64 = math.exp %63 : vector<2x32xf32>
    %cst_29 = arith.constant 1.000000e+00 : f32
    %65 = vector.broadcast %cst_29 : f32 to vector<2x32xf32>
    %66 = arith.addf %65, %64 : vector<2x32xf32>
    %67 = arith.divf %65, %66 : vector<2x32xf32>
    %c0_30 = arith.constant 0 : index
    %c0_31 = arith.constant 0 : index
    %68 = vector.load %arg10[%c0_30, %c0_31] : memref<2x32xf32, #tpu.memory_space<vmem>>, vector<2x32xf32>
    %69 = arith.mulf %59, %68 : vector<2x32xf32>
    %70 = arith.mulf %53, %61 : vector<2x32xf32>
    %71 = arith.addf %69, %70 : vector<2x32xf32>
    %72 = math.tanh %71 : vector<2x32xf32>
    %73 = arith.mulf %67, %72 : vector<2x32xf32>
    %c0_32 = arith.constant 0 : index
    %c0_33 = arith.constant 0 : index
    %74 = vector.load %arg10[%c0_32, %c0_33] : memref<2x32xf32, #tpu.memory_space<vmem>>, vector<2x32xf32>
    tpu.vector_store %arg10[%c0_32, %c0_33], %71 {strides = array<i32>} : memref<2x32xf32, #tpu.memory_space<vmem>>, vector<2x32xf32>,
    %c0_34 = arith.constant 0 : index
    %c0_35 = arith.constant 0 : index
    %75 = vector.load %arg9[%c0_34, %c0_35] : memref<2x32xf32, #tpu.memory_space<vmem>>, vector<2x32xf32>
    tpu.vector_store %arg9[%c0_34, %c0_35], %73 {strides = array<i32>} : memref<2x32xf32, #tpu.memory_space<vmem>>, vector<2x32xf32>,
    %c0_36 = arith.constant 0 : index
    %c0_37 = arith.constant 0 : index
    %c0_38 = arith.constant 0 : index
    %76 = vector.load %arg6[%c0_36, %c0_37, %c0_38] : memref<1x2x32xf32, #tpu.memory_space<vmem>>, vector<1x2x32xf32>
    %77 = vector.shape_cast %76 : vector<1x2x32xf32> to vector<2x32xf32>
    %78 = vector.shape_cast %73 : vector<2x32xf32> to vector<1x2x32xf32>
    tpu.vector_store %arg6[%c0_36, %c0_37, %c0_38], %78 {strides = array<i32>} : memref<1x2x32xf32, #tpu.memory_space<vmem>>, vector<1x2x32xf32>,
    return
  }
  func.func @transform_0(%arg0: i32) -> (i32, i32, i32) {
    %c0_i32 = arith.constant 0 : i32
    %c0_i32_0 = arith.constant 0 : i32
    %c0_i32_1 = arith.constant 0 : i32
    return %arg0, %c0_i32, %c0_i32_0 : i32, i32, i32
  }
  func.func @transform_1(%arg0: i32) -> (i32, i32, i32) {
    %c15_i32 = arith.constant 15 : i32
    %0 = arith.subi %c15_i32, %arg0 : i32
    %c0_i32 = arith.constant 0 : i32
    %c1_i32 = arith.constant 1 : i32
    %c0_i32_0 = arith.constant 0 : i32
    return %0, %c0_i32, %c1_i32 : i32, i32, i32
  }
  func.func @transform_2(%arg0: i32) -> (i32, i32) {
    %c0_i32 = arith.constant 0 : i32
    %c0_i32_0 = arith.constant 0 : i32
    %c0_i32_1 = arith.constant 0 : i32
    return %c0_i32, %c0_i32_0 : i32, i32
  }
  func.func @transform_3(%arg0: i32) -> (i32, i32) {
    %c0_i32 = arith.constant 0 : i32
    %c0_i32_0 = arith.constant 0 : i32
    %c0_i32_1 = arith.constant 0 : i32
    return %c0_i32, %c0_i32_0 : i32, i32
  }
  func.func @transform_4(%arg0: i32) -> (i32, i32, i32) {
    %c0_i32 = arith.constant 0 : i32
    %c0_i32_0 = arith.constant 0 : i32
    %c0_i32_1 = arith.constant 0 : i32
    return %arg0, %c0_i32, %c0_i32_0 : i32, i32, i32
  }
  func.func @transform_5(%arg0: i32) -> (i32, i32, i32) {
    %c15_i32 = arith.constant 15 : i32
    %0 = arith.subi %c15_i32, %arg0 : i32
    %c0_i32 = arith.constant 0 : i32
    %c0_i32_0 = arith.constant 0 : i32
    %c0_i32_1 = arith.constant 0 : i32
    return %0, %c0_i32, %c0_i32_0 : i32, i32, i32
  }
}

module attributes {stable_mosaic.version = 11 : i64} {
  func.func @_char_cnn_kernel(%arg0: i32, %arg1: memref<16x8x256xbf16, #tpu.memory_space<vmem>>, %arg2: memref<3x256x256xbf16, #tpu.memory_space<vmem>>, %arg3: memref<1x256xf32, #tpu.memory_space<vmem>>, %arg4: memref<16x256xf32, #tpu.memory_space<vmem>>) attributes {dimension_semantics = [#tpu.dimension_semantics<parallel>], iteration_bounds = array<i64: 1>, scalar_prefetch = 0 : i64, scratch_operands = 0 : i64, tpu.core_type = #tpu.core_type<tc>, window_params = [{transform_indices = @transform_0, window_bounds = array<i64: 16, 8, 256>}, {pipeline_mode = #tpu.pipeline_mode<synchronous>, transform_indices = @transform_1, window_bounds = array<i64: 3, 256, 256>}, {pipeline_mode = #tpu.pipeline_mode<synchronous>, transform_indices = @transform_2, window_bounds = array<i64: 1, 256>}, {transform_indices = @transform_3, window_bounds = array<i64: 16, 256>}]} {
    %c0 = arith.constant 0 : index
    %c0_0 = arith.constant 0 : index
    %c0_1 = arith.constant 0 : index
    %0 = vector.load %arg1[%c0, %c0_0, %c0_1] : memref<16x8x256xbf16, #tpu.memory_space<vmem>>, vector<16x8x256xbf16>
    %1 = vector.shape_cast %0 : vector<16x8x256xbf16> to vector<128x256xbf16>
    %c0_2 = arith.constant 0 : index
    %c0_3 = arith.constant 0 : index
    %c0_4 = arith.constant 0 : index
    %2 = vector.load %arg2[%c0_2, %c0_3, %c0_4] : memref<3x256x256xbf16, #tpu.memory_space<vmem>>, vector<1x256x256xbf16>
    %3 = vector.shape_cast %2 : vector<1x256x256xbf16> to vector<256x256xbf16>
    %cst = arith.constant dense<0.000000e+00> : vector<128x256xf32>
    %4 = tpu.matmul %1, %3, %cst {dimension_numbers = #tpu.dot_dimension_numbers<[1], [0], [0], [1], [0, 0, 1, 1], [], []>} : vector<128x256xbf16>, vector<256x256xbf16>, vector<128x256xf32> -> vector<128x256xf32>
    %5 = vector.shape_cast %4 : vector<128x256xf32> to vector<16x8x256xf32>
    %c1 = arith.constant 1 : index
    %c0_5 = arith.constant 0 : index
    %c0_6 = arith.constant 0 : index
    %6 = vector.load %arg2[%c1, %c0_5, %c0_6] : memref<3x256x256xbf16, #tpu.memory_space<vmem>>, vector<1x256x256xbf16>
    %7 = vector.shape_cast %6 : vector<1x256x256xbf16> to vector<256x256xbf16>
    %cst_7 = arith.constant dense<0.000000e+00> : vector<128x256xf32>
    %8 = tpu.matmul %1, %7, %cst_7 {dimension_numbers = #tpu.dot_dimension_numbers<[1], [0], [0], [1], [0, 0, 1, 1], [], []>} : vector<128x256xbf16>, vector<256x256xbf16>, vector<128x256xf32> -> vector<128x256xf32>
    %9 = vector.shape_cast %8 : vector<128x256xf32> to vector<16x8x256xf32>
    %c2 = arith.constant 2 : index
    %c0_8 = arith.constant 0 : index
    %c0_9 = arith.constant 0 : index
    %10 = vector.load %arg2[%c2, %c0_8, %c0_9] : memref<3x256x256xbf16, #tpu.memory_space<vmem>>, vector<1x256x256xbf16>
    %11 = vector.shape_cast %10 : vector<1x256x256xbf16> to vector<256x256xbf16>
    %cst_10 = arith.constant dense<0.000000e+00> : vector<128x256xf32>
    %12 = tpu.matmul %1, %11, %cst_10 {dimension_numbers = #tpu.dot_dimension_numbers<[1], [0], [0], [1], [0, 0, 1, 1], [], []>} : vector<128x256xbf16>, vector<256x256xbf16>, vector<128x256xf32> -> vector<128x256xf32>
    %13 = vector.shape_cast %12 : vector<128x256xf32> to vector<16x8x256xf32>
    %c0_11 = arith.constant 0 : index
    %c0_12 = arith.constant 0 : index
    %14 = vector.load %arg3[%c0_11, %c0_12] : memref<1x256xf32, #tpu.memory_space<vmem>>, vector<1x256xf32>
    %15 = vector.extract_strided_slice %5 {offsets = [0, 0, 0], sizes = [16, 1, 256], strides = [1, 1, 1]} : vector<16x8x256xf32> to vector<16x1x256xf32>
    %16 = vector.shape_cast %15 : vector<16x1x256xf32> to vector<16x256xf32>
    %17 = vector.broadcast %14 : vector<1x256xf32> to vector<16x256xf32>
    %18 = arith.addf %17, %16 : vector<16x256xf32>
    %19 = vector.extract_strided_slice %9 {offsets = [0, 1, 0], sizes = [16, 1, 256], strides = [1, 1, 1]} : vector<16x8x256xf32> to vector<16x1x256xf32>
    %20 = vector.shape_cast %19 : vector<16x1x256xf32> to vector<16x256xf32>
    %21 = arith.addf %18, %20 : vector<16x256xf32>
    %22 = vector.extract_strided_slice %13 {offsets = [0, 2, 0], sizes = [16, 1, 256], strides = [1, 1, 1]} : vector<16x8x256xf32> to vector<16x1x256xf32>
    %23 = vector.shape_cast %22 : vector<16x1x256xf32> to vector<16x256xf32>
    %24 = arith.addf %21, %23 : vector<16x256xf32>
    %cst_13 = arith.constant 0.000000e+00 : f32
    %25 = vector.broadcast %cst_13 : f32 to vector<16x256xf32>
    %26 = arith.maximumf %24, %25 : vector<16x256xf32>
    %27 = vector.extract_strided_slice %5 {offsets = [0, 1, 0], sizes = [16, 1, 256], strides = [1, 1, 1]} : vector<16x8x256xf32> to vector<16x1x256xf32>
    %28 = vector.shape_cast %27 : vector<16x1x256xf32> to vector<16x256xf32>
    %29 = vector.broadcast %14 : vector<1x256xf32> to vector<16x256xf32>
    %30 = arith.addf %29, %28 : vector<16x256xf32>
    %31 = vector.extract_strided_slice %9 {offsets = [0, 2, 0], sizes = [16, 1, 256], strides = [1, 1, 1]} : vector<16x8x256xf32> to vector<16x1x256xf32>
    %32 = vector.shape_cast %31 : vector<16x1x256xf32> to vector<16x256xf32>
    %33 = arith.addf %30, %32 : vector<16x256xf32>
    %34 = vector.extract_strided_slice %13 {offsets = [0, 3, 0], sizes = [16, 1, 256], strides = [1, 1, 1]} : vector<16x8x256xf32> to vector<16x1x256xf32>
    %35 = vector.shape_cast %34 : vector<16x1x256xf32> to vector<16x256xf32>
    %36 = arith.addf %33, %35 : vector<16x256xf32>
    %cst_14 = arith.constant 0.000000e+00 : f32
    %37 = vector.broadcast %cst_14 : f32 to vector<16x256xf32>
    %38 = arith.maximumf %36, %37 : vector<16x256xf32>
    %39 = arith.maximumf %26, %38 : vector<16x256xf32>
    %40 = vector.extract_strided_slice %5 {offsets = [0, 2, 0], sizes = [16, 1, 256], strides = [1, 1, 1]} : vector<16x8x256xf32> to vector<16x1x256xf32>
    %41 = vector.shape_cast %40 : vector<16x1x256xf32> to vector<16x256xf32>
    %42 = vector.broadcast %14 : vector<1x256xf32> to vector<16x256xf32>
    %43 = arith.addf %42, %41 : vector<16x256xf32>
    %44 = vector.extract_strided_slice %9 {offsets = [0, 3, 0], sizes = [16, 1, 256], strides = [1, 1, 1]} : vector<16x8x256xf32> to vector<16x1x256xf32>
    %45 = vector.shape_cast %44 : vector<16x1x256xf32> to vector<16x256xf32>
    %46 = arith.addf %43, %45 : vector<16x256xf32>
    %47 = vector.extract_strided_slice %13 {offsets = [0, 4, 0], sizes = [16, 1, 256], strides = [1, 1, 1]} : vector<16x8x256xf32> to vector<16x1x256xf32>
    %48 = vector.shape_cast %47 : vector<16x1x256xf32> to vector<16x256xf32>
    %49 = arith.addf %46, %48 : vector<16x256xf32>
    %cst_15 = arith.constant 0.000000e+00 : f32
    %50 = vector.broadcast %cst_15 : f32 to vector<16x256xf32>
    %51 = arith.maximumf %49, %50 : vector<16x256xf32>
    %52 = arith.maximumf %39, %51 : vector<16x256xf32>
    %53 = vector.extract_strided_slice %5 {offsets = [0, 3, 0], sizes = [16, 1, 256], strides = [1, 1, 1]} : vector<16x8x256xf32> to vector<16x1x256xf32>
    %54 = vector.shape_cast %53 : vector<16x1x256xf32> to vector<16x256xf32>
    %55 = vector.broadcast %14 : vector<1x256xf32> to vector<16x256xf32>
    %56 = arith.addf %55, %54 : vector<16x256xf32>
    %57 = vector.extract_strided_slice %9 {offsets = [0, 4, 0], sizes = [16, 1, 256], strides = [1, 1, 1]} : vector<16x8x256xf32> to vector<16x1x256xf32>
    %58 = vector.shape_cast %57 : vector<16x1x256xf32> to vector<16x256xf32>
    %59 = arith.addf %56, %58 : vector<16x256xf32>
    %60 = vector.extract_strided_slice %13 {offsets = [0, 5, 0], sizes = [16, 1, 256], strides = [1, 1, 1]} : vector<16x8x256xf32> to vector<16x1x256xf32>
    %61 = vector.shape_cast %60 : vector<16x1x256xf32> to vector<16x256xf32>
    %62 = arith.addf %59, %61 : vector<16x256xf32>
    %cst_16 = arith.constant 0.000000e+00 : f32
    %63 = vector.broadcast %cst_16 : f32 to vector<16x256xf32>
    %64 = arith.maximumf %62, %63 : vector<16x256xf32>
    %65 = arith.maximumf %52, %64 : vector<16x256xf32>
    %66 = vector.extract_strided_slice %5 {offsets = [0, 4, 0], sizes = [16, 1, 256], strides = [1, 1, 1]} : vector<16x8x256xf32> to vector<16x1x256xf32>
    %67 = vector.shape_cast %66 : vector<16x1x256xf32> to vector<16x256xf32>
    %68 = vector.broadcast %14 : vector<1x256xf32> to vector<16x256xf32>
    %69 = arith.addf %68, %67 : vector<16x256xf32>
    %70 = vector.extract_strided_slice %9 {offsets = [0, 5, 0], sizes = [16, 1, 256], strides = [1, 1, 1]} : vector<16x8x256xf32> to vector<16x1x256xf32>
    %71 = vector.shape_cast %70 : vector<16x1x256xf32> to vector<16x256xf32>
    %72 = arith.addf %69, %71 : vector<16x256xf32>
    %73 = vector.extract_strided_slice %13 {offsets = [0, 6, 0], sizes = [16, 1, 256], strides = [1, 1, 1]} : vector<16x8x256xf32> to vector<16x1x256xf32>
    %74 = vector.shape_cast %73 : vector<16x1x256xf32> to vector<16x256xf32>
    %75 = arith.addf %72, %74 : vector<16x256xf32>
    %cst_17 = arith.constant 0.000000e+00 : f32
    %76 = vector.broadcast %cst_17 : f32 to vector<16x256xf32>
    %77 = arith.maximumf %75, %76 : vector<16x256xf32>
    %78 = arith.maximumf %65, %77 : vector<16x256xf32>
    %79 = vector.extract_strided_slice %5 {offsets = [0, 5, 0], sizes = [16, 1, 256], strides = [1, 1, 1]} : vector<16x8x256xf32> to vector<16x1x256xf32>
    %80 = vector.shape_cast %79 : vector<16x1x256xf32> to vector<16x256xf32>
    %81 = vector.broadcast %14 : vector<1x256xf32> to vector<16x256xf32>
    %82 = arith.addf %81, %80 : vector<16x256xf32>
    %83 = vector.extract_strided_slice %9 {offsets = [0, 6, 0], sizes = [16, 1, 256], strides = [1, 1, 1]} : vector<16x8x256xf32> to vector<16x1x256xf32>
    %84 = vector.shape_cast %83 : vector<16x1x256xf32> to vector<16x256xf32>
    %85 = arith.addf %82, %84 : vector<16x256xf32>
    %86 = vector.extract_strided_slice %13 {offsets = [0, 7, 0], sizes = [16, 1, 256], strides = [1, 1, 1]} : vector<16x8x256xf32> to vector<16x1x256xf32>
    %87 = vector.shape_cast %86 : vector<16x1x256xf32> to vector<16x256xf32>
    %88 = arith.addf %85, %87 : vector<16x256xf32>
    %cst_18 = arith.constant 0.000000e+00 : f32
    %89 = vector.broadcast %cst_18 : f32 to vector<16x256xf32>
    %90 = arith.maximumf %88, %89 : vector<16x256xf32>
    %91 = arith.maximumf %78, %90 : vector<16x256xf32>
    %c0_19 = arith.constant 0 : index
    %c0_20 = arith.constant 0 : index
    %92 = vector.load %arg4[%c0_19, %c0_20] : memref<16x256xf32, #tpu.memory_space<vmem>>, vector<16x256xf32>
    tpu.vector_store %arg4[%c0_19, %c0_20], %91 {strides = array<i32>} : memref<16x256xf32, #tpu.memory_space<vmem>>, vector<16x256xf32>,
    return
  }
  func.func @transform_0(%arg0: i32) -> (i32, i32, i32) {
    %c0_i32 = arith.constant 0 : i32
    %c0_i32_0 = arith.constant 0 : i32
    %c0_i32_1 = arith.constant 0 : i32
    return %arg0, %c0_i32, %c0_i32_0 : i32, i32, i32
  }
  func.func @transform_1(%arg0: i32) -> (i32, i32, i32) {
    %c0_i32 = arith.constant 0 : i32
    %c0_i32_0 = arith.constant 0 : i32
    %c0_i32_1 = arith.constant 0 : i32
    %c0_i32_2 = arith.constant 0 : i32
    return %c0_i32, %c0_i32_0, %c0_i32_1 : i32, i32, i32
  }
  func.func @transform_2(%arg0: i32) -> (i32, i32) {
    %c0_i32 = arith.constant 0 : i32
    %c0_i32_0 = arith.constant 0 : i32
    %c0_i32_1 = arith.constant 0 : i32
    return %c0_i32, %c0_i32_0 : i32, i32
  }
  func.func @transform_3(%arg0: i32) -> (i32, i32) {
    %c0_i32 = arith.constant 0 : i32
    %c0_i32_0 = arith.constant 0 : i32
    return %arg0, %c0_i32 : i32, i32
  }
}

module attributes {stable_mosaic.version = 11 : i64} {
  func.func @_linear_kernel(%arg0: i32, %arg1: memref<16x512xf32, #tpu.memory_space<vmem>>, %arg2: memref<512x32xbf16, #tpu.memory_space<vmem>>, %arg3: memref<1x32xf32, #tpu.memory_space<vmem>>, %arg4: memref<16x32xf32, #tpu.memory_space<vmem>>) attributes {dimension_semantics = [#tpu.dimension_semantics<parallel>], iteration_bounds = array<i64: 1>, scalar_prefetch = 0 : i64, scratch_operands = 0 : i64, tpu.core_type = #tpu.core_type<tc>, window_params = [{transform_indices = @transform_0, window_bounds = array<i64: 16, 512>}, {pipeline_mode = #tpu.pipeline_mode<synchronous>, transform_indices = @transform_1, window_bounds = array<i64: 512, 32>}, {pipeline_mode = #tpu.pipeline_mode<synchronous>, transform_indices = @transform_2, window_bounds = array<i64: 1, 32>}, {transform_indices = @transform_3, window_bounds = array<i64: 16, 32>}]} {
    %c0 = arith.constant 0 : index
    %c0_0 = arith.constant 0 : index
    %0 = vector.load %arg1[%c0, %c0_0] : memref<16x512xf32, #tpu.memory_space<vmem>>, vector<16x512xf32>
    %1 = arith.truncf %0 : vector<16x512xf32> to vector<16x512xbf16>
    %c0_1 = arith.constant 0 : index
    %c0_2 = arith.constant 0 : index
    %2 = vector.load %arg2[%c0_1, %c0_2] : memref<512x32xbf16, #tpu.memory_space<vmem>>, vector<512x32xbf16>
    %cst = arith.constant dense<0.000000e+00> : vector<16x32xf32>
    %3 = tpu.matmul %1, %2, %cst {dimension_numbers = #tpu.dot_dimension_numbers<[1], [0], [0], [1], [0, 0, 1, 1], [], []>} : vector<16x512xbf16>, vector<512x32xbf16>, vector<16x32xf32> -> vector<16x32xf32>
    %c0_3 = arith.constant 0 : index
    %c0_4 = arith.constant 0 : index
    %4 = vector.load %arg3[%c0_3, %c0_4] : memref<1x32xf32, #tpu.memory_space<vmem>>, vector<1x32xf32>
    %5 = vector.broadcast %4 : vector<1x32xf32> to vector<16x32xf32>
    %6 = arith.addf %3, %5 : vector<16x32xf32>
    %c0_5 = arith.constant 0 : index
    %c0_6 = arith.constant 0 : index
    %7 = vector.load %arg4[%c0_5, %c0_6] : memref<16x32xf32, #tpu.memory_space<vmem>>, vector<16x32xf32>
    tpu.vector_store %arg4[%c0_5, %c0_6], %6 {strides = array<i32>} : memref<16x32xf32, #tpu.memory_space<vmem>>, vector<16x32xf32>,
    return
  }
  func.func @transform_0(%arg0: i32) -> (i32, i32) {
    %c0_i32 = arith.constant 0 : i32
    %c0_i32_0 = arith.constant 0 : i32
    return %arg0, %c0_i32 : i32, i32
  }
  func.func @transform_1(%arg0: i32) -> (i32, i32) {
    %c0_i32 = arith.constant 0 : i32
    %c0_i32_0 = arith.constant 0 : i32
    %c0_i32_1 = arith.constant 0 : i32
    return %c0_i32, %c0_i32_0 : i32, i32
  }
  func.func @transform_2(%arg0: i32) -> (i32, i32) {
    %c0_i32 = arith.constant 0 : i32
    %c0_i32_0 = arith.constant 0 : i32
    %c0_i32_1 = arith.constant 0 : i32
    return %c0_i32, %c0_i32_0 : i32, i32
  }
  func.func @transform_3(%arg0: i32) -> (i32, i32) {
    %c0_i32 = arith.constant 0 : i32
    %c0_i32_0 = arith.constant 0 : i32
    return %arg0, %c0_i32 : i32, i32
  }
}

module attributes {stable_mosaic.version = 11 : i64} {
  func.func @_highway_kernel(%arg0: i32, %arg1: memref<16x32xf32, #tpu.memory_space<vmem>>, %arg2: memref<32x64xbf16, #tpu.memory_space<vmem>>, %arg3: memref<1x64xf32, #tpu.memory_space<vmem>>, %arg4: memref<16x32xf32, #tpu.memory_space<vmem>>) attributes {dimension_semantics = [#tpu.dimension_semantics<parallel>], iteration_bounds = array<i64: 1>, scalar_prefetch = 0 : i64, scratch_operands = 0 : i64, tpu.core_type = #tpu.core_type<tc>, window_params = [{transform_indices = @transform_0, window_bounds = array<i64: 16, 32>}, {pipeline_mode = #tpu.pipeline_mode<synchronous>, transform_indices = @transform_1, window_bounds = array<i64: 32, 64>}, {pipeline_mode = #tpu.pipeline_mode<synchronous>, transform_indices = @transform_2, window_bounds = array<i64: 1, 64>}, {transform_indices = @transform_3, window_bounds = array<i64: 16, 32>}]} {
    %c0 = arith.constant 0 : index
    %c0_0 = arith.constant 0 : index
    %0 = vector.load %arg1[%c0, %c0_0] : memref<16x32xf32, #tpu.memory_space<vmem>>, vector<16x32xf32>
    %1 = arith.truncf %0 : vector<16x32xf32> to vector<16x32xbf16>
    %c0_1 = arith.constant 0 : index
    %c0_2 = arith.constant 0 : index
    %2 = vector.load %arg2[%c0_1, %c0_2] : memref<32x64xbf16, #tpu.memory_space<vmem>>, vector<32x64xbf16>
    %cst = arith.constant dense<0.000000e+00> : vector<16x64xf32>
    %3 = tpu.matmul %1, %2, %cst {dimension_numbers = #tpu.dot_dimension_numbers<[1], [0], [0], [1], [0, 0, 1, 1], [], []>} : vector<16x32xbf16>, vector<32x64xbf16>, vector<16x64xf32> -> vector<16x64xf32>
    %c0_3 = arith.constant 0 : index
    %c0_4 = arith.constant 0 : index
    %4 = vector.load %arg3[%c0_3, %c0_4] : memref<1x64xf32, #tpu.memory_space<vmem>>, vector<1x64xf32>
    %5 = vector.broadcast %4 : vector<1x64xf32> to vector<16x64xf32>
    %6 = arith.addf %3, %5 : vector<16x64xf32>
    %7 = vector.extract_strided_slice %6 {offsets = [0, 0], sizes = [16, 32], strides = [1, 1]} : vector<16x64xf32> to vector<16x32xf32>
    %cst_5 = arith.constant 0.000000e+00 : f32
    %8 = vector.broadcast %cst_5 : f32 to vector<16x32xf32>
    %9 = arith.maximumf %7, %8 : vector<16x32xf32>
    %10 = vector.extract_strided_slice %6 {offsets = [0, 32], sizes = [16, 32], strides = [1, 1]} : vector<16x64xf32> to vector<16x32xf32>
    %11 = arith.negf %10 : vector<16x32xf32>
    %12 = math.exp %11 : vector<16x32xf32>
    %cst_6 = arith.constant 1.000000e+00 : f32
    %13 = vector.broadcast %cst_6 : f32 to vector<16x32xf32>
    %14 = arith.addf %13, %12 : vector<16x32xf32>
    %15 = arith.divf %13, %14 : vector<16x32xf32>
    %16 = arith.mulf %15, %9 : vector<16x32xf32>
    %cst_7 = arith.constant 1.000000e+00 : f32
    %17 = vector.broadcast %cst_7 : f32 to vector<16x32xf32>
    %18 = arith.subf %17, %15 : vector<16x32xf32>
    %19 = arith.mulf %18, %0 : vector<16x32xf32>
    %20 = arith.addf %16, %19 : vector<16x32xf32>
    %c0_8 = arith.constant 0 : index
    %c0_9 = arith.constant 0 : index
    %21 = vector.load %arg4[%c0_8, %c0_9] : memref<16x32xf32, #tpu.memory_space<vmem>>, vector<16x32xf32>
    tpu.vector_store %arg4[%c0_8, %c0_9], %20 {strides = array<i32>} : memref<16x32xf32, #tpu.memory_space<vmem>>, vector<16x32xf32>,
    return
  }
  func.func @transform_0(%arg0: i32) -> (i32, i32) {
    %c0_i32 = arith.constant 0 : i32
    %c0_i32_0 = arith.constant 0 : i32
    return %arg0, %c0_i32 : i32, i32
  }
  func.func @transform_1(%arg0: i32) -> (i32, i32) {
    %c0_i32 = arith.constant 0 : i32
    %c0_i32_0 = arith.constant 0 : i32
    %c0_i32_1 = arith.constant 0 : i32
    return %c0_i32, %c0_i32_0 : i32, i32
  }
  func.func @transform_2(%arg0: i32) -> (i32, i32) {
    %c0_i32 = arith.constant 0 : i32
    %c0_i32_0 = arith.constant 0 : i32
    %c0_i32_1 = arith.constant 0 : i32
    return %c0_i32, %c0_i32_0 : i32, i32
  }
  func.func @transform_3(%arg0: i32) -> (i32, i32) {
    %c0_i32 = arith.constant 0 : i32
    %c0_i32_0 = arith.constant 0 : i32
    return %arg0, %c0_i32 : i32, i32
  }
}

module attributes {stable_mosaic.version = 11 : i64} {
  func.func @_linear_kernel(%arg0: i32, %arg1: memref<16x32xf32, #tpu.memory_space<vmem>>, %arg2: memref<32x256xbf16, #tpu.memory_space<vmem>>, %arg3: memref<1x256xf32, #tpu.memory_space<vmem>>, %arg4: memref<16x256xf32, #tpu.memory_space<vmem>>) attributes {dimension_semantics = [#tpu.dimension_semantics<parallel>], iteration_bounds = array<i64: 1>, scalar_prefetch = 0 : i64, scratch_operands = 0 : i64, tpu.core_type = #tpu.core_type<tc>, window_params = [{transform_indices = @transform_0, window_bounds = array<i64: 16, 32>}, {pipeline_mode = #tpu.pipeline_mode<synchronous>, transform_indices = @transform_1, window_bounds = array<i64: 32, 256>}, {pipeline_mode = #tpu.pipeline_mode<synchronous>, transform_indices = @transform_2, window_bounds = array<i64: 1, 256>}, {transform_indices = @transform_3, window_bounds = array<i64: 16, 256>}]} {
    %c0 = arith.constant 0 : index
    %c0_0 = arith.constant 0 : index
    %0 = vector.load %arg1[%c0, %c0_0] : memref<16x32xf32, #tpu.memory_space<vmem>>, vector<16x32xf32>
    %1 = arith.truncf %0 : vector<16x32xf32> to vector<16x32xbf16>
    %c0_1 = arith.constant 0 : index
    %c0_2 = arith.constant 0 : index
    %2 = vector.load %arg2[%c0_1, %c0_2] : memref<32x256xbf16, #tpu.memory_space<vmem>>, vector<32x256xbf16>
    %cst = arith.constant dense<0.000000e+00> : vector<16x256xf32>
    %3 = tpu.matmul %1, %2, %cst {dimension_numbers = #tpu.dot_dimension_numbers<[1], [0], [0], [1], [0, 0, 1, 1], [], []>} : vector<16x32xbf16>, vector<32x256xbf16>, vector<16x256xf32> -> vector<16x256xf32>
    %c0_3 = arith.constant 0 : index
    %c0_4 = arith.constant 0 : index
    %4 = vector.load %arg3[%c0_3, %c0_4] : memref<1x256xf32, #tpu.memory_space<vmem>>, vector<1x256xf32>
    %5 = vector.broadcast %4 : vector<1x256xf32> to vector<16x256xf32>
    %6 = arith.addf %3, %5 : vector<16x256xf32>
    %c0_5 = arith.constant 0 : index
    %c0_6 = arith.constant 0 : index
    %7 = vector.load %arg4[%c0_5, %c0_6] : memref<16x256xf32, #tpu.memory_space<vmem>>, vector<16x256xf32>
    tpu.vector_store %arg4[%c0_5, %c0_6], %6 {strides = array<i32>} : memref<16x256xf32, #tpu.memory_space<vmem>>, vector<16x256xf32>,
    return
  }
  func.func @transform_0(%arg0: i32) -> (i32, i32) {
    %c0_i32 = arith.constant 0 : i32
    %c0_i32_0 = arith.constant 0 : i32
    return %arg0, %c0_i32 : i32, i32
  }
  func.func @transform_1(%arg0: i32) -> (i32, i32) {
    %c0_i32 = arith.constant 0 : i32
    %c0_i32_0 = arith.constant 0 : i32
    %c0_i32_1 = arith.constant 0 : i32
    return %c0_i32, %c0_i32_0 : i32, i32
  }
  func.func @transform_2(%arg0: i32) -> (i32, i32) {
    %c0_i32 = arith.constant 0 : i32
    %c0_i32_0 = arith.constant 0 : i32
    %c0_i32_1 = arith.constant 0 : i32
    return %c0_i32, %c0_i32_0 : i32, i32
  }
  func.func @transform_3(%arg0: i32) -> (i32, i32) {
    %c0_i32 = arith.constant 0 : i32
    %c0_i32_0 = arith.constant 0 : i32
    return %arg0, %c0_i32 : i32, i32
  }
}

module attributes {stable_mosaic.version = 11 : i64} {
  func.func @_bilstm_step_kernel(%arg0: i32, %arg1: memref<1x2x128xf32, #tpu.memory_space<vmem>>, %arg2: memref<1x2x128xf32, #tpu.memory_space<vmem>>, %arg3: memref<32x128xbf16, #tpu.memory_space<vmem>>, %arg4: memref<32x128xbf16, #tpu.memory_space<vmem>>, %arg5: memref<1x2x32xf32, #tpu.memory_space<vmem>>, %arg6: memref<1x2x32xf32, #tpu.memory_space<vmem>>, %arg7: memref<2x32xf32, #tpu.memory_space<vmem>>, %arg8: memref<2x32xf32, #tpu.memory_space<vmem>>, %arg9: memref<2x32xf32, #tpu.memory_space<vmem>>, %arg10: memref<2x32xf32, #tpu.memory_space<vmem>>) attributes {dimension_semantics = [#tpu.dimension_semantics<arbitrary>], iteration_bounds = array<i64: 8>, scalar_prefetch = 0 : i64, scratch_operands = 4 : i64, tpu.core_type = #tpu.core_type<tc>, window_params = [{transform_indices = @transform_0, window_bounds = array<i64: 1, 2, 128>}, {transform_indices = @transform_1, window_bounds = array<i64: 1, 2, 128>}, {pipeline_mode = #tpu.pipeline_mode<synchronous>, transform_indices = @transform_2, window_bounds = array<i64: 32, 128>}, {pipeline_mode = #tpu.pipeline_mode<synchronous>, transform_indices = @transform_3, window_bounds = array<i64: 32, 128>}, {transform_indices = @transform_4, window_bounds = array<i64: 1, 2, 32>}, {transform_indices = @transform_5, window_bounds = array<i64: 1, 2, 32>}]} {
    %c0_i32 = arith.constant 0 : i32
    %0 = arith.cmpi eq, %arg0, %c0_i32 : i32
    %1 = arith.extui %0 : i1 to i32
    %c0_i32_0 = arith.constant 0 : i32
    %2 = arith.cmpi ne, %1, %c0_i32_0 : i32
    scf.if %2 {
      %cst_39 = arith.constant 0.000000e+00 : f32
      %79 = vector.broadcast %cst_39 : f32 to vector<2x32xf32>
      %c0_40 = arith.constant 0 : index
      %c0_41 = arith.constant 0 : index
      %80 = vector.load %arg7[%c0_40, %c0_41] : memref<2x32xf32, #tpu.memory_space<vmem>>, vector<2x32xf32>
      tpu.vector_store %arg7[%c0_40, %c0_41], %79 {strides = array<i32>} : memref<2x32xf32, #tpu.memory_space<vmem>>, vector<2x32xf32>,
      %cst_42 = arith.constant 0.000000e+00 : f32
      %81 = vector.broadcast %cst_42 : f32 to vector<2x32xf32>
      %c0_43 = arith.constant 0 : index
      %c0_44 = arith.constant 0 : index
      %82 = vector.load %arg8[%c0_43, %c0_44] : memref<2x32xf32, #tpu.memory_space<vmem>>, vector<2x32xf32>
      tpu.vector_store %arg8[%c0_43, %c0_44], %81 {strides = array<i32>} : memref<2x32xf32, #tpu.memory_space<vmem>>, vector<2x32xf32>,
      %cst_45 = arith.constant 0.000000e+00 : f32
      %83 = vector.broadcast %cst_45 : f32 to vector<2x32xf32>
      %c0_46 = arith.constant 0 : index
      %c0_47 = arith.constant 0 : index
      %84 = vector.load %arg9[%c0_46, %c0_47] : memref<2x32xf32, #tpu.memory_space<vmem>>, vector<2x32xf32>
      tpu.vector_store %arg9[%c0_46, %c0_47], %83 {strides = array<i32>} : memref<2x32xf32, #tpu.memory_space<vmem>>, vector<2x32xf32>,
      %cst_48 = arith.constant 0.000000e+00 : f32
      %85 = vector.broadcast %cst_48 : f32 to vector<2x32xf32>
      %c0_49 = arith.constant 0 : index
      %c0_50 = arith.constant 0 : index
      %86 = vector.load %arg10[%c0_49, %c0_50] : memref<2x32xf32, #tpu.memory_space<vmem>>, vector<2x32xf32>
      tpu.vector_store %arg10[%c0_49, %c0_50], %85 {strides = array<i32>} : memref<2x32xf32, #tpu.memory_space<vmem>>, vector<2x32xf32>,
    } else {
    }
    %c0 = arith.constant 0 : index
    %c0_1 = arith.constant 0 : index
    %c0_2 = arith.constant 0 : index
    %3 = vector.load %arg1[%c0, %c0_1, %c0_2] : memref<1x2x128xf32, #tpu.memory_space<vmem>>, vector<1x2x128xf32>
    %4 = vector.shape_cast %3 : vector<1x2x128xf32> to vector<2x128xf32>
    %c0_3 = arith.constant 0 : index
    %c0_4 = arith.constant 0 : index
    %5 = vector.load %arg7[%c0_3, %c0_4] : memref<2x32xf32, #tpu.memory_space<vmem>>, vector<2x32xf32>
    %6 = arith.truncf %5 : vector<2x32xf32> to vector<2x32xbf16>
    %c0_5 = arith.constant 0 : index
    %c0_6 = arith.constant 0 : index
    %7 = vector.load %arg3[%c0_5, %c0_6] : memref<32x128xbf16, #tpu.memory_space<vmem>>, vector<32x128xbf16>
    %cst = arith.constant dense<0.000000e+00> : vector<2x128xf32>
    %8 = tpu.matmul %6, %7, %cst {dimension_numbers = #tpu.dot_dimension_numbers<[1], [0], [0], [1], [0, 0, 1, 1], [], []>} : vector<2x32xbf16>, vector<32x128xbf16>, vector<2x128xf32> -> vector<2x128xf32>
    %9 = arith.addf %4, %8 : vector<2x128xf32>
    %10 = vector.extract_strided_slice %9 {offsets = [0, 0], sizes = [2, 32], strides = [1, 1]} : vector<2x128xf32> to vector<2x32xf32>
    %11 = arith.negf %10 : vector<2x32xf32>
    %12 = math.exp %11 : vector<2x32xf32>
    %cst_7 = arith.constant 1.000000e+00 : f32
    %13 = vector.broadcast %cst_7 : f32 to vector<2x32xf32>
    %14 = arith.addf %13, %12 : vector<2x32xf32>
    %15 = arith.divf %13, %14 : vector<2x32xf32>
    %16 = vector.extract_strided_slice %9 {offsets = [0, 32], sizes = [2, 32], strides = [1, 1]} : vector<2x128xf32> to vector<2x32xf32>
    %17 = arith.negf %16 : vector<2x32xf32>
    %18 = math.exp %17 : vector<2x32xf32>
    %cst_8 = arith.constant 1.000000e+00 : f32
    %19 = vector.broadcast %cst_8 : f32 to vector<2x32xf32>
    %20 = arith.addf %19, %18 : vector<2x32xf32>
    %21 = arith.divf %19, %20 : vector<2x32xf32>
    %22 = vector.extract_strided_slice %9 {offsets = [0, 64], sizes = [2, 32], strides = [1, 1]} : vector<2x128xf32> to vector<2x32xf32>
    %23 = math.tanh %22 : vector<2x32xf32>
    %24 = vector.extract_strided_slice %9 {offsets = [0, 96], sizes = [2, 32], strides = [1, 1]} : vector<2x128xf32> to vector<2x32xf32>
    %25 = arith.negf %24 : vector<2x32xf32>
    %26 = math.exp %25 : vector<2x32xf32>
    %cst_9 = arith.constant 1.000000e+00 : f32
    %27 = vector.broadcast %cst_9 : f32 to vector<2x32xf32>
    %28 = arith.addf %27, %26 : vector<2x32xf32>
    %29 = arith.divf %27, %28 : vector<2x32xf32>
    %c0_10 = arith.constant 0 : index
    %c0_11 = arith.constant 0 : index
    %30 = vector.load %arg8[%c0_10, %c0_11] : memref<2x32xf32, #tpu.memory_space<vmem>>, vector<2x32xf32>
    %31 = arith.mulf %21, %30 : vector<2x32xf32>
    %32 = arith.mulf %15, %23 : vector<2x32xf32>
    %33 = arith.addf %31, %32 : vector<2x32xf32>
    %34 = math.tanh %33 : vector<2x32xf32>
    %35 = arith.mulf %29, %34 : vector<2x32xf32>
    %c0_12 = arith.constant 0 : index
    %c0_13 = arith.constant 0 : index
    %36 = vector.load %arg8[%c0_12, %c0_13] : memref<2x32xf32, #tpu.memory_space<vmem>>, vector<2x32xf32>
    tpu.vector_store %arg8[%c0_12, %c0_13], %33 {strides = array<i32>} : memref<2x32xf32, #tpu.memory_space<vmem>>, vector<2x32xf32>,
    %c0_14 = arith.constant 0 : index
    %c0_15 = arith.constant 0 : index
    %37 = vector.load %arg7[%c0_14, %c0_15] : memref<2x32xf32, #tpu.memory_space<vmem>>, vector<2x32xf32>
    tpu.vector_store %arg7[%c0_14, %c0_15], %35 {strides = array<i32>} : memref<2x32xf32, #tpu.memory_space<vmem>>, vector<2x32xf32>,
    %c0_16 = arith.constant 0 : index
    %c0_17 = arith.constant 0 : index
    %c0_18 = arith.constant 0 : index
    %38 = vector.load %arg5[%c0_16, %c0_17, %c0_18] : memref<1x2x32xf32, #tpu.memory_space<vmem>>, vector<1x2x32xf32>
    %39 = vector.shape_cast %38 : vector<1x2x32xf32> to vector<2x32xf32>
    %40 = vector.shape_cast %35 : vector<2x32xf32> to vector<1x2x32xf32>
    tpu.vector_store %arg5[%c0_16, %c0_17, %c0_18], %40 {strides = array<i32>} : memref<1x2x32xf32, #tpu.memory_space<vmem>>, vector<1x2x32xf32>,
    %c0_19 = arith.constant 0 : index
    %c0_20 = arith.constant 0 : index
    %c0_21 = arith.constant 0 : index
    %41 = vector.load %arg2[%c0_19, %c0_20, %c0_21] : memref<1x2x128xf32, #tpu.memory_space<vmem>>, vector<1x2x128xf32>
    %42 = vector.shape_cast %41 : vector<1x2x128xf32> to vector<2x128xf32>
    %c0_22 = arith.constant 0 : index
    %c0_23 = arith.constant 0 : index
    %43 = vector.load %arg9[%c0_22, %c0_23] : memref<2x32xf32, #tpu.memory_space<vmem>>, vector<2x32xf32>
    %44 = arith.truncf %43 : vector<2x32xf32> to vector<2x32xbf16>
    %c0_24 = arith.constant 0 : index
    %c0_25 = arith.constant 0 : index
    %45 = vector.load %arg4[%c0_24, %c0_25] : memref<32x128xbf16, #tpu.memory_space<vmem>>, vector<32x128xbf16>
    %cst_26 = arith.constant dense<0.000000e+00> : vector<2x128xf32>
    %46 = tpu.matmul %44, %45, %cst_26 {dimension_numbers = #tpu.dot_dimension_numbers<[1], [0], [0], [1], [0, 0, 1, 1], [], []>} : vector<2x32xbf16>, vector<32x128xbf16>, vector<2x128xf32> -> vector<2x128xf32>
    %47 = arith.addf %42, %46 : vector<2x128xf32>
    %48 = vector.extract_strided_slice %47 {offsets = [0, 0], sizes = [2, 32], strides = [1, 1]} : vector<2x128xf32> to vector<2x32xf32>
    %49 = arith.negf %48 : vector<2x32xf32>
    %50 = math.exp %49 : vector<2x32xf32>
    %cst_27 = arith.constant 1.000000e+00 : f32
    %51 = vector.broadcast %cst_27 : f32 to vector<2x32xf32>
    %52 = arith.addf %51, %50 : vector<2x32xf32>
    %53 = arith.divf %51, %52 : vector<2x32xf32>
    %54 = vector.extract_strided_slice %47 {offsets = [0, 32], sizes = [2, 32], strides = [1, 1]} : vector<2x128xf32> to vector<2x32xf32>
    %55 = arith.negf %54 : vector<2x32xf32>
    %56 = math.exp %55 : vector<2x32xf32>
    %cst_28 = arith.constant 1.000000e+00 : f32
    %57 = vector.broadcast %cst_28 : f32 to vector<2x32xf32>
    %58 = arith.addf %57, %56 : vector<2x32xf32>
    %59 = arith.divf %57, %58 : vector<2x32xf32>
    %60 = vector.extract_strided_slice %47 {offsets = [0, 64], sizes = [2, 32], strides = [1, 1]} : vector<2x128xf32> to vector<2x32xf32>
    %61 = math.tanh %60 : vector<2x32xf32>
    %62 = vector.extract_strided_slice %47 {offsets = [0, 96], sizes = [2, 32], strides = [1, 1]} : vector<2x128xf32> to vector<2x32xf32>
    %63 = arith.negf %62 : vector<2x32xf32>
    %64 = math.exp %63 : vector<2x32xf32>
    %cst_29 = arith.constant 1.000000e+00 : f32
    %65 = vector.broadcast %cst_29 : f32 to vector<2x32xf32>
    %66 = arith.addf %65, %64 : vector<2x32xf32>
    %67 = arith.divf %65, %66 : vector<2x32xf32>
    %c0_30 = arith.constant 0 : index
    %c0_31 = arith.constant 0 : index
    %68 = vector.load %arg10[%c0_30, %c0_31] : memref<2x32xf32, #tpu.memory_space<vmem>>, vector<2x32xf32>
    %69 = arith.mulf %59, %68 : vector<2x32xf32>
    %70 = arith.mulf %53, %61 : vector<2x32xf32>
    %71 = arith.addf %69, %70 : vector<2x32xf32>
    %72 = math.tanh %71 : vector<2x32xf32>
    %73 = arith.mulf %67, %72 : vector<2x32xf32>
    %c0_32 = arith.constant 0 : index
    %c0_33 = arith.constant 0 : index
    %74 = vector.load %arg10[%c0_32, %c0_33] : memref<2x32xf32, #tpu.memory_space<vmem>>, vector<2x32xf32>
    tpu.vector_store %arg10[%c0_32, %c0_33], %71 {strides = array<i32>} : memref<2x32xf32, #tpu.memory_space<vmem>>, vector<2x32xf32>,
    %c0_34 = arith.constant 0 : index
    %c0_35 = arith.constant 0 : index
    %75 = vector.load %arg9[%c0_34, %c0_35] : memref<2x32xf32, #tpu.memory_space<vmem>>, vector<2x32xf32>
    tpu.vector_store %arg9[%c0_34, %c0_35], %73 {strides = array<i32>} : memref<2x32xf32, #tpu.memory_space<vmem>>, vector<2x32xf32>,
    %c0_36 = arith.constant 0 : index
    %c0_37 = arith.constant 0 : index
    %c0_38 = arith.constant 0 : index
    %76 = vector.load %arg6[%c0_36, %c0_37, %c0_38] : memref<1x2x32xf32, #tpu.memory_space<vmem>>, vector<1x2x32xf32>
    %77 = vector.shape_cast %76 : vector<1x2x32xf32> to vector<2x32xf32>
    %78 = vector.shape_cast %73 : vector<2x32xf32> to vector<1x2x32xf32>
    tpu.vector_store %arg6[%c0_36, %c0_37, %c0_38], %78 {strides = array<i32>} : memref<1x2x32xf32, #tpu.memory_space<vmem>>, vector<1x2x32xf32>,
    return
  }
  func.func @transform_0(%arg0: i32) -> (i32, i32, i32) {
    %c0_i32 = arith.constant 0 : i32
    %c0_i32_0 = arith.constant 0 : i32
    %c0_i32_1 = arith.constant 0 : i32
    return %arg0, %c0_i32, %c0_i32_0 : i32, i32, i32
  }
  func.func @transform_1(%arg0: i32) -> (i32, i32, i32) {
    %c7_i32 = arith.constant 7 : i32
    %0 = arith.subi %c7_i32, %arg0 : i32
    %c0_i32 = arith.constant 0 : i32
    %c1_i32 = arith.constant 1 : i32
    %c0_i32_0 = arith.constant 0 : i32
    return %0, %c0_i32, %c1_i32 : i32, i32, i32
  }
  func.func @transform_2(%arg0: i32) -> (i32, i32) {
    %c0_i32 = arith.constant 0 : i32
    %c0_i32_0 = arith.constant 0 : i32
    %c0_i32_1 = arith.constant 0 : i32
    return %c0_i32, %c0_i32_0 : i32, i32
  }
  func.func @transform_3(%arg0: i32) -> (i32, i32) {
    %c0_i32 = arith.constant 0 : i32
    %c0_i32_0 = arith.constant 0 : i32
    %c0_i32_1 = arith.constant 0 : i32
    return %c0_i32, %c0_i32_0 : i32, i32
  }
  func.func @transform_4(%arg0: i32) -> (i32, i32, i32) {
    %c0_i32 = arith.constant 0 : i32
    %c0_i32_0 = arith.constant 0 : i32
    %c0_i32_1 = arith.constant 0 : i32
    return %arg0, %c0_i32, %c0_i32_0 : i32, i32, i32
  }
  func.func @transform_5(%arg0: i32) -> (i32, i32, i32) {
    %c7_i32 = arith.constant 7 : i32
    %0 = arith.subi %c7_i32, %arg0 : i32
    %c0_i32 = arith.constant 0 : i32
    %c0_i32_0 = arith.constant 0 : i32
    %c0_i32_1 = arith.constant 0 : i32
    return %0, %c0_i32, %c0_i32_0 : i32, i32, i32
  }
}

module attributes {stable_mosaic.version = 11 : i64} {
  func.func @_bidaf_attention_kernel(%arg0: i32, %arg1: memref<1x16x64xf32, #tpu.memory_space<vmem>>, %arg2: memref<1x8x64xf32, #tpu.memory_space<vmem>>, %arg3: memref<1x16x1xf32, #tpu.memory_space<vmem>>, %arg4: memref<1x1x8xf32, #tpu.memory_space<vmem>>, %arg5: memref<1x64xf32, #tpu.memory_space<vmem>>, %arg6: memref<1x64xf32, #tpu.memory_space<vmem>>, %arg7: memref<1x64xf32, #tpu.memory_space<vmem>>, %arg8: memref<1x1xf32, #tpu.memory_space<vmem>>, %arg9: memref<2x256xbf16, #tpu.memory_space<vmem>>, %arg10: memref<1x16x256xf32, #tpu.memory_space<vmem>>, %arg11: memref<1x2x16xf32, #tpu.memory_space<vmem>>) attributes {dimension_semantics = [#tpu.dimension_semantics<parallel>], iteration_bounds = array<i64: 2>, scalar_prefetch = 0 : i64, scratch_operands = 0 : i64, tpu.core_type = #tpu.core_type<tc>, window_params = [{transform_indices = @transform_0, window_bounds = array<i64: 1, 16, 64>}, {transform_indices = @transform_1, window_bounds = array<i64: 1, 8, 64>}, {transform_indices = @transform_2, window_bounds = array<i64: 1, 16, 1>}, {transform_indices = @transform_3, window_bounds = array<i64: 1, 1, 8>}, {pipeline_mode = #tpu.pipeline_mode<synchronous>, transform_indices = @transform_4, window_bounds = array<i64: 1, 64>}, {pipeline_mode = #tpu.pipeline_mode<synchronous>, transform_indices = @transform_5, window_bounds = array<i64: 1, 64>}, {pipeline_mode = #tpu.pipeline_mode<synchronous>, transform_indices = @transform_6, window_bounds = array<i64: 1, 64>}, {pipeline_mode = #tpu.pipeline_mode<synchronous>, transform_indices = @transform_7, window_bounds = array<i64: 1, 1>}, {pipeline_mode = #tpu.pipeline_mode<synchronous>, transform_indices = @transform_8, window_bounds = array<i64: 2, 256>}, {transform_indices = @transform_9, window_bounds = array<i64: 1, 16, 256>}, {transform_indices = @transform_10, window_bounds = array<i64: 1, 2, 16>}]} {
    %c0 = arith.constant 0 : index
    %c0_0 = arith.constant 0 : index
    %c0_1 = arith.constant 0 : index
    %0 = vector.load %arg1[%c0, %c0_0, %c0_1] : memref<1x16x64xf32, #tpu.memory_space<vmem>>, vector<1x16x64xf32>
    %1 = vector.shape_cast %0 : vector<1x16x64xf32> to vector<16x64xf32>
    %c0_2 = arith.constant 0 : index
    %c0_3 = arith.constant 0 : index
    %c0_4 = arith.constant 0 : index
    %2 = vector.load %arg2[%c0_2, %c0_3, %c0_4] : memref<1x8x64xf32, #tpu.memory_space<vmem>>, vector<1x8x64xf32>
    %3 = vector.shape_cast %2 : vector<1x8x64xf32> to vector<8x64xf32>
    %4 = arith.truncf %1 : vector<16x64xf32> to vector<16x64xbf16>
    %5 = arith.truncf %3 : vector<8x64xf32> to vector<8x64xbf16>
    %c0_5 = arith.constant 0 : index
    %c0_6 = arith.constant 0 : index
    %6 = vector.load %arg5[%c0_5, %c0_6] : memref<1x64xf32, #tpu.memory_space<vmem>>, vector<1x64xf32>
    %7 = vector.broadcast %6 : vector<1x64xf32> to vector<16x64xf32>
    %8 = arith.mulf %1, %7 : vector<16x64xf32>
    %cst = arith.constant dense<0.000000e+00> : vector<16xf32>
    %9 = vector.multi_reduction <add>, %8, %cst [1] : vector<16x64xf32> to vector<16xf32>
    %10 = vector.shape_cast %9 : vector<16xf32> to vector<16x1xf32>
    %c0_7 = arith.constant 0 : index
    %c0_8 = arith.constant 0 : index
    %11 = vector.load %arg6[%c0_7, %c0_8] : memref<1x64xf32, #tpu.memory_space<vmem>>, vector<1x64xf32>
    %12 = arith.truncf %11 : vector<1x64xf32> to vector<1x64xbf16>
    %cst_9 = arith.constant dense<0.000000e+00> : vector<1x8xf32>
    %13 = tpu.matmul %12, %5, %cst_9 {dimension_numbers = #tpu.dot_dimension_numbers<[1], [1], [0], [0], [0, 0, 1, 0], [], []>} : vector<1x64xbf16>, vector<8x64xbf16>, vector<1x8xf32> -> vector<1x8xf32>
    %c0_10 = arith.constant 0 : index
    %c0_11 = arith.constant 0 : index
    %14 = vector.load %arg7[%c0_10, %c0_11] : memref<1x64xf32, #tpu.memory_space<vmem>>, vector<1x64xf32>
    %15 = vector.broadcast %14 : vector<1x64xf32> to vector<16x64xf32>
    %16 = arith.mulf %1, %15 : vector<16x64xf32>
    %17 = arith.truncf %16 : vector<16x64xf32> to vector<16x64xbf16>
    %cst_12 = arith.constant dense<0.000000e+00> : vector<16x8xf32>
    %18 = tpu.matmul %17, %5, %cst_12 {dimension_numbers = #tpu.dot_dimension_numbers<[1], [1], [0], [0], [0, 0, 1, 0], [], []>} : vector<16x64xbf16>, vector<8x64xbf16>, vector<16x8xf32> -> vector<16x8xf32>
    %19 = vector.broadcast %10 : vector<16x1xf32> to vector<16x8xf32>
    %20 = arith.addf %18, %19 : vector<16x8xf32>
    %21 = vector.broadcast %13 : vector<1x8xf32> to vector<16x8xf32>
    %22 = arith.addf %20, %21 : vector<16x8xf32>
    %c0_13 = arith.constant 0 : index
    %c0_14 = arith.constant 0 : index
    %23 = vector.load %arg8[%c0_13, %c0_14] : memref<1x1xf32, #tpu.memory_space<vmem>>, vector<1x1xf32>
    %24 = vector.broadcast %23 : vector<1x1xf32> to vector<16x8xf32>
    %25 = arith.addf %22, %24 : vector<16x8xf32>
    %c0_15 = arith.constant 0 : index
    %c0_16 = arith.constant 0 : index
    %c0_17 = arith.constant 0 : index
    %26 = vector.load %arg4[%c0_15, %c0_16, %c0_17] : memref<1x1x8xf32, #tpu.memory_space<vmem>>, vector<1x1x8xf32>
    %27 = vector.shape_cast %26 : vector<1x1x8xf32> to vector<1x8xf32>
    %28 = vector.broadcast %27 : vector<1x8xf32> to vector<16x8xf32>
    %29 = arith.addf %25, %28 : vector<16x8xf32>
    %cst_18 = arith.constant dense<0xFF800000> : vector<16xf32>
    %30 = vector.multi_reduction <maximumf>, %29, %cst_18 [1] : vector<16x8xf32> to vector<16xf32>
    %31 = vector.shape_cast %30 : vector<16xf32> to vector<16x1xf32>
    %32 = vector.broadcast %31 : vector<16x1xf32> to vector<16x8xf32>
    %33 = arith.subf %29, %32 : vector<16x8xf32>
    %34 = math.exp %33 : vector<16x8xf32>
    %cst_19 = arith.constant dense<0.000000e+00> : vector<16xf32>
    %35 = vector.multi_reduction <add>, %34, %cst_19 [1] : vector<16x8xf32> to vector<16xf32>
    %36 = vector.shape_cast %35 : vector<16xf32> to vector<16x1xf32>
    %37 = tpu.reciprocal %36 {approx = true} : vector<16x1xf32> -> vector<16x1xf32>
    %38 = vector.broadcast %37 : vector<16x1xf32> to vector<16x8xf32>
    %39 = arith.mulf %34, %38 : vector<16x8xf32>
    %c0_20 = arith.constant 0 : index
    %c0_21 = arith.constant 0 : index
    %c0_22 = arith.constant 0 : index
    %40 = vector.load %arg3[%c0_20, %c0_21, %c0_22] : memref<1x16x1xf32, #tpu.memory_space<vmem>>, vector<1x16x1xf32>
    %41 = vector.shape_cast %40 : vector<1x16x1xf32> to vector<16x1xf32>
    %42 = vector.broadcast %41 : vector<16x1xf32> to vector<16x8xf32>
    %43 = arith.addf %25, %42 : vector<16x8xf32>
    %cst_23 = arith.constant dense<0xFF800000> : vector<8xf32>
    %44 = vector.multi_reduction <maximumf>, %43, %cst_23 [0] : vector<16x8xf32> to vector<8xf32>
    %45 = vector.shape_cast %44 : vector<8xf32> to vector<1x8xf32>
    %46 = vector.broadcast %45 : vector<1x8xf32> to vector<16x8xf32>
    %47 = arith.subf %43, %46 : vector<16x8xf32>
    %48 = math.exp %47 : vector<16x8xf32>
    %cst_24 = arith.constant dense<0.000000e+00> : vector<8xf32>
    %49 = vector.multi_reduction <add>, %48, %cst_24 [0] : vector<16x8xf32> to vector<8xf32>
    %50 = vector.shape_cast %49 : vector<8xf32> to vector<1x8xf32>
    %51 = tpu.reciprocal %50 {approx = true} : vector<1x8xf32> -> vector<1x8xf32>
    %52 = vector.broadcast %51 : vector<1x8xf32> to vector<16x8xf32>
    %53 = arith.mulf %48, %52 : vector<16x8xf32>
    %54 = arith.truncf %39 : vector<16x8xf32> to vector<16x8xbf16>
    %cst_25 = arith.constant dense<0.000000e+00> : vector<16x64xf32>
    %55 = tpu.matmul %54, %5, %cst_25 {dimension_numbers = #tpu.dot_dimension_numbers<[1], [0], [0], [1], [0, 0, 1, 1], [], []>} : vector<16x8xbf16>, vector<8x64xbf16>, vector<16x64xf32> -> vector<16x64xf32>
    %56 = arith.truncf %53 : vector<16x8xf32> to vector<16x8xbf16>
    %cst_26 = arith.constant dense<0.000000e+00> : vector<8x64xf32>
    %57 = tpu.matmul %56, %4, %cst_26 {dimension_numbers = #tpu.dot_dimension_numbers<[0], [0], [1], [1], [0, 1, 1, 1], [], []>} : vector<16x8xbf16>, vector<16x64xbf16>, vector<8x64xf32> -> vector<8x64xf32>
    %58 = arith.truncf %57 : vector<8x64xf32> to vector<8x64xbf16>
    %cst_27 = arith.constant dense<0.000000e+00> : vector<16x64xf32>
    %59 = tpu.matmul %54, %58, %cst_27 {dimension_numbers = #tpu.dot_dimension_numbers<[1], [0], [0], [1], [0, 0, 1, 1], [], []>} : vector<16x8xbf16>, vector<8x64xbf16>, vector<16x64xf32> -> vector<16x64xf32>
    %60 = arith.mulf %1, %55 : vector<16x64xf32>
    %61 = arith.mulf %1, %59 : vector<16x64xf32>
    %62 = tpu.concatenate %1, %55, %60, %61 in 1 : vector<16x64xf32>, vector<16x64xf32>, vector<16x64xf32>, vector<16x64xf32> -> vector<16x256xf32>
    %c0_28 = arith.constant 0 : index
    %c0_29 = arith.constant 0 : index
    %c0_30 = arith.constant 0 : index
    %63 = vector.load %arg10[%c0_28, %c0_29, %c0_30] : memref<1x16x256xf32, #tpu.memory_space<vmem>>, vector<1x16x256xf32>
    %64 = vector.shape_cast %63 : vector<1x16x256xf32> to vector<16x256xf32>
    %65 = vector.shape_cast %62 : vector<16x256xf32> to vector<1x16x256xf32>
    tpu.vector_store %arg10[%c0_28, %c0_29, %c0_30], %65 {strides = array<i32>} : memref<1x16x256xf32, #tpu.memory_space<vmem>>, vector<1x16x256xf32>,
    %c0_31 = arith.constant 0 : index
    %c0_32 = arith.constant 0 : index
    %66 = vector.load %arg9[%c0_31, %c0_32] : memref<2x256xbf16, #tpu.memory_space<vmem>>, vector<2x256xbf16>
    %67 = arith.truncf %62 : vector<16x256xf32> to vector<16x256xbf16>
    %cst_33 = arith.constant dense<0.000000e+00> : vector<2x16xf32>
    %68 = tpu.matmul %66, %67, %cst_33 {dimension_numbers = #tpu.dot_dimension_numbers<[1], [1], [0], [0], [0, 0, 1, 0], [], []>} : vector<2x256xbf16>, vector<16x256xbf16>, vector<2x16xf32> -> vector<2x16xf32>
    %c0_34 = arith.constant 0 : index
    %c0_35 = arith.constant 0 : index
    %c0_36 = arith.constant 0 : index
    %69 = vector.load %arg11[%c0_34, %c0_35, %c0_36] : memref<1x2x16xf32, #tpu.memory_space<vmem>>, vector<1x2x16xf32>
    %70 = vector.shape_cast %69 : vector<1x2x16xf32> to vector<2x16xf32>
    %71 = vector.shape_cast %68 : vector<2x16xf32> to vector<1x2x16xf32>
    tpu.vector_store %arg11[%c0_34, %c0_35, %c0_36], %71 {strides = array<i32>} : memref<1x2x16xf32, #tpu.memory_space<vmem>>, vector<1x2x16xf32>,
    return
  }
  func.func @transform_0(%arg0: i32) -> (i32, i32, i32) {
    %c0_i32 = arith.constant 0 : i32
    %c0_i32_0 = arith.constant 0 : i32
    %c0_i32_1 = arith.constant 0 : i32
    return %arg0, %c0_i32, %c0_i32_0 : i32, i32, i32
  }
  func.func @transform_1(%arg0: i32) -> (i32, i32, i32) {
    %c0_i32 = arith.constant 0 : i32
    %c0_i32_0 = arith.constant 0 : i32
    %c0_i32_1 = arith.constant 0 : i32
    return %arg0, %c0_i32, %c0_i32_0 : i32, i32, i32
  }
  func.func @transform_2(%arg0: i32) -> (i32, i32, i32) {
    %c0_i32 = arith.constant 0 : i32
    %c0_i32_0 = arith.constant 0 : i32
    %c0_i32_1 = arith.constant 0 : i32
    return %arg0, %c0_i32, %c0_i32_0 : i32, i32, i32
  }
  func.func @transform_3(%arg0: i32) -> (i32, i32, i32) {
    %c0_i32 = arith.constant 0 : i32
    %c0_i32_0 = arith.constant 0 : i32
    %c0_i32_1 = arith.constant 0 : i32
    return %arg0, %c0_i32, %c0_i32_0 : i32, i32, i32
  }
  func.func @transform_4(%arg0: i32) -> (i32, i32) {
    %c0_i32 = arith.constant 0 : i32
    %c0_i32_0 = arith.constant 0 : i32
    %c0_i32_1 = arith.constant 0 : i32
    return %c0_i32, %c0_i32_0 : i32, i32
  }
  func.func @transform_5(%arg0: i32) -> (i32, i32) {
    %c0_i32 = arith.constant 0 : i32
    %c0_i32_0 = arith.constant 0 : i32
    %c0_i32_1 = arith.constant 0 : i32
    return %c0_i32, %c0_i32_0 : i32, i32
  }
  func.func @transform_6(%arg0: i32) -> (i32, i32) {
    %c0_i32 = arith.constant 0 : i32
    %c0_i32_0 = arith.constant 0 : i32
    %c0_i32_1 = arith.constant 0 : i32
    return %c0_i32, %c0_i32_0 : i32, i32
  }
  func.func @transform_7(%arg0: i32) -> (i32, i32) {
    %c0_i32 = arith.constant 0 : i32
    %c0_i32_0 = arith.constant 0 : i32
    %c0_i32_1 = arith.constant 0 : i32
    return %c0_i32, %c0_i32_0 : i32, i32
  }
  func.func @transform_8(%arg0: i32) -> (i32, i32) {
    %c0_i32 = arith.constant 0 : i32
    %c0_i32_0 = arith.constant 0 : i32
    %c0_i32_1 = arith.constant 0 : i32
    return %c0_i32, %c0_i32_0 : i32, i32
  }
  func.func @transform_9(%arg0: i32) -> (i32, i32, i32) {
    %c0_i32 = arith.constant 0 : i32
    %c0_i32_0 = arith.constant 0 : i32
    %c0_i32_1 = arith.constant 0 : i32
    return %arg0, %c0_i32, %c0_i32_0 : i32, i32, i32
  }
  func.func @transform_10(%arg0: i32) -> (i32, i32, i32) {
    %c0_i32 = arith.constant 0 : i32
    %c0_i32_0 = arith.constant 0 : i32
    %c0_i32_1 = arith.constant 0 : i32
    return %arg0, %c0_i32, %c0_i32_0 : i32, i32, i32
  }
}

module attributes {stable_mosaic.version = 11 : i64} {
  func.func @_linear_kernel(%arg0: i32, %arg1: memref<32x256xf32, #tpu.memory_space<vmem>>, %arg2: memref<256x256xbf16, #tpu.memory_space<vmem>>, %arg3: memref<1x256xf32, #tpu.memory_space<vmem>>, %arg4: memref<32x256xf32, #tpu.memory_space<vmem>>) attributes {dimension_semantics = [#tpu.dimension_semantics<parallel>], iteration_bounds = array<i64: 1>, scalar_prefetch = 0 : i64, scratch_operands = 0 : i64, tpu.core_type = #tpu.core_type<tc>, window_params = [{transform_indices = @transform_0, window_bounds = array<i64: 32, 256>}, {pipeline_mode = #tpu.pipeline_mode<synchronous>, transform_indices = @transform_1, window_bounds = array<i64: 256, 256>}, {pipeline_mode = #tpu.pipeline_mode<synchronous>, transform_indices = @transform_2, window_bounds = array<i64: 1, 256>}, {transform_indices = @transform_3, window_bounds = array<i64: 32, 256>}]} {
    %c0 = arith.constant 0 : index
    %c0_0 = arith.constant 0 : index
    %0 = vector.load %arg1[%c0, %c0_0] : memref<32x256xf32, #tpu.memory_space<vmem>>, vector<32x256xf32>
    %1 = arith.truncf %0 : vector<32x256xf32> to vector<32x256xbf16>
    %c0_1 = arith.constant 0 : index
    %c0_2 = arith.constant 0 : index
    %2 = vector.load %arg2[%c0_1, %c0_2] : memref<256x256xbf16, #tpu.memory_space<vmem>>, vector<256x256xbf16>
    %cst = arith.constant dense<0.000000e+00> : vector<32x256xf32>
    %3 = tpu.matmul %1, %2, %cst {dimension_numbers = #tpu.dot_dimension_numbers<[1], [0], [0], [1], [0, 0, 1, 1], [], []>} : vector<32x256xbf16>, vector<256x256xbf16>, vector<32x256xf32> -> vector<32x256xf32>
    %c0_3 = arith.constant 0 : index
    %c0_4 = arith.constant 0 : index
    %4 = vector.load %arg3[%c0_3, %c0_4] : memref<1x256xf32, #tpu.memory_space<vmem>>, vector<1x256xf32>
    %5 = vector.broadcast %4 : vector<1x256xf32> to vector<32x256xf32>
    %6 = arith.addf %3, %5 : vector<32x256xf32>
    %c0_5 = arith.constant 0 : index
    %c0_6 = arith.constant 0 : index
    %7 = vector.load %arg4[%c0_5, %c0_6] : memref<32x256xf32, #tpu.memory_space<vmem>>, vector<32x256xf32>
    tpu.vector_store %arg4[%c0_5, %c0_6], %6 {strides = array<i32>} : memref<32x256xf32, #tpu.memory_space<vmem>>, vector<32x256xf32>,
    return
  }
  func.func @transform_0(%arg0: i32) -> (i32, i32) {
    %c0_i32 = arith.constant 0 : i32
    %c0_i32_0 = arith.constant 0 : i32
    return %arg0, %c0_i32 : i32, i32
  }
  func.func @transform_1(%arg0: i32) -> (i32, i32) {
    %c0_i32 = arith.constant 0 : i32
    %c0_i32_0 = arith.constant 0 : i32
    %c0_i32_1 = arith.constant 0 : i32
    return %c0_i32, %c0_i32_0 : i32, i32
  }
  func.func @transform_2(%arg0: i32) -> (i32, i32) {
    %c0_i32 = arith.constant 0 : i32
    %c0_i32_0 = arith.constant 0 : i32
    %c0_i32_1 = arith.constant 0 : i32
    return %c0_i32, %c0_i32_0 : i32, i32
  }
  func.func @transform_3(%arg0: i32) -> (i32, i32) {
    %c0_i32 = arith.constant 0 : i32
    %c0_i32_0 = arith.constant 0 : i32
    return %arg0, %c0_i32 : i32, i32
  }
}

module attributes {stable_mosaic.version = 11 : i64} {
  func.func @_linear_kernel(%arg0: i32, %arg1: memref<32x64xf32, #tpu.memory_space<vmem>>, %arg2: memref<64x256xbf16, #tpu.memory_space<vmem>>, %arg3: memref<1x256xf32, #tpu.memory_space<vmem>>, %arg4: memref<32x256xf32, #tpu.memory_space<vmem>>) attributes {dimension_semantics = [#tpu.dimension_semantics<parallel>], iteration_bounds = array<i64: 1>, scalar_prefetch = 0 : i64, scratch_operands = 0 : i64, tpu.core_type = #tpu.core_type<tc>, window_params = [{transform_indices = @transform_0, window_bounds = array<i64: 32, 64>}, {pipeline_mode = #tpu.pipeline_mode<synchronous>, transform_indices = @transform_1, window_bounds = array<i64: 64, 256>}, {pipeline_mode = #tpu.pipeline_mode<synchronous>, transform_indices = @transform_2, window_bounds = array<i64: 1, 256>}, {transform_indices = @transform_3, window_bounds = array<i64: 32, 256>}]} {
    %c0 = arith.constant 0 : index
    %c0_0 = arith.constant 0 : index
    %0 = vector.load %arg1[%c0, %c0_0] : memref<32x64xf32, #tpu.memory_space<vmem>>, vector<32x64xf32>
    %1 = arith.truncf %0 : vector<32x64xf32> to vector<32x64xbf16>
    %c0_1 = arith.constant 0 : index
    %c0_2 = arith.constant 0 : index
    %2 = vector.load %arg2[%c0_1, %c0_2] : memref<64x256xbf16, #tpu.memory_space<vmem>>, vector<64x256xbf16>
    %cst = arith.constant dense<0.000000e+00> : vector<32x256xf32>
    %3 = tpu.matmul %1, %2, %cst {dimension_numbers = #tpu.dot_dimension_numbers<[1], [0], [0], [1], [0, 0, 1, 1], [], []>} : vector<32x64xbf16>, vector<64x256xbf16>, vector<32x256xf32> -> vector<32x256xf32>
    %c0_3 = arith.constant 0 : index
    %c0_4 = arith.constant 0 : index
    %4 = vector.load %arg3[%c0_3, %c0_4] : memref<1x256xf32, #tpu.memory_space<vmem>>, vector<1x256xf32>
    %5 = vector.broadcast %4 : vector<1x256xf32> to vector<32x256xf32>
    %6 = arith.addf %3, %5 : vector<32x256xf32>
    %c0_5 = arith.constant 0 : index
    %c0_6 = arith.constant 0 : index
    %7 = vector.load %arg4[%c0_5, %c0_6] : memref<32x256xf32, #tpu.memory_space<vmem>>, vector<32x256xf32>
    tpu.vector_store %arg4[%c0_5, %c0_6], %6 {strides = array<i32>} : memref<32x256xf32, #tpu.memory_space<vmem>>, vector<32x256xf32>,
    return
  }
  func.func @transform_0(%arg0: i32) -> (i32, i32) {
    %c0_i32 = arith.constant 0 : i32
    %c0_i32_0 = arith.constant 0 : i32
    return %arg0, %c0_i32 : i32, i32
  }
  func.func @transform_1(%arg0: i32) -> (i32, i32) {
    %c0_i32 = arith.constant 0 : i32
    %c0_i32_0 = arith.constant 0 : i32
    %c0_i32_1 = arith.constant 0 : i32
    return %c0_i32, %c0_i32_0 : i32, i32
  }
  func.func @transform_2(%arg0: i32) -> (i32, i32) {
    %c0_i32 = arith.constant 0 : i32
    %c0_i32_0 = arith.constant 0 : i32
    %c0_i32_1 = arith.constant 0 : i32
    return %c0_i32, %c0_i32_0 : i32, i32
  }
  func.func @transform_3(%arg0: i32) -> (i32, i32) {
    %c0_i32 = arith.constant 0 : i32
    %c0_i32_0 = arith.constant 0 : i32
    return %arg0, %c0_i32 : i32, i32
  }
}

module attributes {stable_mosaic.version = 11 : i64} {
  func.func @_output_head_kernel(%arg0: i32, %arg1: memref<1x2x16xf32, #tpu.memory_space<vmem>>, %arg2: memref<1x16x64xf32, #tpu.memory_space<vmem>>, %arg3: memref<1x16x64xf32, #tpu.memory_space<vmem>>, %arg4: memref<1x1x16xf32, #tpu.memory_space<vmem>>, %arg5: memref<1x64xbf16, #tpu.memory_space<vmem>>, %arg6: memref<1x64xbf16, #tpu.memory_space<vmem>>, %arg7: memref<2x1xf32, #tpu.memory_space<vmem>>, %arg8: memref<1x2x16xf32, #tpu.memory_space<vmem>>) attributes {dimension_semantics = [#tpu.dimension_semantics<parallel>], iteration_bounds = array<i64: 2>, scalar_prefetch = 0 : i64, scratch_operands = 0 : i64, tpu.core_type = #tpu.core_type<tc>, window_params = [{transform_indices = @transform_0, window_bounds = array<i64: 1, 2, 16>}, {transform_indices = @transform_1, window_bounds = array<i64: 1, 16, 64>}, {transform_indices = @transform_2, window_bounds = array<i64: 1, 16, 64>}, {transform_indices = @transform_3, window_bounds = array<i64: 1, 1, 16>}, {pipeline_mode = #tpu.pipeline_mode<synchronous>, transform_indices = @transform_4, window_bounds = array<i64: 1, 64>}, {pipeline_mode = #tpu.pipeline_mode<synchronous>, transform_indices = @transform_5, window_bounds = array<i64: 1, 64>}, {pipeline_mode = #tpu.pipeline_mode<synchronous>, transform_indices = @transform_6, window_bounds = array<i64: 2, 1>}, {transform_indices = @transform_7, window_bounds = array<i64: 1, 2, 16>}]} {
    %c0 = arith.constant 0 : index
    %c0_0 = arith.constant 0 : index
    %c0_1 = arith.constant 0 : index
    %0 = vector.load %arg2[%c0, %c0_0, %c0_1] : memref<1x16x64xf32, #tpu.memory_space<vmem>>, vector<1x16x64xf32>
    %1 = vector.shape_cast %0 : vector<1x16x64xf32> to vector<16x64xf32>
    %2 = arith.truncf %1 : vector<16x64xf32> to vector<16x64xbf16>
    %c0_2 = arith.constant 0 : index
    %c0_3 = arith.constant 0 : index
    %c0_4 = arith.constant 0 : index
    %3 = vector.load %arg3[%c0_2, %c0_3, %c0_4] : memref<1x16x64xf32, #tpu.memory_space<vmem>>, vector<1x16x64xf32>
    %4 = vector.shape_cast %3 : vector<1x16x64xf32> to vector<16x64xf32>
    %5 = arith.truncf %4 : vector<16x64xf32> to vector<16x64xbf16>
    %c0_5 = arith.constant 0 : index
    %c0_6 = arith.constant 0 : index
    %c0_7 = arith.constant 0 : index
    %6 = vector.load %arg4[%c0_5, %c0_6, %c0_7] : memref<1x1x16xf32, #tpu.memory_space<vmem>>, vector<1x1x16xf32>
    %7 = vector.shape_cast %6 : vector<1x1x16xf32> to vector<1x16xf32>
    %c0_8 = arith.constant 0 : index
    %c0_9 = arith.constant 0 : index
    %c0_10 = arith.constant 0 : index
    %8 = vector.load %arg1[%c0_8, %c0_9, %c0_10] : memref<1x2x16xf32, #tpu.memory_space<vmem>>, vector<1x2x16xf32>
    %9 = vector.shape_cast %8 : vector<1x2x16xf32> to vector<2x16xf32>
    %c0_11 = arith.constant 0 : index
    %c0_12 = arith.constant 0 : index
    %10 = vector.load %arg7[%c0_11, %c0_12] : memref<2x1xf32, #tpu.memory_space<vmem>>, vector<2x1xf32>
    %11 = vector.extract_strided_slice %9 {offsets = [0, 0], sizes = [1, 16], strides = [1, 1]} : vector<2x16xf32> to vector<1x16xf32>
    %c0_13 = arith.constant 0 : index
    %c0_14 = arith.constant 0 : index
    %12 = vector.load %arg5[%c0_13, %c0_14] : memref<1x64xbf16, #tpu.memory_space<vmem>>, vector<1x64xbf16>
    %cst = arith.constant dense<0.000000e+00> : vector<1x16xf32>
    %13 = tpu.matmul %12, %2, %cst {dimension_numbers = #tpu.dot_dimension_numbers<[1], [1], [0], [0], [0, 0, 1, 0], [], []>} : vector<1x64xbf16>, vector<16x64xbf16>, vector<1x16xf32> -> vector<1x16xf32>
    %14 = arith.addf %11, %13 : vector<1x16xf32>
    %15 = vector.extract_strided_slice %10 {offsets = [0, 0], sizes = [1, 1], strides = [1, 1]} : vector<2x1xf32> to vector<1x1xf32>
    %16 = vector.broadcast %15 : vector<1x1xf32> to vector<1x16xf32>
    %17 = arith.addf %14, %16 : vector<1x16xf32>
    %18 = arith.addf %17, %7 : vector<1x16xf32>
    %19 = vector.extract_strided_slice %9 {offsets = [1, 0], sizes = [1, 16], strides = [1, 1]} : vector<2x16xf32> to vector<1x16xf32>
    %c0_15 = arith.constant 0 : index
    %c0_16 = arith.constant 0 : index
    %20 = vector.load %arg6[%c0_15, %c0_16] : memref<1x64xbf16, #tpu.memory_space<vmem>>, vector<1x64xbf16>
    %cst_17 = arith.constant dense<0.000000e+00> : vector<1x16xf32>
    %21 = tpu.matmul %20, %5, %cst_17 {dimension_numbers = #tpu.dot_dimension_numbers<[1], [1], [0], [0], [0, 0, 1, 0], [], []>} : vector<1x64xbf16>, vector<16x64xbf16>, vector<1x16xf32> -> vector<1x16xf32>
    %22 = arith.addf %19, %21 : vector<1x16xf32>
    %23 = vector.extract_strided_slice %10 {offsets = [1, 0], sizes = [1, 1], strides = [1, 1]} : vector<2x1xf32> to vector<1x1xf32>
    %24 = vector.broadcast %23 : vector<1x1xf32> to vector<1x16xf32>
    %25 = arith.addf %22, %24 : vector<1x16xf32>
    %26 = arith.addf %25, %7 : vector<1x16xf32>
    %27 = tpu.concatenate %18, %26 in 0 : vector<1x16xf32>, vector<1x16xf32> -> vector<2x16xf32>
    %cst_18 = arith.constant dense<0xFF800000> : vector<2xf32>
    %28 = vector.multi_reduction <maximumf>, %27, %cst_18 [1] : vector<2x16xf32> to vector<2xf32>
    %29 = vector.shape_cast %28 : vector<2xf32> to vector<2x1xf32>
    %30 = vector.broadcast %29 : vector<2x1xf32> to vector<2x16xf32>
    %31 = arith.subf %27, %30 : vector<2x16xf32>
    %32 = math.exp %31 : vector<2x16xf32>
    %cst_19 = arith.constant dense<0.000000e+00> : vector<2xf32>
    %33 = vector.multi_reduction <add>, %32, %cst_19 [1] : vector<2x16xf32> to vector<2xf32>
    %34 = vector.shape_cast %33 : vector<2xf32> to vector<2x1xf32>
    %35 = math.log %34 : vector<2x1xf32>
    %36 = arith.addf %29, %35 : vector<2x1xf32>
    %37 = vector.broadcast %36 : vector<2x1xf32> to vector<2x16xf32>
    %38 = arith.subf %27, %37 : vector<2x16xf32>
    %c0_20 = arith.constant 0 : index
    %c0_21 = arith.constant 0 : index
    %c0_22 = arith.constant 0 : index
    %39 = vector.load %arg8[%c0_20, %c0_21, %c0_22] : memref<1x2x16xf32, #tpu.memory_space<vmem>>, vector<1x2x16xf32>
    %40 = vector.shape_cast %39 : vector<1x2x16xf32> to vector<2x16xf32>
    %41 = vector.shape_cast %38 : vector<2x16xf32> to vector<1x2x16xf32>
    tpu.vector_store %arg8[%c0_20, %c0_21, %c0_22], %41 {strides = array<i32>} : memref<1x2x16xf32, #tpu.memory_space<vmem>>, vector<1x2x16xf32>,
    return
  }
  func.func @transform_0(%arg0: i32) -> (i32, i32, i32) {
    %c0_i32 = arith.constant 0 : i32
    %c0_i32_0 = arith.constant 0 : i32
    %c0_i32_1 = arith.constant 0 : i32
    return %arg0, %c0_i32, %c0_i32_0 : i32, i32, i32
  }
  func.func @transform_1(%arg0: i32) -> (i32, i32, i32) {
    %c0_i32 = arith.constant 0 : i32
    %c0_i32_0 = arith.constant 0 : i32
    %c0_i32_1 = arith.constant 0 : i32
    return %arg0, %c0_i32, %c0_i32_0 : i32, i32, i32
  }
  func.func @transform_2(%arg0: i32) -> (i32, i32, i32) {
    %c0_i32 = arith.constant 0 : i32
    %c0_i32_0 = arith.constant 0 : i32
    %c0_i32_1 = arith.constant 0 : i32
    return %arg0, %c0_i32, %c0_i32_0 : i32, i32, i32
  }
  func.func @transform_3(%arg0: i32) -> (i32, i32, i32) {
    %c0_i32 = arith.constant 0 : i32
    %c0_i32_0 = arith.constant 0 : i32
    %c0_i32_1 = arith.constant 0 : i32
    return %arg0, %c0_i32, %c0_i32_0 : i32, i32, i32
  }
  func.func @transform_4(%arg0: i32) -> (i32, i32) {
    %c0_i32 = arith.constant 0 : i32
    %c0_i32_0 = arith.constant 0 : i32
    %c0_i32_1 = arith.constant 0 : i32
    return %c0_i32, %c0_i32_0 : i32, i32
  }
  func.func @transform_5(%arg0: i32) -> (i32, i32) {
    %c0_i32 = arith.constant 0 : i32
    %c0_i32_0 = arith.constant 0 : i32
    %c0_i32_1 = arith.constant 0 : i32
    return %c0_i32, %c0_i32_0 : i32, i32
  }
  func.func @transform_6(%arg0: i32) -> (i32, i32) {
    %c0_i32 = arith.constant 0 : i32
    %c0_i32_0 = arith.constant 0 : i32
    %c0_i32_1 = arith.constant 0 : i32
    return %c0_i32, %c0_i32_0 : i32, i32
  }
  func.func @transform_7(%arg0: i32) -> (i32, i32, i32) {
    %c0_i32 = arith.constant 0 : i32
    %c0_i32_0 = arith.constant 0 : i32
    %c0_i32_1 = arith.constant 0 : i32
    return %arg0, %c0_i32, %c0_i32_0 : i32, i32, i32
  }
}

</mosaic_0001>

<llo_original>
// kernel: bidaf_forward.21
$region0: #{bidaf_forward.21}
  #allocation0 [shape = 'u32[]', space=smem, size = 0x4, offset = 0x4, fixed_abs, tag = 'smem constant byte address 0x4 - core index']
  #allocation1 [shape = 'u32[144,128]{1,0:T(1,128)}', space=vmem, size = 0x12000, scoped, tag = 'internal scratch']
  %s0 = inlined_call_operand.vmem [shape: f32[32,512], index: 0, kind: input, shape index: {}]
  %s1 = inlined_call_operand.vmem [shape: bf16[512,32], index: 1, kind: input, shape index: {}]
  %s2 = inlined_call_operand.vmem [shape: f32[1,32], index: 2, kind: input, shape index: {}]
  %s3 = inlined_call_operand.vmem [shape: f32[32,32], index: 3, kind: output, shape index: {}]
  %s4 = sld [smem:[#allocation0]]
  $region22: #{bidaf_forward.21} parent=0
    _
  %s6 = ssub.s32 1, %s4
  %s7 = scalar_select 0, %s6, %s4
  // Predicated region
  $region2: #{bidaf_forward.21} parent=0 // pred_check
    _
  $region3: #{bidaf_forward.21} parent=0 // pred_check_branch
    %9 = sbr.rel (0) target = $region5
  $region4: #{bidaf_forward.21} parent=0 // pred_region
    _
  $region5: #{bidaf_forward.21} parent=0 // pred_fallthru
    _
  // Predicated region
  $region6: #{bidaf_forward.21} parent=0 // pred_check
    _
  $region7: #{bidaf_forward.21} parent=0 // pred_check_branch
    %11 = sbr.rel (0) target = $region9
  $region8: #{bidaf_forward.21} parent=0 // pred_region
    _
  $region9: #{bidaf_forward.21} parent=0 // pred_fallthru
    _
  // Predicated region
  $region10: #{bidaf_forward.21} parent=0 // pred_check
    _
  $region11: #{bidaf_forward.21} parent=0 // pred_check_branch
    %13 = sbr.rel (0) target = $region13
  $region12: #{bidaf_forward.21} parent=0 // pred_region
    _
  $region13: #{bidaf_forward.21} parent=0 // pred_fallthru
    _
  %v15 = vld [vmem:[%s0] sm:$0xff]
  %v16 = vld [vmem:[%s0 + $0x8] sm:$0xff]
  %v17 = vld [vmem:[%s0 + $0x10] sm:$0xff]
  %v18 = vld [vmem:[%s0 + $0x18] sm:$0xff]
  %v19 = vld [vmem:[%s0 + $0x20] sm:$0xff]
  %v20 = vld [vmem:[%s0 + $0x28] sm:$0xff]
  %v21 = vld [vmem:[%s0 + $0x30] sm:$0xff]
  %v22 = vld [vmem:[%s0 + $0x38] sm:$0xff]
  %v23 = vld [vmem:[%s0 + $0x40] sm:$0xff]
  %v24 = vld [vmem:[%s0 + $0x48] sm:$0xff]
  %v25 = vld [vmem:[%s0 + $0x50] sm:$0xff]
  %v26 = vld [vmem:[%s0 + $0x58] sm:$0xff]
  %v27 = vld [vmem:[%s0 + $0x60] sm:$0xff]
  %v28 = vld [vmem:[%s0 + $0x68] sm:$0xff]
  %v29 = vld [vmem:[%s0 + $0x70] sm:$0xff]
  %v30 = vld [vmem:[%s0 + $0x78] sm:$0xff]
  %v31 = vpack.c.bf16 %v19, %v15
  %v32 = vpack.c.bf16 %v20, %v16
  %v33 = vpack.c.bf16 %v21, %v17
  %v34 = vpack.c.bf16 %v22, %v18
  %v35 = vpack.c.bf16 %v27, %v23
  %v36 = vpack.c.bf16 %v28, %v24
  %v37 = vpack.c.bf16 %v29, %v25
  %v38 = vpack.c.bf16 %v30, %v26
  %v39 = vld [vmem:[%s1] sm:$0xf]
  %v40 = vld [vmem:[%s1 + $0x4] sm:$0xf]
  %v41 = vld [vmem:[%s1 + $0x8] sm:$0xf]
  %v42 = vld [vmem:[%s1 + $0xc] sm:$0xf]
  %v43 = vld [vmem:[%s1 + $0x10] sm:$0xf]
  %v44 = vld [vmem:[%s1 + $0x14] sm:$0xf]
  %v45 = vld [vmem:[%s1 + $0x18] sm:$0xf]
  %v46 = vld [vmem:[%s1 + $0x1c] sm:$0xf]
  %v47 = vld [vmem:[%s1 + $0x20] sm:$0xf]
  %v48 = vld [vmem:[%s1 + $0x24] sm:$0xf]
  %v49 = vld [vmem:[%s1 + $0x28] sm:$0xf]
  %v50 = vld [vmem:[%s1 + $0x2c] sm:$0xf]
  %v51 = vld [vmem:[%s1 + $0x30] sm:$0xf]
  %v52 = vld [vmem:[%s1 + $0x34] sm:$0xf]
  %v53 = vld [vmem:[%s1 + $0x38] sm:$0xf]
  %v54 = vld [vmem:[%s1 + $0x3c] sm:$0xf]
  %v55 = vld [vmem:[%s1 + $0x40] sm:$0xf]
  %v56 = vld [vmem:[%s1 + $0x44] sm:$0xf]
  %v57 = vld [vmem:[%s1 + $0x48] sm:$0xf]
  %v58 = vld [vmem:[%s1 + $0x4c] sm:$0xf]
  %v59 = vld [vmem:[%s1 + $0x50] sm:$0xf]
  %v60 = vld [vmem:[%s1 + $0x54] sm:$0xf]
  %v61 = vld [vmem:[%s1 + $0x58] sm:$0xf]
  %v62 = vld [vmem:[%s1 + $0x5c] sm:$0xf]
  %v63 = vld [vmem:[%s1 + $0x60] sm:$0xf]
  %v64 = vld [vmem:[%s1 + $0x64] sm:$0xf]
  %v65 = vld [vmem:[%s1 + $0x68] sm:$0xf]
  %v66 = vld [vmem:[%s1 + $0x6c] sm:$0xf]
  %v67 = vld [vmem:[%s1 + $0x70] sm:$0xf]
  %v68 = vld [vmem:[%s1 + $0x74] sm:$0xf]
  %v69 = vld [vmem:[%s1 + $0x78] sm:$0xf]
  %v70 = vld [vmem:[%s1 + $0x7c] sm:$0xf]
  %v71 = vld [vmem:[%s1 + $0x80] sm:$0xf]
  %v72 = vld [vmem:[%s1 + $0x84] sm:$0xf]
  %v73 = vld [vmem:[%s1 + $0x88] sm:$0xf]
  %v74 = vld [vmem:[%s1 + $0x8c] sm:$0xf]
  %v75 = vld [vmem:[%s1 + $0x90] sm:$0xf]
  %v76 = vld [vmem:[%s1 + $0x94] sm:$0xf]
  %v77 = vld [vmem:[%s1 + $0x98] sm:$0xf]
  %v78 = vld [vmem:[%s1 + $0x9c] sm:$0xf]
  %v79 = vld [vmem:[%s1 + $0xa0] sm:$0xf]
  %v80 = vld [vmem:[%s1 + $0xa4] sm:$0xf]
  %v81 = vld [vmem:[%s1 + $0xa8] sm:$0xf]
  %v82 = vld [vmem:[%s1 + $0xac] sm:$0xf]
  %v83 = vld [vmem:[%s1 + $0xb0] sm:$0xf]
  %v84 = vld [vmem:[%s1 + $0xb4] sm:$0xf]
  %v85 = vld [vmem:[%s1 + $0xb8] sm:$0xf]
  %v86 = vld [vmem:[%s1 + $0xbc] sm:$0xf]
  %v87 = vld [vmem:[%s1 + $0xc0] sm:$0xf]
  %v88 = vld [vmem:[%s1 + $0xc4] sm:$0xf]
  %v89 = vld [vmem:[%s1 + $0xc8] sm:$0xf]
  %v90 = vld [vmem:[%s1 + $0xcc] sm:$0xf]
  %v91 = vld [vmem:[%s1 + $0xd0] sm:$0xf]
  %v92 = vld [vmem:[%s1 + $0xd4] sm:$0xf]
  %v93 = vld [vmem:[%s1 + $0xd8] sm:$0xf]
  %v94 = vld [vmem:[%s1 + $0xdc] sm:$0xf]
  %v95 = vld [vmem:[%s1 + $0xe0] sm:$0xf]
  %v96 = vld [vmem:[%s1 + $0xe4] sm:$0xf]
  %v97 = vld [vmem:[%s1 + $0xe8] sm:$0xf]
  %v98 = vld [vmem:[%s1 + $0xec] sm:$0xf]
  %v99 = vld [vmem:[%s1 + $0xf0] sm:$0xf]
  %v100 = vld [vmem:[%s1 + $0xf4] sm:$0xf]
  %v101 = vld [vmem:[%s1 + $0xf8] sm:$0xf]
  %v102 = vld [vmem:[%s1 + $0xfc] sm:$0xf]
  %v103 = vld [vmem:[%s2] sm:$0x1]
  %v105 = vlaneseq
  %v106 = vshrl.u32 %v105, 7
  %v107 = vsub.s32 0, %v106
  %v108 = vrot.slane %v103, %v107
  %v174 = vunpack.c.l.b16 %v39
  %v175 = vunpack.c.l.b16 %v40
  %v176 = vunpack.c.l.b16 %v41
  %v177 = vunpack.c.l.b16 %v42
  %v178 = vunpack.c.l.b16 %v43
  %v179 = vunpack.c.l.b16 %v44
  %v180 = vunpack.c.l.b16 %v45
  %v181 = vunpack.c.l.b16 %v46
  %v182 = vunpack.c.l.b16 %v47
  %v183 = vunpack.c.l.b16 %v48
  %v184 = vunpack.c.l.b16 %v49
  %v185 = vunpack.c.l.b16 %v50
  %v186 = vunpack.c.l.b16 %v51
  %v187 = vunpack.c.l.b16 %v52
  %v188 = vunpack.c.l.b16 %v53
  %v189 = vunpack.c.l.b16 %v54
  %v190 = vunpack.c.l.b16 %v55
  %v191 = vunpack.c.l.b16 %v56
  %v192 = vunpack.c.l.b16 %v57
  %v193 = vunpack.c.l.b16 %v58
  %v194 = vunpack.c.l.b16 %v59
  %v195 = vunpack.c.l.b16 %v60
  %v196 = vunpack.c.l.b16 %v61
  %v197 = vunpack.c.l.b16 %v62
  %v198 = vunpack.c.l.b16 %v63
  %v199 = vunpack.c.l.b16 %v64
  %v200 = vunpack.c.l.b16 %v65
  %v201 = vunpack.c.l.b16 %v66
  %v202 = vunpack.c.l.b16 %v67
  %v203 = vunpack.c.l.b16 %v68
  %v204 = vunpack.c.l.b16 %v69
  %v205 = vunpack.c.l.b16 %v70
  %v206 = vunpack.c.l.b16 %v71
  %v207 = vunpack.c.l.b16 %v72
  %v208 = vunpack.c.l.b16 %v73
  %v209 = vunpack.c.l.b16 %v74
  %v210 = vunpack.c.l.b16 %v75
  %v211 = vunpack.c.l.b16 %v76
  %v212 = vunpack.c.l.b16 %v77
  %v213 = vunpack.c.l.b16 %v78
  %v214 = vunpack.c.l.b16 %v79
  %v215 = vunpack.c.l.b16 %v80
  %v216 = vunpack.c.l.b16 %v81
  %v217 = vunpack.c.l.b16 %v82
  %v218 = vunpack.c.l.b16 %v83
  %v219 = vunpack.c.l.b16 %v84
  %v220 = vunpack.c.l.b16 %v85
  %v221 = vunpack.c.l.b16 %v86
  %v222 = vunpack.c.l.b16 %v87
  %v223 = vunpack.c.l.b16 %v88
  %v224 = vunpack.c.l.b16 %v89
  %v225 = vunpack.c.l.b16 %v90
  %v226 = vunpack.c.l.b16 %v91
  %v227 = vunpack.c.l.b16 %v92
  %v228 = vunpack.c.l.b16 %v93
  %v229 = vunpack.c.l.b16 %v94
  %v230 = vunpack.c.l.b16 %v95
  %v231 = vunpack.c.l.b16 %v96
  %v232 = vunpack.c.l.b16 %v97
  %v233 = vunpack.c.l.b16 %v98
  %v234 = vunpack.c.l.b16 %v99
  %v235 = vunpack.c.l.b16 %v100
  %v236 = vunpack.c.l.b16 %v101
  %v237 = vunpack.c.l.b16 %v102
  %v238 = vpack.c.b16 %v175, %v174
  %v239 = vpack.c.b16 %v177, %v176
  %v240 = vpack.c.b16 %v179, %v178
  %v241 = vpack.c.b16 %v181, %v180
  %v242 = vpack.c.b16 %v183, %v182
  %v243 = vpack.c.b16 %v185, %v184
  %v244 = vpack.c.b16 %v187, %v186
  %v245 = vpack.c.b16 %v189, %v188
  %v246 = vpack.c.b16 %v191, %v190
  %v247 = vpack.c.b16 %v193, %v192
  %v248 = vpack.c.b16 %v195, %v194
  %v249 = vpack.c.b16 %v197, %v196
  %v250 = vpack.c.b16 %v199, %v198
  %v251 = vpack.c.b16 %v201, %v200
  %v252 = vpack.c.b16 %v203, %v202
  %v253 = vpack.c.b16 %v205, %v204
  %v254 = vpack.c.b16 %v207, %v206
  %v255 = vpack.c.b16 %v209, %v208
  %v256 = vpack.c.b16 %v211, %v210
  %v257 = vpack.c.b16 %v213, %v212
  %v258 = vpack.c.b16 %v215, %v214
  %v259 = vpack.c.b16 %v217, %v216
  %v260 = vpack.c.b16 %v219, %v218
  %v261 = vpack.c.b16 %v221, %v220
  %v262 = vpack.c.b16 %v223, %v222
  %v263 = vpack.c.b16 %v225, %v224
  %v264 = vpack.c.b16 %v227, %v226
  %v265 = vpack.c.b16 %v229, %v228
  %v266 = vpack.c.b16 %v231, %v230
  %v267 = vpack.c.b16 %v233, %v232
  %v268 = vpack.c.b16 %v235, %v234
  %v269 = vpack.c.b16 %v237, %v236
  %302 = vmatprep.subr.bf16.mxu0 0
  %303 = vmatpush1.bf16.msra.mxu0 %v245
  %304 = vmatprep.subr.bf16.mxu0 0
  %305 = vmatpush1.bf16.msra.mxu0 %v244
  %306 = vmatprep.subr.bf16.mxu0 0
  %307 = vmatpush1.bf16.msra.mxu0 %v243
  %308 = vmatprep.subr.bf16.mxu0 0
  %309 = vmatpush1.bf16.msra.mxu0 %v242
  %310 = vmatprep.subr.bf16.mxu0 0
  %311 = vmatpush1.bf16.msra.mxu0 %v241
  %312 = vmatprep.subr.bf16.mxu0 0
  %313 = vmatpush1.bf16.msra.mxu0 %v240
  %314 = vmatprep.subr.bf16.mxu0 0
  %315 = vmatpush1.bf16.msra.mxu0 %v239
  %316 = vmatprep.subr.bf16.mxu0 0
  %317 = vmatpush1.bf16.msra.mxu0 %v238
  %318 = vmatprep.subr.bf16.mxu0 0
  %319 = vmatpush2.bf16.msra.mxu0 %v253
  %320 = vmatprep.subr.bf16.mxu0 0
  %321 = vmatpush2.bf16.msra.mxu0 %v252
  %322 = vmatprep.subr.bf16.mxu0 0
  %323 = vmatpush2.bf16.msra.mxu0 %v251
  %324 = vmatprep.subr.bf16.mxu0 0
  %325 = vmatpush2.bf16.msra.mxu0 %v250
  %326 = vmatprep.subr.bf16.mxu0 0
  %327 = vmatpush2.bf16.msra.mxu0 %v249
  %328 = vmatprep.subr.bf16.mxu0 0
  %329 = vmatpush2.bf16.msra.mxu0 %v248
  %330 = vmatprep.subr.bf16.mxu0 0
  %331 = vmatpush2.bf16.msra.mxu0 %v247
  %332 = vmatprep.subr.bf16.mxu0 0
  %333 = vmatpush2.bf16.msra.mxu0 %v246
  %334 = vmatprep.mubr.bf16.mxu0 %v32
  %335 = vmatmul.mubr.bf16.gmra.mxu0 %v31
  %v336 = vpop.f32.mrf.mxu0
  %v337 = vadd.f32 %v108, %v336
  %v338 = vpop.f32.mrf.mxu0
  %v339 = vpop.f32.mrf.mxu0
  %v340 = vadd.f32 %v108, %v339
  %v341 = vpop.f32.mrf.mxu0
  %342 = vmatprep.mubr.bf16.mxu0 %v36
  %343 = vmatmul.mubr.bf16.gmra.mxu0 %v35
  %v344 = vpop.f32.mrf.mxu0
  %v345 = vadd.f32 %v108, %v344
  %v346 = vpop.f32.mrf.mxu0
  %v347 = vpop.f32.mrf.mxu0
  %v348 = vadd.f32 %v108, %v347
  %v349 = vpop.f32.mrf.mxu0
  %350 = vdwg.mxu0
  %351 = vmatprep.subr.bf16.mxu0 0
  %352 = vmatpush1.bf16.msra.mxu0 %v261
  %353 = vmatprep.subr.bf16.mxu0 0
  %354 = vmatpush1.bf16.msra.mxu0 %v260
  %355 = vmatprep.subr.bf16.mxu0 0
  %356 = vmatpush1.bf16.msra.mxu0 %v259
  %357 = vmatprep.subr.bf16.mxu0 0
  %358 = vmatpush1.bf16.msra.mxu0 %v258
  %359 = vmatprep.subr.bf16.mxu0 0
  %360 = vmatpush1.bf16.msra.mxu0 %v257
  %361 = vmatprep.subr.bf16.mxu0 0
  %362 = vmatpush1.bf16.msra.mxu0 %v256
  %363 = vmatprep.subr.bf16.mxu0 0
  %364 = vmatpush1.bf16.msra.mxu0 %v255
  %365 = vmatprep.subr.bf16.mxu0 0
  %366 = vmatpush1.bf16.msra.mxu0 %v254
  %367 = vmatprep.subr.bf16.mxu0 0
  %368 = vmatpush2.bf16.msra.mxu0 %v269
  %369 = vmatprep.subr.bf16.mxu0 0
  %370 = vmatpush2.bf16.msra.mxu0 %v268
  %371 = vmatprep.subr.bf16.mxu0 0
  %372 = vmatpush2.bf16.msra.mxu0 %v267
  %373 = vmatprep.subr.bf16.mxu0 0
  %374 = vmatpush2.bf16.msra.mxu0 %v266
  %375 = vmatprep.subr.bf16.mxu0 0
  %376 = vmatpush2.bf16.msra.mxu0 %v265
  %377 = vmatprep.subr.bf16.mxu0 0
  %378 = vmatpush2.bf16.msra.mxu0 %v264
  %379 = vmatprep.subr.bf16.mxu0 0
  %380 = vmatpush2.bf16.msra.mxu0 %v263
  %381 = vmatprep.subr.bf16.mxu0 0
  %382 = vmatpush2.bf16.msra.mxu0 %v262
  %383 = vmatprep.mubr.bf16.mxu0 %v34
  %384 = vmatmul.mubr.bf16.gmra.mxu0 %v33
  %v385 = vpop.f32.mrf.mxu0
  %v386 = vadd.f32 %v337, %v385
  %v387 = vpop.f32.mrf.mxu0
  %v388 = vpop.f32.mrf.mxu0
  %v389 = vadd.f32 %v340, %v388
  %v390 = vpop.f32.mrf.mxu0
  %391 = vmatprep.mubr.bf16.mxu0 %v38
  %392 = vmatmul.mubr.bf16.gmra.mxu0 %v37
  %v393 = vpop.f32.mrf.mxu0
  %v394 = vadd.f32 %v345, %v393
  %v395 = vpop.f32.mrf.mxu0
  %v396 = vpop.f32.mrf.mxu0
  %v397 = vadd.f32 %v348, %v396
  %v398 = vpop.f32.mrf.mxu0
  %399 = vdwg.mxu0
  %vm400 = vcmask 261120
  %401 = vst.msk [vmem:[%s3] sm:$0xff] %vm400, %v386
  %402 = vst.msk [vmem:[%s3 + $0x8] sm:$0xff] %vm400, %v389
  %403 = vst.msk [vmem:[%s3 + $0x10] sm:$0xff] %vm400, %v394
  %404 = vst.msk [vmem:[%s3 + $0x18] sm:$0xff] %vm400, %v397
  // Predicated region
  $region14: #{bidaf_forward.21} parent=0 // pred_check
    _
  $region15: #{bidaf_forward.21} parent=0 // pred_check_branch
    %406 = sbr.rel (0) target = $region17
  $region16: #{bidaf_forward.21} parent=0 // pred_region
    _
  $region17: #{bidaf_forward.21} parent=0 // pred_fallthru
    _
  // Predicated region
  $region18: #{bidaf_forward.21} parent=0 // pred_check
    _
  $region19: #{bidaf_forward.21} parent=0 // pred_check_branch
    %408 = sbr.rel (0) target = $region21
  $region20: #{bidaf_forward.21} parent=0 // pred_region
    _
  $region21: #{bidaf_forward.21} parent=0 // pred_fallthru
    _

// kernel: bidaf_forward.22
$region0: #{bidaf_forward.22}
  #allocation0 [shape = 'u32[]', space=smem, size = 0x4, offset = 0x4, fixed_abs, tag = 'smem constant byte address 0x4 - core index']
  #allocation1 [shape = 'u32[144,128]{1,0:T(1,128)}', space=vmem, size = 0x12000, scoped, tag = 'internal scratch']
  %s0 = inlined_call_operand.vmem [shape: f32[32,32], index: 0, kind: input, shape index: {}]
  %s1 = inlined_call_operand.vmem [shape: bf16[32,64], index: 1, kind: input, shape index: {}]
  %s2 = inlined_call_operand.vmem [shape: f32[1,64], index: 2, kind: input, shape index: {}]
  %s3 = inlined_call_operand.vmem [shape: f32[32,32], index: 3, kind: output, shape index: {}]
  %s4 = sld [smem:[#allocation0]]
  $region22: #{bidaf_forward.22} parent=0
    _
  %s6 = ssub.s32 1, %s4
  %s7 = scalar_select 0, %s6, %s4
  // Predicated region
  $region2: #{bidaf_forward.22} parent=0 // pred_check
    _
  $region3: #{bidaf_forward.22} parent=0 // pred_check_branch
    %9 = sbr.rel (0) target = $region5
  $region4: #{bidaf_forward.22} parent=0 // pred_region
    _
  $region5: #{bidaf_forward.22} parent=0 // pred_fallthru
    _
  // Predicated region
  $region6: #{bidaf_forward.22} parent=0 // pred_check
    _
  $region7: #{bidaf_forward.22} parent=0 // pred_check_branch
    %11 = sbr.rel (0) target = $region9
  $region8: #{bidaf_forward.22} parent=0 // pred_region
    _
  $region9: #{bidaf_forward.22} parent=0 // pred_fallthru
    _
  // Predicated region
  $region10: #{bidaf_forward.22} parent=0 // pred_check
    _
  $region11: #{bidaf_forward.22} parent=0 // pred_check_branch
    %13 = sbr.rel (0) target = $region13
  $region12: #{bidaf_forward.22} parent=0 // pred_region
    _
  $region13: #{bidaf_forward.22} parent=0 // pred_fallthru
    _
  %v15 = vld [vmem:[%s0] sm:$0xff]
  %v16 = vld [vmem:[%s0 + $0x8] sm:$0xff]
  %v17 = vld [vmem:[%s0 + $0x10] sm:$0xff]
  %v18 = vld [vmem:[%s0 + $0x18] sm:$0xff]
  %v19 = vpack.c.bf16 %v16, %v15
  %v20 = vpack.c.bf16 %v18, %v17
  %v21 = vld [vmem:[%s1] sm:$0xf]
  %v22 = vld [vmem:[%s1 + $0x4] sm:$0xf]
  %v23 = vld [vmem:[%s1 + $0x8] sm:$0xf]
  %v24 = vld [vmem:[%s1 + $0xc] sm:$0xf]
  %v25 = vld [vmem:[%s2] sm:$0x1]
  %v27 = vlaneseq
  %v28 = vshrl.u32 %v27, 7
  %v29 = vsub.s32 0, %v28
  %v30 = vrot.slane %v25, %v29
  %v36 = vunpack.c.l.b16 %v21
  %v37 = vunpack.c.l.b16 %v22
  %v38 = vunpack.c.l.b16 %v23
  %v39 = vunpack.c.l.b16 %v24
  %v40 = vpack.c.b16 %v37, %v36
  %v41 = vpack.c.b16 %v39, %v38
  %vm44 = vcmask 261120
  %v46 = vsel %vm44, %v19, 0
  %v49 = vsel %vm44, %v20, 0
  %51 = vmatprep.subr.bf16.mxu0 0
  %52 = vmatpush1.bf16.msra.mxu0 0
  %53 = vmatprep.subr.bf16.mxu0 0
  %54 = vmatpush1.bf16.msra.mxu0 0
  %55 = vmatprep.subr.bf16.mxu0 0
  %56 = vmatpush1.bf16.msra.mxu0 0
  %57 = vmatprep.subr.bf16.mxu0 0
  %58 = vmatpush1.bf16.msra.mxu0 0
  %59 = vmatprep.subr.bf16.mxu0 0
  %60 = vmatpush1.bf16.msra.mxu0 0
  %61 = vmatprep.subr.bf16.mxu0 0
  %62 = vmatpush1.bf16.msra.mxu0 0
  %63 = vmatprep.subr.bf16.mxu0 0
  %64 = vmatpush1.bf16.msra.mxu0 %v41
  %65 = vmatprep.subr.bf16.mxu0 0
  %66 = vmatpush1.bf16.msra.mxu0 %v40
  %67 = vmatprep.subr.bf16.mxu0 0
  %68 = vmatpush2.bf16.msra.mxu0 0
  %69 = vmatprep.subr.bf16.mxu0 0
  %70 = vmatpush2.bf16.msra.mxu0 0
  %71 = vmatprep.subr.bf16.mxu0 0
  %72 = vmatpush2.bf16.msra.mxu0 0
  %73 = vmatprep.subr.bf16.mxu0 0
  %74 = vmatpush2.bf16.msra.mxu0 0
  %75 = vmatprep.subr.bf16.mxu0 0
  %76 = vmatpush2.bf16.msra.mxu0 0
  %77 = vmatprep.subr.bf16.mxu0 0
  %78 = vmatpush2.bf16.msra.mxu0 0
  %79 = vmatprep.subr.bf16.mxu0 0
  %80 = vmatpush2.bf16.msra.mxu0 0
  %81 = vmatprep.subr.bf16.mxu0 0
  %82 = vmatpush2.bf16.msra.mxu0 0
  %83 = vmatprep.mubr.bf16.mxu0 0
  %84 = vmatmul.mubr.bf16.gmra.mxu0 %v46
  %v85 = vpop.f32.mrf.mxu0
  %v86 = vadd.f32 %v30, %v85
  %v87 = vpop.f32.mrf.mxu0
  %v88 = vpop.f32.mrf.mxu0
  %v89 = vadd.f32 %v30, %v88
  %v90 = vpop.f32.mrf.mxu0
  %91 = vmatprep.mubr.bf16.mxu0 0
  %92 = vmatmul.mubr.bf16.gmra.mxu0 %v49
  %v93 = vpop.f32.mrf.mxu0
  %v94 = vadd.f32 %v30, %v93
  %v95 = vpop.f32.mrf.mxu0
  %v96 = vpop.f32.mrf.mxu0
  %v97 = vadd.f32 %v30, %v96
  %v98 = vpop.f32.mrf.mxu0
  %99 = vdwg.mxu0
  %v100 = vmax.f32 %v86, 0.0
  %v101 = vmax.f32 %v89, 0.0
  %v102 = vmax.f32 %v94, 0.0
  %v103 = vmax.f32 %v97, 0.0
  %v104 = vxor.u32 %v86, 2147483648
  %v105 = vxor.u32 %v89, 2147483648
  %v106 = vxor.u32 %v94, 2147483648
  %v107 = vxor.u32 %v97, 2147483648
  %v108 = vmul.f32 %v104, 1.442695
  %v109 = vpow.pop %v108
  %v110 = vmul.f32 %v105, 1.442695
  %v111 = vpow.pop %v110
  %v112 = vmul.f32 %v106, 1.442695
  %v113 = vpow.pop %v112
  %v114 = vmul.f32 %v107, 1.442695
  %v115 = vpow.pop %v114
  %v116 = vadd.f32 %v109, 1.0
  %v117 = vadd.f32 %v111, 1.0
  %v118 = vadd.f32 %v113, 1.0
  %v119 = vadd.f32 %v115, 1.0
  %v120 = vrcp.pop %v116
  %v121 = vmul.f32 1.0, %v120
  %v122 = vrcp.pop %v117
  %v123 = vmul.f32 1.0, %v122
  %v124 = vrcp.pop %v118
  %v125 = vmul.f32 1.0, %v124
  %v126 = vrcp.pop %v119
  %v127 = vmul.f32 1.0, %v126
  %132 = vrot.lane.b32.xlu0 %v100, 32
  %v133 = vpop.permute.xlu0 %132
  %134 = vrot.lane.b32.xlu0 %v101, 32
  %v135 = vpop.permute.xlu0 %134
  %136 = vrot.lane.b32.xlu0 %v102, 32
  %v137 = vpop.permute.xlu0 %136
  %138 = vrot.lane.b32.xlu0 %v103, 32
  %v139 = vpop.permute.xlu0 %138
  %v144 = vmul.f32 %v121, %v133
  %v145 = vmul.f32 %v123, %v135
  %v146 = vmul.f32 %v125, %v137
  %v147 = vmul.f32 %v127, %v139
  %v148 = vsub.f32 1.0, %v121
  %v149 = vsub.f32 1.0, %v123
  %v150 = vsub.f32 1.0, %v125
  %v151 = vsub.f32 1.0, %v127
  %156 = vrot.lane.b32.xlu0 %v15, 32
  %v157 = vpop.permute.xlu0 %156
  %158 = vrot.lane.b32.xlu0 %v16, 32
  %v159 = vpop.permute.xlu0 %158
  %160 = vrot.lane.b32.xlu0 %v17, 32
  %v161 = vpop.permute.xlu0 %160
  %162 = vrot.lane.b32.xlu0 %v18, 32
  %v163 = vpop.permute.xlu0 %162
  %v168 = vmul.f32 %v148, %v157
  %v169 = vmul.f32 %v149, %v159
  %v170 = vmul.f32 %v150, %v161
  %v171 = vmul.f32 %v151, %v163
  %v172 = vadd.f32 %v144, %v168
  %v173 = vadd.f32 %v145, %v169
  %v174 = vadd.f32 %v146, %v170
  %v175 = vadd.f32 %v147, %v171
  %180 = vrot.lane.b32.xlu0 %v172, 96
  %v181 = vpop.permute.xlu0 %180
  %182 = vrot.lane.b32.xlu0 %v173, 96
  %v183 = vpop.permute.xlu0 %182
  %184 = vrot.lane.b32.xlu0 %v174, 96
  %v185 = vpop.permute.xlu0 %184
  %186 = vrot.lane.b32.xlu0 %v175, 96
  %v187 = vpop.permute.xlu0 %186
  %192 = vst.msk [vmem:[%s3] sm:$0xff] %vm44, %v181
  %193 = vst.msk [vmem:[%s3 + $0x8] sm:$0xff] %vm44, %v183
  %194 = vst.msk [vmem:[%s3 + $0x10] sm:$0xff] %vm44, %v185
  %195 = vst.msk [vmem:[%s3 + $0x18] sm:$0xff] %vm44, %v187
  // Predicated region
  $region14: #{bidaf_forward.22} parent=0 // pred_check
    _
  $region15: #{bidaf_forward.22} parent=0 // pred_check_branch
    %197 = sbr.rel (0) target = $region17
  $region16: #{bidaf_forward.22} parent=0 // pred_region
    _
  $region17: #{bidaf_forward.22} parent=0 // pred_fallthru
    _
  // Predicated region
  $region18: #{bidaf_forward.22} parent=0 // pred_check
    _
  $region19: #{bidaf_forward.22} parent=0 // pred_check_branch
    %199 = sbr.rel (0) target = $region21
  $region20: #{bidaf_forward.22} parent=0 // pred_region
    _
  $region21: #{bidaf_forward.22} parent=0 // pred_fallthru
    _

// kernel: bidaf_forward.28
$region0: #{bidaf_forward.28}
  #allocation0 [shape = 'u32[]', space=smem, size = 0x4, offset = 0x4, fixed_abs, tag = 'smem constant byte address 0x4 - core index']
  #allocation1 [shape = 'u32[144,128]{1,0:T(1,128)}', space=vmem, size = 0x12000, scoped, tag = 'internal scratch']
  %s0 = inlined_call_operand.vmem [shape: f32[32,32], index: 0, kind: input, shape index: {}]
  %s1 = inlined_call_operand.vmem [shape: bf16[32,256], index: 1, kind: input, shape index: {}]
  %s2 = inlined_call_operand.vmem [shape: f32[1,256], index: 2, kind: input, shape index: {}]
  %s3 = inlined_call_operand.vmem [shape: f32[32,256], index: 3, kind: output, shape index: {}]
  %s4 = sld [smem:[#allocation0]]
  $region22: #{bidaf_forward.28} parent=0
    _
  %s6 = ssub.s32 1, %s4
  %s7 = scalar_select 0, %s6, %s4
  // Predicated region
  $region2: #{bidaf_forward.28} parent=0 // pred_check
    _
  $region3: #{bidaf_forward.28} parent=0 // pred_check_branch
    %9 = sbr.rel (0) target = $region5
  $region4: #{bidaf_forward.28} parent=0 // pred_region
    _
  $region5: #{bidaf_forward.28} parent=0 // pred_fallthru
    _
  // Predicated region
  $region6: #{bidaf_forward.28} parent=0 // pred_check
    _
  $region7: #{bidaf_forward.28} parent=0 // pred_check_branch
    %11 = sbr.rel (0) target = $region9
  $region8: #{bidaf_forward.28} parent=0 // pred_region
    _
  $region9: #{bidaf_forward.28} parent=0 // pred_fallthru
    _
  // Predicated region
  $region10: #{bidaf_forward.28} parent=0 // pred_check
    _
  $region11: #{bidaf_forward.28} parent=0 // pred_check_branch
    %13 = sbr.rel (0) target = $region13
  $region12: #{bidaf_forward.28} parent=0 // pred_region
    _
  $region13: #{bidaf_forward.28} parent=0 // pred_fallthru
    _
  %v15 = vld [vmem:[%s0] sm:$0xff]
  %v16 = vld [vmem:[%s0 + $0x8] sm:$0xff]
  %v17 = vld [vmem:[%s0 + $0x10] sm:$0xff]
  %v18 = vld [vmem:[%s0 + $0x18] sm:$0xff]
  %v19 = vpack.c.bf16 %v16, %v15
  %v20 = vpack.c.bf16 %v18, %v17
  %v21 = vld [vmem:[%s1] sm:$0xff]
  %v22 = vld [vmem:[%s1 + $0x8] sm:$0xff]
  %v23 = vld [vmem:[%s1 + $0x10] sm:$0xff]
  %v24 = vld [vmem:[%s1 + $0x18] sm:$0xff]
  %v25 = vld [vmem:[%s2] sm:$0x3]
  %v27 = vlaneseq
  %v28 = vshrl.u32 %v27, 7
  %v29 = vsub.s32 0, %v28
  %v30 = vrot.slane %v25, %v29
  %v31 = vlaneseq
  %v32 = vshrl.u32 %v31, 7
  %v33 = vsub.s32 1, %v32
  %v34 = vrot.slane %v25, %v33
  %v41 = vunpack.c.l.b16 %v21
  %v42 = vunpack.c.h.b16 %v21
  %v43 = vunpack.c.l.b16 %v22
  %v44 = vunpack.c.h.b16 %v22
  %v45 = vunpack.c.l.b16 %v23
  %v46 = vunpack.c.h.b16 %v23
  %v47 = vunpack.c.l.b16 %v24
  %v48 = vunpack.c.h.b16 %v24
  %v49 = vpack.c.b16 %v43, %v41
  %v50 = vpack.c.b16 %v44, %v42
  %v51 = vpack.c.b16 %v47, %v45
  %v52 = vpack.c.b16 %v48, %v46
  %vm57 = vcmask 261120
  %v59 = vsel %vm57, %v19, 0
  %v62 = vsel %vm57, %v20, 0
  %64 = vmatprep.subr.bf16.mxu0 0
  %65 = vmatpush1.bf16.msra.mxu0 0
  %66 = vmatprep.subr.bf16.mxu0 0
  %67 = vmatpush1.bf16.msra.mxu0 0
  %68 = vmatprep.subr.bf16.mxu0 0
  %69 = vmatpush1.bf16.msra.mxu0 0
  %70 = vmatprep.subr.bf16.mxu0 0
  %71 = vmatpush1.bf16.msra.mxu0 0
  %72 = vmatprep.subr.bf16.mxu0 0
  %73 = vmatpush1.bf16.msra.mxu0 0
  %74 = vmatprep.subr.bf16.mxu0 0
  %75 = vmatpush1.bf16.msra.mxu0 0
  %76 = vmatprep.subr.bf16.mxu0 %v52
  %77 = vmatpush1.bf16.msra.mxu0 %v51
  %78 = vmatprep.subr.bf16.mxu0 %v50
  %79 = vmatpush1.bf16.msra.mxu0 %v49
  %80 = vmatprep.subr.bf16.mxu0 0
  %81 = vmatpush2.bf16.msra.mxu0 0
  %82 = vmatprep.subr.bf16.mxu0 0
  %83 = vmatpush2.bf16.msra.mxu0 0
  %84 = vmatprep.subr.bf16.mxu0 0
  %85 = vmatpush2.bf16.msra.mxu0 0
  %86 = vmatprep.subr.bf16.mxu0 0
  %87 = vmatpush2.bf16.msra.mxu0 0
  %88 = vmatprep.subr.bf16.mxu0 0
  %89 = vmatpush2.bf16.msra.mxu0 0
  %90 = vmatprep.subr.bf16.mxu0 0
  %91 = vmatpush2.bf16.msra.mxu0 0
  %92 = vmatprep.subr.bf16.mxu0 0
  %93 = vmatpush2.bf16.msra.mxu0 0
  %94 = vmatprep.subr.bf16.mxu0 0
  %95 = vmatpush2.bf16.msra.mxu0 0
  %96 = vmatprep.mubr.bf16.mxu0 0
  %97 = vmatmul.mubr.bf16.gmra.mxu0 %v59
  %v98 = vpop.f32.mrf.mxu0
  %v99 = vadd.f32 %v30, %v98
  %v100 = vpop.f32.mrf.mxu0
  %v101 = vadd.f32 %v34, %v100
  %v102 = vpop.f32.mrf.mxu0
  %v103 = vadd.f32 %v30, %v102
  %v104 = vpop.f32.mrf.mxu0
  %v105 = vadd.f32 %v34, %v104
  %106 = vmatprep.mubr.bf16.mxu0 0
  %107 = vmatmul.mubr.bf16.gmra.mxu0 %v62
  %v108 = vpop.f32.mrf.mxu0
  %v109 = vadd.f32 %v30, %v108
  %v110 = vpop.f32.mrf.mxu0
  %v111 = vadd.f32 %v34, %v110
  %v112 = vpop.f32.mrf.mxu0
  %v113 = vadd.f32 %v30, %v112
  %v114 = vpop.f32.mrf.mxu0
  %v115 = vadd.f32 %v34, %v114
  %116 = vdwg.mxu0
  %117 = vst [vmem:[%s3] sm:$0xff] %v99
  %118 = vst [vmem:[%s3 + $0x8] sm:$0xff] %v101
  %119 = vst [vmem:[%s3 + $0x10] sm:$0xff] %v103
  %120 = vst [vmem:[%s3 + $0x18] sm:$0xff] %v105
  %121 = vst [vmem:[%s3 + $0x20] sm:$0xff] %v109
  %122 = vst [vmem:[%s3 + $0x28] sm:$0xff] %v111
  %123 = vst [vmem:[%s3 + $0x30] sm:$0xff] %v113
  %124 = vst [vmem:[%s3 + $0x38] sm:$0xff] %v115
  // Predicated region
  $region14: #{bidaf_forward.28} parent=0 // pred_check
    _
  $region15: #{bidaf_forward.28} parent=0 // pred_check_branch
    %126 = sbr.rel (0) target = $region17
  $region16: #{bidaf_forward.28} parent=0 // pred_region
    _
  $region17: #{bidaf_forward.28} parent=0 // pred_fallthru
    _
  // Predicated region
  $region18: #{bidaf_forward.28} parent=0 // pred_check
    _
  $region19: #{bidaf_forward.28} parent=0 // pred_check_branch
    %128 = sbr.rel (0) target = $region21
  $region20: #{bidaf_forward.28} parent=0 // pred_region
    _
  $region21: #{bidaf_forward.28} parent=0 // pred_fallthru
    _

// kernel: bidaf_forward.29
$region0: #{bidaf_forward.29}
  #allocation0 [shape = 'u32[]', space=smem, size = 0x4, offset = 0x4, fixed_abs, tag = 'smem constant byte address 0x4 - core index']
  #allocation1 [shape = 'u32[144,128]{1,0:T(1,128)}', space=vmem, size = 0x12000, scoped, tag = 'internal scratch']
  #allocation2 [shape = 'f32[2,32]{1,0:T(2,128)}', space=vmem, size = 0x400, scoped, tag = 'scratch operand']
  #allocation3 [shape = 'f32[2,32]{1,0:T(2,128)}', space=vmem, size = 0x400, scoped, tag = 'scratch operand']
  #allocation4 [shape = 'f32[2,32]{1,0:T(2,128)}', space=vmem, size = 0x400, scoped, tag = 'scratch operand']
  #allocation5 [shape = 'f32[2,32]{1,0:T(2,128)}', space=vmem, size = 0x400, scoped, tag = 'scratch operand']
  %s0 = inlined_call_operand.vmem [shape: f32[16,2,256], index: 0, kind: input, shape index: {}, may-alias: {0,1}]
  %s1 = inlined_call_operand.vmem [shape: f32[16,2,256], index: 1, kind: input, shape index: {}, may-alias: {0,1}]
  %s2 = inlined_call_operand.vmem [shape: bf16[32,128], index: 2, kind: input, shape index: {}]
  %s3 = inlined_call_operand.vmem [shape: bf16[32,128], index: 3, kind: input, shape index: {}]
  %s4 = inlined_call_operand.vmem [shape: f32[16,2,32], index: 4, kind: output, shape index: {0}]
  %s5 = inlined_call_operand.vmem [shape: f32[16,2,32], index: 5, kind: output, shape index: {1}]
  %6 = xla_tuple %s4, %s5
  %s7 = sld [smem:[#allocation0]]
  $region61: #{bidaf_forward.29} parent=0
    _
  %s9 = ssub.s32 1, %s7
  %s10 = scalar_select 0, %s9, %s7
  loop: start=0, step=1, limit=18
  $region2: #{bidaf_forward.29} parent=0 // loop_pre_header
    _
  $region3: #{bidaf_forward.29} parent=0 // loop_header
    %s12 = sphi 0, %s16
    %p13 = scmp.ge.s32.totalorder %s12, 18
    %s22 = sphi 0, %s24
    %s25 = sphi 0, %s22
    %s26 = sphi 0, %s25
    %s42 = sphi 0, %s26
    %s50 = sphi 0, %s52
    %s53 = sphi 0, %s50
    %s54 = sphi 0, %s53
    %s70 = sphi 0, %s54
    %s74 = sphi 0, %s74
    %s76 = sphi 0, %s74
    %s77 = sphi 0, %s76
    %s91 = sphi 0, %s77
    %s95 = sphi 0, %s95
    %s97 = sphi 0, %s95
    %s98 = sphi 0, %s97
    %s112 = sphi 0, %s98
    %s118 = sphi 0, %s120
    %s121 = sphi 0, %s118
    %s122 = sphi 0, %s121
    %s138 = sphi 0, %s122
    %s146 = sphi 0, %s148
    %s149 = sphi 0, %s146
    %s150 = sphi 0, %s149
    %s166 = sphi 0, %s150
  $region4: #{bidaf_forward.29} parent=0 // loop_header_branch
    %15 = sbr.rel (%p13) target = $region8
  $region5: #{bidaf_forward.29} parent=0 // loop_body
    %s17 = ssub.s32 %s12, 1
    %s18 = ssub.s32 %s12, 2
    %s19 = sadd.s32 %s12, 1
    %s20 = ssub.s32 %s12, %s19
    %p21 = scmp.eq.s32.totalorder %s20, 0
    %s23 = sadd.s32 %s22, 1
    %s24 = scalar_select %p21, %s22, %s23
    %p27 = pneg %p21
    %p28 = scmp.eq.s32.totalorder %s12, 15
    %p29 = por %p27, %p28
    %p30 = scmp.ne.s32.totalorder %s22, %s25
    %p31 = scmp.eq.s32.totalorder %s12, 0
    %p32 = por %p30, %p31
    %p33 = scmp.ne.s32.totalorder %s22, %s25
    %p34 = scmp.eq.s32.totalorder %s17, 15
    %p35 = por %p33, %p34
    %p36 = scmp.ne.s32.totalorder %s25, %s26
    %p37 = scmp.eq.s32.totalorder %s17, 0
    %p38 = por %p36, %p37
    %p39 = scmp.ne.s32.totalorder %s25, %s26
    %p40 = scmp.eq.s32.totalorder %s18, 15
    %p41 = por %p39, %p40
    %p43 = scmp.ne.s32.totalorder %s26, %s42
    %p44 = scmp.eq.s32.totalorder %s18, 0
    %p45 = por %p43, %p44
    %s46 = ssub.s32 15, %s12
    %s47 = ssub.s32 15, %s19
    %s48 = ssub.s32 %s46, %s47
    %p49 = scmp.eq.s32.totalorder %s48, 0
    %s51 = sadd.s32 %s50, 1
    %s52 = scalar_select %p49, %s50, %s51
    %p55 = pneg %p49
    %p56 = scmp.eq.s32.totalorder %s12, 15
    %p57 = por %p55, %p56
    %p58 = scmp.ne.s32.totalorder %s50, %s53
    %p59 = scmp.eq.s32.totalorder %s12, 0
    %p60 = por %p58, %p59
    %p61 = scmp.ne.s32.totalorder %s50, %s53
    %p62 = scmp.eq.s32.totalorder %s17, 15
    %p63 = por %p61, %p62
    %p64 = scmp.ne.s32.totalorder %s53, %s54
    %p65 = scmp.eq.s32.totalorder %s17, 0
    %p66 = por %p64, %p65
    %p67 = scmp.ne.s32.totalorder %s53, %s54
    %p68 = scmp.eq.s32.totalorder %s18, 15
    %p69 = por %p67, %p68
    %p71 = scmp.ne.s32.totalorder %s54, %s70
    %p72 = scmp.eq.s32.totalorder %s18, 0
    %p73 = por %p71, %p72
    %s75 = sadd.s32 %s74, 1
    %p78 = scmp.eq.s32.totalorder %s12, 15
    %p79 = scmp.ne.s32.totalorder %s74, %s76
    %p80 = scmp.eq.s32.totalorder %s12, 0
    %p81 = por %p79, %p80
    %p82 = scmp.ne.s32.totalorder %s74, %s76
    %p83 = scmp.eq.s32.totalorder %s17, 15
    %p84 = por %p82, %p83
    %p85 = scmp.ne.s32.totalorder %s76, %s77
    %p86 = scmp.eq.s32.totalorder %s17, 0
    %p87 = por %p85, %p86
    %p88 = scmp.ne.s32.totalorder %s76, %s77
    %p89 = scmp.eq.s32.totalorder %s18, 15
    %p90 = por %p88, %p89
    %p92 = scmp.ne.s32.totalorder %s77, %s91
    %p93 = scmp.eq.s32.totalorder %s18, 0
    %p94 = por %p92, %p93
    %s96 = sadd.s32 %s95, 1
    %p99 = scmp.eq.s32.totalorder %s12, 15
    %p100 = scmp.ne.s32.totalorder %s95, %s97
    %p101 = scmp.eq.s32.totalorder %s12, 0
    %p102 = por %p100, %p101
    %p103 = scmp.ne.s32.totalorder %s95, %s97
    %p104 = scmp.eq.s32.totalorder %s17, 15
    %p105 = por %p103, %p104
    %p106 = scmp.ne.s32.totalorder %s97, %s98
    %p107 = scmp.eq.s32.totalorder %s17, 0
    %p108 = por %p106, %p107
    %p109 = scmp.ne.s32.totalorder %s97, %s98
    %p110 = scmp.eq.s32.totalorder %s18, 15
    %p111 = por %p109, %p110
    %p113 = scmp.ne.s32.totalorder %s98, %s112
    %p114 = scmp.eq.s32.totalorder %s18, 0
    %p115 = por %p113, %p114
    %s116 = ssub.s32 %s12, %s19
    %p117 = scmp.eq.s32.totalorder %s116, 0
    %s119 = sadd.s32 %s118, 1
    %s120 = scalar_select %p117, %s118, %s119
    %p123 = pneg %p117
    %p124 = scmp.eq.s32.totalorder %s12, 15
    %p125 = por %p123, %p124
    %p126 = scmp.ne.s32.totalorder %s118, %s121
    %p127 = scmp.eq.s32.totalorder %s12, 0
    %p128 = por %p126, %p127
    %p129 = scmp.ne.s32.totalorder %s118, %s121
    %p130 = scmp.eq.s32.totalorder %s17, 15
    %p131 = por %p129, %p130
    %p132 = scmp.ne.s32.totalorder %s121, %s122
    %p133 = scmp.eq.s32.totalorder %s17, 0
    %p134 = por %p132, %p133
    %p135 = scmp.ne.s32.totalorder %s121, %s122
    %p136 = scmp.eq.s32.totalorder %s18, 15
    %p137 = por %p135, %p136
    %p139 = scmp.ne.s32.totalorder %s122, %s138
    %p140 = scmp.eq.s32.totalorder %s18, 0
    %p141 = por %p139, %p140
    %s142 = ssub.s32 15, %s12
    %s143 = ssub.s32 15, %s19
    %s144 = ssub.s32 %s142, %s143
    %p145 = scmp.eq.s32.totalorder %s144, 0
    %s147 = sadd.s32 %s146, 1
    %s148 = scalar_select %p145, %s146, %s147
    %p151 = pneg %p145
    %p152 = scmp.eq.s32.totalorder %s12, 15
    %p153 = por %p151, %p152
    %p154 = scmp.ne.s32.totalorder %s146, %s149
    %p155 = scmp.eq.s32.totalorder %s12, 0
    %p156 = por %p154, %p155
    %p157 = scmp.ne.s32.totalorder %s146, %s149
    %p158 = scmp.eq.s32.totalorder %s17, 15
    %p159 = por %p157, %p158
    %p160 = scmp.ne.s32.totalorder %s149, %s150
    %p161 = scmp.eq.s32.totalorder %s17, 0
    %p162 = por %p160, %p161
    %p163 = scmp.ne.s32.totalorder %s149, %s150
    %p164 = scmp.eq.s32.totalorder %s18, 15
    %p165 = por %p163, %p164
    %p167 = scmp.ne.s32.totalorder %s150, %s166
    %p168 = scmp.eq.s32.totalorder %s18, 0
    %p169 = por %p167, %p168
    %p170 = scmp.le.s32.totalorder 1, %s12
    %p171 = scmp.lt.s32.totalorder %s12, 17
    %p172 = pnand %p170, %p171
    %p173 = pneg %p172
    // Predicated region
    $region9: #{bidaf_forward.29} parent=5 // pred_check
      _
    $region10: #{bidaf_forward.29} parent=5 // pred_check_branch
      %175 = sbr.rel (%p172) target = $region12
    $region11: #{bidaf_forward.29} parent=5 // pred_region
      %s176 = ssub.s32 %s12, 1
      // Predicated region
      $region13: #{bidaf_forward.29} parent=11 // pred_check
        %p177 = pneg %p87
      $region14: #{bidaf_forward.29} parent=11 // pred_check_branch
        %179 = sbr.rel (%p177) target = $region16
      $region15: #{bidaf_forward.29} parent=11 // pred_region
        _
      $region16: #{bidaf_forward.29} parent=11 // pred_fallthru
        _
      // Predicated region
      $region17: #{bidaf_forward.29} parent=11 // pred_check
        %p180 = pneg %p108
      $region18: #{bidaf_forward.29} parent=11 // pred_check_branch
        %182 = sbr.rel (%p180) target = $region20
      $region19: #{bidaf_forward.29} parent=11 // pred_region
        _
      $region20: #{bidaf_forward.29} parent=11 // pred_fallthru
        _
    $region12: #{bidaf_forward.29} parent=5 // pred_fallthru
      _
    %p183 = scmp.lt.s32.totalorder %s12, 16
    // Predicated region
    $region21: #{bidaf_forward.29} parent=5 // pred_check
      %p184 = pneg %p183
    $region22: #{bidaf_forward.29} parent=5 // pred_check_branch
      %186 = sbr.rel (%p184) target = $region24
    $region23: #{bidaf_forward.29} parent=5 // pred_region
      // Predicated region
      $region25: #{bidaf_forward.29} parent=23 // pred_check
        %p187 = pneg %p32
      $region26: #{bidaf_forward.29} parent=23 // pred_check_branch
        %189 = sbr.rel (%p187) target = $region28
      $region27: #{bidaf_forward.29} parent=23 // pred_region
        %p190 = scmp.lt.s32.totalorder %s12, 15
        %s191 = scalar_select %p190, %s12, 15
        %s192 = smul.addr %s191, 2
        %s193 = smul.addr %s192, 2
        %s194 = scalar_lea.vmem %s0, %s193
      $region28: #{bidaf_forward.29} parent=23 // pred_fallthru
        _
      // Predicated region
      $region29: #{bidaf_forward.29} parent=23 // pred_check
        %p195 = pneg %p60
      $region30: #{bidaf_forward.29} parent=23 // pred_check_branch
        %197 = sbr.rel (%p195) target = $region32
      $region31: #{bidaf_forward.29} parent=23 // pred_region
        %s198 = ssub.s32 15, %s12
        %p199 = scmp.lt.s32.totalorder %s198, 15
        %s200 = scalar_select %p199, %s198, 15
        %s201 = smul.addr %s200, 2
        %s202 = sadd.s32 1, %s201
        %s203 = smul.addr %s202, 2
        %s204 = scalar_lea.vmem %s1, %s203
        %s205 = ssub.s32 15, %s12
      $region32: #{bidaf_forward.29} parent=23 // pred_fallthru
        _
    $region24: #{bidaf_forward.29} parent=5 // pred_fallthru
      _
    %p206 = scmp.le.s32.totalorder 1, %s12
    %p207 = scmp.lt.s32.totalorder %s12, 17
    %p208 = pnand %p206, %p207
    %p209 = pneg %p208
    // Predicated region
    $region33: #{bidaf_forward.29} parent=5 // pred_check
      _
    $region34: #{bidaf_forward.29} parent=5 // pred_check_branch
      %211 = sbr.rel (%p208) target = $region36
    $region35: #{bidaf_forward.29} parent=5 // pred_region
      %s212 = ssub.s32 %s12, 1
      %p213 = scmp.lt.s32.totalorder %s17, 15
      %s214 = scalar_select %p213, %s17, 15
      %s215 = smul.addr %s214, 2
      %s216 = smul.addr %s215, 2
      %s217 = scalar_lea.vmem %s0, %s216
      %p218 = pneg %p38
      %p219 = pneg %p35
      %s220 = ssub.s32 15, %s17
      %p221 = scmp.lt.s32.totalorder %s220, 15
      %s222 = scalar_select %p221, %s220, 15
      %s223 = smul.addr %s222, 2
      %s224 = sadd.s32 1, %s223
      %s225 = smul.addr %s224, 2
      %s226 = scalar_lea.vmem %s1, %s225
      %p227 = pneg %p66
      %p228 = pneg %p63
      %p229 = pneg %p87
      %p230 = pneg %p84
      %p231 = pneg %p108
      %p232 = pneg %p105
      %p233 = pneg %p134
      %p234 = pneg %p131
      %p235 = scmp.lt.s32.totalorder %s17, 15
      %s236 = scalar_select %p235, %s17, 15
      %s237 = smul.addr %s236, 2
      %s238 = scalar_lea.vmem %s4, %s237
      %p239 = pneg %p162
      %p240 = pneg %p159
      %s241 = ssub.s32 15, %s17
      %p242 = scmp.lt.s32.totalorder %s241, 15
      %s243 = scalar_select %p242, %s241, 15
      %s244 = smul.addr %s243, 2
      %s245 = scalar_lea.vmem %s5, %s244
      %p246 = scmp.lt.s32.totalorder %s17, 15
      %s247 = scalar_select %p246, %s17, 15
      %s248 = smul.addr %s247, 2
      %s249 = smul.addr %s248, 2
      %s250 = scalar_lea.vmem %s0, %s249
      %s251 = ssub.s32 15, %s17
      %p252 = scmp.lt.s32.totalorder %s251, 15
      %s253 = scalar_select %p252, %s251, 15
      %s254 = smul.addr %s253, 2
      %s255 = sadd.s32 1, %s254
      %s256 = smul.addr %s255, 2
      %s257 = scalar_lea.vmem %s1, %s256
      %s258 = ssub.s32 15, %s17
      %p259 = scmp.lt.s32.totalorder %s17, 15
      %s260 = scalar_select %p259, %s17, 15
      %s261 = smul.addr %s260, 2
      %s262 = scalar_lea.vmem %s4, %s261
      %s263 = ssub.s32 15, %s17
      %p264 = scmp.lt.s32.totalorder %s263, 15
      %s265 = scalar_select %p264, %s263, 15
      %s266 = smul.addr %s265, 2
      %s267 = scalar_lea.vmem %s5, %s266
      %s268 = ssub.s32 15, %s17
      %p270 = scmp.eq.s32.totalorder %s17, 0
      // Predicated region
      $region37: #{bidaf_forward.29} parent=35 // pred_check
        %p271 = pneg %p270
      $region38: #{bidaf_forward.29} parent=35 // pred_check_branch
        %273 = sbr.rel (%p271) target = $region40
      $region39: #{bidaf_forward.29} parent=35 // pred_region
        %vm274 = vcmask 254976
        %275 = vst.msk [vmem:[#allocation2] sm:$0x3] %vm274, 0.0
        %276 = vst.msk [vmem:[#allocation3] sm:$0x3] %vm274, 0.0
        %277 = vst.msk [vmem:[#allocation4] sm:$0x3] %vm274, 0.0
        %278 = vst.msk [vmem:[#allocation5] sm:$0x3] %vm274, 0.0
      $region40: #{bidaf_forward.29} parent=35 // pred_fallthru
        _
      %v279 = vld [vmem:[%s250] sm:$0x3]
      %v280 = vld [vmem:[#allocation2] sm:$0x3]
      %v281 = vpack.c.bf16 %v280, %v280
      %v282 = vld [vmem:[%s2] sm:$0xf]
      %v283 = vld [vmem:[%s2 + $0x4] sm:$0xf]
      %v284 = vld [vmem:[%s2 + $0x8] sm:$0xf]
      %v285 = vld [vmem:[%s2 + $0xc] sm:$0xf]
      %v290 = vunpack.c.l.b16 %v282
      %v291 = vunpack.c.l.b16 %v283
      %v292 = vunpack.c.l.b16 %v284
      %v293 = vunpack.c.l.b16 %v285
      %v294 = vpack.c.b16 %v291, %v290
      %v295 = vpack.c.b16 %v293, %v292
      %vm298 = vcmask 261120
      %v300 = vsel %vm298, %v281, 0
      %302 = vmatprep.subr.bf16.mxu0 0
      %303 = vmatpush1.bf16.msra.mxu0 0
      %304 = vmatprep.subr.bf16.mxu0 0
      %305 = vmatpush1.bf16.msra.mxu0 0
      %306 = vmatprep.subr.bf16.mxu0 0
      %307 = vmatpush1.bf16.msra.mxu0 0
      %308 = vmatprep.subr.bf16.mxu0 0
      %309 = vmatpush1.bf16.msra.mxu0 0
      %310 = vmatprep.subr.bf16.mxu0 0
      %311 = vmatpush1.bf16.msra.mxu0 0
      %312 = vmatprep.subr.bf16.mxu0 0
      %313 = vmatpush1.bf16.msra.mxu0 0
      %314 = vmatprep.subr.bf16.mxu0 0
      %315 = vmatpush1.bf16.msra.mxu0 %v295
      %316 = vmatprep.subr.bf16.mxu0 0
      %317 = vmatpush1.bf16.msra.mxu0 %v294
      %318 = vmatprep.subr.bf16.mxu0 0
      %319 = vmatpush2.bf16.msra.mxu0 0
      %320 = vmatprep.subr.bf16.mxu0 0
      %321 = vmatpush2.bf16.msra.mxu0 0
      %322 = vmatprep.subr.bf16.mxu0 0
      %323 = vmatpush2.bf16.msra.mxu0 0
      %324 = vmatprep.subr.bf16.mxu0 0
      %325 = vmatpush2.bf16.msra.mxu0 0
      %326 = vmatprep.subr.bf16.mxu0 0
      %327 = vmatpush2.bf16.msra.mxu0 0
      %328 = vmatprep.subr.bf16.mxu0 0
      %329 = vmatpush2.bf16.msra.mxu0 0
      %330 = vmatprep.subr.bf16.mxu0 0
      %331 = vmatpush2.bf16.msra.mxu0 0
      %332 = vmatprep.subr.bf16.mxu0 0
      %333 = vmatpush2.bf16.msra.mxu0 0
      %334 = vmatprep.mubr.bf16.mxu0 0
      %335 = vmatmul.mubr.bf16.gmra.mxu0 %v300
      %v336 = vpop.f32.mrf.mxu0
      %v337 = vadd.f32 0.0, %v336
      %v338 = vpop.f32.mrf.mxu0
      %v339 = vpop.f32.mrf.mxu0
      %v340 = vpop.f32.mrf.mxu0
      %341 = vdwg.mxu0
      %v342 = vadd.f32 %v279, %v337
      %v343 = vxor.u32 %v342, 2147483648
      %v344 = vmul.f32 %v343, 1.442695
      %v345 = vpow.pop %v344
      %v346 = vadd.f32 %v345, 1.0
      %v347 = vrcp.pop %v346
      %v348 = vmul.f32 1.0, %v347
      %v349 = vtanh.pop %v342
      %v350 = vld [vmem:[#allocation3] sm:$0x3]
      %352 = vrot.lane.b32.xlu0 %v350, 32
      %v353 = vpop.permute.xlu0 %352
      %v355 = vmul.f32 %v348, %v353
      %357 = vrot.lane.b32.xlu0 %v349, 64
      %v358 = vpop.permute.xlu0 %357
      %v360 = vmul.f32 %v348, %v358
      %362 = vrot.lane.b32.xlu0 %v360, 32
      %v363 = vpop.permute.xlu0 %362
      %v365 = vadd.f32 %v355, %v363
      %v366 = vtanh.pop %v365
      %368 = vrot.lane.b32.xlu0 %v366, 64
      %v369 = vpop.permute.xlu0 %368
      %v371 = vmul.f32 %v348, %v369
      %373 = vrot.lane.b32.xlu0 %v365, 96
      %v374 = vpop.permute.xlu0 %373
      %vm376 = vcmask 254976
      %377 = vst.msk [vmem:[#allocation3] sm:$0x3] %vm376, %v374
      %379 = vrot.lane.b32.xlu0 %v371, 32
      %v380 = vpop.permute.xlu0 %379
      %382 = vst.msk [vmem:[#allocation2] sm:$0x3] %vm376, %v380
      %383 = vst.msk [vmem:[%s262] sm:$0x3] %vm376, %v380
      %v384 = vld [vmem:[%s257] sm:$0x3]
      %v385 = vld [vmem:[#allocation4] sm:$0x3]
      %v386 = vpack.c.bf16 %v385, %v385
      %v387 = vld [vmem:[%s3] sm:$0xf]
      %v388 = vld [vmem:[%s3 + $0x4] sm:$0xf]
      %v389 = vld [vmem:[%s3 + $0x8] sm:$0xf]
      %v390 = vld [vmem:[%s3 + $0xc] sm:$0xf]
      %v395 = vunpack.c.l.b16 %v387
      %v396 = vunpack.c.l.b16 %v388
      %v397 = vunpack.c.l.b16 %v389
      %v398 = vunpack.c.l.b16 %v390
      %v399 = vpack.c.b16 %v396, %v395
      %v400 = vpack.c.b16 %v398, %v397
      %v404 = vsel %vm298, %v386, 0
      %406 = vmatprep.subr.bf16.mxu0 0
      %407 = vmatpush1.bf16.msra.mxu0 0
      %408 = vmatprep.subr.bf16.mxu0 0
      %409 = vmatpush1.bf16.msra.mxu0 0
      %410 = vmatprep.subr.bf16.mxu0 0
      %411 = vmatpush1.bf16.msra.mxu0 0
      %412 = vmatprep.subr.bf16.mxu0 0
      %413 = vmatpush1.bf16.msra.mxu0 0
      %414 = vmatprep.subr.bf16.mxu0 0
      %415 = vmatpush1.bf16.msra.mxu0 0
      %416 = vmatprep.subr.bf16.mxu0 0
      %417 = vmatpush1.bf16.msra.mxu0 0
      %418 = vmatprep.subr.bf16.mxu0 0
      %419 = vmatpush1.bf16.msra.mxu0 %v400
      %420 = vmatprep.subr.bf16.mxu0 0
      %421 = vmatpush1.bf16.msra.mxu0 %v399
      %422 = vmatprep.subr.bf16.mxu0 0
      %423 = vmatpush2.bf16.msra.mxu0 0
      %424 = vmatprep.subr.bf16.mxu0 0
      %425 = vmatpush2.bf16.msra.mxu0 0
      %426 = vmatprep.subr.bf16.mxu0 0
      %427 = vmatpush2.bf16.msra.mxu0 0
      %428 = vmatprep.subr.bf16.mxu0 0
      %429 = vmatpush2.bf16.msra.mxu0 0
      %430 = vmatprep.subr.bf16.mxu0 0
      %431 = vmatpush2.bf16.msra.mxu0 0
      %432 = vmatprep.subr.bf16.mxu0 0
      %433 = vmatpush2.bf16.msra.mxu0 0
      %434 = vmatprep.subr.bf16.mxu0 0
      %435 = vmatpush2.bf16.msra.mxu0 0
      %436 = vmatprep.subr.bf16.mxu0 0
      %437 = vmatpush2.bf16.msra.mxu0 0
      %438 = vmatprep.mubr.bf16.mxu0 0
      %439 = vmatmul.mubr.bf16.gmra.mxu0 %v404
      %v440 = vpop.f32.mrf.mxu0
      %v441 = vadd.f32 0.0, %v440
      %v442 = vpop.f32.mrf.mxu0
      %v443 = vpop.f32.mrf.mxu0
      %v444 = vpop.f32.mrf.mxu0
      %445 = vdwg.mxu0
      %v446 = vadd.f32 %v384, %v441
      %v447 = vxor.u32 %v446, 2147483648
      %v448 = vmul.f32 %v447, 1.442695
      %v449 = vpow.pop %v448
      %v450 = vadd.f32 %v449, 1.0
      %v451 = vrcp.pop %v450
      %v452 = vmul.f32 1.0, %v451
      %v453 = vtanh.pop %v446
      %v454 = vld [vmem:[#allocation5] sm:$0x3]
      %456 = vrot.lane.b32.xlu0 %v454, 32
      %v457 = vpop.permute.xlu0 %456
      %v459 = vmul.f32 %v452, %v457
      %461 = vrot.lane.b32.xlu0 %v453, 64
      %v462 = vpop.permute.xlu0 %461
      %v464 = vmul.f32 %v452, %v462
      %466 = vrot.lane.b32.xlu0 %v464, 32
      %v467 = vpop.permute.xlu0 %466
      %v469 = vadd.f32 %v459, %v467
      %v470 = vtanh.pop %v469
      %472 = vrot.lane.b32.xlu0 %v470, 64
      %v473 = vpop.permute.xlu0 %472
      %v475 = vmul.f32 %v452, %v473
      %477 = vrot.lane.b32.xlu0 %v469, 96
      %v478 = vpop.permute.xlu0 %477
      %480 = vst.msk [vmem:[#allocation5] sm:$0x3] %vm376, %v478
      %482 = vrot.lane.b32.xlu0 %v475, 32
      %v483 = vpop.permute.xlu0 %482
      %485 = vst.msk [vmem:[#allocation4] sm:$0x3] %vm376, %v483
      %486 = vst.msk [vmem:[%s267] sm:$0x3] %vm376, %v483
      %p487 = scmp.lt.s32.totalorder %s17, 15
      %s488 = scalar_select %p487, %s17, 15
      %s489 = smul.addr %s488, 2
      %s490 = scalar_lea.vmem %s4, %s489
      %s491 = ssub.s32 15, %s17
      %p492 = scmp.lt.s32.totalorder %s491, 15
      %s493 = scalar_select %p492, %s491, 15
      %s494 = smul.addr %s493, 2
      %s495 = scalar_lea.vmem %s5, %s494
      // Predicated region
      $region41: #{bidaf_forward.29} parent=35 // pred_check
        %p496 = pneg %p131
      $region42: #{bidaf_forward.29} parent=35 // pred_check_branch
        %498 = sbr.rel (%p496) target = $region44
      $region43: #{bidaf_forward.29} parent=35 // pred_region
        _
      $region44: #{bidaf_forward.29} parent=35 // pred_fallthru
        _
      // Predicated region
      $region45: #{bidaf_forward.29} parent=35 // pred_check
        %p499 = pneg %p159
      $region46: #{bidaf_forward.29} parent=35 // pred_check_branch
        %501 = sbr.rel (%p499) target = $region48
      $region47: #{bidaf_forward.29} parent=35 // pred_region
        %s502 = ssub.s32 15, %s17
      $region48: #{bidaf_forward.29} parent=35 // pred_fallthru
        _
    $region36: #{bidaf_forward.29} parent=5 // pred_fallthru
      _
    %p503 = scmp.le.s32.totalorder 2, %s12
    // Predicated region
    $region49: #{bidaf_forward.29} parent=5 // pred_check
      %p504 = pneg %p503
    $region50: #{bidaf_forward.29} parent=5 // pred_check_branch
      %506 = sbr.rel (%p504) target = $region52
    $region51: #{bidaf_forward.29} parent=5 // pred_region
      %s507 = ssub.s32 %s12, 2
      // Predicated region
      $region53: #{bidaf_forward.29} parent=51 // pred_check
        %p508 = pneg %p137
      $region54: #{bidaf_forward.29} parent=51 // pred_check_branch
        %510 = sbr.rel (%p508) target = $region56
      $region55: #{bidaf_forward.29} parent=51 // pred_region
        %p511 = scmp.lt.s32.totalorder %s18, 15
        %s512 = scalar_select %p511, %s18, 15
        %s513 = smul.addr %s512, 2
        %s514 = scalar_lea.vmem %s4, %s513
      $region56: #{bidaf_forward.29} parent=51 // pred_fallthru
        _
      // Predicated region
      $region57: #{bidaf_forward.29} parent=51 // pred_check
        %p515 = pneg %p165
      $region58: #{bidaf_forward.29} parent=51 // pred_check_branch
        %517 = sbr.rel (%p515) target = $region60
      $region59: #{bidaf_forward.29} parent=51 // pred_region
        %s518 = ssub.s32 15, %s18
        %p519 = scmp.lt.s32.totalorder %s518, 15
        %s520 = scalar_select %p519, %s518, 15
        %s521 = smul.addr %s520, 2
        %s522 = scalar_lea.vmem %s5, %s521
      $region60: #{bidaf_forward.29} parent=51 // pred_fallthru
        _
    $region52: #{bidaf_forward.29} parent=5 // pred_fallthru
      _
  $region6: #{bidaf_forward.29} parent=0 // loop_footer
    %s16 = sadd.s32 1, %s12
  $region7: #{bidaf_forward.29} parent=0 // loop_footer_branch
    %11 = sbr.rel target = $region3
  $region8: #{bidaf_forward.29} parent=0 // loop_exit
    _

// kernel: bidaf_forward.20
$region0: #{bidaf_forward.20}
  #allocation0 [shape = 'u32[]', space=smem, size = 0x4, offset = 0x4, fixed_abs, tag = 'smem constant byte address 0x4 - core index']
  #allocation1 [shape = 'u32[144,128]{1,0:T(1,128)}', space=vmem, size = 0x12000, scoped, tag = 'internal scratch']
  %s0 = inlined_call_operand.vmem [shape: bf16[32,8,256], index: 0, kind: input, shape index: {}]
  %s1 = inlined_call_operand.vmem [shape: bf16[3,256,256], index: 1, kind: input, shape index: {}]
  %s2 = inlined_call_operand.vmem [shape: f32[1,256], index: 2, kind: input, shape index: {}]
  %s3 = inlined_call_operand.vmem [shape: f32[32,256], index: 3, kind: output, shape index: {}]
  %s4 = sld [smem:[#allocation0]]
  $region22: #{bidaf_forward.20} parent=0
    _
  %s6 = ssub.s32 1, %s4
  %s7 = scalar_select 0, %s6, %s4
  // Predicated region
  $region2: #{bidaf_forward.20} parent=0 // pred_check
    _
  $region3: #{bidaf_forward.20} parent=0 // pred_check_branch
    %9 = sbr.rel (0) target = $region5
  $region4: #{bidaf_forward.20} parent=0 // pred_region
    _
  $region5: #{bidaf_forward.20} parent=0 // pred_fallthru
    _
  // Predicated region
  $region6: #{bidaf_forward.20} parent=0 // pred_check
    _
  $region7: #{bidaf_forward.20} parent=0 // pred_check_branch
    %11 = sbr.rel (0) target = $region9
  $region8: #{bidaf_forward.20} parent=0 // pred_region
    _
  $region9: #{bidaf_forward.20} parent=0 // pred_fallthru
    _
  // Predicated region
  $region10: #{bidaf_forward.20} parent=0 // pred_check
    _
  $region11: #{bidaf_forward.20} parent=0 // pred_check_branch
    %13 = sbr.rel (0) target = $region13
  $region12: #{bidaf_forward.20} parent=0 // pred_region
    _
  $region13: #{bidaf_forward.20} parent=0 // pred_fallthru
    _
  %v14 = vld [vmem:[%s0] sm:$0xff]
  %v15 = vld [vmem:[%s0 + $0x8] sm:$0xff]
  %v16 = vld [vmem:[%s0 + $0x10] sm:$0xff]
  %v17 = vld [vmem:[%s0 + $0x18] sm:$0xff]
  %v18 = vld [vmem:[%s0 + $0x20] sm:$0xff]
  %v19 = vld [vmem:[%s0 + $0x28] sm:$0xff]
  %v20 = vld [vmem:[%s0 + $0x30] sm:$0xff]
  %v21 = vld [vmem:[%s0 + $0x38] sm:$0xff]
  %v22 = vld [vmem:[%s0 + $0x40] sm:$0xff]
  %v23 = vld [vmem:[%s0 + $0x48] sm:$0xff]
  %v24 = vld [vmem:[%s0 + $0x50] sm:$0xff]
  %v25 = vld [vmem:[%s0 + $0x58] sm:$0xff]
  %v26 = vld [vmem:[%s0 + $0x60] sm:$0xff]
  %v27 = vld [vmem:[%s0 + $0x68] sm:$0xff]
  %v28 = vld [vmem:[%s0 + $0x70] sm:$0xff]
  %v29 = vld [vmem:[%s0 + $0x78] sm:$0xff]
  %v30 = vld [vmem:[%s0 + $0x80] sm:$0xff]
  %v31 = vld [vmem:[%s0 + $0x88] sm:$0xff]
  %v32 = vld [vmem:[%s0 + $0x90] sm:$0xff]
  %v33 = vld [vmem:[%s0 + $0x98] sm:$0xff]
  %v34 = vld [vmem:[%s0 + $0xa0] sm:$0xff]
  %v35 = vld [vmem:[%s0 + $0xa8] sm:$0xff]
  %v36 = vld [vmem:[%s0 + $0xb0] sm:$0xff]
  %v37 = vld [vmem:[%s0 + $0xb8] sm:$0xff]
  %v38 = vld [vmem:[%s0 + $0xc0] sm:$0xff]
  %v39 = vld [vmem:[%s0 + $0xc8] sm:$0xff]
  %v40 = vld [vmem:[%s0 + $0xd0] sm:$0xff]
  %v41 = vld [vmem:[%s0 + $0xd8] sm:$0xff]
  %v42 = vld [vmem:[%s0 + $0xe0] sm:$0xff]
  %v43 = vld [vmem:[%s0 + $0xe8] sm:$0xff]
  %v44 = vld [vmem:[%s0 + $0xf0] sm:$0xff]
  %v45 = vld [vmem:[%s0 + $0xf8] sm:$0xff]
  %v46 = vld [vmem:[%s1] sm:$0xff]
  %v47 = vld [vmem:[%s1 + $0x8] sm:$0xff]
  %v48 = vld [vmem:[%s1 + $0x10] sm:$0xff]
  %v49 = vld [vmem:[%s1 + $0x18] sm:$0xff]
  %v50 = vld [vmem:[%s1 + $0x20] sm:$0xff]
  %v51 = vld [vmem:[%s1 + $0x28] sm:$0xff]
  %v52 = vld [vmem:[%s1 + $0x30] sm:$0xff]
  %v53 = vld [vmem:[%s1 + $0x38] sm:$0xff]
  %v54 = vld [vmem:[%s1 + $0x40] sm:$0xff]
  %v55 = vld [vmem:[%s1 + $0x48] sm:$0xff]
  %v56 = vld [vmem:[%s1 + $0x50] sm:$0xff]
  %v57 = vld [vmem:[%s1 + $0x58] sm:$0xff]
  %v58 = vld [vmem:[%s1 + $0x60] sm:$0xff]
  %v59 = vld [vmem:[%s1 + $0x68] sm:$0xff]
  %v60 = vld [vmem:[%s1 + $0x70] sm:$0xff]
  %v61 = vld [vmem:[%s1 + $0x78] sm:$0xff]
  %v62 = vld [vmem:[%s1 + $0x80] sm:$0xff]
  %v63 = vld [vmem:[%s1 + $0x88] sm:$0xff]
  %v64 = vld [vmem:[%s1 + $0x90] sm:$0xff]
  %v65 = vld [vmem:[%s1 + $0x98] sm:$0xff]
  %v66 = vld [vmem:[%s1 + $0xa0] sm:$0xff]
  %v67 = vld [vmem:[%s1 + $0xa8] sm:$0xff]
  %v68 = vld [vmem:[%s1 + $0xb0] sm:$0xff]
  %v69 = vld [vmem:[%s1 + $0xb8] sm:$0xff]
  %v70 = vld [vmem:[%s1 + $0xc0] sm:$0xff]
  %v71 = vld [vmem:[%s1 + $0xc8] sm:$0xff]
  %v72 = vld [vmem:[%s1 + $0xd0] sm:$0xff]
  %v73 = vld [vmem:[%s1 + $0xd8] sm:$0xff]
  %v74 = vld [vmem:[%s1 + $0xe0] sm:$0xff]
  %v75 = vld [vmem:[%s1 + $0xe8] sm:$0xff]
  %v76 = vld [vmem:[%s1 + $0xf0] sm:$0xff]
  %v77 = vld [vmem:[%s1 + $0xf8] sm:$0xff]
  %v110 = vunpack.c.l.b16 %v14
  %v111 = vunpack.c.h.b16 %v14
  %v112 = vunpack.c.l.b16 %v15
  %v113 = vunpack.c.h.b16 %v15
  %v114 = vunpack.c.l.b16 %v16
  %v115 = vunpack.c.h.b16 %v16
  %v116 = vunpack.c.l.b16 %v17
  %v117 = vunpack.c.h.b16 %v17
  %v118 = vunpack.c.l.b16 %v18
  %v119 = vunpack.c.h.b16 %v18
  %v120 = vunpack.c.l.b16 %v19
  %v121 = vunpack.c.h.b16 %v19
  %v122 = vunpack.c.l.b16 %v20
  %v123 = vunpack.c.h.b16 %v20
  %v124 = vunpack.c.l.b16 %v21
  %v125 = vunpack.c.h.b16 %v21
  %v126 = vunpack.c.l.b16 %v22
  %v127 = vunpack.c.h.b16 %v22
  %v128 = vunpack.c.l.b16 %v23
  %v129 = vunpack.c.h.b16 %v23
  %v130 = vunpack.c.l.b16 %v24
  %v131 = vunpack.c.h.b16 %v24
  %v132 = vunpack.c.l.b16 %v25
  %v133 = vunpack.c.h.b16 %v25
  %v134 = vunpack.c.l.b16 %v26
  %v135 = vunpack.c.h.b16 %v26
  %v136 = vunpack.c.l.b16 %v27
  %v137 = vunpack.c.h.b16 %v27
  %v138 = vunpack.c.l.b16 %v28
  %v139 = vunpack.c.h.b16 %v28
  %v140 = vunpack.c.l.b16 %v29
  %v141 = vunpack.c.h.b16 %v29
  %v142 = vunpack.c.l.b16 %v30
  %v143 = vunpack.c.h.b16 %v30
  %v144 = vunpack.c.l.b16 %v31
  %v145 = vunpack.c.h.b16 %v31
  %v146 = vunpack.c.l.b16 %v32
  %v147 = vunpack.c.h.b16 %v32
  %v148 = vunpack.c.l.b16 %v33
  %v149 = vunpack.c.h.b16 %v33
  %v150 = vunpack.c.l.b16 %v34
  %v151 = vunpack.c.h.b16 %v34
  %v152 = vunpack.c.l.b16 %v35
  %v153 = vunpack.c.h.b16 %v35
  %v154 = vunpack.c.l.b16 %v36
  %v155 = vunpack.c.h.b16 %v36
  %v156 = vunpack.c.l.b16 %v37
  %v157 = vunpack.c.h.b16 %v37
  %v158 = vunpack.c.l.b16 %v38
  %v159 = vunpack.c.h.b16 %v38
  %v160 = vunpack.c.l.b16 %v39
  %v161 = vunpack.c.h.b16 %v39
  %v162 = vunpack.c.l.b16 %v40
  %v163 = vunpack.c.h.b16 %v40
  %v164 = vunpack.c.l.b16 %v41
  %v165 = vunpack.c.h.b16 %v41
  %v166 = vunpack.c.l.b16 %v42
  %v167 = vunpack.c.h.b16 %v42
  %v168 = vunpack.c.l.b16 %v43
  %v169 = vunpack.c.h.b16 %v43
  %v170 = vunpack.c.l.b16 %v44
  %v171 = vunpack.c.h.b16 %v44
  %v172 = vunpack.c.l.b16 %v45
  %v173 = vunpack.c.h.b16 %v45
  %v174 = vpack.c.b16 %v112, %v110
  %v175 = vpack.c.b16 %v113, %v111
  %v176 = vpack.c.b16 %v116, %v114
  %v177 = vpack.c.b16 %v117, %v115
  %v178 = vpack.c.b16 %v120, %v118
  %v179 = vpack.c.b16 %v121, %v119
  %v180 = vpack.c.b16 %v124, %v122
  %v181 = vpack.c.b16 %v125, %v123
  %v182 = vpack.c.b16 %v128, %v126
  %v183 = vpack.c.b16 %v129, %v127
  %v184 = vpack.c.b16 %v132, %v130
  %v185 = vpack.c.b16 %v133, %v131
  %v186 = vpack.c.b16 %v136, %v134
  %v187 = vpack.c.b16 %v137, %v135
  %v188 = vpack.c.b16 %v140, %v138
  %v189 = vpack.c.b16 %v141, %v139
  %v190 = vpack.c.b16 %v144, %v142
  %v191 = vpack.c.b16 %v145, %v143
  %v192 = vpack.c.b16 %v148, %v146
  %v193 = vpack.c.b16 %v149, %v147
  %v194 = vpack.c.b16 %v152, %v150
  %v195 = vpack.c.b16 %v153, %v151
  %v196 = vpack.c.b16 %v156, %v154
  %v197 = vpack.c.b16 %v157, %v155
  %v198 = vpack.c.b16 %v160, %v158
  %v199 = vpack.c.b16 %v161, %v159
  %v200 = vpack.c.b16 %v164, %v162
  %v201 = vpack.c.b16 %v165, %v163
  %v202 = vpack.c.b16 %v168, %v166
  %v203 = vpack.c.b16 %v169, %v167
  %v204 = vpack.c.b16 %v172, %v170
  %v205 = vpack.c.b16 %v173, %v171
  %v270 = vunpack.c.l.b16 %v46
  %v271 = vunpack.c.h.b16 %v46
  %v272 = vunpack.c.l.b16 %v47
  %v273 = vunpack.c.h.b16 %v47
  %v274 = vunpack.c.l.b16 %v48
  %v275 = vunpack.c.h.b16 %v48
  %v276 = vunpack.c.l.b16 %v49
  %v277 = vunpack.c.h.b16 %v49
  %v278 = vunpack.c.l.b16 %v50
  %v279 = vunpack.c.h.b16 %v50
  %v280 = vunpack.c.l.b16 %v51
  %v281 = vunpack.c.h.b16 %v51
  %v282 = vunpack.c.l.b16 %v52
  %v283 = vunpack.c.h.b16 %v52
  %v284 = vunpack.c.l.b16 %v53
  %v285 = vunpack.c.h.b16 %v53
  %v286 = vunpack.c.l.b16 %v54
  %v287 = vunpack.c.h.b16 %v54
  %v288 = vunpack.c.l.b16 %v55
  %v289 = vunpack.c.h.b16 %v55
  %v290 = vunpack.c.l.b16 %v56
  %v291 = vunpack.c.h.b16 %v56
  %v292 = vunpack.c.l.b16 %v57
  %v293 = vunpack.c.h.b16 %v57
  %v294 = vunpack.c.l.b16 %v58
  %v295 = vunpack.c.h.b16 %v58
  %v296 = vunpack.c.l.b16 %v59
  %v297 = vunpack.c.h.b16 %v59
  %v298 = vunpack.c.l.b16 %v60
  %v299 = vunpack.c.h.b16 %v60
  %v300 = vunpack.c.l.b16 %v61
  %v301 = vunpack.c.h.b16 %v61
  %v302 = vunpack.c.l.b16 %v62
  %v303 = vunpack.c.h.b16 %v62
  %v304 = vunpack.c.l.b16 %v63
  %v305 = vunpack.c.h.b16 %v63
  %v306 = vunpack.c.l.b16 %v64
  %v307 = vunpack.c.h.b16 %v64
  %v308 = vunpack.c.l.b16 %v65
  %v309 = vunpack.c.h.b16 %v65
  %v310 = vunpack.c.l.b16 %v66
  %v311 = vunpack.c.h.b16 %v66
  %v312 = vunpack.c.l.b16 %v67
  %v313 = vunpack.c.h.b16 %v67
  %v314 = vunpack.c.l.b16 %v68
  %v315 = vunpack.c.h.b16 %v68
  %v316 = vunpack.c.l.b16 %v69
  %v317 = vunpack.c.h.b16 %v69
  %v318 = vunpack.c.l.b16 %v70
  %v319 = vunpack.c.h.b16 %v70
  %v320 = vunpack.c.l.b16 %v71
  %v321 = vunpack.c.h.b16 %v71
  %v322 = vunpack.c.l.b16 %v72
  %v323 = vunpack.c.h.b16 %v72
  %v324 = vunpack.c.l.b16 %v73
  %v325 = vunpack.c.h.b16 %v73
  %v326 = vunpack.c.l.b16 %v74
  %v327 = vunpack.c.h.b16 %v74
  %v328 = vunpack.c.l.b16 %v75
  %v329 = vunpack.c.h.b16 %v75
  %v330 = vunpack.c.l.b16 %v76
  %v331 = vunpack.c.h.b16 %v76
  %v332 = vunpack.c.l.b16 %v77
  %v333 = vunpack.c.h.b16 %v77
  %v334 = vpack.c.b16 %v272, %v270
  %v335 = vpack.c.b16 %v273, %v271
  %v336 = vpack.c.b16 %v276, %v274
  %v337 = vpack.c.b16 %v277, %v275
  %v338 = vpack.c.b16 %v280, %v278
  %v339 = vpack.c.b16 %v281, %v279
  %v340 = vpack.c.b16 %v284, %v282
  %v341 = vpack.c.b16 %v285, %v283
  %v342 = vpack.c.b16 %v288, %v286
  %v343 = vpack.c.b16 %v289, %v287
  %v344 = vpack.c.b16 %v292, %v290
  %v345 = vpack.c.b16 %v293, %v291
  %v346 = vpack.c.b16 %v296, %v294
  %v347 = vpack.c.b16 %v297, %v295
  %v348 = vpack.c.b16 %v300, %v298
  %v349 = vpack.c.b16 %v301, %v299
  %v350 = vpack.c.b16 %v304, %v302
  %v351 = vpack.c.b16 %v305, %v303
  %v352 = vpack.c.b16 %v308, %v306
  %v353 = vpack.c.b16 %v309, %v307
  %v354 = vpack.c.b16 %v312, %v310
  %v355 = vpack.c.b16 %v313, %v311
  %v356 = vpack.c.b16 %v316, %v314
  %v357 = vpack.c.b16 %v317, %v315
  %v358 = vpack.c.b16 %v320, %v318
  %v359 = vpack.c.b16 %v321, %v319
  %v360 = vpack.c.b16 %v324, %v322
  %v361 = vpack.c.b16 %v325, %v323
  %v362 = vpack.c.b16 %v328, %v326
  %v363 = vpack.c.b16 %v329, %v327
  %v364 = vpack.c.b16 %v332, %v330
  %v365 = vpack.c.b16 %v333, %v331
  %398 = vmatprep.subr.bf16.mxu0 %v349
  %399 = vmatpush1.bf16.msra.mxu0 %v348
  %400 = vmatprep.subr.bf16.mxu0 %v347
  %401 = vmatpush1.bf16.msra.mxu0 %v346
  %402 = vmatprep.subr.bf16.mxu0 %v345
  %403 = vmatpush1.bf16.msra.mxu0 %v344
  %404 = vmatprep.subr.bf16.mxu0 %v343
  %405 = vmatpush1.bf16.msra.mxu0 %v342
  %406 = vmatprep.subr.bf16.mxu0 %v341
  %407 = vmatpush1.bf16.msra.mxu0 %v340
  %408 = vmatprep.subr.bf16.mxu0 %v339
  %409 = vmatpush1.bf16.msra.mxu0 %v338
  %410 = vmatprep.subr.bf16.mxu0 %v337
  %411 = vmatpush1.bf16.msra.mxu0 %v336
  %412 = vmatprep.subr.bf16.mxu0 %v335
  %413 = vmatpush1.bf16.msra.mxu0 %v334
  %414 = vmatprep.subr.bf16.mxu0 %v365
  %415 = vmatpush2.bf16.msra.mxu0 %v364
  %416 = vmatprep.subr.bf16.mxu0 %v363
  %417 = vmatpush2.bf16.msra.mxu0 %v362
  %418 = vmatprep.subr.bf16.mxu0 %v361
  %419 = vmatpush2.bf16.msra.mxu0 %v360
  %420 = vmatprep.subr.bf16.mxu0 %v359
  %421 = vmatpush2.bf16.msra.mxu0 %v358
  %422 = vmatprep.subr.bf16.mxu0 %v357
  %423 = vmatpush2.bf16.msra.mxu0 %v356
  %424 = vmatprep.subr.bf16.mxu0 %v355
  %425 = vmatpush2.bf16.msra.mxu0 %v354
  %426 = vmatprep.subr.bf16.mxu0 %v353
  %427 = vmatpush2.bf16.msra.mxu0 %v352
  %428 = vmatprep.subr.bf16.mxu0 %v351
  %429 = vmatpush2.bf16.msra.mxu0 %v350
  %430 = vmatprep.mubr.bf16.mxu0 %v175
  %431 = vmatmul.mubr.bf16.gmra.mxu0 %v174
  %v432 = vpop.f32.mrf.mxu0
  %v433 = vadd.f32 0.0, %v432
  %v434 = vpop.f32.mrf.mxu0
  %v435 = vadd.f32 0.0, %v434
  %v436 = vpop.f32.mrf.mxu0
  %v437 = vadd.f32 0.0, %v436
  %v438 = vpop.f32.mrf.mxu0
  %v439 = vadd.f32 0.0, %v438
  %440 = vmatprep.mubr.bf16.mxu0 %v177
  %441 = vmatmul.mubr.bf16.gmra.mxu0 %v176
  %v442 = vpop.f32.mrf.mxu0
  %v443 = vadd.f32 0.0, %v442
  %v444 = vpop.f32.mrf.mxu0
  %v445 = vadd.f32 0.0, %v444
  %v446 = vpop.f32.mrf.mxu0
  %v447 = vadd.f32 0.0, %v446
  %v448 = vpop.f32.mrf.mxu0
  %v449 = vadd.f32 0.0, %v448
  %450 = vmatprep.mubr.bf16.mxu0 %v179
  %451 = vmatmul.mubr.bf16.gmra.mxu0 %v178
  %v452 = vpop.f32.mrf.mxu0
  %v453 = vadd.f32 0.0, %v452
  %v454 = vpop.f32.mrf.mxu0
  %v455 = vadd.f32 0.0, %v454
  %v456 = vpop.f32.mrf.mxu0
  %v457 = vadd.f32 0.0, %v456
  %v458 = vpop.f32.mrf.mxu0
  %v459 = vadd.f32 0.0, %v458
  %460 = vmatprep.mubr.bf16.mxu0 %v181
  %461 = vmatmul.mubr.bf16.gmra.mxu0 %v180
  %v462 = vpop.f32.mrf.mxu0
  %v463 = vadd.f32 0.0, %v462
  %v464 = vpop.f32.mrf.mxu0
  %v465 = vadd.f32 0.0, %v464
  %v466 = vpop.f32.mrf.mxu0
  %v467 = vadd.f32 0.0, %v466
  %v468 = vpop.f32.mrf.mxu0
  %v469 = vadd.f32 0.0, %v468
  %470 = vmatprep.mubr.bf16.mxu0 %v183
  %471 = vmatmul.mubr.bf16.gmra.mxu0 %v182
  %v472 = vpop.f32.mrf.mxu0
  %v473 = vadd.f32 0.0, %v472
  %v474 = vpop.f32.mrf.mxu0
  %v475 = vadd.f32 0.0, %v474
  %v476 = vpop.f32.mrf.mxu0
  %v477 = vadd.f32 0.0, %v476
  %v478 = vpop.f32.mrf.mxu0
  %v479 = vadd.f32 0.0, %v478
  %480 = vmatprep.mubr.bf16.mxu0 %v185
  %481 = vmatmul.mubr.bf16.gmra.mxu0 %v184
  %v482 = vpop.f32.mrf.mxu0
  %v483 = vadd.f32 0.0, %v482
  %v484 = vpop.f32.mrf.mxu0
  %v485 = vadd.f32 0.0, %v484
  %v486 = vpop.f32.mrf.mxu0
  %v487 = vadd.f32 0.0, %v486
  %v488 = vpop.f32.mrf.mxu0
  %v489 = vadd.f32 0.0, %v488
  %490 = vmatprep.mubr.bf16.mxu0 %v187
  %491 = vmatmul.mubr.bf16.gmra.mxu0 %v186
  %v492 = vpop.f32.mrf.mxu0
  %v493 = vadd.f32 0.0, %v492
  %v494 = vpop.f32.mrf.mxu0
  %v495 = vadd.f32 0.0, %v494
  %v496 = vpop.f32.mrf.mxu0
  %v497 = vadd.f32 0.0, %v496
  %v498 = vpop.f32.mrf.mxu0
  %v499 = vadd.f32 0.0, %v498
  %500 = vmatprep.mubr.bf16.mxu0 %v189
  %501 = vmatmul.mubr.bf16.gmra.mxu0 %v188
  %v502 = vpop.f32.mrf.mxu0
  %v503 = vadd.f32 0.0, %v502
  %v504 = vpop.f32.mrf.mxu0
  %v505 = vadd.f32 0.0, %v504
  %v506 = vpop.f32.mrf.mxu0
  %v507 = vadd.f32 0.0, %v506
  %v508 = vpop.f32.mrf.mxu0
  %v509 = vadd.f32 0.0, %v508
  %510 = vmatprep.mubr.bf16.mxu0 %v191
  %511 = vmatmul.mubr.bf16.gmra.mxu0 %v190
  %v512 = vpop.f32.mrf.mxu0
  %v513 = vadd.f32 0.0, %v512
  %v514 = vpop.f32.mrf.mxu0
  %v515 = vadd.f32 0.0, %v514
  %v516 = vpop.f32.mrf.mxu0
  %v517 = vadd.f32 0.0, %v516
  %v518 = vpop.f32.mrf.mxu0
  %v519 = vadd.f32 0.0, %v518
  %520 = vmatprep.mubr.bf16.mxu0 %v193
  %521 = vmatmul.mubr.bf16.gmra.mxu0 %v192
  %v522 = vpop.f32.mrf.mxu0
  %v523 = vadd.f32 0.0, %v522
  %v524 = vpop.f32.mrf.mxu0
  %v525 = vadd.f32 0.0, %v524
  %v526 = vpop.f32.mrf.mxu0
  %v527 = vadd.f32 0.0, %v526
  %v528 = vpop.f32.mrf.mxu0
  %v529 = vadd.f32 0.0, %v528
  %530 = vmatprep.mubr.bf16.mxu0 %v195
  %531 = vmatmul.mubr.bf16.gmra.mxu0 %v194
  %v532 = vpop.f32.mrf.mxu0
  %v533 = vadd.f32 0.0, %v532
  %v534 = vpop.f32.mrf.mxu0
  %v535 = vadd.f32 0.0, %v534
  %v536 = vpop.f32.mrf.mxu0
  %v537 = vadd.f32 0.0, %v536
  %v538 = vpop.f32.mrf.mxu0
  %v539 = vadd.f32 0.0, %v538
  %540 = vmatprep.mubr.bf16.mxu0 %v197
  %541 = vmatmul.mubr.bf16.gmra.mxu0 %v196
  %v542 = vpop.f32.mrf.mxu0
  %v543 = vadd.f32 0.0, %v542
  %v544 = vpop.f32.mrf.mxu0
  %v545 = vadd.f32 0.0, %v544
  %v546 = vpop.f32.mrf.mxu0
  %v547 = vadd.f32 0.0, %v546
  %v548 = vpop.f32.mrf.mxu0
  %v549 = vadd.f32 0.0, %v548
  %550 = vmatprep.mubr.bf16.mxu0 %v199
  %551 = vmatmul.mubr.bf16.gmra.mxu0 %v198
  %v552 = vpop.f32.mrf.mxu0
  %v553 = vadd.f32 0.0, %v552
  %v554 = vpop.f32.mrf.mxu0
  %v555 = vadd.f32 0.0, %v554
  %v556 = vpop.f32.mrf.mxu0
  %v557 = vadd.f32 0.0, %v556
  %v558 = vpop.f32.mrf.mxu0
  %v559 = vadd.f32 0.0, %v558
  %560 = vmatprep.mubr.bf16.mxu0 %v201
  %561 = vmatmul.mubr.bf16.gmra.mxu0 %v200
  %v562 = vpop.f32.mrf.mxu0
  %v563 = vadd.f32 0.0, %v562
  %v564 = vpop.f32.mrf.mxu0
  %v565 = vadd.f32 0.0, %v564
  %v566 = vpop.f32.mrf.mxu0
  %v567 = vadd.f32 0.0, %v566
  %v568 = vpop.f32.mrf.mxu0
  %v569 = vadd.f32 0.0, %v568
  %570 = vmatprep.mubr.bf16.mxu0 %v203
  %571 = vmatmul.mubr.bf16.gmra.mxu0 %v202
  %v572 = vpop.f32.mrf.mxu0
  %v573 = vadd.f32 0.0, %v572
  %v574 = vpop.f32.mrf.mxu0
  %v575 = vadd.f32 0.0, %v574
  %v576 = vpop.f32.mrf.mxu0
  %v577 = vadd.f32 0.0, %v576
  %v578 = vpop.f32.mrf.mxu0
  %v579 = vadd.f32 0.0, %v578
  %580 = vmatprep.mubr.bf16.mxu0 %v205
  %581 = vmatmul.mubr.bf16.gmra.mxu0 %v204
  %v582 = vpop.f32.mrf.mxu0
  %v583 = vadd.f32 0.0, %v582
  %v584 = vpop.f32.mrf.mxu0
  %v585 = vadd.f32 0.0, %v584
  %v586 = vpop.f32.mrf.mxu0
  %v587 = vadd.f32 0.0, %v586
  %v588 = vpop.f32.mrf.mxu0
  %v589 = vadd.f32 0.0, %v588
  %590 = vdwg.mxu0
  %s591 = scalar_lea.vmem %s1, 256
  %v592 = vld [vmem:[%s591] sm:$0xff]
  %v593 = vld [vmem:[%s591 + $0x8] sm:$0xff]
  %v594 = vld [vmem:[%s591 + $0x10] sm:$0xff]
  %v595 = vld [vmem:[%s591 + $0x18] sm:$0xff]
  %v596 = vld [vmem:[%s591 + $0x20] sm:$0xff]
  %v597 = vld [vmem:[%s591 + $0x28] sm:$0xff]
  %v598 = vld [vmem:[%s591 + $0x30] sm:$0xff]
  %v599 = vld [vmem:[%s591 + $0x38] sm:$0xff]
  %v600 = vld [vmem:[%s591 + $0x40] sm:$0xff]
  %v601 = vld [vmem:[%s591 + $0x48] sm:$0xff]
  %v602 = vld [vmem:[%s591 + $0x50] sm:$0xff]
  %v603 = vld [vmem:[%s591 + $0x58] sm:$0xff]
  %v604 = vld [vmem:[%s591 + $0x60] sm:$0xff]
  %v605 = vld [vmem:[%s591 + $0x68] sm:$0xff]
  %v606 = vld [vmem:[%s591 + $0x70] sm:$0xff]
  %v607 = vld [vmem:[%s591 + $0x78] sm:$0xff]
  %v608 = vld [vmem:[%s591 + $0x80] sm:$0xff]
  %v609 = vld [vmem:[%s591 + $0x88] sm:$0xff]
  %v610 = vld [vmem:[%s591 + $0x90] sm:$0xff]
  %v611 = vld [vmem:[%s591 + $0x98] sm:$0xff]
  %v612 = vld [vmem:[%s591 + $0xa0] sm:$0xff]
  %v613 = vld [vmem:[%s591 + $0xa8] sm:$0xff]
  %v614 = vld [vmem:[%s591 + $0xb0] sm:$0xff]
  %v615 = vld [vmem:[%s591 + $0xb8] sm:$0xff]
  %v616 = vld [vmem:[%s591 + $0xc0] sm:$0xff]
  %v617 = vld [vmem:[%s591 + $0xc8] sm:$0xff]
  %v618 = vld [vmem:[%s591 + $0xd0] sm:$0xff]
  %v619 = vld [vmem:[%s591 + $0xd8] sm:$0xff]
  %v620 = vld [vmem:[%s591 + $0xe0] sm:$0xff]
  %v621 = vld [vmem:[%s591 + $0xe8] sm:$0xff]
  %v622 = vld [vmem:[%s591 + $0xf0] sm:$0xff]
  %v623 = vld [vmem:[%s591 + $0xf8] sm:$0xff]
  %v656 = vunpack.c.l.b16 %v592
  %v657 = vunpack.c.h.b16 %v592
  %v658 = vunpack.c.l.b16 %v593
  %v659 = vunpack.c.h.b16 %v593
  %v660 = vunpack.c.l.b16 %v594
  %v661 = vunpack.c.h.b16 %v594
  %v662 = vunpack.c.l.b16 %v595
  %v663 = vunpack.c.h.b16 %v595
  %v664 = vunpack.c.l.b16 %v596
  %v665 = vunpack.c.h.b16 %v596
  %v666 = vunpack.c.l.b16 %v597
  %v667 = vunpack.c.h.b16 %v597
  %v668 = vunpack.c.l.b16 %v598
  %v669 = vunpack.c.h.b16 %v598
  %v670 = vunpack.c.l.b16 %v599
  %v671 = vunpack.c.h.b16 %v599
  %v672 = vunpack.c.l.b16 %v600
  %v673 = vunpack.c.h.b16 %v600
  %v674 = vunpack.c.l.b16 %v601
  %v675 = vunpack.c.h.b16 %v601
  %v676 = vunpack.c.l.b16 %v602
  %v677 = vunpack.c.h.b16 %v602
  %v678 = vunpack.c.l.b16 %v603
  %v679 = vunpack.c.h.b16 %v603
  %v680 = vunpack.c.l.b16 %v604
  %v681 = vunpack.c.h.b16 %v604
  %v682 = vunpack.c.l.b16 %v605
  %v683 = vunpack.c.h.b16 %v605
  %v684 = vunpack.c.l.b16 %v606
  %v685 = vunpack.c.h.b16 %v606
  %v686 = vunpack.c.l.b16 %v607
  %v687 = vunpack.c.h.b16 %v607
  %v688 = vunpack.c.l.b16 %v608
  %v689 = vunpack.c.h.b16 %v608
  %v690 = vunpack.c.l.b16 %v609
  %v691 = vunpack.c.h.b16 %v609
  %v692 = vunpack.c.l.b16 %v610
  %v693 = vunpack.c.h.b16 %v610
  %v694 = vunpack.c.l.b16 %v611
  %v695 = vunpack.c.h.b16 %v611
  %v696 = vunpack.c.l.b16 %v612
  %v697 = vunpack.c.h.b16 %v612
  %v698 = vunpack.c.l.b16 %v613
  %v699 = vunpack.c.h.b16 %v613
  %v700 = vunpack.c.l.b16 %v614
  %v701 = vunpack.c.h.b16 %v614
  %v702 = vunpack.c.l.b16 %v615
  %v703 = vunpack.c.h.b16 %v615
  %v704 = vunpack.c.l.b16 %v616
  %v705 = vunpack.c.h.b16 %v616
  %v706 = vunpack.c.l.b16 %v617
  %v707 = vunpack.c.h.b16 %v617
  %v708 = vunpack.c.l.b16 %v618
  %v709 = vunpack.c.h.b16 %v618
  %v710 = vunpack.c.l.b16 %v619
  %v711 = vunpack.c.h.b16 %v619
  %v712 = vunpack.c.l.b16 %v620
  %v713 = vunpack.c.h.b16 %v620
  %v714 = vunpack.c.l.b16 %v621
  %v715 = vunpack.c.h.b16 %v621
  %v716 = vunpack.c.l.b16 %v622
  %v717 = vunpack.c.h.b16 %v622
  %v718 = vunpack.c.l.b16 %v623
  %v719 = vunpack.c.h.b16 %v623
  %v720 = vpack.c.b16 %v658, %v656
  %v721 = vpack.c.b16 %v659, %v657
  %v722 = vpack.c.b16 %v662, %v660
  %v723 = vpack.c.b16 %v663, %v661
  %v724 = vpack.c.b16 %v666, %v664
  %v725 = vpack.c.b16 %v667, %v665
  %v726 = vpack.c.b16 %v670, %v668
  %v727 = vpack.c.b16 %v671, %v669
  %v728 = vpack.c.b16 %v674, %v672
  %v729 = vpack.c.b16 %v675, %v673
  %v730 = vpack.c.b16 %v678, %v676
  %v731 = vpack.c.b16 %v679, %v677
  %v732 = vpack.c.b16 %v682, %v680
  %v733 = vpack.c.b16 %v683, %v681
  %v734 = vpack.c.b16 %v686, %v684
  %v735 = vpack.c.b16 %v687, %v685
  %v736 = vpack.c.b16 %v690, %v688
  %v737 = vpack.c.b16 %v691, %v689
  %v738 = vpack.c.b16 %v694, %v692
  %v739 = vpack.c.b16 %v695, %v693
  %v740 = vpack.c.b16 %v698, %v696
  %v741 = vpack.c.b16 %v699, %v697
  %v742 = vpack.c.b16 %v702, %v700
  %v743 = vpack.c.b16 %v703, %v701
  %v744 = vpack.c.b16 %v706, %v704
  %v745 = vpack.c.b16 %v707, %v705
  %v746 = vpack.c.b16 %v710, %v708
  %v747 = vpack.c.b16 %v711, %v709
  %v748 = vpack.c.b16 %v714, %v712
  %v749 = vpack.c.b16 %v715, %v713
  %v750 = vpack.c.b16 %v718, %v716
  %v751 = vpack.c.b16 %v719, %v717
  %784 = vmatprep.subr.bf16.mxu0 %v735
  %785 = vmatpush1.bf16.msra.mxu0 %v734
  %786 = vmatprep.subr.bf16.mxu0 %v733
  %787 = vmatpush1.bf16.msra.mxu0 %v732
  %788 = vmatprep.subr.bf16.mxu0 %v731
  %789 = vmatpush1.bf16.msra.mxu0 %v730
  %790 = vmatprep.subr.bf16.mxu0 %v729
  %791 = vmatpush1.bf16.msra.mxu0 %v728
  %792 = vmatprep.subr.bf16.mxu0 %v727
  %793 = vmatpush1.bf16.msra.mxu0 %v726
  %794 = vmatprep.subr.bf16.mxu0 %v725
  %795 = vmatpush1.bf16.msra.mxu0 %v724
  %796 = vmatprep.subr.bf16.mxu0 %v723
  %797 = vmatpush1.bf16.msra.mxu0 %v722
  %798 = vmatprep.subr.bf16.mxu0 %v721
  %799 = vmatpush1.bf16.msra.mxu0 %v720
  %800 = vmatprep.subr.bf16.mxu0 %v751
  %801 = vmatpush2.bf16.msra.mxu0 %v750
  %802 = vmatprep.subr.bf16.mxu0 %v749
  %803 = vmatpush2.bf16.msra.mxu0 %v748
  %804 = vmatprep.subr.bf16.mxu0 %v747
  %805 = vmatpush2.bf16.msra.mxu0 %v746
  %806 = vmatprep.subr.bf16.mxu0 %v745
  %807 = vmatpush2.bf16.msra.mxu0 %v744
  %808 = vmatprep.subr.bf16.mxu0 %v743
  %809 = vmatpush2.bf16.msra.mxu0 %v742
  %810 = vmatprep.subr.bf16.mxu0 %v741
  %811 = vmatpush2.bf16.msra.mxu0 %v740
  %812 = vmatprep.subr.bf16.mxu0 %v739
  %813 = vmatpush2.bf16.msra.mxu0 %v738
  %814 = vmatprep.subr.bf16.mxu0 %v737
  %815 = vmatpush2.bf16.msra.mxu0 %v736
  %816 = vmatprep.mubr.bf16.mxu0 %v175
  %817 = vmatmul.mubr.bf16.gmra.mxu0 %v174
  %v818 = vpop.f32.mrf.mxu0
  %v819 = vadd.f32 0.0, %v818
  %v820 = vpop.f32.mrf.mxu0
  %v821 = vadd.f32 0.0, %v820
  %v822 = vpop.f32.mrf.mxu0
  %v823 = vadd.f32 0.0, %v822
  %v824 = vpop.f32.mrf.mxu0
  %v825 = vadd.f32 0.0, %v824
  %826 = vmatprep.mubr.bf16.mxu0 %v177
  %827 = vmatmul.mubr.bf16.gmra.mxu0 %v176
  %v828 = vpop.f32.mrf.mxu0
  %v829 = vadd.f32 0.0, %v828
  %v830 = vpop.f32.mrf.mxu0
  %v831 = vadd.f32 0.0, %v830
  %v832 = vpop.f32.mrf.mxu0
  %v833 = vadd.f32 0.0, %v832
  %v834 = vpop.f32.mrf.mxu0
  %v835 = vadd.f32 0.0, %v834
  %836 = vmatprep.mubr.bf16.mxu0 %v179
  %837 = vmatmul.mubr.bf16.gmra.mxu0 %v178
  %v838 = vpop.f32.mrf.mxu0
  %v839 = vadd.f32 0.0, %v838
  %v840 = vpop.f32.mrf.mxu0
  %v841 = vadd.f32 0.0, %v840
  %v842 = vpop.f32.mrf.mxu0
  %v843 = vadd.f32 0.0, %v842
  %v844 = vpop.f32.mrf.mxu0
  %v845 = vadd.f32 0.0, %v844
  %846 = vmatprep.mubr.bf16.mxu0 %v181
  %847 = vmatmul.mubr.bf16.gmra.mxu0 %v180
  %v848 = vpop.f32.mrf.mxu0
  %v849 = vadd.f32 0.0, %v848
  %v850 = vpop.f32.mrf.mxu0
  %v851 = vadd.f32 0.0, %v850
  %v852 = vpop.f32.mrf.mxu0
  %v853 = vadd.f32 0.0, %v852
  %v854 = vpop.f32.mrf.mxu0
  %v855 = vadd.f32 0.0, %v854
  %856 = vmatprep.mubr.bf16.mxu0 %v183
  %857 = vmatmul.mubr.bf16.gmra.mxu0 %v182
  %v858 = vpop.f32.mrf.mxu0
  %v859 = vadd.f32 0.0, %v858
  %v860 = vpop.f32.mrf.mxu0
  %v861 = vadd.f32 0.0, %v860
  %v862 = vpop.f32.mrf.mxu0
  %v863 = vadd.f32 0.0, %v862
  %v864 = vpop.f32.mrf.mxu0
  %v865 = vadd.f32 0.0, %v864
  %866 = vmatprep.mubr.bf16.mxu0 %v185
  %867 = vmatmul.mubr.bf16.gmra.mxu0 %v184
  %v868 = vpop.f32.mrf.mxu0
  %v869 = vadd.f32 0.0, %v868
  %v870 = vpop.f32.mrf.mxu0
  %v871 = vadd.f32 0.0, %v870
  %v872 = vpop.f32.mrf.mxu0
  %v873 = vadd.f32 0.0, %v872
  %v874 = vpop.f32.mrf.mxu0
  %v875 = vadd.f32 0.0, %v874
  %876 = vmatprep.mubr.bf16.mxu0 %v187
  %877 = vmatmul.mubr.bf16.gmra.mxu0 %v186
  %v878 = vpop.f32.mrf.mxu0
  %v879 = vadd.f32 0.0, %v878
  %v880 = vpop.f32.mrf.mxu0
  %v881 = vadd.f32 0.0, %v880
  %v882 = vpop.f32.mrf.mxu0
  %v883 = vadd.f32 0.0, %v882
  %v884 = vpop.f32.mrf.mxu0
  %v885 = vadd.f32 0.0, %v884
  %886 = vmatprep.mubr.bf16.mxu0 %v189
  %887 = vmatmul.mubr.bf16.gmra.mxu0 %v188
  %v888 = vpop.f32.mrf.mxu0
  %v889 = vadd.f32 0.0, %v888
  %v890 = vpop.f32.mrf.mxu0
  %v891 = vadd.f32 0.0, %v890
  %v892 = vpop.f32.mrf.mxu0
  %v893 = vadd.f32 0.0, %v892
  %v894 = vpop.f32.mrf.mxu0
  %v895 = vadd.f32 0.0, %v894
  %896 = vmatprep.mubr.bf16.mxu0 %v191
  %897 = vmatmul.mubr.bf16.gmra.mxu0 %v190
  %v898 = vpop.f32.mrf.mxu0
  %v899 = vadd.f32 0.0, %v898
  %v900 = vpop.f32.mrf.mxu0
  %v901 = vadd.f32 0.0, %v900
  %v902 = vpop.f32.mrf.mxu0
  %v903 = vadd.f32 0.0, %v902
  %v904 = vpop.f32.mrf.mxu0
  %v905 = vadd.f32 0.0, %v904
  %906 = vmatprep.mubr.bf16.mxu0 %v193
  %907 = vmatmul.mubr.bf16.gmra.mxu0 %v192
  %v908 = vpop.f32.mrf.mxu0
  %v909 = vadd.f32 0.0, %v908
  %v910 = vpop.f32.mrf.mxu0
  %v911 = vadd.f32 0.0, %v910
  %v912 = vpop.f32.mrf.mxu0
  %v913 = vadd.f32 0.0, %v912
  %v914 = vpop.f32.mrf.mxu0
  %v915 = vadd.f32 0.0, %v914
  %916 = vmatprep.mubr.bf16.mxu0 %v195
  %917 = vmatmul.mubr.bf16.gmra.mxu0 %v194
  %v918 = vpop.f32.mrf.mxu0
  %v919 = vadd.f32 0.0, %v918
  %v920 = vpop.f32.mrf.mxu0
  %v921 = vadd.f32 0.0, %v920
  %v922 = vpop.f32.mrf.mxu0
  %v923 = vadd.f32 0.0, %v922
  %v924 = vpop.f32.mrf.mxu0
  %v925 = vadd.f32 0.0, %v924
  %926 = vmatprep.mubr.bf16.mxu0 %v197
  %927 = vmatmul.mubr.bf16.gmra.mxu0 %v196
  %v928 = vpop.f32.mrf.mxu0
  %v929 = vadd.f32 0.0, %v928
  %v930 = vpop.f32.mrf.mxu0
  %v931 = vadd.f32 0.0, %v930
  %v932 = vpop.f32.mrf.mxu0
  %v933 = vadd.f32 0.0, %v932
  %v934 = vpop.f32.mrf.mxu0
  %v935 = vadd.f32 0.0, %v934
  %936 = vmatprep.mubr.bf16.mxu0 %v199
  %937 = vmatmul.mubr.bf16.gmra.mxu0 %v198
  %v938 = vpop.f32.mrf.mxu0
  %v939 = vadd.f32 0.0, %v938
  %v940 = vpop.f32.mrf.mxu0
  %v941 = vadd.f32 0.0, %v940
  %v942 = vpop.f32.mrf.mxu0
  %v943 = vadd.f32 0.0, %v942
  %v944 = vpop.f32.mrf.mxu0
  %v945 = vadd.f32 0.0, %v944
  %946 = vmatprep.mubr.bf16.mxu0 %v201
  %947 = vmatmul.mubr.bf16.gmra.mxu0 %v200
  %v948 = vpop.f32.mrf.mxu0
  %v949 = vadd.f32 0.0, %v948
  %v950 = vpop.f32.mrf.mxu0
  %v951 = vadd.f32 0.0, %v950
  %v952 = vpop.f32.mrf.mxu0
  %v953 = vadd.f32 0.0, %v952
  %v954 = vpop.f32.mrf.mxu0
  %v955 = vadd.f32 0.0, %v954
  %956 = vmatprep.mubr.bf16.mxu0 %v203
  %957 = vmatmul.mubr.bf16.gmra.mxu0 %v202
  %v958 = vpop.f32.mrf.mxu0
  %v959 = vadd.f32 0.0, %v958
  %v960 = vpop.f32.mrf.mxu0
  %v961 = vadd.f32 0.0, %v960
  %v962 = vpop.f32.mrf.mxu0
  %v963 = vadd.f32 0.0, %v962
  %v964 = vpop.f32.mrf.mxu0
  %v965 = vadd.f32 0.0, %v964
  %966 = vmatprep.mubr.bf16.mxu0 %v205
  %967 = vmatmul.mubr.bf16.gmra.mxu0 %v204
  %v968 = vpop.f32.mrf.mxu0
  %v969 = vadd.f32 0.0, %v968
  %v970 = vpop.f32.mrf.mxu0
  %v971 = vadd.f32 0.0, %v970
  %v972 = vpop.f32.mrf.mxu0
  %v973 = vadd.f32 0.0, %v972
  %v974 = vpop.f32.mrf.mxu0
  %v975 = vadd.f32 0.0, %v974
  %976 = vdwg.mxu0
  %s977 = scalar_lea.vmem %s1, 512
  %v978 = vld [vmem:[%s977] sm:$0xff]
  %v979 = vld [vmem:[%s977 + $0x8] sm:$0xff]
  %v980 = vld [vmem:[%s977 + $0x10] sm:$0xff]
  %v981 = vld [vmem:[%s977 + $0x18] sm:$0xff]
  %v982 = vld [vmem:[%s977 + $0x20] sm:$0xff]
  %v983 = vld [vmem:[%s977 + $0x28] sm:$0xff]
  %v984 = vld [vmem:[%s977 + $0x30] sm:$0xff]
  %v985 = vld [vmem:[%s977 + $0x38] sm:$0xff]
  %v986 = vld [vmem:[%s977 + $0x40] sm:$0xff]
  %v987 = vld [vmem:[%s977 + $0x48] sm:$0xff]
  %v988 = vld [vmem:[%s977 + $0x50] sm:$0xff]
  %v989 = vld [vmem:[%s977 + $0x58] sm:$0xff]
  %v990 = vld [vmem:[%s977 + $0x60] sm:$0xff]
  %v991 = vld [vmem:[%s977 + $0x68] sm:$0xff]
  %v992 = vld [vmem:[%s977 + $0x70] sm:$0xff]
  %v993 = vld [vmem:[%s977 + $0x78] sm:$0xff]
  %v994 = vld [vmem:[%s977 + $0x80] sm:$0xff]
  %v995 = vld [vmem:[%s977 + $0x88] sm:$0xff]
  %v996 = vld [vmem:[%s977 + $0x90] sm:$0xff]
  %v997 = vld [vmem:[%s977 + $0x98] sm:$0xff]
  %v998 = vld [vmem:[%s977 + $0xa0] sm:$0xff]
  %v999 = vld [vmem:[%s977 + $0xa8] sm:$0xff]
  %v1000 = vld [vmem:[%s977 + $0xb0] sm:$0xff]
  %v1001 = vld [vmem:[%s977 + $0xb8] sm:$0xff]
  %v1002 = vld [vmem:[%s977 + $0xc0] sm:$0xff]
  %v1003 = vld [vmem:[%s977 + $0xc8] sm:$0xff]
  %v1004 = vld [vmem:[%s977 + $0xd0] sm:$0xff]
  %v1005 = vld [vmem:[%s977 + $0xd8] sm:$0xff]
  %v1006 = vld [vmem:[%s977 + $0xe0] sm:$0xff]
  %v1007 = vld [vmem:[%s977 + $0xe8] sm:$0xff]
  %v1008 = vld [vmem:[%s977 + $0xf0] sm:$0xff]
  %v1009 = vld [vmem:[%s977 + $0xf8] sm:$0xff]
  %v1042 = vunpack.c.l.b16 %v978
  %v1043 = vunpack.c.h.b16 %v978
  %v1044 = vunpack.c.l.b16 %v979
  %v1045 = vunpack.c.h.b16 %v979
  %v1046 = vunpack.c.l.b16 %v980
  %v1047 = vunpack.c.h.b16 %v980
  %v1048 = vunpack.c.l.b16 %v981
  %v1049 = vunpack.c.h.b16 %v981
  %v1050 = vunpack.c.l.b16 %v982
  %v1051 = vunpack.c.h.b16 %v982
  %v1052 = vunpack.c.l.b16 %v983
  %v1053 = vunpack.c.h.b16 %v983
  %v1054 = vunpack.c.l.b16 %v984
  %v1055 = vunpack.c.h.b16 %v984
  %v1056 = vunpack.c.l.b16 %v985
  %v1057 = vunpack.c.h.b16 %v985
  %v1058 = vunpack.c.l.b16 %v986
  %v1059 = vunpack.c.h.b16 %v986
  %v1060 = vunpack.c.l.b16 %v987
  %v1061 = vunpack.c.h.b16 %v987
  %v1062 = vunpack.c.l.b16 %v988
  %v1063 = vunpack.c.h.b16 %v988
  %v1064 = vunpack.c.l.b16 %v989
  %v1065 = vunpack.c.h.b16 %v989
  %v1066 = vunpack.c.l.b16 %v990
  %v1067 = vunpack.c.h.b16 %v990
  %v1068 = vunpack.c.l.b16 %v991
  %v1069 = vunpack.c.h.b16 %v991
  %v1070 = vunpack.c.l.b16 %v992
  %v1071 = vunpack.c.h.b16 %v992
  %v1072 = vunpack.c.l.b16 %v993
  %v1073 = vunpack.c.h.b16 %v993
  %v1074 = vunpack.c.l.b16 %v994
  %v1075 = vunpack.c.h.b16 %v994
  %v1076 = vunpack.c.l.b16 %v995
  %v1077 = vunpack.c.h.b16 %v995
  %v1078 = vunpack.c.l.b16 %v996
  %v1079 = vunpack.c.h.b16 %v996
  %v1080 = vunpack.c.l.b16 %v997
  %v1081 = vunpack.c.h.b16 %v997
  %v1082 = vunpack.c.l.b16 %v998
  %v1083 = vunpack.c.h.b16 %v998
  %v1084 = vunpack.c.l.b16 %v999
  %v1085 = vunpack.c.h.b16 %v999
  %v1086 = vunpack.c.l.b16 %v1000
  %v1087 = vunpack.c.h.b16 %v1000
  %v1088 = vunpack.c.l.b16 %v1001
  %v1089 = vunpack.c.h.b16 %v1001
  %v1090 = vunpack.c.l.b16 %v1002
  %v1091 = vunpack.c.h.b16 %v1002
  %v1092 = vunpack.c.l.b16 %v1003
  %v1093 = vunpack.c.h.b16 %v1003
  %v1094 = vunpack.c.l.b16 %v1004
  %v1095 = vunpack.c.h.b16 %v1004
  %v1096 = vunpack.c.l.b16 %v1005
  %v1097 = vunpack.c.h.b16 %v1005
  %v1098 = vunpack.c.l.b16 %v1006
  %v1099 = vunpack.c.h.b16 %v1006
  %v1100 = vunpack.c.l.b16 %v1007
  %v1101 = vunpack.c.h.b16 %v1007
  %v1102 = vunpack.c.l.b16 %v1008
  %v1103 = vunpack.c.h.b16 %v1008
  %v1104 = vunpack.c.l.b16 %v1009
  %v1105 = vunpack.c.h.b16 %v1009
  %v1106 = vpack.c.b16 %v1044, %v1042
  %v1107 = vpack.c.b16 %v1045, %v1043
  %v1108 = vpack.c.b16 %v1048, %v1046
  %v1109 = vpack.c.b16 %v1049, %v1047
  %v1110 = vpack.c.b16 %v1052, %v1050
  %v1111 = vpack.c.b16 %v1053, %v1051
  %v1112 = vpack.c.b16 %v1056, %v1054
  %v1113 = vpack.c.b16 %v1057, %v1055
  %v1114 = vpack.c.b16 %v1060, %v1058
  %v1115 = vpack.c.b16 %v1061, %v1059
  %v1116 = vpack.c.b16 %v1064, %v1062
  %v1117 = vpack.c.b16 %v1065, %v1063
  %v1118 = vpack.c.b16 %v1068, %v1066
  %v1119 = vpack.c.b16 %v1069, %v1067
  %v1120 = vpack.c.b16 %v1072, %v1070
  %v1121 = vpack.c.b16 %v1073, %v1071
  %v1122 = vpack.c.b16 %v1076, %v1074
  %v1123 = vpack.c.b16 %v1077, %v1075
  %v1124 = vpack.c.b16 %v1080, %v1078
  %v1125 = vpack.c.b16 %v1081, %v1079
  %v1126 = vpack.c.b16 %v1084, %v1082
  %v1127 = vpack.c.b16 %v1085, %v1083
  %v1128 = vpack.c.b16 %v1088, %v1086
  %v1129 = vpack.c.b16 %v1089, %v1087
  %v1130 = vpack.c.b16 %v1092, %v1090
  %v1131 = vpack.c.b16 %v1093, %v1091
  %v1132 = vpack.c.b16 %v1096, %v1094
  %v1133 = vpack.c.b16 %v1097, %v1095
  %v1134 = vpack.c.b16 %v1100, %v1098
  %v1135 = vpack.c.b16 %v1101, %v1099
  %v1136 = vpack.c.b16 %v1104, %v1102
  %v1137 = vpack.c.b16 %v1105, %v1103
  %1170 = vmatprep.subr.bf16.mxu0 %v1121
  %1171 = vmatpush1.bf16.msra.mxu0 %v1120
  %1172 = vmatprep.subr.bf16.mxu0 %v1119
  %1173 = vmatpush1.bf16.msra.mxu0 %v1118
  %1174 = vmatprep.subr.bf16.mxu0 %v1117
  %1175 = vmatpush1.bf16.msra.mxu0 %v1116
  %1176 = vmatprep.subr.bf16.mxu0 %v1115
  %1177 = vmatpush1.bf16.msra.mxu0 %v1114
  %1178 = vmatprep.subr.bf16.mxu0 %v1113
  %1179 = vmatpush1.bf16.msra.mxu0 %v1112
  %1180 = vmatprep.subr.bf16.mxu0 %v1111
  %1181 = vmatpush1.bf16.msra.mxu0 %v1110
  %1182 = vmatprep.subr.bf16.mxu0 %v1109
  %1183 = vmatpush1.bf16.msra.mxu0 %v1108
  %1184 = vmatprep.subr.bf16.mxu0 %v1107
  %1185 = vmatpush1.bf16.msra.mxu0 %v1106
  %1186 = vmatprep.subr.bf16.mxu0 %v1137
  %1187 = vmatpush2.bf16.msra.mxu0 %v1136
  %1188 = vmatprep.subr.bf16.mxu0 %v1135
  %1189 = vmatpush2.bf16.msra.mxu0 %v1134
  %1190 = vmatprep.subr.bf16.mxu0 %v1133
  %1191 = vmatpush2.bf16.msra.mxu0 %v1132
  %1192 = vmatprep.subr.bf16.mxu0 %v1131
  %1193 = vmatpush2.bf16.msra.mxu0 %v1130
  %1194 = vmatprep.subr.bf16.mxu0 %v1129
  %1195 = vmatpush2.bf16.msra.mxu0 %v1128
  %1196 = vmatprep.subr.bf16.mxu0 %v1127
  %1197 = vmatpush2.bf16.msra.mxu0 %v1126
  %1198 = vmatprep.subr.bf16.mxu0 %v1125
  %1199 = vmatpush2.bf16.msra.mxu0 %v1124
  %1200 = vmatprep.subr.bf16.mxu0 %v1123
  %1201 = vmatpush2.bf16.msra.mxu0 %v1122
  %1202 = vmatprep.mubr.bf16.mxu0 %v175
  %1203 = vmatmul.mubr.bf16.gmra.mxu0 %v174
  %v1204 = vpop.f32.mrf.mxu0
  %v1205 = vadd.f32 0.0, %v1204
  %v1206 = vpop.f32.mrf.mxu0
  %v1207 = vadd.f32 0.0, %v1206
  %v1208 = vpop.f32.mrf.mxu0
  %v1209 = vadd.f32 0.0, %v1208
  %v1210 = vpop.f32.mrf.mxu0
  %v1211 = vadd.f32 0.0, %v1210
  %1212 = vmatprep.mubr.bf16.mxu0 %v177
  %1213 = vmatmul.mubr.bf16.gmra.mxu0 %v176
  %v1214 = vpop.f32.mrf.mxu0
  %v1215 = vadd.f32 0.0, %v1214
  %v1216 = vpop.f32.mrf.mxu0
  %v1217 = vadd.f32 0.0, %v1216
  %v1218 = vpop.f32.mrf.mxu0
  %v1219 = vadd.f32 0.0, %v1218
  %v1220 = vpop.f32.mrf.mxu0
  %v1221 = vadd.f32 0.0, %v1220
  %1222 = vmatprep.mubr.bf16.mxu0 %v179
  %1223 = vmatmul.mubr.bf16.gmra.mxu0 %v178
  %v1224 = vpop.f32.mrf.mxu0
  %v1225 = vadd.f32 0.0, %v1224
  %v1226 = vpop.f32.mrf.mxu0
  %v1227 = vadd.f32 0.0, %v1226
  %v1228 = vpop.f32.mrf.mxu0
  %v1229 = vadd.f32 0.0, %v1228
  %v1230 = vpop.f32.mrf.mxu0
  %v1231 = vadd.f32 0.0, %v1230
  %1232 = vmatprep.mubr.bf16.mxu0 %v181
  %1233 = vmatmul.mubr.bf16.gmra.mxu0 %v180
  %v1234 = vpop.f32.mrf.mxu0
  %v1235 = vadd.f32 0.0, %v1234
  %v1236 = vpop.f32.mrf.mxu0
  %v1237 = vadd.f32 0.0, %v1236
  %v1238 = vpop.f32.mrf.mxu0
  %v1239 = vadd.f32 0.0, %v1238
  %v1240 = vpop.f32.mrf.mxu0
  %v1241 = vadd.f32 0.0, %v1240
  %1242 = vmatprep.mubr.bf16.mxu0 %v183
  %1243 = vmatmul.mubr.bf16.gmra.mxu0 %v182
  %v1244 = vpop.f32.mrf.mxu0
  %v1245 = vadd.f32 0.0, %v1244
  %v1246 = vpop.f32.mrf.mxu0
  %v1247 = vadd.f32 0.0, %v1246
  %v1248 = vpop.f32.mrf.mxu0
  %v1249 = vadd.f32 0.0, %v1248
  %v1250 = vpop.f32.mrf.mxu0
  %v1251 = vadd.f32 0.0, %v1250
  %1252 = vmatprep.mubr.bf16.mxu0 %v185
  %1253 = vmatmul.mubr.bf16.gmra.mxu0 %v184
  %v1254 = vpop.f32.mrf.mxu0
  %v1255 = vadd.f32 0.0, %v1254
  %v1256 = vpop.f32.mrf.mxu0
  %v1257 = vadd.f32 0.0, %v1256
  %v1258 = vpop.f32.mrf.mxu0
  %v1259 = vadd.f32 0.0, %v1258
  %v1260 = vpop.f32.mrf.mxu0
  %v1261 = vadd.f32 0.0, %v1260
  %1262 = vmatprep.mubr.bf16.mxu0 %v187
  %1263 = vmatmul.mubr.bf16.gmra.mxu0 %v186
  %v1264 = vpop.f32.mrf.mxu0
  %v1265 = vadd.f32 0.0, %v1264
  %v1266 = vpop.f32.mrf.mxu0
  %v1267 = vadd.f32 0.0, %v1266
  %v1268 = vpop.f32.mrf.mxu0
  %v1269 = vadd.f32 0.0, %v1268
  %v1270 = vpop.f32.mrf.mxu0
  %v1271 = vadd.f32 0.0, %v1270
  %1272 = vmatprep.mubr.bf16.mxu0 %v189
  %1273 = vmatmul.mubr.bf16.gmra.mxu0 %v188
  %v1274 = vpop.f32.mrf.mxu0
  %v1275 = vadd.f32 0.0, %v1274
  %v1276 = vpop.f32.mrf.mxu0
  %v1277 = vadd.f32 0.0, %v1276
  %v1278 = vpop.f32.mrf.mxu0
  %v1279 = vadd.f32 0.0, %v1278
  %v1280 = vpop.f32.mrf.mxu0
  %v1281 = vadd.f32 0.0, %v1280
  %1282 = vmatprep.mubr.bf16.mxu0 %v191
  %1283 = vmatmul.mubr.bf16.gmra.mxu0 %v190
  %v1284 = vpop.f32.mrf.mxu0
  %v1285 = vadd.f32 0.0, %v1284
  %v1286 = vpop.f32.mrf.mxu0
  %v1287 = vadd.f32 0.0, %v1286
  %v1288 = vpop.f32.mrf.mxu0
  %v1289 = vadd.f32 0.0, %v1288
  %v1290 = vpop.f32.mrf.mxu0
  %v1291 = vadd.f32 0.0, %v1290
  %1292 = vmatprep.mubr.bf16.mxu0 %v193
  %1293 = vmatmul.mubr.bf16.gmra.mxu0 %v192
  %v1294 = vpop.f32.mrf.mxu0
  %v1295 = vadd.f32 0.0, %v1294
  %v1296 = vpop.f32.mrf.mxu0
  %v1297 = vadd.f32 0.0, %v1296
  %v1298 = vpop.f32.mrf.mxu0
  %v1299 = vadd.f32 0.0, %v1298
  %v1300 = vpop.f32.mrf.mxu0
  %v1301 = vadd.f32 0.0, %v1300
  %1302 = vmatprep.mubr.bf16.mxu0 %v195
  %1303 = vmatmul.mubr.bf16.gmra.mxu0 %v194
  %v1304 = vpop.f32.mrf.mxu0
  %v1305 = vadd.f32 0.0, %v1304
  %v1306 = vpop.f32.mrf.mxu0
  %v1307 = vadd.f32 0.0, %v1306
  %v1308 = vpop.f32.mrf.mxu0
  %v1309 = vadd.f32 0.0, %v1308
  %v1310 = vpop.f32.mrf.mxu0
  %v1311 = vadd.f32 0.0, %v1310
  %1312 = vmatprep.mubr.bf16.mxu0 %v197
  %1313 = vmatmul.mubr.bf16.gmra.mxu0 %v196
  %v1314 = vpop.f32.mrf.mxu0
  %v1315 = vadd.f32 0.0, %v1314
  %v1316 = vpop.f32.mrf.mxu0
  %v1317 = vadd.f32 0.0, %v1316
  %v1318 = vpop.f32.mrf.mxu0
  %v1319 = vadd.f32 0.0, %v1318
  %v1320 = vpop.f32.mrf.mxu0
  %v1321 = vadd.f32 0.0, %v1320
  %1322 = vmatprep.mubr.bf16.mxu0 %v199
  %1323 = vmatmul.mubr.bf16.gmra.mxu0 %v198
  %v1324 = vpop.f32.mrf.mxu0
  %v1325 = vadd.f32 0.0, %v1324
  %v1326 = vpop.f32.mrf.mxu0
  %v1327 = vadd.f32 0.0, %v1326
  %v1328 = vpop.f32.mrf.mxu0
  %v1329 = vadd.f32 0.0, %v1328
  %v1330 = vpop.f32.mrf.mxu0
  %v1331 = vadd.f32 0.0, %v1330
  %1332 = vmatprep.mubr.bf16.mxu0 %v201
  %1333 = vmatmul.mubr.bf16.gmra.mxu0 %v200
  %v1334 = vpop.f32.mrf.mxu0
  %v1335 = vadd.f32 0.0, %v1334
  %v1336 = vpop.f32.mrf.mxu0
  %v1337 = vadd.f32 0.0, %v1336
  %v1338 = vpop.f32.mrf.mxu0
  %v1339 = vadd.f32 0.0, %v1338
  %v1340 = vpop.f32.mrf.mxu0
  %v1341 = vadd.f32 0.0, %v1340
  %1342 = vmatprep.mubr.bf16.mxu0 %v203
  %1343 = vmatmul.mubr.bf16.gmra.mxu0 %v202
  %v1344 = vpop.f32.mrf.mxu0
  %v1345 = vadd.f32 0.0, %v1344
  %v1346 = vpop.f32.mrf.mxu0
  %v1347 = vadd.f32 0.0, %v1346
  %v1348 = vpop.f32.mrf.mxu0
  %v1349 = vadd.f32 0.0, %v1348
  %v1350 = vpop.f32.mrf.mxu0
  %v1351 = vadd.f32 0.0, %v1350
  %1352 = vmatprep.mubr.bf16.mxu0 %v205
  %1353 = vmatmul.mubr.bf16.gmra.mxu0 %v204
  %v1354 = vpop.f32.mrf.mxu0
  %v1355 = vadd.f32 0.0, %v1354
  %v1356 = vpop.f32.mrf.mxu0
  %v1357 = vadd.f32 0.0, %v1356
  %v1358 = vpop.f32.mrf.mxu0
  %v1359 = vadd.f32 0.0, %v1358
  %v1360 = vpop.f32.mrf.mxu0
  %v1361 = vadd.f32 0.0, %v1360
  %1362 = vdwg.mxu0
  %v1363 = vld [vmem:[%s2] sm:$0x3]
  %v1365 = vlaneseq
  %v1366 = vshrl.u32 %v1365, 7
  %v1367 = vsub.s32 0, %v1366
  %v1368 = vrot.slane %v1363, %v1367
  %v1369 = vlaneseq
  %v1370 = vshrl.u32 %v1369, 7
  %v1371 = vsub.s32 1, %v1370
  %v1372 = vrot.slane %v1363, %v1371
  %v1439 = vrot.slane %v437, 7
  %vm1440 = vcmask 1041409
  %v1441 = vsel %vm1440, %v1439, %v433
  %v1442 = vrot.slane %v443, 6
  %vm1443 = vcmask 1042434
  %v1444 = vsel %vm1443, %v1442, %v1441
  %v1445 = vrot.slane %v447, 5
  %vm1446 = vcmask 1043459
  %v1447 = vsel %vm1446, %v1445, %v1444
  %v1448 = vrot.slane %v453, 4
  %vm1449 = vcmask 1044484
  %v1450 = vsel %vm1449, %v1448, %v1447
  %v1451 = vrot.slane %v457, 3
  %vm1452 = vcmask 1045509
  %v1453 = vsel %vm1452, %v1451, %v1450
  %v1454 = vrot.slane %v463, 2
  %vm1455 = vcmask 1046534
  %v1456 = vsel %vm1455, %v1454, %v1453
  %v1457 = vrot.slane %v467, 1
  %vm1458 = vcmask 1047559
  %v1459 = vsel %vm1458, %v1457, %v1456
  %v1460 = vrot.slane %v439, 7
  %v1461 = vsel %vm1440, %v1460, %v435
  %v1462 = vrot.slane %v445, 6
  %v1463 = vsel %vm1443, %v1462, %v1461
  %v1464 = vrot.slane %v449, 5
  %v1465 = vsel %vm1446, %v1464, %v1463
  %v1466 = vrot.slane %v455, 4
  %v1467 = vsel %vm1449, %v1466, %v1465
  %v1468 = vrot.slane %v459, 3
  %v1469 = vsel %vm1452, %v1468, %v1467
  %v1470 = vrot.slane %v465, 2
  %v1471 = vsel %vm1455, %v1470, %v1469
  %v1472 = vrot.slane %v469, 1
  %v1473 = vsel %vm1458, %v1472, %v1471
  %v1474 = vrot.slane %v477, 7
  %v1475 = vsel %vm1440, %v1474, %v473
  %v1476 = vrot.slane %v483, 6
  %v1477 = vsel %vm1443, %v1476, %v1475
  %v1478 = vrot.slane %v487, 5
  %v1479 = vsel %vm1446, %v1478, %v1477
  %v1480 = vrot.slane %v493, 4
  %v1481 = vsel %vm1449, %v1480, %v1479
  %v1482 = vrot.slane %v497, 3
  %v1483 = vsel %vm1452, %v1482, %v1481
  %v1484 = vrot.slane %v503, 2
  %v1485 = vsel %vm1455, %v1484, %v1483
  %v1486 = vrot.slane %v507, 1
  %v1487 = vsel %vm1458, %v1486, %v1485
  %v1488 = vrot.slane %v479, 7
  %v1489 = vsel %vm1440, %v1488, %v475
  %v1490 = vrot.slane %v485, 6
  %v1491 = vsel %vm1443, %v1490, %v1489
  %v1492 = vrot.slane %v489, 5
  %v1493 = vsel %vm1446, %v1492, %v1491
  %v1494 = vrot.slane %v495, 4
  %v1495 = vsel %vm1449, %v1494, %v1493
  %v1496 = vrot.slane %v499, 3
  %v1497 = vsel %vm1452, %v1496, %v1495
  %v1498 = vrot.slane %v505, 2
  %v1499 = vsel %vm1455, %v1498, %v1497
  %v1500 = vrot.slane %v509, 1
  %v1501 = vsel %vm1458, %v1500, %v1499
  %v1502 = vrot.slane %v517, 7
  %v1503 = vsel %vm1440, %v1502, %v513
  %v1504 = vrot.slane %v523, 6
  %v1505 = vsel %vm1443, %v1504, %v1503
  %v1506 = vrot.slane %v527, 5
  %v1507 = vsel %vm1446, %v1506, %v1505
  %v1508 = vrot.slane %v533, 4
  %v1509 = vsel %vm1449, %v1508, %v1507
  %v1510 = vrot.slane %v537, 3
  %v1511 = vsel %vm1452, %v1510, %v1509
  %v1512 = vrot.slane %v543, 2
  %v1513 = vsel %vm1455, %v1512, %v1511
  %v1514 = vrot.slane %v547, 1
  %v1515 = vsel %vm1458, %v1514, %v1513
  %v1516 = vrot.slane %v519, 7
  %v1517 = vsel %vm1440, %v1516, %v515
  %v1518 = vrot.slane %v525, 6
  %v1519 = vsel %vm1443, %v1518, %v1517
  %v1520 = vrot.slane %v529, 5
  %v1521 = vsel %vm1446, %v1520, %v1519
  %v1522 = vrot.slane %v535, 4
  %v1523 = vsel %vm1449, %v1522, %v1521
  %v1524 = vrot.slane %v539, 3
  %v1525 = vsel %vm1452, %v1524, %v1523
  %v1526 = vrot.slane %v545, 2
  %v1527 = vsel %vm1455, %v1526, %v1525
  %v1528 = vrot.slane %v549, 1
  %v1529 = vsel %vm1458, %v1528, %v1527
  %v1530 = vrot.slane %v557, 7
  %v1531 = vsel %vm1440, %v1530, %v553
  %v1532 = vrot.slane %v563, 6
  %v1533 = vsel %vm1443, %v1532, %v1531
  %v1534 = vrot.slane %v567, 5
  %v1535 = vsel %vm1446, %v1534, %v1533
  %v1536 = vrot.slane %v573, 4
  %v1537 = vsel %vm1449, %v1536, %v1535
  %v1538 = vrot.slane %v577, 3
  %v1539 = vsel %vm1452, %v1538, %v1537
  %v1540 = vrot.slane %v583, 2
  %v1541 = vsel %vm1455, %v1540, %v1539
  %v1542 = vrot.slane %v587, 1
  %v1543 = vsel %vm1458, %v1542, %v1541
  %v1544 = vrot.slane %v559, 7
  %v1545 = vsel %vm1440, %v1544, %v555
  %v1546 = vrot.slane %v565, 6
  %v1547 = vsel %vm1443, %v1546, %v1545
  %v1548 = vrot.slane %v569, 5
  %v1549 = vsel %vm1446, %v1548, %v1547
  %v1550 = vrot.slane %v575, 4
  %v1551 = vsel %vm1449, %v1550, %v1549
  %v1552 = vrot.slane %v579, 3
  %v1553 = vsel %vm1452, %v1552, %v1551
  %v1554 = vrot.slane %v585, 2
  %v1555 = vsel %vm1455, %v1554, %v1553
  %v1556 = vrot.slane %v589, 1
  %v1557 = vsel %vm1458, %v1556, %v1555
  %v1566 = vadd.f32 %v1368, %v1459
  %v1567 = vadd.f32 %v1372, %v1473
  %v1568 = vadd.f32 %v1368, %v1487
  %v1569 = vadd.f32 %v1372, %v1501
  %v1570 = vadd.f32 %v1368, %v1515
  %v1571 = vadd.f32 %v1372, %v1529
  %v1572 = vadd.f32 %v1368, %v1543
  %v1573 = vadd.f32 %v1372, %v1557
  %v1638 = vrot.slane %v819, 1
  %v1639 = vsel %vm1440, %v823, %v1638
  %v1640 = vrot.slane %v829, 7
  %v1641 = vsel %vm1443, %v1640, %v1639
  %v1642 = vrot.slane %v833, 6
  %v1643 = vsel %vm1446, %v1642, %v1641
  %v1644 = vrot.slane %v839, 5
  %v1645 = vsel %vm1449, %v1644, %v1643
  %v1646 = vrot.slane %v843, 4
  %v1647 = vsel %vm1452, %v1646, %v1645
  %v1648 = vrot.slane %v849, 3
  %v1649 = vsel %vm1455, %v1648, %v1647
  %v1650 = vrot.slane %v853, 2
  %v1651 = vsel %vm1458, %v1650, %v1649
  %v1652 = vrot.slane %v821, 1
  %v1653 = vsel %vm1440, %v825, %v1652
  %v1654 = vrot.slane %v831, 7
  %v1655 = vsel %vm1443, %v1654, %v1653
  %v1656 = vrot.slane %v835, 6
  %v1657 = vsel %vm1446, %v1656, %v1655
  %v1658 = vrot.slane %v841, 5
  %v1659 = vsel %vm1449, %v1658, %v1657
  %v1660 = vrot.slane %v845, 4
  %v1661 = vsel %vm1452, %v1660, %v1659
  %v1662 = vrot.slane %v851, 3
  %v1663 = vsel %vm1455, %v1662, %v1661
  %v1664 = vrot.slane %v855, 2
  %v1665 = vsel %vm1458, %v1664, %v1663
  %v1666 = vrot.slane %v859, 1
  %v1667 = vsel %vm1440, %v863, %v1666
  %v1668 = vrot.slane %v869, 7
  %v1669 = vsel %vm1443, %v1668, %v1667
  %v1670 = vrot.slane %v873, 6
  %v1671 = vsel %vm1446, %v1670, %v1669
  %v1672 = vrot.slane %v879, 5
  %v1673 = vsel %vm1449, %v1672, %v1671
  %v1674 = vrot.slane %v883, 4
  %v1675 = vsel %vm1452, %v1674, %v1673
  %v1676 = vrot.slane %v889, 3
  %v1677 = vsel %vm1455, %v1676, %v1675
  %v1678 = vrot.slane %v893, 2
  %v1679 = vsel %vm1458, %v1678, %v1677
  %v1680 = vrot.slane %v861, 1
  %v1681 = vsel %vm1440, %v865, %v1680
  %v1682 = vrot.slane %v871, 7
  %v1683 = vsel %vm1443, %v1682, %v1681
  %v1684 = vrot.slane %v875, 6
  %v1685 = vsel %vm1446, %v1684, %v1683
  %v1686 = vrot.slane %v881, 5
  %v1687 = vsel %vm1449, %v1686, %v1685
  %v1688 = vrot.slane %v885, 4
  %v1689 = vsel %vm1452, %v1688, %v1687
  %v1690 = vrot.slane %v891, 3
  %v1691 = vsel %vm1455, %v1690, %v1689
  %v1692 = vrot.slane %v895, 2
  %v1693 = vsel %vm1458, %v1692, %v1691
  %v1694 = vrot.slane %v899, 1
  %v1695 = vsel %vm1440, %v903, %v1694
  %v1696 = vrot.slane %v909, 7
  %v1697 = vsel %vm1443, %v1696, %v1695
  %v1698 = vrot.slane %v913, 6
  %v1699 = vsel %vm1446, %v1698, %v1697
  %v1700 = vrot.slane %v919, 5
  %v1701 = vsel %vm1449, %v1700, %v1699
  %v1702 = vrot.slane %v923, 4
  %v1703 = vsel %vm1452, %v1702, %v1701
  %v1704 = vrot.slane %v929, 3
  %v1705 = vsel %vm1455, %v1704, %v1703
  %v1706 = vrot.slane %v933, 2
  %v1707 = vsel %vm1458, %v1706, %v1705
  %v1708 = vrot.slane %v901, 1
  %v1709 = vsel %vm1440, %v905, %v1708
  %v1710 = vrot.slane %v911, 7
  %v1711 = vsel %vm1443, %v1710, %v1709
  %v1712 = vrot.slane %v915, 6
  %v1713 = vsel %vm1446, %v1712, %v1711
  %v1714 = vrot.slane %v921, 5
  %v1715 = vsel %vm1449, %v1714, %v1713
  %v1716 = vrot.slane %v925, 4
  %v1717 = vsel %vm1452, %v1716, %v1715
  %v1718 = vrot.slane %v931, 3
  %v1719 = vsel %vm1455, %v1718, %v1717
  %v1720 = vrot.slane %v935, 2
  %v1721 = vsel %vm1458, %v1720, %v1719
  %v1722 = vrot.slane %v939, 1
  %v1723 = vsel %vm1440, %v943, %v1722
  %v1724 = vrot.slane %v949, 7
  %v1725 = vsel %vm1443, %v1724, %v1723
  %v1726 = vrot.slane %v953, 6
  %v1727 = vsel %vm1446, %v1726, %v1725
  %v1728 = vrot.slane %v959, 5
  %v1729 = vsel %vm1449, %v1728, %v1727
  %v1730 = vrot.slane %v963, 4
  %v1731 = vsel %vm1452, %v1730, %v1729
  %v1732 = vrot.slane %v969, 3
  %v1733 = vsel %vm1455, %v1732, %v1731
  %v1734 = vrot.slane %v973, 2
  %v1735 = vsel %vm1458, %v1734, %v1733
  %v1736 = vrot.slane %v941, 1
  %v1737 = vsel %vm1440, %v945, %v1736
  %v1738 = vrot.slane %v951, 7
  %v1739 = vsel %vm1443, %v1738, %v1737
  %v1740 = vrot.slane %v955, 6
  %v1741 = vsel %vm1446, %v1740, %v1739
  %v1742 = vrot.slane %v961, 5
  %v1743 = vsel %vm1449, %v1742, %v1741
  %v1744 = vrot.slane %v965, 4
  %v1745 = vsel %vm1452, %v1744, %v1743
  %v1746 = vrot.slane %v971, 3
  %v1747 = vsel %vm1455, %v1746, %v1745
  %v1748 = vrot.slane %v975, 2
  %v1749 = vsel %vm1458, %v1748, %v1747
  %v1758 = vadd.f32 %v1566, %v1651
  %v1759 = vadd.f32 %v1567, %v1665
  %v1760 = vadd.f32 %v1568, %v1679
  %v1761 = vadd.f32 %v1569, %v1693
  %v1762 = vadd.f32 %v1570, %v1707
  %v1763 = vadd.f32 %v1571, %v1721
  %v1764 = vadd.f32 %v1572, %v1735
  %v1765 = vadd.f32 %v1573, %v1749
  %v1830 = vrot.slane %v1205, 2
  %v1831 = vrot.slane %v1209, 1
  %v1832 = vsel %vm1440, %v1831, %v1830
  %v1833 = vsel %vm1443, %v1215, %v1832
  %v1834 = vrot.slane %v1219, 7
  %v1835 = vsel %vm1446, %v1834, %v1833
  %v1836 = vrot.slane %v1225, 6
  %v1837 = vsel %vm1449, %v1836, %v1835
  %v1838 = vrot.slane %v1229, 5
  %v1839 = vsel %vm1452, %v1838, %v1837
  %v1840 = vrot.slane %v1235, 4
  %v1841 = vsel %vm1455, %v1840, %v1839
  %v1842 = vrot.slane %v1239, 3
  %v1843 = vsel %vm1458, %v1842, %v1841
  %v1844 = vrot.slane %v1207, 2
  %v1845 = vrot.slane %v1211, 1
  %v1846 = vsel %vm1440, %v1845, %v1844
  %v1847 = vsel %vm1443, %v1217, %v1846
  %v1848 = vrot.slane %v1221, 7
  %v1849 = vsel %vm1446, %v1848, %v1847
  %v1850 = vrot.slane %v1227, 6
  %v1851 = vsel %vm1449, %v1850, %v1849
  %v1852 = vrot.slane %v1231, 5
  %v1853 = vsel %vm1452, %v1852, %v1851
  %v1854 = vrot.slane %v1237, 4
  %v1855 = vsel %vm1455, %v1854, %v1853
  %v1856 = vrot.slane %v1241, 3
  %v1857 = vsel %vm1458, %v1856, %v1855
  %v1858 = vrot.slane %v1245, 2
  %v1859 = vrot.slane %v1249, 1
  %v1860 = vsel %vm1440, %v1859, %v1858
  %v1861 = vsel %vm1443, %v1255, %v1860
  %v1862 = vrot.slane %v1259, 7
  %v1863 = vsel %vm1446, %v1862, %v1861
  %v1864 = vrot.slane %v1265, 6
  %v1865 = vsel %vm1449, %v1864, %v1863
  %v1866 = vrot.slane %v1269, 5
  %v1867 = vsel %vm1452, %v1866, %v1865
  %v1868 = vrot.slane %v1275, 4
  %v1869 = vsel %vm1455, %v1868, %v1867
  %v1870 = vrot.slane %v1279, 3
  %v1871 = vsel %vm1458, %v1870, %v1869
  %v1872 = vrot.slane %v1247, 2
  %v1873 = vrot.slane %v1251, 1
  %v1874 = vsel %vm1440, %v1873, %v1872
  %v1875 = vsel %vm1443, %v1257, %v1874
  %v1876 = vrot.slane %v1261, 7
  %v1877 = vsel %vm1446, %v1876, %v1875
  %v1878 = vrot.slane %v1267, 6
  %v1879 = vsel %vm1449, %v1878, %v1877
  %v1880 = vrot.slane %v1271, 5
  %v1881 = vsel %vm1452, %v1880, %v1879
  %v1882 = vrot.slane %v1277, 4
  %v1883 = vsel %vm1455, %v1882, %v1881
  %v1884 = vrot.slane %v1281, 3
  %v1885 = vsel %vm1458, %v1884, %v1883
  %v1886 = vrot.slane %v1285, 2
  %v1887 = vrot.slane %v1289, 1
  %v1888 = vsel %vm1440, %v1887, %v1886
  %v1889 = vsel %vm1443, %v1295, %v1888
  %v1890 = vrot.slane %v1299, 7
  %v1891 = vsel %vm1446, %v1890, %v1889
  %v1892 = vrot.slane %v1305, 6
  %v1893 = vsel %vm1449, %v1892, %v1891
  %v1894 = vrot.slane %v1309, 5
  %v1895 = vsel %vm1452, %v1894, %v1893
  %v1896 = vrot.slane %v1315, 4
  %v1897 = vsel %vm1455, %v1896, %v1895
  %v1898 = vrot.slane %v1319, 3
  %v1899 = vsel %vm1458, %v1898, %v1897
  %v1900 = vrot.slane %v1287, 2
  %v1901 = vrot.slane %v1291, 1
  %v1902 = vsel %vm1440, %v1901, %v1900
  %v1903 = vsel %vm1443, %v1297, %v1902
  %v1904 = vrot.slane %v1301, 7
  %v1905 = vsel %vm1446, %v1904, %v1903
  %v1906 = vrot.slane %v1307, 6
  %v1907 = vsel %vm1449, %v1906, %v1905
  %v1908 = vrot.slane %v1311, 5
  %v1909 = vsel %vm1452, %v1908, %v1907
  %v1910 = vrot.slane %v1317, 4
  %v1911 = vsel %vm1455, %v1910, %v1909
  %v1912 = vrot.slane %v1321, 3
  %v1913 = vsel %vm1458, %v1912, %v1911
  %v1914 = vrot.slane %v1325, 2
  %v1915 = vrot.slane %v1329, 1
  %v1916 = vsel %vm1440, %v1915, %v1914
  %v1917 = vsel %vm1443, %v1335, %v1916
  %v1918 = vrot.slane %v1339, 7
  %v1919 = vsel %vm1446, %v1918, %v1917
  %v1920 = vrot.slane %v1345, 6
  %v1921 = vsel %vm1449, %v1920, %v1919
  %v1922 = vrot.slane %v1349, 5
  %v1923 = vsel %vm1452, %v1922, %v1921
  %v1924 = vrot.slane %v1355, 4
  %v1925 = vsel %vm1455, %v1924, %v1923
  %v1926 = vrot.slane %v1359, 3
  %v1927 = vsel %vm1458, %v1926, %v1925
  %v1928 = vrot.slane %v1327, 2
  %v1929 = vrot.slane %v1331, 1
  %v1930 = vsel %vm1440, %v1929, %v1928
  %v1931 = vsel %vm1443, %v1337, %v1930
  %v1932 = vrot.slane %v1341, 7
  %v1933 = vsel %vm1446, %v1932, %v1931
  %v1934 = vrot.slane %v1347, 6
  %v1935 = vsel %vm1449, %v1934, %v1933
  %v1936 = vrot.slane %v1351, 5
  %v1937 = vsel %vm1452, %v1936, %v1935
  %v1938 = vrot.slane %v1357, 4
  %v1939 = vsel %vm1455, %v1938, %v1937
  %v1940 = vrot.slane %v1361, 3
  %v1941 = vsel %vm1458, %v1940, %v1939
  %v1950 = vadd.f32 %v1758, %v1843
  %v1951 = vadd.f32 %v1759, %v1857
  %v1952 = vadd.f32 %v1760, %v1871
  %v1953 = vadd.f32 %v1761, %v1885
  %v1954 = vadd.f32 %v1762, %v1899
  %v1955 = vadd.f32 %v1763, %v1913
  %v1956 = vadd.f32 %v1764, %v1927
  %v1957 = vadd.f32 %v1765, %v1941
  %v1958 = vmax.f32 %v1950, 0.0
  %v1959 = vmax.f32 %v1951, 0.0
  %v1960 = vmax.f32 %v1952, 0.0
  %v1961 = vmax.f32 %v1953, 0.0
  %v1962 = vmax.f32 %v1954, 0.0
  %v1963 = vmax.f32 %v1955, 0.0
  %v1964 = vmax.f32 %v1956, 0.0
  %v1965 = vmax.f32 %v1957, 0.0
  %v1966 = vrot.slane %v433, 1
  %v1967 = vsel %vm1440, %v437, %v1966
  %v1968 = vrot.slane %v443, 7
  %v1969 = vsel %vm1443, %v1968, %v1967
  %v1970 = vrot.slane %v447, 6
  %v1971 = vsel %vm1446, %v1970, %v1969
  %v1972 = vrot.slane %v453, 5
  %v1973 = vsel %vm1449, %v1972, %v1971
  %v1974 = vrot.slane %v457, 4
  %v1975 = vsel %vm1452, %v1974, %v1973
  %v1976 = vrot.slane %v463, 3
  %v1977 = vsel %vm1455, %v1976, %v1975
  %v1978 = vrot.slane %v467, 2
  %v1979 = vsel %vm1458, %v1978, %v1977
  %v1980 = vrot.slane %v435, 1
  %v1981 = vsel %vm1440, %v439, %v1980
  %v1982 = vrot.slane %v445, 7
  %v1983 = vsel %vm1443, %v1982, %v1981
  %v1984 = vrot.slane %v449, 6
  %v1985 = vsel %vm1446, %v1984, %v1983
  %v1986 = vrot.slane %v455, 5
  %v1987 = vsel %vm1449, %v1986, %v1985
  %v1988 = vrot.slane %v459, 4
  %v1989 = vsel %vm1452, %v1988, %v1987
  %v1990 = vrot.slane %v465, 3
  %v1991 = vsel %vm1455, %v1990, %v1989
  %v1992 = vrot.slane %v469, 2
  %v1993 = vsel %vm1458, %v1992, %v1991
  %v1994 = vrot.slane %v473, 1
  %v1995 = vsel %vm1440, %v477, %v1994
  %v1996 = vrot.slane %v483, 7
  %v1997 = vsel %vm1443, %v1996, %v1995
  %v1998 = vrot.slane %v487, 6
  %v1999 = vsel %vm1446, %v1998, %v1997
  %v2000 = vrot.slane %v493, 5
  %v2001 = vsel %vm1449, %v2000, %v1999
  %v2002 = vrot.slane %v497, 4
  %v2003 = vsel %vm1452, %v2002, %v2001
  %v2004 = vrot.slane %v503, 3
  %v2005 = vsel %vm1455, %v2004, %v2003
  %v2006 = vrot.slane %v507, 2
  %v2007 = vsel %vm1458, %v2006, %v2005
  %v2008 = vrot.slane %v475, 1
  %v2009 = vsel %vm1440, %v479, %v2008
  %v2010 = vrot.slane %v485, 7
  %v2011 = vsel %vm1443, %v2010, %v2009
  %v2012 = vrot.slane %v489, 6
  %v2013 = vsel %vm1446, %v2012, %v2011
  %v2014 = vrot.slane %v495, 5
  %v2015 = vsel %vm1449, %v2014, %v2013
  %v2016 = vrot.slane %v499, 4
  %v2017 = vsel %vm1452, %v2016, %v2015
  %v2018 = vrot.slane %v505, 3
  %v2019 = vsel %vm1455, %v2018, %v2017
  %v2020 = vrot.slane %v509, 2
  %v2021 = vsel %vm1458, %v2020, %v2019
  %v2022 = vrot.slane %v513, 1
  %v2023 = vsel %vm1440, %v517, %v2022
  %v2024 = vrot.slane %v523, 7
  %v2025 = vsel %vm1443, %v2024, %v2023
  %v2026 = vrot.slane %v527, 6
  %v2027 = vsel %vm1446, %v2026, %v2025
  %v2028 = vrot.slane %v533, 5
  %v2029 = vsel %vm1449, %v2028, %v2027
  %v2030 = vrot.slane %v537, 4
  %v2031 = vsel %vm1452, %v2030, %v2029
  %v2032 = vrot.slane %v543, 3
  %v2033 = vsel %vm1455, %v2032, %v2031
  %v2034 = vrot.slane %v547, 2
  %v2035 = vsel %vm1458, %v2034, %v2033
  %v2036 = vrot.slane %v515, 1
  %v2037 = vsel %vm1440, %v519, %v2036
  %v2038 = vrot.slane %v525, 7
  %v2039 = vsel %vm1443, %v2038, %v2037
  %v2040 = vrot.slane %v529, 6
  %v2041 = vsel %vm1446, %v2040, %v2039
  %v2042 = vrot.slane %v535, 5
  %v2043 = vsel %vm1449, %v2042, %v2041
  %v2044 = vrot.slane %v539, 4
  %v2045 = vsel %vm1452, %v2044, %v2043
  %v2046 = vrot.slane %v545, 3
  %v2047 = vsel %vm1455, %v2046, %v2045
  %v2048 = vrot.slane %v549, 2
  %v2049 = vsel %vm1458, %v2048, %v2047
  %v2050 = vrot.slane %v553, 1
  %v2051 = vsel %vm1440, %v557, %v2050
  %v2052 = vrot.slane %v563, 7
  %v2053 = vsel %vm1443, %v2052, %v2051
  %v2054 = vrot.slane %v567, 6
  %v2055 = vsel %vm1446, %v2054, %v2053
  %v2056 = vrot.slane %v573, 5
  %v2057 = vsel %vm1449, %v2056, %v2055
  %v2058 = vrot.slane %v577, 4
  %v2059 = vsel %vm1452, %v2058, %v2057
  %v2060 = vrot.slane %v583, 3
  %v2061 = vsel %vm1455, %v2060, %v2059
  %v2062 = vrot.slane %v587, 2
  %v2063 = vsel %vm1458, %v2062, %v2061
  %v2064 = vrot.slane %v555, 1
  %v2065 = vsel %vm1440, %v559, %v2064
  %v2066 = vrot.slane %v565, 7
  %v2067 = vsel %vm1443, %v2066, %v2065
  %v2068 = vrot.slane %v569, 6
  %v2069 = vsel %vm1446, %v2068, %v2067
  %v2070 = vrot.slane %v575, 5
  %v2071 = vsel %vm1449, %v2070, %v2069
  %v2072 = vrot.slane %v579, 4
  %v2073 = vsel %vm1452, %v2072, %v2071
  %v2074 = vrot.slane %v585, 3
  %v2075 = vsel %vm1455, %v2074, %v2073
  %v2076 = vrot.slane %v589, 2
  %v2077 = vsel %vm1458, %v2076, %v2075
  %v2086 = vadd.f32 %v1368, %v1979
  %v2087 = vadd.f32 %v1372, %v1993
  %v2088 = vadd.f32 %v1368, %v2007
  %v2089 = vadd.f32 %v1372, %v2021
  %v2090 = vadd.f32 %v1368, %v2035
  %v2091 = vadd.f32 %v1372, %v2049
  %v2092 = vadd.f32 %v1368, %v2063
  %v2093 = vadd.f32 %v1372, %v2077
  %v2094 = vrot.slane %v819, 2
  %v2095 = vrot.slane %v823, 1
  %v2096 = vsel %vm1440, %v2095, %v2094
  %v2097 = vsel %vm1443, %v829, %v2096
  %v2098 = vrot.slane %v833, 7
  %v2099 = vsel %vm1446, %v2098, %v2097
  %v2100 = vrot.slane %v839, 6
  %v2101 = vsel %vm1449, %v2100, %v2099
  %v2102 = vrot.slane %v843, 5
  %v2103 = vsel %vm1452, %v2102, %v2101
  %v2104 = vrot.slane %v849, 4
  %v2105 = vsel %vm1455, %v2104, %v2103
  %v2106 = vrot.slane %v853, 3
  %v2107 = vsel %vm1458, %v2106, %v2105
  %v2108 = vrot.slane %v821, 2
  %v2109 = vrot.slane %v825, 1
  %v2110 = vsel %vm1440, %v2109, %v2108
  %v2111 = vsel %vm1443, %v831, %v2110
  %v2112 = vrot.slane %v835, 7
  %v2113 = vsel %vm1446, %v2112, %v2111
  %v2114 = vrot.slane %v841, 6
  %v2115 = vsel %vm1449, %v2114, %v2113
  %v2116 = vrot.slane %v845, 5
  %v2117 = vsel %vm1452, %v2116, %v2115
  %v2118 = vrot.slane %v851, 4
  %v2119 = vsel %vm1455, %v2118, %v2117
  %v2120 = vrot.slane %v855, 3
  %v2121 = vsel %vm1458, %v2120, %v2119
  %v2122 = vrot.slane %v859, 2
  %v2123 = vrot.slane %v863, 1
  %v2124 = vsel %vm1440, %v2123, %v2122
  %v2125 = vsel %vm1443, %v869, %v2124
  %v2126 = vrot.slane %v873, 7
  %v2127 = vsel %vm1446, %v2126, %v2125
  %v2128 = vrot.slane %v879, 6
  %v2129 = vsel %vm1449, %v2128, %v2127
  %v2130 = vrot.slane %v883, 5
  %v2131 = vsel %vm1452, %v2130, %v2129
  %v2132 = vrot.slane %v889, 4
  %v2133 = vsel %vm1455, %v2132, %v2131
  %v2134 = vrot.slane %v893, 3
  %v2135 = vsel %vm1458, %v2134, %v2133
  %v2136 = vrot.slane %v861, 2
  %v2137 = vrot.slane %v865, 1
  %v2138 = vsel %vm1440, %v2137, %v2136
  %v2139 = vsel %vm1443, %v871, %v2138
  %v2140 = vrot.slane %v875, 7
  %v2141 = vsel %vm1446, %v2140, %v2139
  %v2142 = vrot.slane %v881, 6
  %v2143 = vsel %vm1449, %v2142, %v2141
  %v2144 = vrot.slane %v885, 5
  %v2145 = vsel %vm1452, %v2144, %v2143
  %v2146 = vrot.slane %v891, 4
  %v2147 = vsel %vm1455, %v2146, %v2145
  %v2148 = vrot.slane %v895, 3
  %v2149 = vsel %vm1458, %v2148, %v2147
  %v2150 = vrot.slane %v899, 2
  %v2151 = vrot.slane %v903, 1
  %v2152 = vsel %vm1440, %v2151, %v2150
  %v2153 = vsel %vm1443, %v909, %v2152
  %v2154 = vrot.slane %v913, 7
  %v2155 = vsel %vm1446, %v2154, %v2153
  %v2156 = vrot.slane %v919, 6
  %v2157 = vsel %vm1449, %v2156, %v2155
  %v2158 = vrot.slane %v923, 5
  %v2159 = vsel %vm1452, %v2158, %v2157
  %v2160 = vrot.slane %v929, 4
  %v2161 = vsel %vm1455, %v2160, %v2159
  %v2162 = vrot.slane %v933, 3
  %v2163 = vsel %vm1458, %v2162, %v2161
  %v2164 = vrot.slane %v901, 2
  %v2165 = vrot.slane %v905, 1
  %v2166 = vsel %vm1440, %v2165, %v2164
  %v2167 = vsel %vm1443, %v911, %v2166
  %v2168 = vrot.slane %v915, 7
  %v2169 = vsel %vm1446, %v2168, %v2167
  %v2170 = vrot.slane %v921, 6
  %v2171 = vsel %vm1449, %v2170, %v2169
  %v2172 = vrot.slane %v925, 5
  %v2173 = vsel %vm1452, %v2172, %v2171
  %v2174 = vrot.slane %v931, 4
  %v2175 = vsel %vm1455, %v2174, %v2173
  %v2176 = vrot.slane %v935, 3
  %v2177 = vsel %vm1458, %v2176, %v2175
  %v2178 = vrot.slane %v939, 2
  %v2179 = vrot.slane %v943, 1
  %v2180 = vsel %vm1440, %v2179, %v2178
  %v2181 = vsel %vm1443, %v949, %v2180
  %v2182 = vrot.slane %v953, 7
  %v2183 = vsel %vm1446, %v2182, %v2181
  %v2184 = vrot.slane %v959, 6
  %v2185 = vsel %vm1449, %v2184, %v2183
  %v2186 = vrot.slane %v963, 5
  %v2187 = vsel %vm1452, %v2186, %v2185
  %v2188 = vrot.slane %v969, 4
  %v2189 = vsel %vm1455, %v2188, %v2187
  %v2190 = vrot.slane %v973, 3
  %v2191 = vsel %vm1458, %v2190, %v2189
  %v2192 = vrot.slane %v941, 2
  %v2193 = vrot.slane %v945, 1
  %v2194 = vsel %vm1440, %v2193, %v2192
  %v2195 = vsel %vm1443, %v951, %v2194
  %v2196 = vrot.slane %v955, 7
  %v2197 = vsel %vm1446, %v2196, %v2195
  %v2198 = vrot.slane %v961, 6
  %v2199 = vsel %vm1449, %v2198, %v2197
  %v2200 = vrot.slane %v965, 5
  %v2201 = vsel %vm1452, %v2200, %v2199
  %v2202 = vrot.slane %v971, 4
  %v2203 = vsel %vm1455, %v2202, %v2201
  %v2204 = vrot.slane %v975, 3
  %v2205 = vsel %vm1458, %v2204, %v2203
  %v2214 = vadd.f32 %v2086, %v2107
  %v2215 = vadd.f32 %v2087, %v2121
  %v2216 = vadd.f32 %v2088, %v2135
  %v2217 = vadd.f32 %v2089, %v2149
  %v2218 = vadd.f32 %v2090, %v2163
  %v2219 = vadd.f32 %v2091, %v2177
  %v2220 = vadd.f32 %v2092, %v2191
  %v2221 = vadd.f32 %v2093, %v2205
  %v2222 = vrot.slane %v1205, 3
  %v2223 = vrot.slane %v1209, 2
  %v2224 = vsel %vm1440, %v2223, %v2222
  %v2225 = vrot.slane %v1215, 1
  %v2226 = vsel %vm1443, %v2225, %v2224
  %v2227 = vsel %vm1446, %v1219, %v2226
  %v2228 = vrot.slane %v1225, 7
  %v2229 = vsel %vm1449, %v2228, %v2227
  %v2230 = vrot.slane %v1229, 6
  %v2231 = vsel %vm1452, %v2230, %v2229
  %v2232 = vrot.slane %v1235, 5
  %v2233 = vsel %vm1455, %v2232, %v2231
  %v2234 = vrot.slane %v1239, 4
  %v2235 = vsel %vm1458, %v2234, %v2233
  %v2236 = vrot.slane %v1207, 3
  %v2237 = vrot.slane %v1211, 2
  %v2238 = vsel %vm1440, %v2237, %v2236
  %v2239 = vrot.slane %v1217, 1
  %v2240 = vsel %vm1443, %v2239, %v2238
  %v2241 = vsel %vm1446, %v1221, %v2240
  %v2242 = vrot.slane %v1227, 7
  %v2243 = vsel %vm1449, %v2242, %v2241
  %v2244 = vrot.slane %v1231, 6
  %v2245 = vsel %vm1452, %v2244, %v2243
  %v2246 = vrot.slane %v1237, 5
  %v2247 = vsel %vm1455, %v2246, %v2245
  %v2248 = vrot.slane %v1241, 4
  %v2249 = vsel %vm1458, %v2248, %v2247
  %v2250 = vrot.slane %v1245, 3
  %v2251 = vrot.slane %v1249, 2
  %v2252 = vsel %vm1440, %v2251, %v2250
  %v2253 = vrot.slane %v1255, 1
  %v2254 = vsel %vm1443, %v2253, %v2252
  %v2255 = vsel %vm1446, %v1259, %v2254
  %v2256 = vrot.slane %v1265, 7
  %v2257 = vsel %vm1449, %v2256, %v2255
  %v2258 = vrot.slane %v1269, 6
  %v2259 = vsel %vm1452, %v2258, %v2257
  %v2260 = vrot.slane %v1275, 5
  %v2261 = vsel %vm1455, %v2260, %v2259
  %v2262 = vrot.slane %v1279, 4
  %v2263 = vsel %vm1458, %v2262, %v2261
  %v2264 = vrot.slane %v1247, 3
  %v2265 = vrot.slane %v1251, 2
  %v2266 = vsel %vm1440, %v2265, %v2264
  %v2267 = vrot.slane %v1257, 1
  %v2268 = vsel %vm1443, %v2267, %v2266
  %v2269 = vsel %vm1446, %v1261, %v2268
  %v2270 = vrot.slane %v1267, 7
  %v2271 = vsel %vm1449, %v2270, %v2269
  %v2272 = vrot.slane %v1271, 6
  %v2273 = vsel %vm1452, %v2272, %v2271
  %v2274 = vrot.slane %v1277, 5
  %v2275 = vsel %vm1455, %v2274, %v2273
  %v2276 = vrot.slane %v1281, 4
  %v2277 = vsel %vm1458, %v2276, %v2275
  %v2278 = vrot.slane %v1285, 3
  %v2279 = vrot.slane %v1289, 2
  %v2280 = vsel %vm1440, %v2279, %v2278
  %v2281 = vrot.slane %v1295, 1
  %v2282 = vsel %vm1443, %v2281, %v2280
  %v2283 = vsel %vm1446, %v1299, %v2282
  %v2284 = vrot.slane %v1305, 7
  %v2285 = vsel %vm1449, %v2284, %v2283
  %v2286 = vrot.slane %v1309, 6
  %v2287 = vsel %vm1452, %v2286, %v2285
  %v2288 = vrot.slane %v1315, 5
  %v2289 = vsel %vm1455, %v2288, %v2287
  %v2290 = vrot.slane %v1319, 4
  %v2291 = vsel %vm1458, %v2290, %v2289
  %v2292 = vrot.slane %v1287, 3
  %v2293 = vrot.slane %v1291, 2
  %v2294 = vsel %vm1440, %v2293, %v2292
  %v2295 = vrot.slane %v1297, 1
  %v2296 = vsel %vm1443, %v2295, %v2294
  %v2297 = vsel %vm1446, %v1301, %v2296
  %v2298 = vrot.slane %v1307, 7
  %v2299 = vsel %vm1449, %v2298, %v2297
  %v2300 = vrot.slane %v1311, 6
  %v2301 = vsel %vm1452, %v2300, %v2299
  %v2302 = vrot.slane %v1317, 5
  %v2303 = vsel %vm1455, %v2302, %v2301
  %v2304 = vrot.slane %v1321, 4
  %v2305 = vsel %vm1458, %v2304, %v2303
  %v2306 = vrot.slane %v1325, 3
  %v2307 = vrot.slane %v1329, 2
  %v2308 = vsel %vm1440, %v2307, %v2306
  %v2309 = vrot.slane %v1335, 1
  %v2310 = vsel %vm1443, %v2309, %v2308
  %v2311 = vsel %vm1446, %v1339, %v2310
  %v2312 = vrot.slane %v1345, 7
  %v2313 = vsel %vm1449, %v2312, %v2311
  %v2314 = vrot.slane %v1349, 6
  %v2315 = vsel %vm1452, %v2314, %v2313
  %v2316 = vrot.slane %v1355, 5
  %v2317 = vsel %vm1455, %v2316, %v2315
  %v2318 = vrot.slane %v1359, 4
  %v2319 = vsel %vm1458, %v2318, %v2317
  %v2320 = vrot.slane %v1327, 3
  %v2321 = vrot.slane %v1331, 2
  %v2322 = vsel %vm1440, %v2321, %v2320
  %v2323 = vrot.slane %v1337, 1
  %v2324 = vsel %vm1443, %v2323, %v2322
  %v2325 = vsel %vm1446, %v1341, %v2324
  %v2326 = vrot.slane %v1347, 7
  %v2327 = vsel %vm1449, %v2326, %v2325
  %v2328 = vrot.slane %v1351, 6
  %v2329 = vsel %vm1452, %v2328, %v2327
  %v2330 = vrot.slane %v1357, 5
  %v2331 = vsel %vm1455, %v2330, %v2329
  %v2332 = vrot.slane %v1361, 4
  %v2333 = vsel %vm1458, %v2332, %v2331
  %v2342 = vadd.f32 %v2214, %v2235
  %v2343 = vadd.f32 %v2215, %v2249
  %v2344 = vadd.f32 %v2216, %v2263
  %v2345 = vadd.f32 %v2217, %v2277
  %v2346 = vadd.f32 %v2218, %v2291
  %v2347 = vadd.f32 %v2219, %v2305
  %v2348 = vadd.f32 %v2220, %v2319
  %v2349 = vadd.f32 %v2221, %v2333
  %v2350 = vmax.f32 %v2342, 0.0
  %v2351 = vmax.f32 %v2343, 0.0
  %v2352 = vmax.f32 %v2344, 0.0
  %v2353 = vmax.f32 %v2345, 0.0
  %v2354 = vmax.f32 %v2346, 0.0
  %v2355 = vmax.f32 %v2347, 0.0
  %v2356 = vmax.f32 %v2348, 0.0
  %v2357 = vmax.f32 %v2349, 0.0
  %v2358 = vmax.f32 %v1958, %v2350
  %v2359 = vmax.f32 %v1959, %v2351
  %v2360 = vmax.f32 %v1960, %v2352
  %v2361 = vmax.f32 %v1961, %v2353
  %v2362 = vmax.f32 %v1962, %v2354
  %v2363 = vmax.f32 %v1963, %v2355
  %v2364 = vmax.f32 %v1964, %v2356
  %v2365 = vmax.f32 %v1965, %v2357
  %v2366 = vrot.slane %v433, 2
  %v2367 = vrot.slane %v437, 1
  %v2368 = vsel %vm1440, %v2367, %v2366
  %v2369 = vsel %vm1443, %v443, %v2368
  %v2370 = vrot.slane %v447, 7
  %v2371 = vsel %vm1446, %v2370, %v2369
  %v2372 = vrot.slane %v453, 6
  %v2373 = vsel %vm1449, %v2372, %v2371
  %v2374 = vrot.slane %v457, 5
  %v2375 = vsel %vm1452, %v2374, %v2373
  %v2376 = vrot.slane %v463, 4
  %v2377 = vsel %vm1455, %v2376, %v2375
  %v2378 = vrot.slane %v467, 3
  %v2379 = vsel %vm1458, %v2378, %v2377
  %v2380 = vrot.slane %v435, 2
  %v2381 = vrot.slane %v439, 1
  %v2382 = vsel %vm1440, %v2381, %v2380
  %v2383 = vsel %vm1443, %v445, %v2382
  %v2384 = vrot.slane %v449, 7
  %v2385 = vsel %vm1446, %v2384, %v2383
  %v2386 = vrot.slane %v455, 6
  %v2387 = vsel %vm1449, %v2386, %v2385
  %v2388 = vrot.slane %v459, 5
  %v2389 = vsel %vm1452, %v2388, %v2387
  %v2390 = vrot.slane %v465, 4
  %v2391 = vsel %vm1455, %v2390, %v2389
  %v2392 = vrot.slane %v469, 3
  %v2393 = vsel %vm1458, %v2392, %v2391
  %v2394 = vrot.slane %v473, 2
  %v2395 = vrot.slane %v477, 1
  %v2396 = vsel %vm1440, %v2395, %v2394
  %v2397 = vsel %vm1443, %v483, %v2396
  %v2398 = vrot.slane %v487, 7
  %v2399 = vsel %vm1446, %v2398, %v2397
  %v2400 = vrot.slane %v493, 6
  %v2401 = vsel %vm1449, %v2400, %v2399
  %v2402 = vrot.slane %v497, 5
  %v2403 = vsel %vm1452, %v2402, %v2401
  %v2404 = vrot.slane %v503, 4
  %v2405 = vsel %vm1455, %v2404, %v2403
  %v2406 = vrot.slane %v507, 3
  %v2407 = vsel %vm1458, %v2406, %v2405
  %v2408 = vrot.slane %v475, 2
  %v2409 = vrot.slane %v479, 1
  %v2410 = vsel %vm1440, %v2409, %v2408
  %v2411 = vsel %vm1443, %v485, %v2410
  %v2412 = vrot.slane %v489, 7
  %v2413 = vsel %vm1446, %v2412, %v2411
  %v2414 = vrot.slane %v495, 6
  %v2415 = vsel %vm1449, %v2414, %v2413
  %v2416 = vrot.slane %v499, 5
  %v2417 = vsel %vm1452, %v2416, %v2415
  %v2418 = vrot.slane %v505, 4
  %v2419 = vsel %vm1455, %v2418, %v2417
  %v2420 = vrot.slane %v509, 3
  %v2421 = vsel %vm1458, %v2420, %v2419
  %v2422 = vrot.slane %v513, 2
  %v2423 = vrot.slane %v517, 1
  %v2424 = vsel %vm1440, %v2423, %v2422
  %v2425 = vsel %vm1443, %v523, %v2424
  %v2426 = vrot.slane %v527, 7
  %v2427 = vsel %vm1446, %v2426, %v2425
  %v2428 = vrot.slane %v533, 6
  %v2429 = vsel %vm1449, %v2428, %v2427
  %v2430 = vrot.slane %v537, 5
  %v2431 = vsel %vm1452, %v2430, %v2429
  %v2432 = vrot.slane %v543, 4
  %v2433 = vsel %vm1455, %v2432, %v2431
  %v2434 = vrot.slane %v547, 3
  %v2435 = vsel %vm1458, %v2434, %v2433
  %v2436 = vrot.slane %v515, 2
  %v2437 = vrot.slane %v519, 1
  %v2438 = vsel %vm1440, %v2437, %v2436
  %v2439 = vsel %vm1443, %v525, %v2438
  %v2440 = vrot.slane %v529, 7
  %v2441 = vsel %vm1446, %v2440, %v2439
  %v2442 = vrot.slane %v535, 6
  %v2443 = vsel %vm1449, %v2442, %v2441
  %v2444 = vrot.slane %v539, 5
  %v2445 = vsel %vm1452, %v2444, %v2443
  %v2446 = vrot.slane %v545, 4
  %v2447 = vsel %vm1455, %v2446, %v2445
  %v2448 = vrot.slane %v549, 3
  %v2449 = vsel %vm1458, %v2448, %v2447
  %v2450 = vrot.slane %v553, 2
  %v2451 = vrot.slane %v557, 1
  %v2452 = vsel %vm1440, %v2451, %v2450
  %v2453 = vsel %vm1443, %v563, %v2452
  %v2454 = vrot.slane %v567, 7
  %v2455 = vsel %vm1446, %v2454, %v2453
  %v2456 = vrot.slane %v573, 6
  %v2457 = vsel %vm1449, %v2456, %v2455
  %v2458 = vrot.slane %v577, 5
  %v2459 = vsel %vm1452, %v2458, %v2457
  %v2460 = vrot.slane %v583, 4
  %v2461 = vsel %vm1455, %v2460, %v2459
  %v2462 = vrot.slane %v587, 3
  %v2463 = vsel %vm1458, %v2462, %v2461
  %v2464 = vrot.slane %v555, 2
  %v2465 = vrot.slane %v559, 1
  %v2466 = vsel %vm1440, %v2465, %v2464
  %v2467 = vsel %vm1443, %v565, %v2466
  %v2468 = vrot.slane %v569, 7
  %v2469 = vsel %vm1446, %v2468, %v2467
  %v2470 = vrot.slane %v575, 6
  %v2471 = vsel %vm1449, %v2470, %v2469
  %v2472 = vrot.slane %v579, 5
  %v2473 = vsel %vm1452, %v2472, %v2471
  %v2474 = vrot.slane %v585, 4
  %v2475 = vsel %vm1455, %v2474, %v2473
  %v2476 = vrot.slane %v589, 3
  %v2477 = vsel %vm1458, %v2476, %v2475
  %v2486 = vadd.f32 %v1368, %v2379
  %v2487 = vadd.f32 %v1372, %v2393
  %v2488 = vadd.f32 %v1368, %v2407
  %v2489 = vadd.f32 %v1372, %v2421
  %v2490 = vadd.f32 %v1368, %v2435
  %v2491 = vadd.f32 %v1372, %v2449
  %v2492 = vadd.f32 %v1368, %v2463
  %v2493 = vadd.f32 %v1372, %v2477
  %v2494 = vrot.slane %v819, 3
  %v2495 = vrot.slane %v823, 2
  %v2496 = vsel %vm1440, %v2495, %v2494
  %v2497 = vrot.slane %v829, 1
  %v2498 = vsel %vm1443, %v2497, %v2496
  %v2499 = vsel %vm1446, %v833, %v2498
  %v2500 = vrot.slane %v839, 7
  %v2501 = vsel %vm1449, %v2500, %v2499
  %v2502 = vrot.slane %v843, 6
  %v2503 = vsel %vm1452, %v2502, %v2501
  %v2504 = vrot.slane %v849, 5
  %v2505 = vsel %vm1455, %v2504, %v2503
  %v2506 = vrot.slane %v853, 4
  %v2507 = vsel %vm1458, %v2506, %v2505
  %v2508 = vrot.slane %v821, 3
  %v2509 = vrot.slane %v825, 2
  %v2510 = vsel %vm1440, %v2509, %v2508
  %v2511 = vrot.slane %v831, 1
  %v2512 = vsel %vm1443, %v2511, %v2510
  %v2513 = vsel %vm1446, %v835, %v2512
  %v2514 = vrot.slane %v841, 7
  %v2515 = vsel %vm1449, %v2514, %v2513
  %v2516 = vrot.slane %v845, 6
  %v2517 = vsel %vm1452, %v2516, %v2515
  %v2518 = vrot.slane %v851, 5
  %v2519 = vsel %vm1455, %v2518, %v2517
  %v2520 = vrot.slane %v855, 4
  %v2521 = vsel %vm1458, %v2520, %v2519
  %v2522 = vrot.slane %v859, 3
  %v2523 = vrot.slane %v863, 2
  %v2524 = vsel %vm1440, %v2523, %v2522
  %v2525 = vrot.slane %v869, 1
  %v2526 = vsel %vm1443, %v2525, %v2524
  %v2527 = vsel %vm1446, %v873, %v2526
  %v2528 = vrot.slane %v879, 7
  %v2529 = vsel %vm1449, %v2528, %v2527
  %v2530 = vrot.slane %v883, 6
  %v2531 = vsel %vm1452, %v2530, %v2529
  %v2532 = vrot.slane %v889, 5
  %v2533 = vsel %vm1455, %v2532, %v2531
  %v2534 = vrot.slane %v893, 4
  %v2535 = vsel %vm1458, %v2534, %v2533
  %v2536 = vrot.slane %v861, 3
  %v2537 = vrot.slane %v865, 2
  %v2538 = vsel %vm1440, %v2537, %v2536
  %v2539 = vrot.slane %v871, 1
  %v2540 = vsel %vm1443, %v2539, %v2538
  %v2541 = vsel %vm1446, %v875, %v2540
  %v2542 = vrot.slane %v881, 7
  %v2543 = vsel %vm1449, %v2542, %v2541
  %v2544 = vrot.slane %v885, 6
  %v2545 = vsel %vm1452, %v2544, %v2543
  %v2546 = vrot.slane %v891, 5
  %v2547 = vsel %vm1455, %v2546, %v2545
  %v2548 = vrot.slane %v895, 4
  %v2549 = vsel %vm1458, %v2548, %v2547
  %v2550 = vrot.slane %v899, 3
  %v2551 = vrot.slane %v903, 2
  %v2552 = vsel %vm1440, %v2551, %v2550
  %v2553 = vrot.slane %v909, 1
  %v2554 = vsel %vm1443, %v2553, %v2552
  %v2555 = vsel %vm1446, %v913, %v2554
  %v2556 = vrot.slane %v919, 7
  %v2557 = vsel %vm1449, %v2556, %v2555
  %v2558 = vrot.slane %v923, 6
  %v2559 = vsel %vm1452, %v2558, %v2557
  %v2560 = vrot.slane %v929, 5
  %v2561 = vsel %vm1455, %v2560, %v2559
  %v2562 = vrot.slane %v933, 4
  %v2563 = vsel %vm1458, %v2562, %v2561
  %v2564 = vrot.slane %v901, 3
  %v2565 = vrot.slane %v905, 2
  %v2566 = vsel %vm1440, %v2565, %v2564
  %v2567 = vrot.slane %v911, 1
  %v2568 = vsel %vm1443, %v2567, %v2566
  %v2569 = vsel %vm1446, %v915, %v2568
  %v2570 = vrot.slane %v921, 7
  %v2571 = vsel %vm1449, %v2570, %v2569
  %v2572 = vrot.slane %v925, 6
  %v2573 = vsel %vm1452, %v2572, %v2571
  %v2574 = vrot.slane %v931, 5
  %v2575 = vsel %vm1455, %v2574, %v2573
  %v2576 = vrot.slane %v935, 4
  %v2577 = vsel %vm1458, %v2576, %v2575
  %v2578 = vrot.slane %v939, 3
  %v2579 = vrot.slane %v943, 2
  %v2580 = vsel %vm1440, %v2579, %v2578
  %v2581 = vrot.slane %v949, 1
  %v2582 = vsel %vm1443, %v2581, %v2580
  %v2583 = vsel %vm1446, %v953, %v2582
  %v2584 = vrot.slane %v959, 7
  %v2585 = vsel %vm1449, %v2584, %v2583
  %v2586 = vrot.slane %v963, 6
  %v2587 = vsel %vm1452, %v2586, %v2585
  %v2588 = vrot.slane %v969, 5
  %v2589 = vsel %vm1455, %v2588, %v2587
  %v2590 = vrot.slane %v973, 4
  %v2591 = vsel %vm1458, %v2590, %v2589
  %v2592 = vrot.slane %v941, 3
  %v2593 = vrot.slane %v945, 2
  %v2594 = vsel %vm1440, %v2593, %v2592
  %v2595 = vrot.slane %v951, 1
  %v2596 = vsel %vm1443, %v2595, %v2594
  %v2597 = vsel %vm1446, %v955, %v2596
  %v2598 = vrot.slane %v961, 7
  %v2599 = vsel %vm1449, %v2598, %v2597
  %v2600 = vrot.slane %v965, 6
  %v2601 = vsel %vm1452, %v2600, %v2599
  %v2602 = vrot.slane %v971, 5
  %v2603 = vsel %vm1455, %v2602, %v2601
  %v2604 = vrot.slane %v975, 4
  %v2605 = vsel %vm1458, %v2604, %v2603
  %v2614 = vadd.f32 %v2486, %v2507
  %v2615 = vadd.f32 %v2487, %v2521
  %v2616 = vadd.f32 %v2488, %v2535
  %v2617 = vadd.f32 %v2489, %v2549
  %v2618 = vadd.f32 %v2490, %v2563
  %v2619 = vadd.f32 %v2491, %v2577
  %v2620 = vadd.f32 %v2492, %v2591
  %v2621 = vadd.f32 %v2493, %v2605
  %v2622 = vrot.slane %v1205, 4
  %v2623 = vrot.slane %v1209, 3
  %v2624 = vsel %vm1440, %v2623, %v2622
  %v2625 = vrot.slane %v1215, 2
  %v2626 = vsel %vm1443, %v2625, %v2624
  %v2627 = vrot.slane %v1219, 1
  %v2628 = vsel %vm1446, %v2627, %v2626
  %v2629 = vsel %vm1449, %v1225, %v2628
  %v2630 = vrot.slane %v1229, 7
  %v2631 = vsel %vm1452, %v2630, %v2629
  %v2632 = vrot.slane %v1235, 6
  %v2633 = vsel %vm1455, %v2632, %v2631
  %v2634 = vrot.slane %v1239, 5
  %v2635 = vsel %vm1458, %v2634, %v2633
  %v2636 = vrot.slane %v1207, 4
  %v2637 = vrot.slane %v1211, 3
  %v2638 = vsel %vm1440, %v2637, %v2636
  %v2639 = vrot.slane %v1217, 2
  %v2640 = vsel %vm1443, %v2639, %v2638
  %v2641 = vrot.slane %v1221, 1
  %v2642 = vsel %vm1446, %v2641, %v2640
  %v2643 = vsel %vm1449, %v1227, %v2642
  %v2644 = vrot.slane %v1231, 7
  %v2645 = vsel %vm1452, %v2644, %v2643
  %v2646 = vrot.slane %v1237, 6
  %v2647 = vsel %vm1455, %v2646, %v2645
  %v2648 = vrot.slane %v1241, 5
  %v2649 = vsel %vm1458, %v2648, %v2647
  %v2650 = vrot.slane %v1245, 4
  %v2651 = vrot.slane %v1249, 3
  %v2652 = vsel %vm1440, %v2651, %v2650
  %v2653 = vrot.slane %v1255, 2
  %v2654 = vsel %vm1443, %v2653, %v2652
  %v2655 = vrot.slane %v1259, 1
  %v2656 = vsel %vm1446, %v2655, %v2654
  %v2657 = vsel %vm1449, %v1265, %v2656
  %v2658 = vrot.slane %v1269, 7
  %v2659 = vsel %vm1452, %v2658, %v2657
  %v2660 = vrot.slane %v1275, 6
  %v2661 = vsel %vm1455, %v2660, %v2659
  %v2662 = vrot.slane %v1279, 5
  %v2663 = vsel %vm1458, %v2662, %v2661
  %v2664 = vrot.slane %v1247, 4
  %v2665 = vrot.slane %v1251, 3
  %v2666 = vsel %vm1440, %v2665, %v2664
  %v2667 = vrot.slane %v1257, 2
  %v2668 = vsel %vm1443, %v2667, %v2666
  %v2669 = vrot.slane %v1261, 1
  %v2670 = vsel %vm1446, %v2669, %v2668
  %v2671 = vsel %vm1449, %v1267, %v2670
  %v2672 = vrot.slane %v1271, 7
  %v2673 = vsel %vm1452, %v2672, %v2671
  %v2674 = vrot.slane %v1277, 6
  %v2675 = vsel %vm1455, %v2674, %v2673
  %v2676 = vrot.slane %v1281, 5
  %v2677 = vsel %vm1458, %v2676, %v2675
  %v2678 = vrot.slane %v1285, 4
  %v2679 = vrot.slane %v1289, 3
  %v2680 = vsel %vm1440, %v2679, %v2678
  %v2681 = vrot.slane %v1295, 2
  %v2682 = vsel %vm1443, %v2681, %v2680
  %v2683 = vrot.slane %v1299, 1
  %v2684 = vsel %vm1446, %v2683, %v2682
  %v2685 = vsel %vm1449, %v1305, %v2684
  %v2686 = vrot.slane %v1309, 7
  %v2687 = vsel %vm1452, %v2686, %v2685
  %v2688 = vrot.slane %v1315, 6
  %v2689 = vsel %vm1455, %v2688, %v2687
  %v2690 = vrot.slane %v1319, 5
  %v2691 = vsel %vm1458, %v2690, %v2689
  %v2692 = vrot.slane %v1287, 4
  %v2693 = vrot.slane %v1291, 3
  %v2694 = vsel %vm1440, %v2693, %v2692
  %v2695 = vrot.slane %v1297, 2
  %v2696 = vsel %vm1443, %v2695, %v2694
  %v2697 = vrot.slane %v1301, 1
  %v2698 = vsel %vm1446, %v2697, %v2696
  %v2699 = vsel %vm1449, %v1307, %v2698
  %v2700 = vrot.slane %v1311, 7
  %v2701 = vsel %vm1452, %v2700, %v2699
  %v2702 = vrot.slane %v1317, 6
  %v2703 = vsel %vm1455, %v2702, %v2701
  %v2704 = vrot.slane %v1321, 5
  %v2705 = vsel %vm1458, %v2704, %v2703
  %v2706 = vrot.slane %v1325, 4
  %v2707 = vrot.slane %v1329, 3
  %v2708 = vsel %vm1440, %v2707, %v2706
  %v2709 = vrot.slane %v1335, 2
  %v2710 = vsel %vm1443, %v2709, %v2708
  %v2711 = vrot.slane %v1339, 1
  %v2712 = vsel %vm1446, %v2711, %v2710
  %v2713 = vsel %vm1449, %v1345, %v2712
  %v2714 = vrot.slane %v1349, 7
  %v2715 = vsel %vm1452, %v2714, %v2713
  %v2716 = vrot.slane %v1355, 6
  %v2717 = vsel %vm1455, %v2716, %v2715
  %v2718 = vrot.slane %v1359, 5
  %v2719 = vsel %vm1458, %v2718, %v2717
  %v2720 = vrot.slane %v1327, 4
  %v2721 = vrot.slane %v1331, 3
  %v2722 = vsel %vm1440, %v2721, %v2720
  %v2723 = vrot.slane %v1337, 2
  %v2724 = vsel %vm1443, %v2723, %v2722
  %v2725 = vrot.slane %v1341, 1
  %v2726 = vsel %vm1446, %v2725, %v2724
  %v2727 = vsel %vm1449, %v1347, %v2726
  %v2728 = vrot.slane %v1351, 7
  %v2729 = vsel %vm1452, %v2728, %v2727
  %v2730 = vrot.slane %v1357, 6
  %v2731 = vsel %vm1455, %v2730, %v2729
  %v2732 = vrot.slane %v1361, 5
  %v2733 = vsel %vm1458, %v2732, %v2731
  %v2742 = vadd.f32 %v2614, %v2635
  %v2743 = vadd.f32 %v2615, %v2649
  %v2744 = vadd.f32 %v2616, %v2663
  %v2745 = vadd.f32 %v2617, %v2677
  %v2746 = vadd.f32 %v2618, %v2691
  %v2747 = vadd.f32 %v2619, %v2705
  %v2748 = vadd.f32 %v2620, %v2719
  %v2749 = vadd.f32 %v2621, %v2733
  %v2750 = vmax.f32 %v2742, 0.0
  %v2751 = vmax.f32 %v2743, 0.0
  %v2752 = vmax.f32 %v2744, 0.0
  %v2753 = vmax.f32 %v2745, 0.0
  %v2754 = vmax.f32 %v2746, 0.0
  %v2755 = vmax.f32 %v2747, 0.0
  %v2756 = vmax.f32 %v2748, 0.0
  %v2757 = vmax.f32 %v2749, 0.0
  %v2758 = vmax.f32 %v2358, %v2750
  %v2759 = vmax.f32 %v2359, %v2751
  %v2760 = vmax.f32 %v2360, %v2752
  %v2761 = vmax.f32 %v2361, %v2753
  %v2762 = vmax.f32 %v2362, %v2754
  %v2763 = vmax.f32 %v2363, %v2755
  %v2764 = vmax.f32 %v2364, %v2756
  %v2765 = vmax.f32 %v2365, %v2757
  %v2766 = vrot.slane %v433, 3
  %v2767 = vrot.slane %v437, 2
  %v2768 = vsel %vm1440, %v2767, %v2766
  %v2769 = vrot.slane %v443, 1
  %v2770 = vsel %vm1443, %v2769, %v2768
  %v2771 = vsel %vm1446, %v447, %v2770
  %v2772 = vrot.slane %v453, 7
  %v2773 = vsel %vm1449, %v2772, %v2771
  %v2774 = vrot.slane %v457, 6
  %v2775 = vsel %vm1452, %v2774, %v2773
  %v2776 = vrot.slane %v463, 5
  %v2777 = vsel %vm1455, %v2776, %v2775
  %v2778 = vrot.slane %v467, 4
  %v2779 = vsel %vm1458, %v2778, %v2777
  %v2780 = vrot.slane %v435, 3
  %v2781 = vrot.slane %v439, 2
  %v2782 = vsel %vm1440, %v2781, %v2780
  %v2783 = vrot.slane %v445, 1
  %v2784 = vsel %vm1443, %v2783, %v2782
  %v2785 = vsel %vm1446, %v449, %v2784
  %v2786 = vrot.slane %v455, 7
  %v2787 = vsel %vm1449, %v2786, %v2785
  %v2788 = vrot.slane %v459, 6
  %v2789 = vsel %vm1452, %v2788, %v2787
  %v2790 = vrot.slane %v465, 5
  %v2791 = vsel %vm1455, %v2790, %v2789
  %v2792 = vrot.slane %v469, 4
  %v2793 = vsel %vm1458, %v2792, %v2791
  %v2794 = vrot.slane %v473, 3
  %v2795 = vrot.slane %v477, 2
  %v2796 = vsel %vm1440, %v2795, %v2794
  %v2797 = vrot.slane %v483, 1
  %v2798 = vsel %vm1443, %v2797, %v2796
  %v2799 = vsel %vm1446, %v487, %v2798
  %v2800 = vrot.slane %v493, 7
  %v2801 = vsel %vm1449, %v2800, %v2799
  %v2802 = vrot.slane %v497, 6
  %v2803 = vsel %vm1452, %v2802, %v2801
  %v2804 = vrot.slane %v503, 5
  %v2805 = vsel %vm1455, %v2804, %v2803
  %v2806 = vrot.slane %v507, 4
  %v2807 = vsel %vm1458, %v2806, %v2805
  %v2808 = vrot.slane %v475, 3
  %v2809 = vrot.slane %v479, 2
  %v2810 = vsel %vm1440, %v2809, %v2808
  %v2811 = vrot.slane %v485, 1
  %v2812 = vsel %vm1443, %v2811, %v2810
  %v2813 = vsel %vm1446, %v489, %v2812
  %v2814 = vrot.slane %v495, 7
  %v2815 = vsel %vm1449, %v2814, %v2813
  %v2816 = vrot.slane %v499, 6
  %v2817 = vsel %vm1452, %v2816, %v2815
  %v2818 = vrot.slane %v505, 5
  %v2819 = vsel %vm1455, %v2818, %v2817
  %v2820 = vrot.slane %v509, 4
  %v2821 = vsel %vm1458, %v2820, %v2819
  %v2822 = vrot.slane %v513, 3
  %v2823 = vrot.slane %v517, 2
  %v2824 = vsel %vm1440, %v2823, %v2822
  %v2825 = vrot.slane %v523, 1
  %v2826 = vsel %vm1443, %v2825, %v2824
  %v2827 = vsel %vm1446, %v527, %v2826
  %v2828 = vrot.slane %v533, 7
  %v2829 = vsel %vm1449, %v2828, %v2827
  %v2830 = vrot.slane %v537, 6
  %v2831 = vsel %vm1452, %v2830, %v2829
  %v2832 = vrot.slane %v543, 5
  %v2833 = vsel %vm1455, %v2832, %v2831
  %v2834 = vrot.slane %v547, 4
  %v2835 = vsel %vm1458, %v2834, %v2833
  %v2836 = vrot.slane %v515, 3
  %v2837 = vrot.slane %v519, 2
  %v2838 = vsel %vm1440, %v2837, %v2836
  %v2839 = vrot.slane %v525, 1
  %v2840 = vsel %vm1443, %v2839, %v2838
  %v2841 = vsel %vm1446, %v529, %v2840
  %v2842 = vrot.slane %v535, 7
  %v2843 = vsel %vm1449, %v2842, %v2841
  %v2844 = vrot.slane %v539, 6
  %v2845 = vsel %vm1452, %v2844, %v2843
  %v2846 = vrot.slane %v545, 5
  %v2847 = vsel %vm1455, %v2846, %v2845
  %v2848 = vrot.slane %v549, 4
  %v2849 = vsel %vm1458, %v2848, %v2847
  %v2850 = vrot.slane %v553, 3
  %v2851 = vrot.slane %v557, 2
  %v2852 = vsel %vm1440, %v2851, %v2850
  %v2853 = vrot.slane %v563, 1
  %v2854 = vsel %vm1443, %v2853, %v2852
  %v2855 = vsel %vm1446, %v567, %v2854
  %v2856 = vrot.slane %v573, 7
  %v2857 = vsel %vm1449, %v2856, %v2855
  %v2858 = vrot.slane %v577, 6
  %v2859 = vsel %vm1452, %v2858, %v2857
  %v2860 = vrot.slane %v583, 5
  %v2861 = vsel %vm1455, %v2860, %v2859
  %v2862 = vrot.slane %v587, 4
  %v2863 = vsel %vm1458, %v2862, %v2861
  %v2864 = vrot.slane %v555, 3
  %v2865 = vrot.slane %v559, 2
  %v2866 = vsel %vm1440, %v2865, %v2864
  %v2867 = vrot.slane %v565, 1
  %v2868 = vsel %vm1443, %v2867, %v2866
  %v2869 = vsel %vm1446, %v569, %v2868
  %v2870 = vrot.slane %v575, 7
  %v2871 = vsel %vm1449, %v2870, %v2869
  %v2872 = vrot.slane %v579, 6
  %v2873 = vsel %vm1452, %v2872, %v2871
  %v2874 = vrot.slane %v585, 5
  %v2875 = vsel %vm1455, %v2874, %v2873
  %v2876 = vrot.slane %v589, 4
  %v2877 = vsel %vm1458, %v2876, %v2875
  %v2886 = vadd.f32 %v1368, %v2779
  %v2887 = vadd.f32 %v1372, %v2793
  %v2888 = vadd.f32 %v1368, %v2807
  %v2889 = vadd.f32 %v1372, %v2821
  %v2890 = vadd.f32 %v1368, %v2835
  %v2891 = vadd.f32 %v1372, %v2849
  %v2892 = vadd.f32 %v1368, %v2863
  %v2893 = vadd.f32 %v1372, %v2877
  %v2894 = vrot.slane %v819, 4
  %v2895 = vrot.slane %v823, 3
  %v2896 = vsel %vm1440, %v2895, %v2894
  %v2897 = vrot.slane %v829, 2
  %v2898 = vsel %vm1443, %v2897, %v2896
  %v2899 = vrot.slane %v833, 1
  %v2900 = vsel %vm1446, %v2899, %v2898
  %v2901 = vsel %vm1449, %v839, %v2900
  %v2902 = vrot.slane %v843, 7
  %v2903 = vsel %vm1452, %v2902, %v2901
  %v2904 = vrot.slane %v849, 6
  %v2905 = vsel %vm1455, %v2904, %v2903
  %v2906 = vrot.slane %v853, 5
  %v2907 = vsel %vm1458, %v2906, %v2905
  %v2908 = vrot.slane %v821, 4
  %v2909 = vrot.slane %v825, 3
  %v2910 = vsel %vm1440, %v2909, %v2908
  %v2911 = vrot.slane %v831, 2
  %v2912 = vsel %vm1443, %v2911, %v2910
  %v2913 = vrot.slane %v835, 1
  %v2914 = vsel %vm1446, %v2913, %v2912
  %v2915 = vsel %vm1449, %v841, %v2914
  %v2916 = vrot.slane %v845, 7
  %v2917 = vsel %vm1452, %v2916, %v2915
  %v2918 = vrot.slane %v851, 6
  %v2919 = vsel %vm1455, %v2918, %v2917
  %v2920 = vrot.slane %v855, 5
  %v2921 = vsel %vm1458, %v2920, %v2919
  %v2922 = vrot.slane %v859, 4
  %v2923 = vrot.slane %v863, 3
  %v2924 = vsel %vm1440, %v2923, %v2922
  %v2925 = vrot.slane %v869, 2
  %v2926 = vsel %vm1443, %v2925, %v2924
  %v2927 = vrot.slane %v873, 1
  %v2928 = vsel %vm1446, %v2927, %v2926
  %v2929 = vsel %vm1449, %v879, %v2928
  %v2930 = vrot.slane %v883, 7
  %v2931 = vsel %vm1452, %v2930, %v2929
  %v2932 = vrot.slane %v889, 6
  %v2933 = vsel %vm1455, %v2932, %v2931
  %v2934 = vrot.slane %v893, 5
  %v2935 = vsel %vm1458, %v2934, %v2933
  %v2936 = vrot.slane %v861, 4
  %v2937 = vrot.slane %v865, 3
  %v2938 = vsel %vm1440, %v2937, %v2936
  %v2939 = vrot.slane %v871, 2
  %v2940 = vsel %vm1443, %v2939, %v2938
  %v2941 = vrot.slane %v875, 1
  %v2942 = vsel %vm1446, %v2941, %v2940
  %v2943 = vsel %vm1449, %v881, %v2942
  %v2944 = vrot.slane %v885, 7
  %v2945 = vsel %vm1452, %v2944, %v2943
  %v2946 = vrot.slane %v891, 6
  %v2947 = vsel %vm1455, %v2946, %v2945
  %v2948 = vrot.slane %v895, 5
  %v2949 = vsel %vm1458, %v2948, %v2947
  %v2950 = vrot.slane %v899, 4
  %v2951 = vrot.slane %v903, 3
  %v2952 = vsel %vm1440, %v2951, %v2950
  %v2953 = vrot.slane %v909, 2
  %v2954 = vsel %vm1443, %v2953, %v2952
  %v2955 = vrot.slane %v913, 1
  %v2956 = vsel %vm1446, %v2955, %v2954
  %v2957 = vsel %vm1449, %v919, %v2956
  %v2958 = vrot.slane %v923, 7
  %v2959 = vsel %vm1452, %v2958, %v2957
  %v2960 = vrot.slane %v929, 6
  %v2961 = vsel %vm1455, %v2960, %v2959
  %v2962 = vrot.slane %v933, 5
  %v2963 = vsel %vm1458, %v2962, %v2961
  %v2964 = vrot.slane %v901, 4
  %v2965 = vrot.slane %v905, 3
  %v2966 = vsel %vm1440, %v2965, %v2964
  %v2967 = vrot.slane %v911, 2
  %v2968 = vsel %vm1443, %v2967, %v2966
  %v2969 = vrot.slane %v915, 1
  %v2970 = vsel %vm1446, %v2969, %v2968
  %v2971 = vsel %vm1449, %v921, %v2970
  %v2972 = vrot.slane %v925, 7
  %v2973 = vsel %vm1452, %v2972, %v2971
  %v2974 = vrot.slane %v931, 6
  %v2975 = vsel %vm1455, %v2974, %v2973
  %v2976 = vrot.slane %v935, 5
  %v2977 = vsel %vm1458, %v2976, %v2975
  %v2978 = vrot.slane %v939, 4
  %v2979 = vrot.slane %v943, 3
  %v2980 = vsel %vm1440, %v2979, %v2978
  %v2981 = vrot.slane %v949, 2
  %v2982 = vsel %vm1443, %v2981, %v2980
  %v2983 = vrot.slane %v953, 1
  %v2984 = vsel %vm1446, %v2983, %v2982
  %v2985 = vsel %vm1449, %v959, %v2984
  %v2986 = vrot.slane %v963, 7
  %v2987 = vsel %vm1452, %v2986, %v2985
  %v2988 = vrot.slane %v969, 6
  %v2989 = vsel %vm1455, %v2988, %v2987
  %v2990 = vrot.slane %v973, 5
  %v2991 = vsel %vm1458, %v2990, %v2989
  %v2992 = vrot.slane %v941, 4
  %v2993 = vrot.slane %v945, 3
  %v2994 = vsel %vm1440, %v2993, %v2992
  %v2995 = vrot.slane %v951, 2
  %v2996 = vsel %vm1443, %v2995, %v2994
  %v2997 = vrot.slane %v955, 1
  %v2998 = vsel %vm1446, %v2997, %v2996
  %v2999 = vsel %vm1449, %v961, %v2998
  %v3000 = vrot.slane %v965, 7
  %v3001 = vsel %vm1452, %v3000, %v2999
  %v3002 = vrot.slane %v971, 6
  %v3003 = vsel %vm1455, %v3002, %v3001
  %v3004 = vrot.slane %v975, 5
  %v3005 = vsel %vm1458, %v3004, %v3003
  %v3014 = vadd.f32 %v2886, %v2907
  %v3015 = vadd.f32 %v2887, %v2921
  %v3016 = vadd.f32 %v2888, %v2935
  %v3017 = vadd.f32 %v2889, %v2949
  %v3018 = vadd.f32 %v2890, %v2963
  %v3019 = vadd.f32 %v2891, %v2977
  %v3020 = vadd.f32 %v2892, %v2991
  %v3021 = vadd.f32 %v2893, %v3005
  %v3022 = vrot.slane %v1205, 5
  %v3023 = vrot.slane %v1209, 4
  %v3024 = vsel %vm1440, %v3023, %v3022
  %v3025 = vrot.slane %v1215, 3
  %v3026 = vsel %vm1443, %v3025, %v3024
  %v3027 = vrot.slane %v1219, 2
  %v3028 = vsel %vm1446, %v3027, %v3026
  %v3029 = vrot.slane %v1225, 1
  %v3030 = vsel %vm1449, %v3029, %v3028
  %v3031 = vsel %vm1452, %v1229, %v3030
  %v3032 = vrot.slane %v1235, 7
  %v3033 = vsel %vm1455, %v3032, %v3031
  %v3034 = vrot.slane %v1239, 6
  %v3035 = vsel %vm1458, %v3034, %v3033
  %v3036 = vrot.slane %v1207, 5
  %v3037 = vrot.slane %v1211, 4
  %v3038 = vsel %vm1440, %v3037, %v3036
  %v3039 = vrot.slane %v1217, 3
  %v3040 = vsel %vm1443, %v3039, %v3038
  %v3041 = vrot.slane %v1221, 2
  %v3042 = vsel %vm1446, %v3041, %v3040
  %v3043 = vrot.slane %v1227, 1
  %v3044 = vsel %vm1449, %v3043, %v3042
  %v3045 = vsel %vm1452, %v1231, %v3044
  %v3046 = vrot.slane %v1237, 7
  %v3047 = vsel %vm1455, %v3046, %v3045
  %v3048 = vrot.slane %v1241, 6
  %v3049 = vsel %vm1458, %v3048, %v3047
  %v3050 = vrot.slane %v1245, 5
  %v3051 = vrot.slane %v1249, 4
  %v3052 = vsel %vm1440, %v3051, %v3050
  %v3053 = vrot.slane %v1255, 3
  %v3054 = vsel %vm1443, %v3053, %v3052
  %v3055 = vrot.slane %v1259, 2
  %v3056 = vsel %vm1446, %v3055, %v3054
  %v3057 = vrot.slane %v1265, 1
  %v3058 = vsel %vm1449, %v3057, %v3056
  %v3059 = vsel %vm1452, %v1269, %v3058
  %v3060 = vrot.slane %v1275, 7
  %v3061 = vsel %vm1455, %v3060, %v3059
  %v3062 = vrot.slane %v1279, 6
  %v3063 = vsel %vm1458, %v3062, %v3061
  %v3064 = vrot.slane %v1247, 5
  %v3065 = vrot.slane %v1251, 4
  %v3066 = vsel %vm1440, %v3065, %v3064
  %v3067 = vrot.slane %v1257, 3
  %v3068 = vsel %vm1443, %v3067, %v3066
  %v3069 = vrot.slane %v1261, 2
  %v3070 = vsel %vm1446, %v3069, %v3068
  %v3071 = vrot.slane %v1267, 1
  %v3072 = vsel %vm1449, %v3071, %v3070
  %v3073 = vsel %vm1452, %v1271, %v3072
  %v3074 = vrot.slane %v1277, 7
  %v3075 = vsel %vm1455, %v3074, %v3073
  %v3076 = vrot.slane %v1281, 6
  %v3077 = vsel %vm1458, %v3076, %v3075
  %v3078 = vrot.slane %v1285, 5
  %v3079 = vrot.slane %v1289, 4
  %v3080 = vsel %vm1440, %v3079, %v3078
  %v3081 = vrot.slane %v1295, 3
  %v3082 = vsel %vm1443, %v3081, %v3080
  %v3083 = vrot.slane %v1299, 2
  %v3084 = vsel %vm1446, %v3083, %v3082
  %v3085 = vrot.slane %v1305, 1
  %v3086 = vsel %vm1449, %v3085, %v3084
  %v3087 = vsel %vm1452, %v1309, %v3086
  %v3088 = vrot.slane %v1315, 7
  %v3089 = vsel %vm1455, %v3088, %v3087
  %v3090 = vrot.slane %v1319, 6
  %v3091 = vsel %vm1458, %v3090, %v3089
  %v3092 = vrot.slane %v1287, 5
  %v3093 = vrot.slane %v1291, 4
  %v3094 = vsel %vm1440, %v3093, %v3092
  %v3095 = vrot.slane %v1297, 3
  %v3096 = vsel %vm1443, %v3095, %v3094
  %v3097 = vrot.slane %v1301, 2
  %v3098 = vsel %vm1446, %v3097, %v3096
  %v3099 = vrot.slane %v1307, 1
  %v3100 = vsel %vm1449, %v3099, %v3098
  %v3101 = vsel %vm1452, %v1311, %v3100
  %v3102 = vrot.slane %v1317, 7
  %v3103 = vsel %vm1455, %v3102, %v3101
  %v3104 = vrot.slane %v1321, 6
  %v3105 = vsel %vm1458, %v3104, %v3103
  %v3106 = vrot.slane %v1325, 5
  %v3107 = vrot.slane %v1329, 4
  %v3108 = vsel %vm1440, %v3107, %v3106
  %v3109 = vrot.slane %v1335, 3
  %v3110 = vsel %vm1443, %v3109, %v3108
  %v3111 = vrot.slane %v1339, 2
  %v3112 = vsel %vm1446, %v3111, %v3110
  %v3113 = vrot.slane %v1345, 1
  %v3114 = vsel %vm1449, %v3113, %v3112
  %v3115 = vsel %vm1452, %v1349, %v3114
  %v3116 = vrot.slane %v1355, 7
  %v3117 = vsel %vm1455, %v3116, %v3115
  %v3118 = vrot.slane %v1359, 6
  %v3119 = vsel %vm1458, %v3118, %v3117
  %v3120 = vrot.slane %v1327, 5
  %v3121 = vrot.slane %v1331, 4
  %v3122 = vsel %vm1440, %v3121, %v3120
  %v3123 = vrot.slane %v1337, 3
  %v3124 = vsel %vm1443, %v3123, %v3122
  %v3125 = vrot.slane %v1341, 2
  %v3126 = vsel %vm1446, %v3125, %v3124
  %v3127 = vrot.slane %v1347, 1
  %v3128 = vsel %vm1449, %v3127, %v3126
  %v3129 = vsel %vm1452, %v1351, %v3128
  %v3130 = vrot.slane %v1357, 7
  %v3131 = vsel %vm1455, %v3130, %v3129
  %v3132 = vrot.slane %v1361, 6
  %v3133 = vsel %vm1458, %v3132, %v3131
  %v3142 = vadd.f32 %v3014, %v3035
  %v3143 = vadd.f32 %v3015, %v3049
  %v3144 = vadd.f32 %v3016, %v3063
  %v3145 = vadd.f32 %v3017, %v3077
  %v3146 = vadd.f32 %v3018, %v3091
  %v3147 = vadd.f32 %v3019, %v3105
  %v3148 = vadd.f32 %v3020, %v3119
  %v3149 = vadd.f32 %v3021, %v3133
  %v3150 = vmax.f32 %v3142, 0.0
  %v3151 = vmax.f32 %v3143, 0.0
  %v3152 = vmax.f32 %v3144, 0.0
  %v3153 = vmax.f32 %v3145, 0.0
  %v3154 = vmax.f32 %v3146, 0.0
  %v3155 = vmax.f32 %v3147, 0.0
  %v3156 = vmax.f32 %v3148, 0.0
  %v3157 = vmax.f32 %v3149, 0.0
  %v3158 = vmax.f32 %v2758, %v3150
  %v3159 = vmax.f32 %v2759, %v3151
  %v3160 = vmax.f32 %v2760, %v3152
  %v3161 = vmax.f32 %v2761, %v3153
  %v3162 = vmax.f32 %v2762, %v3154
  %v3163 = vmax.f32 %v2763, %v3155
  %v3164 = vmax.f32 %v2764, %v3156
  %v3165 = vmax.f32 %v2765, %v3157
  %v3166 = vrot.slane %v433, 4
  %v3167 = vrot.slane %v437, 3
  %v3168 = vsel %vm1440, %v3167, %v3166
  %v3169 = vrot.slane %v443, 2
  %v3170 = vsel %vm1443, %v3169, %v3168
  %v3171 = vrot.slane %v447, 1
  %v3172 = vsel %vm1446, %v3171, %v3170
  %v3173 = vsel %vm1449, %v453, %v3172
  %v3174 = vrot.slane %v457, 7
  %v3175 = vsel %vm1452, %v3174, %v3173
  %v3176 = vrot.slane %v463, 6
  %v3177 = vsel %vm1455, %v3176, %v3175
  %v3178 = vrot.slane %v467, 5
  %v3179 = vsel %vm1458, %v3178, %v3177
  %v3180 = vrot.slane %v435, 4
  %v3181 = vrot.slane %v439, 3
  %v3182 = vsel %vm1440, %v3181, %v3180
  %v3183 = vrot.slane %v445, 2
  %v3184 = vsel %vm1443, %v3183, %v3182
  %v3185 = vrot.slane %v449, 1
  %v3186 = vsel %vm1446, %v3185, %v3184
  %v3187 = vsel %vm1449, %v455, %v3186
  %v3188 = vrot.slane %v459, 7
  %v3189 = vsel %vm1452, %v3188, %v3187
  %v3190 = vrot.slane %v465, 6
  %v3191 = vsel %vm1455, %v3190, %v3189
  %v3192 = vrot.slane %v469, 5
  %v3193 = vsel %vm1458, %v3192, %v3191
  %v3194 = vrot.slane %v473, 4
  %v3195 = vrot.slane %v477, 3
  %v3196 = vsel %vm1440, %v3195, %v3194
  %v3197 = vrot.slane %v483, 2
  %v3198 = vsel %vm1443, %v3197, %v3196
  %v3199 = vrot.slane %v487, 1
  %v3200 = vsel %vm1446, %v3199, %v3198
  %v3201 = vsel %vm1449, %v493, %v3200
  %v3202 = vrot.slane %v497, 7
  %v3203 = vsel %vm1452, %v3202, %v3201
  %v3204 = vrot.slane %v503, 6
  %v3205 = vsel %vm1455, %v3204, %v3203
  %v3206 = vrot.slane %v507, 5
  %v3207 = vsel %vm1458, %v3206, %v3205
  %v3208 = vrot.slane %v475, 4
  %v3209 = vrot.slane %v479, 3
  %v3210 = vsel %vm1440, %v3209, %v3208
  %v3211 = vrot.slane %v485, 2
  %v3212 = vsel %vm1443, %v3211, %v3210
  %v3213 = vrot.slane %v489, 1
  %v3214 = vsel %vm1446, %v3213, %v3212
  %v3215 = vsel %vm1449, %v495, %v3214
  %v3216 = vrot.slane %v499, 7
  %v3217 = vsel %vm1452, %v3216, %v3215
  %v3218 = vrot.slane %v505, 6
  %v3219 = vsel %vm1455, %v3218, %v3217
  %v3220 = vrot.slane %v509, 5
  %v3221 = vsel %vm1458, %v3220, %v3219
  %v3222 = vrot.slane %v513, 4
  %v3223 = vrot.slane %v517, 3
  %v3224 = vsel %vm1440, %v3223, %v3222
  %v3225 = vrot.slane %v523, 2
  %v3226 = vsel %vm1443, %v3225, %v3224
  %v3227 = vrot.slane %v527, 1
  %v3228 = vsel %vm1446, %v3227, %v3226
  %v3229 = vsel %vm1449, %v533, %v3228
  %v3230 = vrot.slane %v537, 7
  %v3231 = vsel %vm1452, %v3230, %v3229
  %v3232 = vrot.slane %v543, 6
  %v3233 = vsel %vm1455, %v3232, %v3231
  %v3234 = vrot.slane %v547, 5
  %v3235 = vsel %vm1458, %v3234, %v3233
  %v3236 = vrot.slane %v515, 4
  %v3237 = vrot.slane %v519, 3
  %v3238 = vsel %vm1440, %v3237, %v3236
  %v3239 = vrot.slane %v525, 2
  %v3240 = vsel %vm1443, %v3239, %v3238
  %v3241 = vrot.slane %v529, 1
  %v3242 = vsel %vm1446, %v3241, %v3240
  %v3243 = vsel %vm1449, %v535, %v3242
  %v3244 = vrot.slane %v539, 7
  %v3245 = vsel %vm1452, %v3244, %v3243
  %v3246 = vrot.slane %v545, 6
  %v3247 = vsel %vm1455, %v3246, %v3245
  %v3248 = vrot.slane %v549, 5
  %v3249 = vsel %vm1458, %v3248, %v3247
  %v3250 = vrot.slane %v553, 4
  %v3251 = vrot.slane %v557, 3
  %v3252 = vsel %vm1440, %v3251, %v3250
  %v3253 = vrot.slane %v563, 2
  %v3254 = vsel %vm1443, %v3253, %v3252
  %v3255 = vrot.slane %v567, 1
  %v3256 = vsel %vm1446, %v3255, %v3254
  %v3257 = vsel %vm1449, %v573, %v3256
  %v3258 = vrot.slane %v577, 7
  %v3259 = vsel %vm1452, %v3258, %v3257
  %v3260 = vrot.slane %v583, 6
  %v3261 = vsel %vm1455, %v3260, %v3259
  %v3262 = vrot.slane %v587, 5
  %v3263 = vsel %vm1458, %v3262, %v3261
  %v3264 = vrot.slane %v555, 4
  %v3265 = vrot.slane %v559, 3
  %v3266 = vsel %vm1440, %v3265, %v3264
  %v3267 = vrot.slane %v565, 2
  %v3268 = vsel %vm1443, %v3267, %v3266
  %v3269 = vrot.slane %v569, 1
  %v3270 = vsel %vm1446, %v3269, %v3268
  %v3271 = vsel %vm1449, %v575, %v3270
  %v3272 = vrot.slane %v579, 7
  %v3273 = vsel %vm1452, %v3272, %v3271
  %v3274 = vrot.slane %v585, 6
  %v3275 = vsel %vm1455, %v3274, %v3273
  %v3276 = vrot.slane %v589, 5
  %v3277 = vsel %vm1458, %v3276, %v3275
  %v3286 = vadd.f32 %v1368, %v3179
  %v3287 = vadd.f32 %v1372, %v3193
  %v3288 = vadd.f32 %v1368, %v3207
  %v3289 = vadd.f32 %v1372, %v3221
  %v3290 = vadd.f32 %v1368, %v3235
  %v3291 = vadd.f32 %v1372, %v3249
  %v3292 = vadd.f32 %v1368, %v3263
  %v3293 = vadd.f32 %v1372, %v3277
  %v3294 = vrot.slane %v819, 5
  %v3295 = vrot.slane %v823, 4
  %v3296 = vsel %vm1440, %v3295, %v3294
  %v3297 = vrot.slane %v829, 3
  %v3298 = vsel %vm1443, %v3297, %v3296
  %v3299 = vrot.slane %v833, 2
  %v3300 = vsel %vm1446, %v3299, %v3298
  %v3301 = vrot.slane %v839, 1
  %v3302 = vsel %vm1449, %v3301, %v3300
  %v3303 = vsel %vm1452, %v843, %v3302
  %v3304 = vrot.slane %v849, 7
  %v3305 = vsel %vm1455, %v3304, %v3303
  %v3306 = vrot.slane %v853, 6
  %v3307 = vsel %vm1458, %v3306, %v3305
  %v3308 = vrot.slane %v821, 5
  %v3309 = vrot.slane %v825, 4
  %v3310 = vsel %vm1440, %v3309, %v3308
  %v3311 = vrot.slane %v831, 3
  %v3312 = vsel %vm1443, %v3311, %v3310
  %v3313 = vrot.slane %v835, 2
  %v3314 = vsel %vm1446, %v3313, %v3312
  %v3315 = vrot.slane %v841, 1
  %v3316 = vsel %vm1449, %v3315, %v3314
  %v3317 = vsel %vm1452, %v845, %v3316
  %v3318 = vrot.slane %v851, 7
  %v3319 = vsel %vm1455, %v3318, %v3317
  %v3320 = vrot.slane %v855, 6
  %v3321 = vsel %vm1458, %v3320, %v3319
  %v3322 = vrot.slane %v859, 5
  %v3323 = vrot.slane %v863, 4
  %v3324 = vsel %vm1440, %v3323, %v3322
  %v3325 = vrot.slane %v869, 3
  %v3326 = vsel %vm1443, %v3325, %v3324
  %v3327 = vrot.slane %v873, 2
  %v3328 = vsel %vm1446, %v3327, %v3326
  %v3329 = vrot.slane %v879, 1
  %v3330 = vsel %vm1449, %v3329, %v3328
  %v3331 = vsel %vm1452, %v883, %v3330
  %v3332 = vrot.slane %v889, 7
  %v3333 = vsel %vm1455, %v3332, %v3331
  %v3334 = vrot.slane %v893, 6
  %v3335 = vsel %vm1458, %v3334, %v3333
  %v3336 = vrot.slane %v861, 5
  %v3337 = vrot.slane %v865, 4
  %v3338 = vsel %vm1440, %v3337, %v3336
  %v3339 = vrot.slane %v871, 3
  %v3340 = vsel %vm1443, %v3339, %v3338
  %v3341 = vrot.slane %v875, 2
  %v3342 = vsel %vm1446, %v3341, %v3340
  %v3343 = vrot.slane %v881, 1
  %v3344 = vsel %vm1449, %v3343, %v3342
  %v3345 = vsel %vm1452, %v885, %v3344
  %v3346 = vrot.slane %v891, 7
  %v3347 = vsel %vm1455, %v3346, %v3345
  %v3348 = vrot.slane %v895, 6
  %v3349 = vsel %vm1458, %v3348, %v3347
  %v3350 = vrot.slane %v899, 5
  %v3351 = vrot.slane %v903, 4
  %v3352 = vsel %vm1440, %v3351, %v3350
  %v3353 = vrot.slane %v909, 3
  %v3354 = vsel %vm1443, %v3353, %v3352
  %v3355 = vrot.slane %v913, 2
  %v3356 = vsel %vm1446, %v3355, %v3354
  %v3357 = vrot.slane %v919, 1
  %v3358 = vsel %vm1449, %v3357, %v3356
  %v3359 = vsel %vm1452, %v923, %v3358
  %v3360 = vrot.slane %v929, 7
  %v3361 = vsel %vm1455, %v3360, %v3359
  %v3362 = vrot.slane %v933, 6
  %v3363 = vsel %vm1458, %v3362, %v3361
  %v3364 = vrot.slane %v901, 5
  %v3365 = vrot.slane %v905, 4
  %v3366 = vsel %vm1440, %v3365, %v3364
  %v3367 = vrot.slane %v911, 3
  %v3368 = vsel %vm1443, %v3367, %v3366
  %v3369 = vrot.slane %v915, 2
  %v3370 = vsel %vm1446, %v3369, %v3368
  %v3371 = vrot.slane %v921, 1
  %v3372 = vsel %vm1449, %v3371, %v3370
  %v3373 = vsel %vm1452, %v925, %v3372
  %v3374 = vrot.slane %v931, 7
  %v3375 = vsel %vm1455, %v3374, %v3373
  %v3376 = vrot.slane %v935, 6
  %v3377 = vsel %vm1458, %v3376, %v3375
  %v3378 = vrot.slane %v939, 5
  %v3379 = vrot.slane %v943, 4
  %v3380 = vsel %vm1440, %v3379, %v3378
  %v3381 = vrot.slane %v949, 3
  %v3382 = vsel %vm1443, %v3381, %v3380
  %v3383 = vrot.slane %v953, 2
  %v3384 = vsel %vm1446, %v3383, %v3382
  %v3385 = vrot.slane %v959, 1
  %v3386 = vsel %vm1449, %v3385, %v3384
  %v3387 = vsel %vm1452, %v963, %v3386
  %v3388 = vrot.slane %v969, 7
  %v3389 = vsel %vm1455, %v3388, %v3387
  %v3390 = vrot.slane %v973, 6
  %v3391 = vsel %vm1458, %v3390, %v3389
  %v3392 = vrot.slane %v941, 5
  %v3393 = vrot.slane %v945, 4
  %v3394 = vsel %vm1440, %v3393, %v3392
  %v3395 = vrot.slane %v951, 3
  %v3396 = vsel %vm1443, %v3395, %v3394
  %v3397 = vrot.slane %v955, 2
  %v3398 = vsel %vm1446, %v3397, %v3396
  %v3399 = vrot.slane %v961, 1
  %v3400 = vsel %vm1449, %v3399, %v3398
  %v3401 = vsel %vm1452, %v965, %v3400
  %v3402 = vrot.slane %v971, 7
  %v3403 = vsel %vm1455, %v3402, %v3401
  %v3404 = vrot.slane %v975, 6
  %v3405 = vsel %vm1458, %v3404, %v3403
  %v3414 = vadd.f32 %v3286, %v3307
  %v3415 = vadd.f32 %v3287, %v3321
  %v3416 = vadd.f32 %v3288, %v3335
  %v3417 = vadd.f32 %v3289, %v3349
  %v3418 = vadd.f32 %v3290, %v3363
  %v3419 = vadd.f32 %v3291, %v3377
  %v3420 = vadd.f32 %v3292, %v3391
  %v3421 = vadd.f32 %v3293, %v3405
  %v3422 = vrot.slane %v1205, 6
  %v3423 = vrot.slane %v1209, 5
  %v3424 = vsel %vm1440, %v3423, %v3422
  %v3425 = vrot.slane %v1215, 4
  %v3426 = vsel %vm1443, %v3425, %v3424
  %v3427 = vrot.slane %v1219, 3
  %v3428 = vsel %vm1446, %v3427, %v3426
  %v3429 = vrot.slane %v1225, 2
  %v3430 = vsel %vm1449, %v3429, %v3428
  %v3431 = vrot.slane %v1229, 1
  %v3432 = vsel %vm1452, %v3431, %v3430
  %v3433 = vsel %vm1455, %v1235, %v3432
  %v3434 = vrot.slane %v1239, 7
  %v3435 = vsel %vm1458, %v3434, %v3433
  %v3436 = vrot.slane %v1207, 6
  %v3437 = vrot.slane %v1211, 5
  %v3438 = vsel %vm1440, %v3437, %v3436
  %v3439 = vrot.slane %v1217, 4
  %v3440 = vsel %vm1443, %v3439, %v3438
  %v3441 = vrot.slane %v1221, 3
  %v3442 = vsel %vm1446, %v3441, %v3440
  %v3443 = vrot.slane %v1227, 2
  %v3444 = vsel %vm1449, %v3443, %v3442
  %v3445 = vrot.slane %v1231, 1
  %v3446 = vsel %vm1452, %v3445, %v3444
  %v3447 = vsel %vm1455, %v1237, %v3446
  %v3448 = vrot.slane %v1241, 7
  %v3449 = vsel %vm1458, %v3448, %v3447
  %v3450 = vrot.slane %v1245, 6
  %v3451 = vrot.slane %v1249, 5
  %v3452 = vsel %vm1440, %v3451, %v3450
  %v3453 = vrot.slane %v1255, 4
  %v3454 = vsel %vm1443, %v3453, %v3452
  %v3455 = vrot.slane %v1259, 3
  %v3456 = vsel %vm1446, %v3455, %v3454
  %v3457 = vrot.slane %v1265, 2
  %v3458 = vsel %vm1449, %v3457, %v3456
  %v3459 = vrot.slane %v1269, 1
  %v3460 = vsel %vm1452, %v3459, %v3458
  %v3461 = vsel %vm1455, %v1275, %v3460
  %v3462 = vrot.slane %v1279, 7
  %v3463 = vsel %vm1458, %v3462, %v3461
  %v3464 = vrot.slane %v1247, 6
  %v3465 = vrot.slane %v1251, 5
  %v3466 = vsel %vm1440, %v3465, %v3464
  %v3467 = vrot.slane %v1257, 4
  %v3468 = vsel %vm1443, %v3467, %v3466
  %v3469 = vrot.slane %v1261, 3
  %v3470 = vsel %vm1446, %v3469, %v3468
  %v3471 = vrot.slane %v1267, 2
  %v3472 = vsel %vm1449, %v3471, %v3470
  %v3473 = vrot.slane %v1271, 1
  %v3474 = vsel %vm1452, %v3473, %v3472
  %v3475 = vsel %vm1455, %v1277, %v3474
  %v3476 = vrot.slane %v1281, 7
  %v3477 = vsel %vm1458, %v3476, %v3475
  %v3478 = vrot.slane %v1285, 6
  %v3479 = vrot.slane %v1289, 5
  %v3480 = vsel %vm1440, %v3479, %v3478
  %v3481 = vrot.slane %v1295, 4
  %v3482 = vsel %vm1443, %v3481, %v3480
  %v3483 = vrot.slane %v1299, 3
  %v3484 = vsel %vm1446, %v3483, %v3482
  %v3485 = vrot.slane %v1305, 2
  %v3486 = vsel %vm1449, %v3485, %v3484
  %v3487 = vrot.slane %v1309, 1
  %v3488 = vsel %vm1452, %v3487, %v3486
  %v3489 = vsel %vm1455, %v1315, %v3488
  %v3490 = vrot.slane %v1319, 7
  %v3491 = vsel %vm1458, %v3490, %v3489
  %v3492 = vrot.slane %v1287, 6
  %v3493 = vrot.slane %v1291, 5
  %v3494 = vsel %vm1440, %v3493, %v3492
  %v3495 = vrot.slane %v1297, 4
  %v3496 = vsel %vm1443, %v3495, %v3494
  %v3497 = vrot.slane %v1301, 3
  %v3498 = vsel %vm1446, %v3497, %v3496
  %v3499 = vrot.slane %v1307, 2
  %v3500 = vsel %vm1449, %v3499, %v3498
  %v3501 = vrot.slane %v1311, 1
  %v3502 = vsel %vm1452, %v3501, %v3500
  %v3503 = vsel %vm1455, %v1317, %v3502
  %v3504 = vrot.slane %v1321, 7
  %v3505 = vsel %vm1458, %v3504, %v3503
  %v3506 = vrot.slane %v1325, 6
  %v3507 = vrot.slane %v1329, 5
  %v3508 = vsel %vm1440, %v3507, %v3506
  %v3509 = vrot.slane %v1335, 4
  %v3510 = vsel %vm1443, %v3509, %v3508
  %v3511 = vrot.slane %v1339, 3
  %v3512 = vsel %vm1446, %v3511, %v3510
  %v3513 = vrot.slane %v1345, 2
  %v3514 = vsel %vm1449, %v3513, %v3512
  %v3515 = vrot.slane %v1349, 1
  %v3516 = vsel %vm1452, %v3515, %v3514
  %v3517 = vsel %vm1455, %v1355, %v3516
  %v3518 = vrot.slane %v1359, 7
  %v3519 = vsel %vm1458, %v3518, %v3517
  %v3520 = vrot.slane %v1327, 6
  %v3521 = vrot.slane %v1331, 5
  %v3522 = vsel %vm1440, %v3521, %v3520
  %v3523 = vrot.slane %v1337, 4
  %v3524 = vsel %vm1443, %v3523, %v3522
  %v3525 = vrot.slane %v1341, 3
  %v3526 = vsel %vm1446, %v3525, %v3524
  %v3527 = vrot.slane %v1347, 2
  %v3528 = vsel %vm1449, %v3527, %v3526
  %v3529 = vrot.slane %v1351, 1
  %v3530 = vsel %vm1452, %v3529, %v3528
  %v3531 = vsel %vm1455, %v1357, %v3530
  %v3532 = vrot.slane %v1361, 7
  %v3533 = vsel %vm1458, %v3532, %v3531
  %v3542 = vadd.f32 %v3414, %v3435
  %v3543 = vadd.f32 %v3415, %v3449
  %v3544 = vadd.f32 %v3416, %v3463
  %v3545 = vadd.f32 %v3417, %v3477
  %v3546 = vadd.f32 %v3418, %v3491
  %v3547 = vadd.f32 %v3419, %v3505
  %v3548 = vadd.f32 %v3420, %v3519
  %v3549 = vadd.f32 %v3421, %v3533
  %v3550 = vmax.f32 %v3542, 0.0
  %v3551 = vmax.f32 %v3543, 0.0
  %v3552 = vmax.f32 %v3544, 0.0
  %v3553 = vmax.f32 %v3545, 0.0
  %v3554 = vmax.f32 %v3546, 0.0
  %v3555 = vmax.f32 %v3547, 0.0
  %v3556 = vmax.f32 %v3548, 0.0
  %v3557 = vmax.f32 %v3549, 0.0
  %v3558 = vmax.f32 %v3158, %v3550
  %v3559 = vmax.f32 %v3159, %v3551
  %v3560 = vmax.f32 %v3160, %v3552
  %v3561 = vmax.f32 %v3161, %v3553
  %v3562 = vmax.f32 %v3162, %v3554
  %v3563 = vmax.f32 %v3163, %v3555
  %v3564 = vmax.f32 %v3164, %v3556
  %v3565 = vmax.f32 %v3165, %v3557
  %v3566 = vrot.slane %v433, 5
  %v3567 = vrot.slane %v437, 4
  %v3568 = vsel %vm1440, %v3567, %v3566
  %v3569 = vrot.slane %v443, 3
  %v3570 = vsel %vm1443, %v3569, %v3568
  %v3571 = vrot.slane %v447, 2
  %v3572 = vsel %vm1446, %v3571, %v3570
  %v3573 = vrot.slane %v453, 1
  %v3574 = vsel %vm1449, %v3573, %v3572
  %v3575 = vsel %vm1452, %v457, %v3574
  %v3576 = vrot.slane %v463, 7
  %v3577 = vsel %vm1455, %v3576, %v3575
  %v3578 = vrot.slane %v467, 6
  %v3579 = vsel %vm1458, %v3578, %v3577
  %v3580 = vrot.slane %v435, 5
  %v3581 = vrot.slane %v439, 4
  %v3582 = vsel %vm1440, %v3581, %v3580
  %v3583 = vrot.slane %v445, 3
  %v3584 = vsel %vm1443, %v3583, %v3582
  %v3585 = vrot.slane %v449, 2
  %v3586 = vsel %vm1446, %v3585, %v3584
  %v3587 = vrot.slane %v455, 1
  %v3588 = vsel %vm1449, %v3587, %v3586
  %v3589 = vsel %vm1452, %v459, %v3588
  %v3590 = vrot.slane %v465, 7
  %v3591 = vsel %vm1455, %v3590, %v3589
  %v3592 = vrot.slane %v469, 6
  %v3593 = vsel %vm1458, %v3592, %v3591
  %v3594 = vrot.slane %v473, 5
  %v3595 = vrot.slane %v477, 4
  %v3596 = vsel %vm1440, %v3595, %v3594
  %v3597 = vrot.slane %v483, 3
  %v3598 = vsel %vm1443, %v3597, %v3596
  %v3599 = vrot.slane %v487, 2
  %v3600 = vsel %vm1446, %v3599, %v3598
  %v3601 = vrot.slane %v493, 1
  %v3602 = vsel %vm1449, %v3601, %v3600
  %v3603 = vsel %vm1452, %v497, %v3602
  %v3604 = vrot.slane %v503, 7
  %v3605 = vsel %vm1455, %v3604, %v3603
  %v3606 = vrot.slane %v507, 6
  %v3607 = vsel %vm1458, %v3606, %v3605
  %v3608 = vrot.slane %v475, 5
  %v3609 = vrot.slane %v479, 4
  %v3610 = vsel %vm1440, %v3609, %v3608
  %v3611 = vrot.slane %v485, 3
  %v3612 = vsel %vm1443, %v3611, %v3610
  %v3613 = vrot.slane %v489, 2
  %v3614 = vsel %vm1446, %v3613, %v3612
  %v3615 = vrot.slane %v495, 1
  %v3616 = vsel %vm1449, %v3615, %v3614
  %v3617 = vsel %vm1452, %v499, %v3616
  %v3618 = vrot.slane %v505, 7
  %v3619 = vsel %vm1455, %v3618, %v3617
  %v3620 = vrot.slane %v509, 6
  %v3621 = vsel %vm1458, %v3620, %v3619
  %v3622 = vrot.slane %v513, 5
  %v3623 = vrot.slane %v517, 4
  %v3624 = vsel %vm1440, %v3623, %v3622
  %v3625 = vrot.slane %v523, 3
  %v3626 = vsel %vm1443, %v3625, %v3624
  %v3627 = vrot.slane %v527, 2
  %v3628 = vsel %vm1446, %v3627, %v3626
  %v3629 = vrot.slane %v533, 1
  %v3630 = vsel %vm1449, %v3629, %v3628
  %v3631 = vsel %vm1452, %v537, %v3630
  %v3632 = vrot.slane %v543, 7
  %v3633 = vsel %vm1455, %v3632, %v3631
  %v3634 = vrot.slane %v547, 6
  %v3635 = vsel %vm1458, %v3634, %v3633
  %v3636 = vrot.slane %v515, 5
  %v3637 = vrot.slane %v519, 4
  %v3638 = vsel %vm1440, %v3637, %v3636
  %v3639 = vrot.slane %v525, 3
  %v3640 = vsel %vm1443, %v3639, %v3638
  %v3641 = vrot.slane %v529, 2
  %v3642 = vsel %vm1446, %v3641, %v3640
  %v3643 = vrot.slane %v535, 1
  %v3644 = vsel %vm1449, %v3643, %v3642
  %v3645 = vsel %vm1452, %v539, %v3644
  %v3646 = vrot.slane %v545, 7
  %v3647 = vsel %vm1455, %v3646, %v3645
  %v3648 = vrot.slane %v549, 6
  %v3649 = vsel %vm1458, %v3648, %v3647
  %v3650 = vrot.slane %v553, 5
  %v3651 = vrot.slane %v557, 4
  %v3652 = vsel %vm1440, %v3651, %v3650
  %v3653 = vrot.slane %v563, 3
  %v3654 = vsel %vm1443, %v3653, %v3652
  %v3655 = vrot.slane %v567, 2
  %v3656 = vsel %vm1446, %v3655, %v3654
  %v3657 = vrot.slane %v573, 1
  %v3658 = vsel %vm1449, %v3657, %v3656
  %v3659 = vsel %vm1452, %v577, %v3658
  %v3660 = vrot.slane %v583, 7
  %v3661 = vsel %vm1455, %v3660, %v3659
  %v3662 = vrot.slane %v587, 6
  %v3663 = vsel %vm1458, %v3662, %v3661
  %v3664 = vrot.slane %v555, 5
  %v3665 = vrot.slane %v559, 4
  %v3666 = vsel %vm1440, %v3665, %v3664
  %v3667 = vrot.slane %v565, 3
  %v3668 = vsel %vm1443, %v3667, %v3666
  %v3669 = vrot.slane %v569, 2
  %v3670 = vsel %vm1446, %v3669, %v3668
  %v3671 = vrot.slane %v575, 1
  %v3672 = vsel %vm1449, %v3671, %v3670
  %v3673 = vsel %vm1452, %v579, %v3672
  %v3674 = vrot.slane %v585, 7
  %v3675 = vsel %vm1455, %v3674, %v3673
  %v3676 = vrot.slane %v589, 6
  %v3677 = vsel %vm1458, %v3676, %v3675
  %v3686 = vadd.f32 %v1368, %v3579
  %v3687 = vadd.f32 %v1372, %v3593
  %v3688 = vadd.f32 %v1368, %v3607
  %v3689 = vadd.f32 %v1372, %v3621
  %v3690 = vadd.f32 %v1368, %v3635
  %v3691 = vadd.f32 %v1372, %v3649
  %v3692 = vadd.f32 %v1368, %v3663
  %v3693 = vadd.f32 %v1372, %v3677
  %v3694 = vrot.slane %v819, 6
  %v3695 = vrot.slane %v823, 5
  %v3696 = vsel %vm1440, %v3695, %v3694
  %v3697 = vrot.slane %v829, 4
  %v3698 = vsel %vm1443, %v3697, %v3696
  %v3699 = vrot.slane %v833, 3
  %v3700 = vsel %vm1446, %v3699, %v3698
  %v3701 = vrot.slane %v839, 2
  %v3702 = vsel %vm1449, %v3701, %v3700
  %v3703 = vrot.slane %v843, 1
  %v3704 = vsel %vm1452, %v3703, %v3702
  %v3705 = vsel %vm1455, %v849, %v3704
  %v3706 = vrot.slane %v853, 7
  %v3707 = vsel %vm1458, %v3706, %v3705
  %v3708 = vrot.slane %v821, 6
  %v3709 = vrot.slane %v825, 5
  %v3710 = vsel %vm1440, %v3709, %v3708
  %v3711 = vrot.slane %v831, 4
  %v3712 = vsel %vm1443, %v3711, %v3710
  %v3713 = vrot.slane %v835, 3
  %v3714 = vsel %vm1446, %v3713, %v3712
  %v3715 = vrot.slane %v841, 2
  %v3716 = vsel %vm1449, %v3715, %v3714
  %v3717 = vrot.slane %v845, 1
  %v3718 = vsel %vm1452, %v3717, %v3716
  %v3719 = vsel %vm1455, %v851, %v3718
  %v3720 = vrot.slane %v855, 7
  %v3721 = vsel %vm1458, %v3720, %v3719
  %v3722 = vrot.slane %v859, 6
  %v3723 = vrot.slane %v863, 5
  %v3724 = vsel %vm1440, %v3723, %v3722
  %v3725 = vrot.slane %v869, 4
  %v3726 = vsel %vm1443, %v3725, %v3724
  %v3727 = vrot.slane %v873, 3
  %v3728 = vsel %vm1446, %v3727, %v3726
  %v3729 = vrot.slane %v879, 2
  %v3730 = vsel %vm1449, %v3729, %v3728
  %v3731 = vrot.slane %v883, 1
  %v3732 = vsel %vm1452, %v3731, %v3730
  %v3733 = vsel %vm1455, %v889, %v3732
  %v3734 = vrot.slane %v893, 7
  %v3735 = vsel %vm1458, %v3734, %v3733
  %v3736 = vrot.slane %v861, 6
  %v3737 = vrot.slane %v865, 5
  %v3738 = vsel %vm1440, %v3737, %v3736
  %v3739 = vrot.slane %v871, 4
  %v3740 = vsel %vm1443, %v3739, %v3738
  %v3741 = vrot.slane %v875, 3
  %v3742 = vsel %vm1446, %v3741, %v3740
  %v3743 = vrot.slane %v881, 2
  %v3744 = vsel %vm1449, %v3743, %v3742
  %v3745 = vrot.slane %v885, 1
  %v3746 = vsel %vm1452, %v3745, %v3744
  %v3747 = vsel %vm1455, %v891, %v3746
  %v3748 = vrot.slane %v895, 7
  %v3749 = vsel %vm1458, %v3748, %v3747
  %v3750 = vrot.slane %v899, 6
  %v3751 = vrot.slane %v903, 5
  %v3752 = vsel %vm1440, %v3751, %v3750
  %v3753 = vrot.slane %v909, 4
  %v3754 = vsel %vm1443, %v3753, %v3752
  %v3755 = vrot.slane %v913, 3
  %v3756 = vsel %vm1446, %v3755, %v3754
  %v3757 = vrot.slane %v919, 2
  %v3758 = vsel %vm1449, %v3757, %v3756
  %v3759 = vrot.slane %v923, 1
  %v3760 = vsel %vm1452, %v3759, %v3758
  %v3761 = vsel %vm1455, %v929, %v3760
  %v3762 = vrot.slane %v933, 7
  %v3763 = vsel %vm1458, %v3762, %v3761
  %v3764 = vrot.slane %v901, 6
  %v3765 = vrot.slane %v905, 5
  %v3766 = vsel %vm1440, %v3765, %v3764
  %v3767 = vrot.slane %v911, 4
  %v3768 = vsel %vm1443, %v3767, %v3766
  %v3769 = vrot.slane %v915, 3
  %v3770 = vsel %vm1446, %v3769, %v3768
  %v3771 = vrot.slane %v921, 2
  %v3772 = vsel %vm1449, %v3771, %v3770
  %v3773 = vrot.slane %v925, 1
  %v3774 = vsel %vm1452, %v3773, %v3772
  %v3775 = vsel %vm1455, %v931, %v3774
  %v3776 = vrot.slane %v935, 7
  %v3777 = vsel %vm1458, %v3776, %v3775
  %v3778 = vrot.slane %v939, 6
  %v3779 = vrot.slane %v943, 5
  %v3780 = vsel %vm1440, %v3779, %v3778
  %v3781 = vrot.slane %v949, 4
  %v3782 = vsel %vm1443, %v3781, %v3780
  %v3783 = vrot.slane %v953, 3
  %v3784 = vsel %vm1446, %v3783, %v3782
  %v3785 = vrot.slane %v959, 2
  %v3786 = vsel %vm1449, %v3785, %v3784
  %v3787 = vrot.slane %v963, 1
  %v3788 = vsel %vm1452, %v3787, %v3786
  %v3789 = vsel %vm1455, %v969, %v3788
  %v3790 = vrot.slane %v973, 7
  %v3791 = vsel %vm1458, %v3790, %v3789
  %v3792 = vrot.slane %v941, 6
  %v3793 = vrot.slane %v945, 5
  %v3794 = vsel %vm1440, %v3793, %v3792
  %v3795 = vrot.slane %v951, 4
  %v3796 = vsel %vm1443, %v3795, %v3794
  %v3797 = vrot.slane %v955, 3
  %v3798 = vsel %vm1446, %v3797, %v3796
  %v3799 = vrot.slane %v961, 2
  %v3800 = vsel %vm1449, %v3799, %v3798
  %v3801 = vrot.slane %v965, 1
  %v3802 = vsel %vm1452, %v3801, %v3800
  %v3803 = vsel %vm1455, %v971, %v3802
  %v3804 = vrot.slane %v975, 7
  %v3805 = vsel %vm1458, %v3804, %v3803
  %v3814 = vadd.f32 %v3686, %v3707
  %v3815 = vadd.f32 %v3687, %v3721
  %v3816 = vadd.f32 %v3688, %v3735
  %v3817 = vadd.f32 %v3689, %v3749
  %v3818 = vadd.f32 %v3690, %v3763
  %v3819 = vadd.f32 %v3691, %v3777
  %v3820 = vadd.f32 %v3692, %v3791
  %v3821 = vadd.f32 %v3693, %v3805
  %v3822 = vrot.slane %v1205, 7
  %v3823 = vrot.slane %v1209, 6
  %v3824 = vsel %vm1440, %v3823, %v3822
  %v3825 = vrot.slane %v1215, 5
  %v3826 = vsel %vm1443, %v3825, %v3824
  %v3827 = vrot.slane %v1219, 4
  %v3828 = vsel %vm1446, %v3827, %v3826
  %v3829 = vrot.slane %v1225, 3
  %v3830 = vsel %vm1449, %v3829, %v3828
  %v3831 = vrot.slane %v1229, 2
  %v3832 = vsel %vm1452, %v3831, %v3830
  %v3833 = vrot.slane %v1235, 1
  %v3834 = vsel %vm1455, %v3833, %v3832
  %v3835 = vsel %vm1458, %v1239, %v3834
  %v3836 = vrot.slane %v1207, 7
  %v3837 = vrot.slane %v1211, 6
  %v3838 = vsel %vm1440, %v3837, %v3836
  %v3839 = vrot.slane %v1217, 5
  %v3840 = vsel %vm1443, %v3839, %v3838
  %v3841 = vrot.slane %v1221, 4
  %v3842 = vsel %vm1446, %v3841, %v3840
  %v3843 = vrot.slane %v1227, 3
  %v3844 = vsel %vm1449, %v3843, %v3842
  %v3845 = vrot.slane %v1231, 2
  %v3846 = vsel %vm1452, %v3845, %v3844
  %v3847 = vrot.slane %v1237, 1
  %v3848 = vsel %vm1455, %v3847, %v3846
  %v3849 = vsel %vm1458, %v1241, %v3848
  %v3850 = vrot.slane %v1245, 7
  %v3851 = vrot.slane %v1249, 6
  %v3852 = vsel %vm1440, %v3851, %v3850
  %v3853 = vrot.slane %v1255, 5
  %v3854 = vsel %vm1443, %v3853, %v3852
  %v3855 = vrot.slane %v1259, 4
  %v3856 = vsel %vm1446, %v3855, %v3854
  %v3857 = vrot.slane %v1265, 3
  %v3858 = vsel %vm1449, %v3857, %v3856
  %v3859 = vrot.slane %v1269, 2
  %v3860 = vsel %vm1452, %v3859, %v3858
  %v3861 = vrot.slane %v1275, 1
  %v3862 = vsel %vm1455, %v3861, %v3860
  %v3863 = vsel %vm1458, %v1279, %v3862
  %v3864 = vrot.slane %v1247, 7
  %v3865 = vrot.slane %v1251, 6
  %v3866 = vsel %vm1440, %v3865, %v3864
  %v3867 = vrot.slane %v1257, 5
  %v3868 = vsel %vm1443, %v3867, %v3866
  %v3869 = vrot.slane %v1261, 4
  %v3870 = vsel %vm1446, %v3869, %v3868
  %v3871 = vrot.slane %v1267, 3
  %v3872 = vsel %vm1449, %v3871, %v3870
  %v3873 = vrot.slane %v1271, 2
  %v3874 = vsel %vm1452, %v3873, %v3872
  %v3875 = vrot.slane %v1277, 1
  %v3876 = vsel %vm1455, %v3875, %v3874
  %v3877 = vsel %vm1458, %v1281, %v3876
  %v3878 = vrot.slane %v1285, 7
  %v3879 = vrot.slane %v1289, 6
  %v3880 = vsel %vm1440, %v3879, %v3878
  %v3881 = vrot.slane %v1295, 5
  %v3882 = vsel %vm1443, %v3881, %v3880
  %v3883 = vrot.slane %v1299, 4
  %v3884 = vsel %vm1446, %v3883, %v3882
  %v3885 = vrot.slane %v1305, 3
  %v3886 = vsel %vm1449, %v3885, %v3884
  %v3887 = vrot.slane %v1309, 2
  %v3888 = vsel %vm1452, %v3887, %v3886
  %v3889 = vrot.slane %v1315, 1
  %v3890 = vsel %vm1455, %v3889, %v3888
  %v3891 = vsel %vm1458, %v1319, %v3890
  %v3892 = vrot.slane %v1287, 7
  %v3893 = vrot.slane %v1291, 6
  %v3894 = vsel %vm1440, %v3893, %v3892
  %v3895 = vrot.slane %v1297, 5
  %v3896 = vsel %vm1443, %v3895, %v3894
  %v3897 = vrot.slane %v1301, 4
  %v3898 = vsel %vm1446, %v3897, %v3896
  %v3899 = vrot.slane %v1307, 3
  %v3900 = vsel %vm1449, %v3899, %v3898
  %v3901 = vrot.slane %v1311, 2
  %v3902 = vsel %vm1452, %v3901, %v3900
  %v3903 = vrot.slane %v1317, 1
  %v3904 = vsel %vm1455, %v3903, %v3902
  %v3905 = vsel %vm1458, %v1321, %v3904
  %v3906 = vrot.slane %v1325, 7
  %v3907 = vrot.slane %v1329, 6
  %v3908 = vsel %vm1440, %v3907, %v3906
  %v3909 = vrot.slane %v1335, 5
  %v3910 = vsel %vm1443, %v3909, %v3908
  %v3911 = vrot.slane %v1339, 4
  %v3912 = vsel %vm1446, %v3911, %v3910
  %v3913 = vrot.slane %v1345, 3
  %v3914 = vsel %vm1449, %v3913, %v3912
  %v3915 = vrot.slane %v1349, 2
  %v3916 = vsel %vm1452, %v3915, %v3914
  %v3917 = vrot.slane %v1355, 1
  %v3918 = vsel %vm1455, %v3917, %v3916
  %v3919 = vsel %vm1458, %v1359, %v3918
  %v3920 = vrot.slane %v1327, 7
  %v3921 = vrot.slane %v1331, 6
  %v3922 = vsel %vm1440, %v3921, %v3920
  %v3923 = vrot.slane %v1337, 5
  %v3924 = vsel %vm1443, %v3923, %v3922
  %v3925 = vrot.slane %v1341, 4
  %v3926 = vsel %vm1446, %v3925, %v3924
  %v3927 = vrot.slane %v1347, 3
  %v3928 = vsel %vm1449, %v3927, %v3926
  %v3929 = vrot.slane %v1351, 2
  %v3930 = vsel %vm1452, %v3929, %v3928
  %v3931 = vrot.slane %v1357, 1
  %v3932 = vsel %vm1455, %v3931, %v3930
  %v3933 = vsel %vm1458, %v1361, %v3932
  %v3942 = vadd.f32 %v3814, %v3835
  %v3943 = vadd.f32 %v3815, %v3849
  %v3944 = vadd.f32 %v3816, %v3863
  %v3945 = vadd.f32 %v3817, %v3877
  %v3946 = vadd.f32 %v3818, %v3891
  %v3947 = vadd.f32 %v3819, %v3905
  %v3948 = vadd.f32 %v3820, %v3919
  %v3949 = vadd.f32 %v3821, %v3933
  %v3950 = vmax.f32 %v3942, 0.0
  %v3951 = vmax.f32 %v3943, 0.0
  %v3952 = vmax.f32 %v3944, 0.0
  %v3953 = vmax.f32 %v3945, 0.0
  %v3954 = vmax.f32 %v3946, 0.0
  %v3955 = vmax.f32 %v3947, 0.0
  %v3956 = vmax.f32 %v3948, 0.0
  %v3957 = vmax.f32 %v3949, 0.0
  %v3958 = vmax.f32 %v3558, %v3950
  %v3959 = vmax.f32 %v3559, %v3951
  %v3960 = vmax.f32 %v3560, %v3952
  %v3961 = vmax.f32 %v3561, %v3953
  %v3962 = vmax.f32 %v3562, %v3954
  %v3963 = vmax.f32 %v3563, %v3955
  %v3964 = vmax.f32 %v3564, %v3956
  %v3965 = vmax.f32 %v3565, %v3957
  %3966 = vst [vmem:[%s3] sm:$0xff] %v3958
  %3967 = vst [vmem:[%s3 + $0x8] sm:$0xff] %v3959
  %3968 = vst [vmem:[%s3 + $0x10] sm:$0xff] %v3960
  %3969 = vst [vmem:[%s3 + $0x18] sm:$0xff] %v3961
  %3970 = vst [vmem:[%s3 + $0x20] sm:$0xff] %v3962
  %3971 = vst [vmem:[%s3 + $0x28] sm:$0xff] %v3963
  %3972 = vst [vmem:[%s3 + $0x30] sm:$0xff] %v3964
  %3973 = vst [vmem:[%s3 + $0x38] sm:$0xff] %v3965
  // Predicated region
  $region14: #{bidaf_forward.20} parent=0 // pred_check
    _
  $region15: #{bidaf_forward.20} parent=0 // pred_check_branch
    %3975 = sbr.rel (0) target = $region17
  $region16: #{bidaf_forward.20} parent=0 // pred_region
    _
  $region17: #{bidaf_forward.20} parent=0 // pred_fallthru
    _
  // Predicated region
  $region18: #{bidaf_forward.20} parent=0 // pred_check
    _
  $region19: #{bidaf_forward.20} parent=0 // pred_check_branch
    %3977 = sbr.rel (0) target = $region21
  $region20: #{bidaf_forward.20} parent=0 // pred_region
    _
  $region21: #{bidaf_forward.20} parent=0 // pred_fallthru
    _

// kernel: bidaf_forward.25
$region0: #{bidaf_forward.25}
  #allocation0 [shape = 'u32[]', space=smem, size = 0x4, offset = 0x4, fixed_abs, tag = 'smem constant byte address 0x4 - core index']
  #allocation1 [shape = 'u32[144,128]{1,0:T(1,128)}', space=vmem, size = 0x12000, scoped, tag = 'internal scratch']
  %s0 = inlined_call_operand.vmem [shape: f32[16,512], index: 0, kind: input, shape index: {}]
  %s1 = inlined_call_operand.vmem [shape: bf16[512,32], index: 1, kind: input, shape index: {}]
  %s2 = inlined_call_operand.vmem [shape: f32[1,32], index: 2, kind: input, shape index: {}]
  %s3 = inlined_call_operand.vmem [shape: f32[16,32], index: 3, kind: output, shape index: {}]
  %s4 = sld [smem:[#allocation0]]
  $region22: #{bidaf_forward.25} parent=0
    _
  %s6 = ssub.s32 1, %s4
  %s7 = scalar_select 0, %s6, %s4
  // Predicated region
  $region2: #{bidaf_forward.25} parent=0 // pred_check
    _
  $region3: #{bidaf_forward.25} parent=0 // pred_check_branch
    %9 = sbr.rel (0) target = $region5
  $region4: #{bidaf_forward.25} parent=0 // pred_region
    _
  $region5: #{bidaf_forward.25} parent=0 // pred_fallthru
    _
  // Predicated region
  $region6: #{bidaf_forward.25} parent=0 // pred_check
    _
  $region7: #{bidaf_forward.25} parent=0 // pred_check_branch
    %11 = sbr.rel (0) target = $region9
  $region8: #{bidaf_forward.25} parent=0 // pred_region
    _
  $region9: #{bidaf_forward.25} parent=0 // pred_fallthru
    _
  // Predicated region
  $region10: #{bidaf_forward.25} parent=0 // pred_check
    _
  $region11: #{bidaf_forward.25} parent=0 // pred_check_branch
    %13 = sbr.rel (0) target = $region13
  $region12: #{bidaf_forward.25} parent=0 // pred_region
    _
  $region13: #{bidaf_forward.25} parent=0 // pred_fallthru
    _
  %v15 = vld [vmem:[%s0] sm:$0xff]
  %v16 = vld [vmem:[%s0 + $0x8] sm:$0xff]
  %v17 = vld [vmem:[%s0 + $0x10] sm:$0xff]
  %v18 = vld [vmem:[%s0 + $0x18] sm:$0xff]
  %v19 = vld [vmem:[%s0 + $0x20] sm:$0xff]
  %v20 = vld [vmem:[%s0 + $0x28] sm:$0xff]
  %v21 = vld [vmem:[%s0 + $0x30] sm:$0xff]
  %v22 = vld [vmem:[%s0 + $0x38] sm:$0xff]
  %v23 = vpack.c.bf16 %v19, %v15
  %v24 = vpack.c.bf16 %v20, %v16
  %v25 = vpack.c.bf16 %v21, %v17
  %v26 = vpack.c.bf16 %v22, %v18
  %v27 = vld [vmem:[%s1] sm:$0xf]
  %v28 = vld [vmem:[%s1 + $0x4] sm:$0xf]
  %v29 = vld [vmem:[%s1 + $0x8] sm:$0xf]
  %v30 = vld [vmem:[%s1 + $0xc] sm:$0xf]
  %v31 = vld [vmem:[%s1 + $0x10] sm:$0xf]
  %v32 = vld [vmem:[%s1 + $0x14] sm:$0xf]
  %v33 = vld [vmem:[%s1 + $0x18] sm:$0xf]
  %v34 = vld [vmem:[%s1 + $0x1c] sm:$0xf]
  %v35 = vld [vmem:[%s1 + $0x20] sm:$0xf]
  %v36 = vld [vmem:[%s1 + $0x24] sm:$0xf]
  %v37 = vld [vmem:[%s1 + $0x28] sm:$0xf]
  %v38 = vld [vmem:[%s1 + $0x2c] sm:$0xf]
  %v39 = vld [vmem:[%s1 + $0x30] sm:$0xf]
  %v40 = vld [vmem:[%s1 + $0x34] sm:$0xf]
  %v41 = vld [vmem:[%s1 + $0x38] sm:$0xf]
  %v42 = vld [vmem:[%s1 + $0x3c] sm:$0xf]
  %v43 = vld [vmem:[%s1 + $0x40] sm:$0xf]
  %v44 = vld [vmem:[%s1 + $0x44] sm:$0xf]
  %v45 = vld [vmem:[%s1 + $0x48] sm:$0xf]
  %v46 = vld [vmem:[%s1 + $0x4c] sm:$0xf]
  %v47 = vld [vmem:[%s1 + $0x50] sm:$0xf]
  %v48 = vld [vmem:[%s1 + $0x54] sm:$0xf]
  %v49 = vld [vmem:[%s1 + $0x58] sm:$0xf]
  %v50 = vld [vmem:[%s1 + $0x5c] sm:$0xf]
  %v51 = vld [vmem:[%s1 + $0x60] sm:$0xf]
  %v52 = vld [vmem:[%s1 + $0x64] sm:$0xf]
  %v53 = vld [vmem:[%s1 + $0x68] sm:$0xf]
  %v54 = vld [vmem:[%s1 + $0x6c] sm:$0xf]
  %v55 = vld [vmem:[%s1 + $0x70] sm:$0xf]
  %v56 = vld [vmem:[%s1 + $0x74] sm:$0xf]
  %v57 = vld [vmem:[%s1 + $0x78] sm:$0xf]
  %v58 = vld [vmem:[%s1 + $0x7c] sm:$0xf]
  %v59 = vld [vmem:[%s1 + $0x80] sm:$0xf]
  %v60 = vld [vmem:[%s1 + $0x84] sm:$0xf]
  %v61 = vld [vmem:[%s1 + $0x88] sm:$0xf]
  %v62 = vld [vmem:[%s1 + $0x8c] sm:$0xf]
  %v63 = vld [vmem:[%s1 + $0x90] sm:$0xf]
  %v64 = vld [vmem:[%s1 + $0x94] sm:$0xf]
  %v65 = vld [vmem:[%s1 + $0x98] sm:$0xf]
  %v66 = vld [vmem:[%s1 + $0x9c] sm:$0xf]
  %v67 = vld [vmem:[%s1 + $0xa0] sm:$0xf]
  %v68 = vld [vmem:[%s1 + $0xa4] sm:$0xf]
  %v69 = vld [vmem:[%s1 + $0xa8] sm:$0xf]
  %v70 = vld [vmem:[%s1 + $0xac] sm:$0xf]
  %v71 = vld [vmem:[%s1 + $0xb0] sm:$0xf]
  %v72 = vld [vmem:[%s1 + $0xb4] sm:$0xf]
  %v73 = vld [vmem:[%s1 + $0xb8] sm:$0xf]
  %v74 = vld [vmem:[%s1 + $0xbc] sm:$0xf]
  %v75 = vld [vmem:[%s1 + $0xc0] sm:$0xf]
  %v76 = vld [vmem:[%s1 + $0xc4] sm:$0xf]
  %v77 = vld [vmem:[%s1 + $0xc8] sm:$0xf]
  %v78 = vld [vmem:[%s1 + $0xcc] sm:$0xf]
  %v79 = vld [vmem:[%s1 + $0xd0] sm:$0xf]
  %v80 = vld [vmem:[%s1 + $0xd4] sm:$0xf]
  %v81 = vld [vmem:[%s1 + $0xd8] sm:$0xf]
  %v82 = vld [vmem:[%s1 + $0xdc] sm:$0xf]
  %v83 = vld [vmem:[%s1 + $0xe0] sm:$0xf]
  %v84 = vld [vmem:[%s1 + $0xe4] sm:$0xf]
  %v85 = vld [vmem:[%s1 + $0xe8] sm:$0xf]
  %v86 = vld [vmem:[%s1 + $0xec] sm:$0xf]
  %v87 = vld [vmem:[%s1 + $0xf0] sm:$0xf]
  %v88 = vld [vmem:[%s1 + $0xf4] sm:$0xf]
  %v89 = vld [vmem:[%s1 + $0xf8] sm:$0xf]
  %v90 = vld [vmem:[%s1 + $0xfc] sm:$0xf]
  %v91 = vld [vmem:[%s2] sm:$0x1]
  %v93 = vlaneseq
  %v94 = vshrl.u32 %v93, 7
  %v95 = vsub.s32 0, %v94
  %v96 = vrot.slane %v91, %v95
  %v162 = vunpack.c.l.b16 %v27
  %v163 = vunpack.c.l.b16 %v28
  %v164 = vunpack.c.l.b16 %v29
  %v165 = vunpack.c.l.b16 %v30
  %v166 = vunpack.c.l.b16 %v31
  %v167 = vunpack.c.l.b16 %v32
  %v168 = vunpack.c.l.b16 %v33
  %v169 = vunpack.c.l.b16 %v34
  %v170 = vunpack.c.l.b16 %v35
  %v171 = vunpack.c.l.b16 %v36
  %v172 = vunpack.c.l.b16 %v37
  %v173 = vunpack.c.l.b16 %v38
  %v174 = vunpack.c.l.b16 %v39
  %v175 = vunpack.c.l.b16 %v40
  %v176 = vunpack.c.l.b16 %v41
  %v177 = vunpack.c.l.b16 %v42
  %v178 = vunpack.c.l.b16 %v43
  %v179 = vunpack.c.l.b16 %v44
  %v180 = vunpack.c.l.b16 %v45
  %v181 = vunpack.c.l.b16 %v46
  %v182 = vunpack.c.l.b16 %v47
  %v183 = vunpack.c.l.b16 %v48
  %v184 = vunpack.c.l.b16 %v49
  %v185 = vunpack.c.l.b16 %v50
  %v186 = vunpack.c.l.b16 %v51
  %v187 = vunpack.c.l.b16 %v52
  %v188 = vunpack.c.l.b16 %v53
  %v189 = vunpack.c.l.b16 %v54
  %v190 = vunpack.c.l.b16 %v55
  %v191 = vunpack.c.l.b16 %v56
  %v192 = vunpack.c.l.b16 %v57
  %v193 = vunpack.c.l.b16 %v58
  %v194 = vunpack.c.l.b16 %v59
  %v195 = vunpack.c.l.b16 %v60
  %v196 = vunpack.c.l.b16 %v61
  %v197 = vunpack.c.l.b16 %v62
  %v198 = vunpack.c.l.b16 %v63
  %v199 = vunpack.c.l.b16 %v64
  %v200 = vunpack.c.l.b16 %v65
  %v201 = vunpack.c.l.b16 %v66
  %v202 = vunpack.c.l.b16 %v67
  %v203 = vunpack.c.l.b16 %v68
  %v204 = vunpack.c.l.b16 %v69
  %v205 = vunpack.c.l.b16 %v70
  %v206 = vunpack.c.l.b16 %v71
  %v207 = vunpack.c.l.b16 %v72
  %v208 = vunpack.c.l.b16 %v73
  %v209 = vunpack.c.l.b16 %v74
  %v210 = vunpack.c.l.b16 %v75
  %v211 = vunpack.c.l.b16 %v76
  %v212 = vunpack.c.l.b16 %v77
  %v213 = vunpack.c.l.b16 %v78
  %v214 = vunpack.c.l.b16 %v79
  %v215 = vunpack.c.l.b16 %v80
  %v216 = vunpack.c.l.b16 %v81
  %v217 = vunpack.c.l.b16 %v82
  %v218 = vunpack.c.l.b16 %v83
  %v219 = vunpack.c.l.b16 %v84
  %v220 = vunpack.c.l.b16 %v85
  %v221 = vunpack.c.l.b16 %v86
  %v222 = vunpack.c.l.b16 %v87
  %v223 = vunpack.c.l.b16 %v88
  %v224 = vunpack.c.l.b16 %v89
  %v225 = vunpack.c.l.b16 %v90
  %v226 = vpack.c.b16 %v163, %v162
  %v227 = vpack.c.b16 %v165, %v164
  %v228 = vpack.c.b16 %v167, %v166
  %v229 = vpack.c.b16 %v169, %v168
  %v230 = vpack.c.b16 %v171, %v170
  %v231 = vpack.c.b16 %v173, %v172
  %v232 = vpack.c.b16 %v175, %v174
  %v233 = vpack.c.b16 %v177, %v176
  %v234 = vpack.c.b16 %v179, %v178
  %v235 = vpack.c.b16 %v181, %v180
  %v236 = vpack.c.b16 %v183, %v182
  %v237 = vpack.c.b16 %v185, %v184
  %v238 = vpack.c.b16 %v187, %v186
  %v239 = vpack.c.b16 %v189, %v188
  %v240 = vpack.c.b16 %v191, %v190
  %v241 = vpack.c.b16 %v193, %v192
  %v242 = vpack.c.b16 %v195, %v194
  %v243 = vpack.c.b16 %v197, %v196
  %v244 = vpack.c.b16 %v199, %v198
  %v245 = vpack.c.b16 %v201, %v200
  %v246 = vpack.c.b16 %v203, %v202
  %v247 = vpack.c.b16 %v205, %v204
  %v248 = vpack.c.b16 %v207, %v206
  %v249 = vpack.c.b16 %v209, %v208
  %v250 = vpack.c.b16 %v211, %v210
  %v251 = vpack.c.b16 %v213, %v212
  %v252 = vpack.c.b16 %v215, %v214
  %v253 = vpack.c.b16 %v217, %v216
  %v254 = vpack.c.b16 %v219, %v218
  %v255 = vpack.c.b16 %v221, %v220
  %v256 = vpack.c.b16 %v223, %v222
  %v257 = vpack.c.b16 %v225, %v224
  %290 = vmatprep.subr.bf16.mxu0 0
  %291 = vmatpush1.bf16.msra.mxu0 %v233
  %292 = vmatprep.subr.bf16.mxu0 0
  %293 = vmatpush1.bf16.msra.mxu0 %v232
  %294 = vmatprep.subr.bf16.mxu0 0
  %295 = vmatpush1.bf16.msra.mxu0 %v231
  %296 = vmatprep.subr.bf16.mxu0 0
  %297 = vmatpush1.bf16.msra.mxu0 %v230
  %298 = vmatprep.subr.bf16.mxu0 0
  %299 = vmatpush1.bf16.msra.mxu0 %v229
  %300 = vmatprep.subr.bf16.mxu0 0
  %301 = vmatpush1.bf16.msra.mxu0 %v228
  %302 = vmatprep.subr.bf16.mxu0 0
  %303 = vmatpush1.bf16.msra.mxu0 %v227
  %304 = vmatprep.subr.bf16.mxu0 0
  %305 = vmatpush1.bf16.msra.mxu0 %v226
  %306 = vmatprep.subr.bf16.mxu0 0
  %307 = vmatpush2.bf16.msra.mxu0 %v241
  %308 = vmatprep.subr.bf16.mxu0 0
  %309 = vmatpush2.bf16.msra.mxu0 %v240
  %310 = vmatprep.subr.bf16.mxu0 0
  %311 = vmatpush2.bf16.msra.mxu0 %v239
  %312 = vmatprep.subr.bf16.mxu0 0
  %313 = vmatpush2.bf16.msra.mxu0 %v238
  %314 = vmatprep.subr.bf16.mxu0 0
  %315 = vmatpush2.bf16.msra.mxu0 %v237
  %316 = vmatprep.subr.bf16.mxu0 0
  %317 = vmatpush2.bf16.msra.mxu0 %v236
  %318 = vmatprep.subr.bf16.mxu0 0
  %319 = vmatpush2.bf16.msra.mxu0 %v235
  %320 = vmatprep.subr.bf16.mxu0 0
  %321 = vmatpush2.bf16.msra.mxu0 %v234
  %322 = vmatprep.mubr.bf16.mxu0 %v24
  %323 = vmatmul.mubr.bf16.gmra.mxu0 %v23
  %v324 = vpop.f32.mrf.mxu0
  %v325 = vadd.f32 %v96, %v324
  %v326 = vpop.f32.mrf.mxu0
  %v327 = vpop.f32.mrf.mxu0
  %v328 = vadd.f32 %v96, %v327
  %v329 = vpop.f32.mrf.mxu0
  %330 = vdwg.mxu0
  %331 = vmatprep.subr.bf16.mxu0 0
  %332 = vmatpush1.bf16.msra.mxu0 %v249
  %333 = vmatprep.subr.bf16.mxu0 0
  %334 = vmatpush1.bf16.msra.mxu0 %v248
  %335 = vmatprep.subr.bf16.mxu0 0
  %336 = vmatpush1.bf16.msra.mxu0 %v247
  %337 = vmatprep.subr.bf16.mxu0 0
  %338 = vmatpush1.bf16.msra.mxu0 %v246
  %339 = vmatprep.subr.bf16.mxu0 0
  %340 = vmatpush1.bf16.msra.mxu0 %v245
  %341 = vmatprep.subr.bf16.mxu0 0
  %342 = vmatpush1.bf16.msra.mxu0 %v244
  %343 = vmatprep.subr.bf16.mxu0 0
  %344 = vmatpush1.bf16.msra.mxu0 %v243
  %345 = vmatprep.subr.bf16.mxu0 0
  %346 = vmatpush1.bf16.msra.mxu0 %v242
  %347 = vmatprep.subr.bf16.mxu0 0
  %348 = vmatpush2.bf16.msra.mxu0 %v257
  %349 = vmatprep.subr.bf16.mxu0 0
  %350 = vmatpush2.bf16.msra.mxu0 %v256
  %351 = vmatprep.subr.bf16.mxu0 0
  %352 = vmatpush2.bf16.msra.mxu0 %v255
  %353 = vmatprep.subr.bf16.mxu0 0
  %354 = vmatpush2.bf16.msra.mxu0 %v254
  %355 = vmatprep.subr.bf16.mxu0 0
  %356 = vmatpush2.bf16.msra.mxu0 %v253
  %357 = vmatprep.subr.bf16.mxu0 0
  %358 = vmatpush2.bf16.msra.mxu0 %v252
  %359 = vmatprep.subr.bf16.mxu0 0
  %360 = vmatpush2.bf16.msra.mxu0 %v251
  %361 = vmatprep.subr.bf16.mxu0 0
  %362 = vmatpush2.bf16.msra.mxu0 %v250
  %363 = vmatprep.mubr.bf16.mxu0 %v26
  %364 = vmatmul.mubr.bf16.gmra.mxu0 %v25
  %v365 = vpop.f32.mrf.mxu0
  %v366 = vadd.f32 %v325, %v365
  %v367 = vpop.f32.mrf.mxu0
  %v368 = vpop.f32.mrf.mxu0
  %v369 = vadd.f32 %v328, %v368
  %v370 = vpop.f32.mrf.mxu0
  %371 = vdwg.mxu0
  %vm372 = vcmask 261120
  %373 = vst.msk [vmem:[%s3] sm:$0xff] %vm372, %v366
  %374 = vst.msk [vmem:[%s3 + $0x8] sm:$0xff] %vm372, %v369
  // Predicated region
  $region14: #{bidaf_forward.25} parent=0 // pred_check
    _
  $region15: #{bidaf_forward.25} parent=0 // pred_check_branch
    %376 = sbr.rel (0) target = $region17
  $region16: #{bidaf_forward.25} parent=0 // pred_region
    _
  $region17: #{bidaf_forward.25} parent=0 // pred_fallthru
    _
  // Predicated region
  $region18: #{bidaf_forward.25} parent=0 // pred_check
    _
  $region19: #{bidaf_forward.25} parent=0 // pred_check_branch
    %378 = sbr.rel (0) target = $region21
  $region20: #{bidaf_forward.25} parent=0 // pred_region
    _
  $region21: #{bidaf_forward.25} parent=0 // pred_fallthru
    _

// kernel: bidaf_forward.26
$region0: #{bidaf_forward.26}
  #allocation0 [shape = 'u32[]', space=smem, size = 0x4, offset = 0x4, fixed_abs, tag = 'smem constant byte address 0x4 - core index']
  #allocation1 [shape = 'u32[144,128]{1,0:T(1,128)}', space=vmem, size = 0x12000, scoped, tag = 'internal scratch']
  %s0 = inlined_call_operand.vmem [shape: f32[16,32], index: 0, kind: input, shape index: {}]
  %s1 = inlined_call_operand.vmem [shape: bf16[32,64], index: 1, kind: input, shape index: {}]
  %s2 = inlined_call_operand.vmem [shape: f32[1,64], index: 2, kind: input, shape index: {}]
  %s3 = inlined_call_operand.vmem [shape: f32[16,32], index: 3, kind: output, shape index: {}]
  %s4 = sld [smem:[#allocation0]]
  $region22: #{bidaf_forward.26} parent=0
    _
  %s6 = ssub.s32 1, %s4
  %s7 = scalar_select 0, %s6, %s4
  // Predicated region
  $region2: #{bidaf_forward.26} parent=0 // pred_check
    _
  $region3: #{bidaf_forward.26} parent=0 // pred_check_branch
    %9 = sbr.rel (0) target = $region5
  $region4: #{bidaf_forward.26} parent=0 // pred_region
    _
  $region5: #{bidaf_forward.26} parent=0 // pred_fallthru
    _
  // Predicated region
  $region6: #{bidaf_forward.26} parent=0 // pred_check
    _
  $region7: #{bidaf_forward.26} parent=0 // pred_check_branch
    %11 = sbr.rel (0) target = $region9
  $region8: #{bidaf_forward.26} parent=0 // pred_region
    _
  $region9: #{bidaf_forward.26} parent=0 // pred_fallthru
    _
  // Predicated region
  $region10: #{bidaf_forward.26} parent=0 // pred_check
    _
  $region11: #{bidaf_forward.26} parent=0 // pred_check_branch
    %13 = sbr.rel (0) target = $region13
  $region12: #{bidaf_forward.26} parent=0 // pred_region
    _
  $region13: #{bidaf_forward.26} parent=0 // pred_fallthru
    _
  %v15 = vld [vmem:[%s0] sm:$0xff]
  %v16 = vld [vmem:[%s0 + $0x8] sm:$0xff]
  %v17 = vpack.c.bf16 %v16, %v15
  %v18 = vld [vmem:[%s1] sm:$0xf]
  %v19 = vld [vmem:[%s1 + $0x4] sm:$0xf]
  %v20 = vld [vmem:[%s1 + $0x8] sm:$0xf]
  %v21 = vld [vmem:[%s1 + $0xc] sm:$0xf]
  %v22 = vld [vmem:[%s2] sm:$0x1]
  %v24 = vlaneseq
  %v25 = vshrl.u32 %v24, 7
  %v26 = vsub.s32 0, %v25
  %v27 = vrot.slane %v22, %v26
  %v33 = vunpack.c.l.b16 %v18
  %v34 = vunpack.c.l.b16 %v19
  %v35 = vunpack.c.l.b16 %v20
  %v36 = vunpack.c.l.b16 %v21
  %v37 = vpack.c.b16 %v34, %v33
  %v38 = vpack.c.b16 %v36, %v35
  %vm41 = vcmask 261120
  %v43 = vsel %vm41, %v17, 0
  %45 = vmatprep.subr.bf16.mxu0 0
  %46 = vmatpush1.bf16.msra.mxu0 0
  %47 = vmatprep.subr.bf16.mxu0 0
  %48 = vmatpush1.bf16.msra.mxu0 0
  %49 = vmatprep.subr.bf16.mxu0 0
  %50 = vmatpush1.bf16.msra.mxu0 0
  %51 = vmatprep.subr.bf16.mxu0 0
  %52 = vmatpush1.bf16.msra.mxu0 0
  %53 = vmatprep.subr.bf16.mxu0 0
  %54 = vmatpush1.bf16.msra.mxu0 0
  %55 = vmatprep.subr.bf16.mxu0 0
  %56 = vmatpush1.bf16.msra.mxu0 0
  %57 = vmatprep.subr.bf16.mxu0 0
  %58 = vmatpush1.bf16.msra.mxu0 %v38
  %59 = vmatprep.subr.bf16.mxu0 0
  %60 = vmatpush1.bf16.msra.mxu0 %v37
  %61 = vmatprep.subr.bf16.mxu0 0
  %62 = vmatpush2.bf16.msra.mxu0 0
  %63 = vmatprep.subr.bf16.mxu0 0
  %64 = vmatpush2.bf16.msra.mxu0 0
  %65 = vmatprep.subr.bf16.mxu0 0
  %66 = vmatpush2.bf16.msra.mxu0 0
  %67 = vmatprep.subr.bf16.mxu0 0
  %68 = vmatpush2.bf16.msra.mxu0 0
  %69 = vmatprep.subr.bf16.mxu0 0
  %70 = vmatpush2.bf16.msra.mxu0 0
  %71 = vmatprep.subr.bf16.mxu0 0
  %72 = vmatpush2.bf16.msra.mxu0 0
  %73 = vmatprep.subr.bf16.mxu0 0
  %74 = vmatpush2.bf16.msra.mxu0 0
  %75 = vmatprep.subr.bf16.mxu0 0
  %76 = vmatpush2.bf16.msra.mxu0 0
  %77 = vmatprep.mubr.bf16.mxu0 0
  %78 = vmatmul.mubr.bf16.gmra.mxu0 %v43
  %v79 = vpop.f32.mrf.mxu0
  %v80 = vadd.f32 %v27, %v79
  %v81 = vpop.f32.mrf.mxu0
  %v82 = vpop.f32.mrf.mxu0
  %v83 = vadd.f32 %v27, %v82
  %v84 = vpop.f32.mrf.mxu0
  %85 = vdwg.mxu0
  %v86 = vmax.f32 %v80, 0.0
  %v87 = vmax.f32 %v83, 0.0
  %v88 = vxor.u32 %v80, 2147483648
  %v89 = vxor.u32 %v83, 2147483648
  %v90 = vmul.f32 %v88, 1.442695
  %v91 = vpow.pop %v90
  %v92 = vmul.f32 %v89, 1.442695
  %v93 = vpow.pop %v92
  %v94 = vadd.f32 %v91, 1.0
  %v95 = vadd.f32 %v93, 1.0
  %v96 = vrcp.pop %v94
  %v97 = vmul.f32 1.0, %v96
  %v98 = vrcp.pop %v95
  %v99 = vmul.f32 1.0, %v98
  %102 = vrot.lane.b32.xlu0 %v86, 32
  %v103 = vpop.permute.xlu0 %102
  %104 = vrot.lane.b32.xlu0 %v87, 32
  %v105 = vpop.permute.xlu0 %104
  %v108 = vmul.f32 %v97, %v103
  %v109 = vmul.f32 %v99, %v105
  %v110 = vsub.f32 1.0, %v97
  %v111 = vsub.f32 1.0, %v99
  %114 = vrot.lane.b32.xlu0 %v15, 32
  %v115 = vpop.permute.xlu0 %114
  %116 = vrot.lane.b32.xlu0 %v16, 32
  %v117 = vpop.permute.xlu0 %116
  %v120 = vmul.f32 %v110, %v115
  %v121 = vmul.f32 %v111, %v117
  %v122 = vadd.f32 %v108, %v120
  %v123 = vadd.f32 %v109, %v121
  %126 = vrot.lane.b32.xlu0 %v122, 96
  %v127 = vpop.permute.xlu0 %126
  %128 = vrot.lane.b32.xlu0 %v123, 96
  %v129 = vpop.permute.xlu0 %128
  %132 = vst.msk [vmem:[%s3] sm:$0xff] %vm41, %v127
  %133 = vst.msk [vmem:[%s3 + $0x8] sm:$0xff] %vm41, %v129
  // Predicated region
  $region14: #{bidaf_forward.26} parent=0 // pred_check
    _
  $region15: #{bidaf_forward.26} parent=0 // pred_check_branch
    %135 = sbr.rel (0) target = $region17
  $region16: #{bidaf_forward.26} parent=0 // pred_region
    _
  $region17: #{bidaf_forward.26} parent=0 // pred_fallthru
    _
  // Predicated region
  $region18: #{bidaf_forward.26} parent=0 // pred_check
    _
  $region19: #{bidaf_forward.26} parent=0 // pred_check_branch
    %137 = sbr.rel (0) target = $region21
  $region20: #{bidaf_forward.26} parent=0 // pred_region
    _
  $region21: #{bidaf_forward.26} parent=0 // pred_fallthru
    _

// kernel: bidaf_forward.30
$region0: #{bidaf_forward.30}
  #allocation0 [shape = 'u32[]', space=smem, size = 0x4, offset = 0x4, fixed_abs, tag = 'smem constant byte address 0x4 - core index']
  #allocation1 [shape = 'u32[144,128]{1,0:T(1,128)}', space=vmem, size = 0x12000, scoped, tag = 'internal scratch']
  %s0 = inlined_call_operand.vmem [shape: f32[16,32], index: 0, kind: input, shape index: {}]
  %s1 = inlined_call_operand.vmem [shape: bf16[32,256], index: 1, kind: input, shape index: {}]
  %s2 = inlined_call_operand.vmem [shape: f32[1,256], index: 2, kind: input, shape index: {}]
  %s3 = inlined_call_operand.vmem [shape: f32[16,256], index: 3, kind: output, shape index: {}]
  %s4 = sld [smem:[#allocation0]]
  $region22: #{bidaf_forward.30} parent=0
    _
  %s6 = ssub.s32 1, %s4
  %s7 = scalar_select 0, %s6, %s4
  // Predicated region
  $region2: #{bidaf_forward.30} parent=0 // pred_check
    _
  $region3: #{bidaf_forward.30} parent=0 // pred_check_branch
    %9 = sbr.rel (0) target = $region5
  $region4: #{bidaf_forward.30} parent=0 // pred_region
    _
  $region5: #{bidaf_forward.30} parent=0 // pred_fallthru
    _
  // Predicated region
  $region6: #{bidaf_forward.30} parent=0 // pred_check
    _
  $region7: #{bidaf_forward.30} parent=0 // pred_check_branch
    %11 = sbr.rel (0) target = $region9
  $region8: #{bidaf_forward.30} parent=0 // pred_region
    _
  $region9: #{bidaf_forward.30} parent=0 // pred_fallthru
    _
  // Predicated region
  $region10: #{bidaf_forward.30} parent=0 // pred_check
    _
  $region11: #{bidaf_forward.30} parent=0 // pred_check_branch
    %13 = sbr.rel (0) target = $region13
  $region12: #{bidaf_forward.30} parent=0 // pred_region
    _
  $region13: #{bidaf_forward.30} parent=0 // pred_fallthru
    _
  %v15 = vld [vmem:[%s0] sm:$0xff]
  %v16 = vld [vmem:[%s0 + $0x8] sm:$0xff]
  %v17 = vpack.c.bf16 %v16, %v15
  %v18 = vld [vmem:[%s1] sm:$0xff]
  %v19 = vld [vmem:[%s1 + $0x8] sm:$0xff]
  %v20 = vld [vmem:[%s1 + $0x10] sm:$0xff]
  %v21 = vld [vmem:[%s1 + $0x18] sm:$0xff]
  %v22 = vld [vmem:[%s2] sm:$0x3]
  %v24 = vlaneseq
  %v25 = vshrl.u32 %v24, 7
  %v26 = vsub.s32 0, %v25
  %v27 = vrot.slane %v22, %v26
  %v28 = vlaneseq
  %v29 = vshrl.u32 %v28, 7
  %v30 = vsub.s32 1, %v29
  %v31 = vrot.slane %v22, %v30
  %v38 = vunpack.c.l.b16 %v18
  %v39 = vunpack.c.h.b16 %v18
  %v40 = vunpack.c.l.b16 %v19
  %v41 = vunpack.c.h.b16 %v19
  %v42 = vunpack.c.l.b16 %v20
  %v43 = vunpack.c.h.b16 %v20
  %v44 = vunpack.c.l.b16 %v21
  %v45 = vunpack.c.h.b16 %v21
  %v46 = vpack.c.b16 %v40, %v38
  %v47 = vpack.c.b16 %v41, %v39
  %v48 = vpack.c.b16 %v44, %v42
  %v49 = vpack.c.b16 %v45, %v43
  %vm54 = vcmask 261120
  %v56 = vsel %vm54, %v17, 0
  %58 = vmatprep.subr.bf16.mxu0 0
  %59 = vmatpush1.bf16.msra.mxu0 0
  %60 = vmatprep.subr.bf16.mxu0 0
  %61 = vmatpush1.bf16.msra.mxu0 0
  %62 = vmatprep.subr.bf16.mxu0 0
  %63 = vmatpush1.bf16.msra.mxu0 0
  %64 = vmatprep.subr.bf16.mxu0 0
  %65 = vmatpush1.bf16.msra.mxu0 0
  %66 = vmatprep.subr.bf16.mxu0 0
  %67 = vmatpush1.bf16.msra.mxu0 0
  %68 = vmatprep.subr.bf16.mxu0 0
  %69 = vmatpush1.bf16.msra.mxu0 0
  %70 = vmatprep.subr.bf16.mxu0 %v49
  %71 = vmatpush1.bf16.msra.mxu0 %v48
  %72 = vmatprep.subr.bf16.mxu0 %v47
  %73 = vmatpush1.bf16.msra.mxu0 %v46
  %74 = vmatprep.subr.bf16.mxu0 0
  %75 = vmatpush2.bf16.msra.mxu0 0
  %76 = vmatprep.subr.bf16.mxu0 0
  %77 = vmatpush2.bf16.msra.mxu0 0
  %78 = vmatprep.subr.bf16.mxu0 0
  %79 = vmatpush2.bf16.msra.mxu0 0
  %80 = vmatprep.subr.bf16.mxu0 0
  %81 = vmatpush2.bf16.msra.mxu0 0
  %82 = vmatprep.subr.bf16.mxu0 0
  %83 = vmatpush2.bf16.msra.mxu0 0
  %84 = vmatprep.subr.bf16.mxu0 0
  %85 = vmatpush2.bf16.msra.mxu0 0
  %86 = vmatprep.subr.bf16.mxu0 0
  %87 = vmatpush2.bf16.msra.mxu0 0
  %88 = vmatprep.subr.bf16.mxu0 0
  %89 = vmatpush2.bf16.msra.mxu0 0
  %90 = vmatprep.mubr.bf16.mxu0 0
  %91 = vmatmul.mubr.bf16.gmra.mxu0 %v56
  %v92 = vpop.f32.mrf.mxu0
  %v93 = vadd.f32 %v27, %v92
  %v94 = vpop.f32.mrf.mxu0
  %v95 = vadd.f32 %v31, %v94
  %v96 = vpop.f32.mrf.mxu0
  %v97 = vadd.f32 %v27, %v96
  %v98 = vpop.f32.mrf.mxu0
  %v99 = vadd.f32 %v31, %v98
  %100 = vdwg.mxu0
  %101 = vst [vmem:[%s3] sm:$0xff] %v93
  %102 = vst [vmem:[%s3 + $0x8] sm:$0xff] %v95
  %103 = vst [vmem:[%s3 + $0x10] sm:$0xff] %v97
  %104 = vst [vmem:[%s3 + $0x18] sm:$0xff] %v99
  // Predicated region
  $region14: #{bidaf_forward.30} parent=0 // pred_check
    _
  $region15: #{bidaf_forward.30} parent=0 // pred_check_branch
    %106 = sbr.rel (0) target = $region17
  $region16: #{bidaf_forward.30} parent=0 // pred_region
    _
  $region17: #{bidaf_forward.30} parent=0 // pred_fallthru
    _
  // Predicated region
  $region18: #{bidaf_forward.30} parent=0 // pred_check
    _
  $region19: #{bidaf_forward.30} parent=0 // pred_check_branch
    %108 = sbr.rel (0) target = $region21
  $region20: #{bidaf_forward.30} parent=0 // pred_region
    _
  $region21: #{bidaf_forward.30} parent=0 // pred_fallthru
    _

// kernel: bidaf_forward.24
$region0: #{bidaf_forward.24}
  #allocation0 [shape = 'u32[]', space=smem, size = 0x4, offset = 0x4, fixed_abs, tag = 'smem constant byte address 0x4 - core index']
  #allocation1 [shape = 'u32[144,128]{1,0:T(1,128)}', space=vmem, size = 0x12000, scoped, tag = 'internal scratch']
  %s0 = inlined_call_operand.vmem [shape: bf16[16,8,256], index: 0, kind: input, shape index: {}]
  %s1 = inlined_call_operand.vmem [shape: bf16[3,256,256], index: 1, kind: input, shape index: {}]
  %s2 = inlined_call_operand.vmem [shape: f32[1,256], index: 2, kind: input, shape index: {}]
  %s3 = inlined_call_operand.vmem [shape: f32[16,256], index: 3, kind: output, shape index: {}]
  %s4 = sld [smem:[#allocation0]]
  $region22: #{bidaf_forward.24} parent=0
    _
  %s6 = ssub.s32 1, %s4
  %s7 = scalar_select 0, %s6, %s4
  // Predicated region
  $region2: #{bidaf_forward.24} parent=0 // pred_check
    _
  $region3: #{bidaf_forward.24} parent=0 // pred_check_branch
    %9 = sbr.rel (0) target = $region5
  $region4: #{bidaf_forward.24} parent=0 // pred_region
    _
  $region5: #{bidaf_forward.24} parent=0 // pred_fallthru
    _
  // Predicated region
  $region6: #{bidaf_forward.24} parent=0 // pred_check
    _
  $region7: #{bidaf_forward.24} parent=0 // pred_check_branch
    %11 = sbr.rel (0) target = $region9
  $region8: #{bidaf_forward.24} parent=0 // pred_region
    _
  $region9: #{bidaf_forward.24} parent=0 // pred_fallthru
    _
  // Predicated region
  $region10: #{bidaf_forward.24} parent=0 // pred_check
    _
  $region11: #{bidaf_forward.24} parent=0 // pred_check_branch
    %13 = sbr.rel (0) target = $region13
  $region12: #{bidaf_forward.24} parent=0 // pred_region
    _
  $region13: #{bidaf_forward.24} parent=0 // pred_fallthru
    _
  %v14 = vld [vmem:[%s0] sm:$0xff]
  %v15 = vld [vmem:[%s0 + $0x8] sm:$0xff]
  %v16 = vld [vmem:[%s0 + $0x10] sm:$0xff]
  %v17 = vld [vmem:[%s0 + $0x18] sm:$0xff]
  %v18 = vld [vmem:[%s0 + $0x20] sm:$0xff]
  %v19 = vld [vmem:[%s0 + $0x28] sm:$0xff]
  %v20 = vld [vmem:[%s0 + $0x30] sm:$0xff]
  %v21 = vld [vmem:[%s0 + $0x38] sm:$0xff]
  %v22 = vld [vmem:[%s0 + $0x40] sm:$0xff]
  %v23 = vld [vmem:[%s0 + $0x48] sm:$0xff]
  %v24 = vld [vmem:[%s0 + $0x50] sm:$0xff]
  %v25 = vld [vmem:[%s0 + $0x58] sm:$0xff]
  %v26 = vld [vmem:[%s0 + $0x60] sm:$0xff]
  %v27 = vld [vmem:[%s0 + $0x68] sm:$0xff]
  %v28 = vld [vmem:[%s0 + $0x70] sm:$0xff]
  %v29 = vld [vmem:[%s0 + $0x78] sm:$0xff]
  %v30 = vld [vmem:[%s1] sm:$0xff]
  %v31 = vld [vmem:[%s1 + $0x8] sm:$0xff]
  %v32 = vld [vmem:[%s1 + $0x10] sm:$0xff]
  %v33 = vld [vmem:[%s1 + $0x18] sm:$0xff]
  %v34 = vld [vmem:[%s1 + $0x20] sm:$0xff]
  %v35 = vld [vmem:[%s1 + $0x28] sm:$0xff]
  %v36 = vld [vmem:[%s1 + $0x30] sm:$0xff]
  %v37 = vld [vmem:[%s1 + $0x38] sm:$0xff]
  %v38 = vld [vmem:[%s1 + $0x40] sm:$0xff]
  %v39 = vld [vmem:[%s1 + $0x48] sm:$0xff]
  %v40 = vld [vmem:[%s1 + $0x50] sm:$0xff]
  %v41 = vld [vmem:[%s1 + $0x58] sm:$0xff]
  %v42 = vld [vmem:[%s1 + $0x60] sm:$0xff]
  %v43 = vld [vmem:[%s1 + $0x68] sm:$0xff]
  %v44 = vld [vmem:[%s1 + $0x70] sm:$0xff]
  %v45 = vld [vmem:[%s1 + $0x78] sm:$0xff]
  %v46 = vld [vmem:[%s1 + $0x80] sm:$0xff]
  %v47 = vld [vmem:[%s1 + $0x88] sm:$0xff]
  %v48 = vld [vmem:[%s1 + $0x90] sm:$0xff]
  %v49 = vld [vmem:[%s1 + $0x98] sm:$0xff]
  %v50 = vld [vmem:[%s1 + $0xa0] sm:$0xff]
  %v51 = vld [vmem:[%s1 + $0xa8] sm:$0xff]
  %v52 = vld [vmem:[%s1 + $0xb0] sm:$0xff]
  %v53 = vld [vmem:[%s1 + $0xb8] sm:$0xff]
  %v54 = vld [vmem:[%s1 + $0xc0] sm:$0xff]
  %v55 = vld [vmem:[%s1 + $0xc8] sm:$0xff]
  %v56 = vld [vmem:[%s1 + $0xd0] sm:$0xff]
  %v57 = vld [vmem:[%s1 + $0xd8] sm:$0xff]
  %v58 = vld [vmem:[%s1 + $0xe0] sm:$0xff]
  %v59 = vld [vmem:[%s1 + $0xe8] sm:$0xff]
  %v60 = vld [vmem:[%s1 + $0xf0] sm:$0xff]
  %v61 = vld [vmem:[%s1 + $0xf8] sm:$0xff]
  %v78 = vunpack.c.l.b16 %v14
  %v79 = vunpack.c.h.b16 %v14
  %v80 = vunpack.c.l.b16 %v15
  %v81 = vunpack.c.h.b16 %v15
  %v82 = vunpack.c.l.b16 %v16
  %v83 = vunpack.c.h.b16 %v16
  %v84 = vunpack.c.l.b16 %v17
  %v85 = vunpack.c.h.b16 %v17
  %v86 = vunpack.c.l.b16 %v18
  %v87 = vunpack.c.h.b16 %v18
  %v88 = vunpack.c.l.b16 %v19
  %v89 = vunpack.c.h.b16 %v19
  %v90 = vunpack.c.l.b16 %v20
  %v91 = vunpack.c.h.b16 %v20
  %v92 = vunpack.c.l.b16 %v21
  %v93 = vunpack.c.h.b16 %v21
  %v94 = vunpack.c.l.b16 %v22
  %v95 = vunpack.c.h.b16 %v22
  %v96 = vunpack.c.l.b16 %v23
  %v97 = vunpack.c.h.b16 %v23
  %v98 = vunpack.c.l.b16 %v24
  %v99 = vunpack.c.h.b16 %v24
  %v100 = vunpack.c.l.b16 %v25
  %v101 = vunpack.c.h.b16 %v25
  %v102 = vunpack.c.l.b16 %v26
  %v103 = vunpack.c.h.b16 %v26
  %v104 = vunpack.c.l.b16 %v27
  %v105 = vunpack.c.h.b16 %v27
  %v106 = vunpack.c.l.b16 %v28
  %v107 = vunpack.c.h.b16 %v28
  %v108 = vunpack.c.l.b16 %v29
  %v109 = vunpack.c.h.b16 %v29
  %v110 = vpack.c.b16 %v80, %v78
  %v111 = vpack.c.b16 %v81, %v79
  %v112 = vpack.c.b16 %v84, %v82
  %v113 = vpack.c.b16 %v85, %v83
  %v114 = vpack.c.b16 %v88, %v86
  %v115 = vpack.c.b16 %v89, %v87
  %v116 = vpack.c.b16 %v92, %v90
  %v117 = vpack.c.b16 %v93, %v91
  %v118 = vpack.c.b16 %v96, %v94
  %v119 = vpack.c.b16 %v97, %v95
  %v120 = vpack.c.b16 %v100, %v98
  %v121 = vpack.c.b16 %v101, %v99
  %v122 = vpack.c.b16 %v104, %v102
  %v123 = vpack.c.b16 %v105, %v103
  %v124 = vpack.c.b16 %v108, %v106
  %v125 = vpack.c.b16 %v109, %v107
  %v174 = vunpack.c.l.b16 %v30
  %v175 = vunpack.c.h.b16 %v30
  %v176 = vunpack.c.l.b16 %v31
  %v177 = vunpack.c.h.b16 %v31
  %v178 = vunpack.c.l.b16 %v32
  %v179 = vunpack.c.h.b16 %v32
  %v180 = vunpack.c.l.b16 %v33
  %v181 = vunpack.c.h.b16 %v33
  %v182 = vunpack.c.l.b16 %v34
  %v183 = vunpack.c.h.b16 %v34
  %v184 = vunpack.c.l.b16 %v35
  %v185 = vunpack.c.h.b16 %v35
  %v186 = vunpack.c.l.b16 %v36
  %v187 = vunpack.c.h.b16 %v36
  %v188 = vunpack.c.l.b16 %v37
  %v189 = vunpack.c.h.b16 %v37
  %v190 = vunpack.c.l.b16 %v38
  %v191 = vunpack.c.h.b16 %v38
  %v192 = vunpack.c.l.b16 %v39
  %v193 = vunpack.c.h.b16 %v39
  %v194 = vunpack.c.l.b16 %v40
  %v195 = vunpack.c.h.b16 %v40
  %v196 = vunpack.c.l.b16 %v41
  %v197 = vunpack.c.h.b16 %v41
  %v198 = vunpack.c.l.b16 %v42
  %v199 = vunpack.c.h.b16 %v42
  %v200 = vunpack.c.l.b16 %v43
  %v201 = vunpack.c.h.b16 %v43
  %v202 = vunpack.c.l.b16 %v44
  %v203 = vunpack.c.h.b16 %v44
  %v204 = vunpack.c.l.b16 %v45
  %v205 = vunpack.c.h.b16 %v45
  %v206 = vunpack.c.l.b16 %v46
  %v207 = vunpack.c.h.b16 %v46
  %v208 = vunpack.c.l.b16 %v47
  %v209 = vunpack.c.h.b16 %v47
  %v210 = vunpack.c.l.b16 %v48
  %v211 = vunpack.c.h.b16 %v48
  %v212 = vunpack.c.l.b16 %v49
  %v213 = vunpack.c.h.b16 %v49
  %v214 = vunpack.c.l.b16 %v50
  %v215 = vunpack.c.h.b16 %v50
  %v216 = vunpack.c.l.b16 %v51
  %v217 = vunpack.c.h.b16 %v51
  %v218 = vunpack.c.l.b16 %v52
  %v219 = vunpack.c.h.b16 %v52
  %v220 = vunpack.c.l.b16 %v53
  %v221 = vunpack.c.h.b16 %v53
  %v222 = vunpack.c.l.b16 %v54
  %v223 = vunpack.c.h.b16 %v54
  %v224 = vunpack.c.l.b16 %v55
  %v225 = vunpack.c.h.b16 %v55
  %v226 = vunpack.c.l.b16 %v56
  %v227 = vunpack.c.h.b16 %v56
  %v228 = vunpack.c.l.b16 %v57
  %v229 = vunpack.c.h.b16 %v57
  %v230 = vunpack.c.l.b16 %v58
  %v231 = vunpack.c.h.b16 %v58
  %v232 = vunpack.c.l.b16 %v59
  %v233 = vunpack.c.h.b16 %v59
  %v234 = vunpack.c.l.b16 %v60
  %v235 = vunpack.c.h.b16 %v60
  %v236 = vunpack.c.l.b16 %v61
  %v237 = vunpack.c.h.b16 %v61
  %v238 = vpack.c.b16 %v176, %v174
  %v239 = vpack.c.b16 %v177, %v175
  %v240 = vpack.c.b16 %v180, %v178
  %v241 = vpack.c.b16 %v181, %v179
  %v242 = vpack.c.b16 %v184, %v182
  %v243 = vpack.c.b16 %v185, %v183
  %v244 = vpack.c.b16 %v188, %v186
  %v245 = vpack.c.b16 %v189, %v187
  %v246 = vpack.c.b16 %v192, %v190
  %v247 = vpack.c.b16 %v193, %v191
  %v248 = vpack.c.b16 %v196, %v194
  %v249 = vpack.c.b16 %v197, %v195
  %v250 = vpack.c.b16 %v200, %v198
  %v251 = vpack.c.b16 %v201, %v199
  %v252 = vpack.c.b16 %v204, %v202
  %v253 = vpack.c.b16 %v205, %v203
  %v254 = vpack.c.b16 %v208, %v206
  %v255 = vpack.c.b16 %v209, %v207
  %v256 = vpack.c.b16 %v212, %v210
  %v257 = vpack.c.b16 %v213, %v211
  %v258 = vpack.c.b16 %v216, %v214
  %v259 = vpack.c.b16 %v217, %v215
  %v260 = vpack.c.b16 %v220, %v218
  %v261 = vpack.c.b16 %v221, %v219
  %v262 = vpack.c.b16 %v224, %v222
  %v263 = vpack.c.b16 %v225, %v223
  %v264 = vpack.c.b16 %v228, %v226
  %v265 = vpack.c.b16 %v229, %v227
  %v266 = vpack.c.b16 %v232, %v230
  %v267 = vpack.c.b16 %v233, %v231
  %v268 = vpack.c.b16 %v236, %v234
  %v269 = vpack.c.b16 %v237, %v235
  %302 = vmatprep.subr.bf16.mxu0 %v253
  %303 = vmatpush1.bf16.msra.mxu0 %v252
  %304 = vmatprep.subr.bf16.mxu0 %v251
  %305 = vmatpush1.bf16.msra.mxu0 %v250
  %306 = vmatprep.subr.bf16.mxu0 %v249
  %307 = vmatpush1.bf16.msra.mxu0 %v248
  %308 = vmatprep.subr.bf16.mxu0 %v247
  %309 = vmatpush1.bf16.msra.mxu0 %v246
  %310 = vmatprep.subr.bf16.mxu0 %v245
  %311 = vmatpush1.bf16.msra.mxu0 %v244
  %312 = vmatprep.subr.bf16.mxu0 %v243
  %313 = vmatpush1.bf16.msra.mxu0 %v242
  %314 = vmatprep.subr.bf16.mxu0 %v241
  %315 = vmatpush1.bf16.msra.mxu0 %v240
  %316 = vmatprep.subr.bf16.mxu0 %v239
  %317 = vmatpush1.bf16.msra.mxu0 %v238
  %318 = vmatprep.subr.bf16.mxu0 %v269
  %319 = vmatpush2.bf16.msra.mxu0 %v268
  %320 = vmatprep.subr.bf16.mxu0 %v267
  %321 = vmatpush2.bf16.msra.mxu0 %v266
  %322 = vmatprep.subr.bf16.mxu0 %v265
  %323 = vmatpush2.bf16.msra.mxu0 %v264
  %324 = vmatprep.subr.bf16.mxu0 %v263
  %325 = vmatpush2.bf16.msra.mxu0 %v262
  %326 = vmatprep.subr.bf16.mxu0 %v261
  %327 = vmatpush2.bf16.msra.mxu0 %v260
  %328 = vmatprep.subr.bf16.mxu0 %v259
  %329 = vmatpush2.bf16.msra.mxu0 %v258
  %330 = vmatprep.subr.bf16.mxu0 %v257
  %331 = vmatpush2.bf16.msra.mxu0 %v256
  %332 = vmatprep.subr.bf16.mxu0 %v255
  %333 = vmatpush2.bf16.msra.mxu0 %v254
  %334 = vmatprep.mubr.bf16.mxu0 %v111
  %335 = vmatmul.mubr.bf16.gmra.mxu0 %v110
  %v336 = vpop.f32.mrf.mxu0
  %v337 = vadd.f32 0.0, %v336
  %v338 = vpop.f32.mrf.mxu0
  %v339 = vadd.f32 0.0, %v338
  %v340 = vpop.f32.mrf.mxu0
  %v341 = vadd.f32 0.0, %v340
  %v342 = vpop.f32.mrf.mxu0
  %v343 = vadd.f32 0.0, %v342
  %344 = vmatprep.mubr.bf16.mxu0 %v113
  %345 = vmatmul.mubr.bf16.gmra.mxu0 %v112
  %v346 = vpop.f32.mrf.mxu0
  %v347 = vadd.f32 0.0, %v346
  %v348 = vpop.f32.mrf.mxu0
  %v349 = vadd.f32 0.0, %v348
  %v350 = vpop.f32.mrf.mxu0
  %v351 = vadd.f32 0.0, %v350
  %v352 = vpop.f32.mrf.mxu0
  %v353 = vadd.f32 0.0, %v352
  %354 = vmatprep.mubr.bf16.mxu0 %v115
  %355 = vmatmul.mubr.bf16.gmra.mxu0 %v114
  %v356 = vpop.f32.mrf.mxu0
  %v357 = vadd.f32 0.0, %v356
  %v358 = vpop.f32.mrf.mxu0
  %v359 = vadd.f32 0.0, %v358
  %v360 = vpop.f32.mrf.mxu0
  %v361 = vadd.f32 0.0, %v360
  %v362 = vpop.f32.mrf.mxu0
  %v363 = vadd.f32 0.0, %v362
  %364 = vmatprep.mubr.bf16.mxu0 %v117
  %365 = vmatmul.mubr.bf16.gmra.mxu0 %v116
  %v366 = vpop.f32.mrf.mxu0
  %v367 = vadd.f32 0.0, %v366
  %v368 = vpop.f32.mrf.mxu0
  %v369 = vadd.f32 0.0, %v368
  %v370 = vpop.f32.mrf.mxu0
  %v371 = vadd.f32 0.0, %v370
  %v372 = vpop.f32.mrf.mxu0
  %v373 = vadd.f32 0.0, %v372
  %374 = vmatprep.mubr.bf16.mxu0 %v119
  %375 = vmatmul.mubr.bf16.gmra.mxu0 %v118
  %v376 = vpop.f32.mrf.mxu0
  %v377 = vadd.f32 0.0, %v376
  %v378 = vpop.f32.mrf.mxu0
  %v379 = vadd.f32 0.0, %v378
  %v380 = vpop.f32.mrf.mxu0
  %v381 = vadd.f32 0.0, %v380
  %v382 = vpop.f32.mrf.mxu0
  %v383 = vadd.f32 0.0, %v382
  %384 = vmatprep.mubr.bf16.mxu0 %v121
  %385 = vmatmul.mubr.bf16.gmra.mxu0 %v120
  %v386 = vpop.f32.mrf.mxu0
  %v387 = vadd.f32 0.0, %v386
  %v388 = vpop.f32.mrf.mxu0
  %v389 = vadd.f32 0.0, %v388
  %v390 = vpop.f32.mrf.mxu0
  %v391 = vadd.f32 0.0, %v390
  %v392 = vpop.f32.mrf.mxu0
  %v393 = vadd.f32 0.0, %v392
  %394 = vmatprep.mubr.bf16.mxu0 %v123
  %395 = vmatmul.mubr.bf16.gmra.mxu0 %v122
  %v396 = vpop.f32.mrf.mxu0
  %v397 = vadd.f32 0.0, %v396
  %v398 = vpop.f32.mrf.mxu0
  %v399 = vadd.f32 0.0, %v398
  %v400 = vpop.f32.mrf.mxu0
  %v401 = vadd.f32 0.0, %v400
  %v402 = vpop.f32.mrf.mxu0
  %v403 = vadd.f32 0.0, %v402
  %404 = vmatprep.mubr.bf16.mxu0 %v125
  %405 = vmatmul.mubr.bf16.gmra.mxu0 %v124
  %v406 = vpop.f32.mrf.mxu0
  %v407 = vadd.f32 0.0, %v406
  %v408 = vpop.f32.mrf.mxu0
  %v409 = vadd.f32 0.0, %v408
  %v410 = vpop.f32.mrf.mxu0
  %v411 = vadd.f32 0.0, %v410
  %v412 = vpop.f32.mrf.mxu0
  %v413 = vadd.f32 0.0, %v412
  %414 = vdwg.mxu0
  %s415 = scalar_lea.vmem %s1, 256
  %v416 = vld [vmem:[%s415] sm:$0xff]
  %v417 = vld [vmem:[%s415 + $0x8] sm:$0xff]
  %v418 = vld [vmem:[%s415 + $0x10] sm:$0xff]
  %v419 = vld [vmem:[%s415 + $0x18] sm:$0xff]
  %v420 = vld [vmem:[%s415 + $0x20] sm:$0xff]
  %v421 = vld [vmem:[%s415 + $0x28] sm:$0xff]
  %v422 = vld [vmem:[%s415 + $0x30] sm:$0xff]
  %v423 = vld [vmem:[%s415 + $0x38] sm:$0xff]
  %v424 = vld [vmem:[%s415 + $0x40] sm:$0xff]
  %v425 = vld [vmem:[%s415 + $0x48] sm:$0xff]
  %v426 = vld [vmem:[%s415 + $0x50] sm:$0xff]
  %v427 = vld [vmem:[%s415 + $0x58] sm:$0xff]
  %v428 = vld [vmem:[%s415 + $0x60] sm:$0xff]
  %v429 = vld [vmem:[%s415 + $0x68] sm:$0xff]
  %v430 = vld [vmem:[%s415 + $0x70] sm:$0xff]
  %v431 = vld [vmem:[%s415 + $0x78] sm:$0xff]
  %v432 = vld [vmem:[%s415 + $0x80] sm:$0xff]
  %v433 = vld [vmem:[%s415 + $0x88] sm:$0xff]
  %v434 = vld [vmem:[%s415 + $0x90] sm:$0xff]
  %v435 = vld [vmem:[%s415 + $0x98] sm:$0xff]
  %v436 = vld [vmem:[%s415 + $0xa0] sm:$0xff]
  %v437 = vld [vmem:[%s415 + $0xa8] sm:$0xff]
  %v438 = vld [vmem:[%s415 + $0xb0] sm:$0xff]
  %v439 = vld [vmem:[%s415 + $0xb8] sm:$0xff]
  %v440 = vld [vmem:[%s415 + $0xc0] sm:$0xff]
  %v441 = vld [vmem:[%s415 + $0xc8] sm:$0xff]
  %v442 = vld [vmem:[%s415 + $0xd0] sm:$0xff]
  %v443 = vld [vmem:[%s415 + $0xd8] sm:$0xff]
  %v444 = vld [vmem:[%s415 + $0xe0] sm:$0xff]
  %v445 = vld [vmem:[%s415 + $0xe8] sm:$0xff]
  %v446 = vld [vmem:[%s415 + $0xf0] sm:$0xff]
  %v447 = vld [vmem:[%s415 + $0xf8] sm:$0xff]
  %v480 = vunpack.c.l.b16 %v416
  %v481 = vunpack.c.h.b16 %v416
  %v482 = vunpack.c.l.b16 %v417
  %v483 = vunpack.c.h.b16 %v417
  %v484 = vunpack.c.l.b16 %v418
  %v485 = vunpack.c.h.b16 %v418
  %v486 = vunpack.c.l.b16 %v419
  %v487 = vunpack.c.h.b16 %v419
  %v488 = vunpack.c.l.b16 %v420
  %v489 = vunpack.c.h.b16 %v420
  %v490 = vunpack.c.l.b16 %v421
  %v491 = vunpack.c.h.b16 %v421
  %v492 = vunpack.c.l.b16 %v422
  %v493 = vunpack.c.h.b16 %v422
  %v494 = vunpack.c.l.b16 %v423
  %v495 = vunpack.c.h.b16 %v423
  %v496 = vunpack.c.l.b16 %v424
  %v497 = vunpack.c.h.b16 %v424
  %v498 = vunpack.c.l.b16 %v425
  %v499 = vunpack.c.h.b16 %v425
  %v500 = vunpack.c.l.b16 %v426
  %v501 = vunpack.c.h.b16 %v426
  %v502 = vunpack.c.l.b16 %v427
  %v503 = vunpack.c.h.b16 %v427
  %v504 = vunpack.c.l.b16 %v428
  %v505 = vunpack.c.h.b16 %v428
  %v506 = vunpack.c.l.b16 %v429
  %v507 = vunpack.c.h.b16 %v429
  %v508 = vunpack.c.l.b16 %v430
  %v509 = vunpack.c.h.b16 %v430
  %v510 = vunpack.c.l.b16 %v431
  %v511 = vunpack.c.h.b16 %v431
  %v512 = vunpack.c.l.b16 %v432
  %v513 = vunpack.c.h.b16 %v432
  %v514 = vunpack.c.l.b16 %v433
  %v515 = vunpack.c.h.b16 %v433
  %v516 = vunpack.c.l.b16 %v434
  %v517 = vunpack.c.h.b16 %v434
  %v518 = vunpack.c.l.b16 %v435
  %v519 = vunpack.c.h.b16 %v435
  %v520 = vunpack.c.l.b16 %v436
  %v521 = vunpack.c.h.b16 %v436
  %v522 = vunpack.c.l.b16 %v437
  %v523 = vunpack.c.h.b16 %v437
  %v524 = vunpack.c.l.b16 %v438
  %v525 = vunpack.c.h.b16 %v438
  %v526 = vunpack.c.l.b16 %v439
  %v527 = vunpack.c.h.b16 %v439
  %v528 = vunpack.c.l.b16 %v440
  %v529 = vunpack.c.h.b16 %v440
  %v530 = vunpack.c.l.b16 %v441
  %v531 = vunpack.c.h.b16 %v441
  %v532 = vunpack.c.l.b16 %v442
  %v533 = vunpack.c.h.b16 %v442
  %v534 = vunpack.c.l.b16 %v443
  %v535 = vunpack.c.h.b16 %v443
  %v536 = vunpack.c.l.b16 %v444
  %v537 = vunpack.c.h.b16 %v444
  %v538 = vunpack.c.l.b16 %v445
  %v539 = vunpack.c.h.b16 %v445
  %v540 = vunpack.c.l.b16 %v446
  %v541 = vunpack.c.h.b16 %v446
  %v542 = vunpack.c.l.b16 %v447
  %v543 = vunpack.c.h.b16 %v447
  %v544 = vpack.c.b16 %v482, %v480
  %v545 = vpack.c.b16 %v483, %v481
  %v546 = vpack.c.b16 %v486, %v484
  %v547 = vpack.c.b16 %v487, %v485
  %v548 = vpack.c.b16 %v490, %v488
  %v549 = vpack.c.b16 %v491, %v489
  %v550 = vpack.c.b16 %v494, %v492
  %v551 = vpack.c.b16 %v495, %v493
  %v552 = vpack.c.b16 %v498, %v496
  %v553 = vpack.c.b16 %v499, %v497
  %v554 = vpack.c.b16 %v502, %v500
  %v555 = vpack.c.b16 %v503, %v501
  %v556 = vpack.c.b16 %v506, %v504
  %v557 = vpack.c.b16 %v507, %v505
  %v558 = vpack.c.b16 %v510, %v508
  %v559 = vpack.c.b16 %v511, %v509
  %v560 = vpack.c.b16 %v514, %v512
  %v561 = vpack.c.b16 %v515, %v513
  %v562 = vpack.c.b16 %v518, %v516
  %v563 = vpack.c.b16 %v519, %v517
  %v564 = vpack.c.b16 %v522, %v520
  %v565 = vpack.c.b16 %v523, %v521
  %v566 = vpack.c.b16 %v526, %v524
  %v567 = vpack.c.b16 %v527, %v525
  %v568 = vpack.c.b16 %v530, %v528
  %v569 = vpack.c.b16 %v531, %v529
  %v570 = vpack.c.b16 %v534, %v532
  %v571 = vpack.c.b16 %v535, %v533
  %v572 = vpack.c.b16 %v538, %v536
  %v573 = vpack.c.b16 %v539, %v537
  %v574 = vpack.c.b16 %v542, %v540
  %v575 = vpack.c.b16 %v543, %v541
  %608 = vmatprep.subr.bf16.mxu0 %v559
  %609 = vmatpush1.bf16.msra.mxu0 %v558
  %610 = vmatprep.subr.bf16.mxu0 %v557
  %611 = vmatpush1.bf16.msra.mxu0 %v556
  %612 = vmatprep.subr.bf16.mxu0 %v555
  %613 = vmatpush1.bf16.msra.mxu0 %v554
  %614 = vmatprep.subr.bf16.mxu0 %v553
  %615 = vmatpush1.bf16.msra.mxu0 %v552
  %616 = vmatprep.subr.bf16.mxu0 %v551
  %617 = vmatpush1.bf16.msra.mxu0 %v550
  %618 = vmatprep.subr.bf16.mxu0 %v549
  %619 = vmatpush1.bf16.msra.mxu0 %v548
  %620 = vmatprep.subr.bf16.mxu0 %v547
  %621 = vmatpush1.bf16.msra.mxu0 %v546
  %622 = vmatprep.subr.bf16.mxu0 %v545
  %623 = vmatpush1.bf16.msra.mxu0 %v544
  %624 = vmatprep.subr.bf16.mxu0 %v575
  %625 = vmatpush2.bf16.msra.mxu0 %v574
  %626 = vmatprep.subr.bf16.mxu0 %v573
  %627 = vmatpush2.bf16.msra.mxu0 %v572
  %628 = vmatprep.subr.bf16.mxu0 %v571
  %629 = vmatpush2.bf16.msra.mxu0 %v570
  %630 = vmatprep.subr.bf16.mxu0 %v569
  %631 = vmatpush2.bf16.msra.mxu0 %v568
  %632 = vmatprep.subr.bf16.mxu0 %v567
  %633 = vmatpush2.bf16.msra.mxu0 %v566
  %634 = vmatprep.subr.bf16.mxu0 %v565
  %635 = vmatpush2.bf16.msra.mxu0 %v564
  %636 = vmatprep.subr.bf16.mxu0 %v563
  %637 = vmatpush2.bf16.msra.mxu0 %v562
  %638 = vmatprep.subr.bf16.mxu0 %v561
  %639 = vmatpush2.bf16.msra.mxu0 %v560
  %640 = vmatprep.mubr.bf16.mxu0 %v111
  %641 = vmatmul.mubr.bf16.gmra.mxu0 %v110
  %v642 = vpop.f32.mrf.mxu0
  %v643 = vadd.f32 0.0, %v642
  %v644 = vpop.f32.mrf.mxu0
  %v645 = vadd.f32 0.0, %v644
  %v646 = vpop.f32.mrf.mxu0
  %v647 = vadd.f32 0.0, %v646
  %v648 = vpop.f32.mrf.mxu0
  %v649 = vadd.f32 0.0, %v648
  %650 = vmatprep.mubr.bf16.mxu0 %v113
  %651 = vmatmul.mubr.bf16.gmra.mxu0 %v112
  %v652 = vpop.f32.mrf.mxu0
  %v653 = vadd.f32 0.0, %v652
  %v654 = vpop.f32.mrf.mxu0
  %v655 = vadd.f32 0.0, %v654
  %v656 = vpop.f32.mrf.mxu0
  %v657 = vadd.f32 0.0, %v656
  %v658 = vpop.f32.mrf.mxu0
  %v659 = vadd.f32 0.0, %v658
  %660 = vmatprep.mubr.bf16.mxu0 %v115
  %661 = vmatmul.mubr.bf16.gmra.mxu0 %v114
  %v662 = vpop.f32.mrf.mxu0
  %v663 = vadd.f32 0.0, %v662
  %v664 = vpop.f32.mrf.mxu0
  %v665 = vadd.f32 0.0, %v664
  %v666 = vpop.f32.mrf.mxu0
  %v667 = vadd.f32 0.0, %v666
  %v668 = vpop.f32.mrf.mxu0
  %v669 = vadd.f32 0.0, %v668
  %670 = vmatprep.mubr.bf16.mxu0 %v117
  %671 = vmatmul.mubr.bf16.gmra.mxu0 %v116
  %v672 = vpop.f32.mrf.mxu0
  %v673 = vadd.f32 0.0, %v672
  %v674 = vpop.f32.mrf.mxu0
  %v675 = vadd.f32 0.0, %v674
  %v676 = vpop.f32.mrf.mxu0
  %v677 = vadd.f32 0.0, %v676
  %v678 = vpop.f32.mrf.mxu0
  %v679 = vadd.f32 0.0, %v678
  %680 = vmatprep.mubr.bf16.mxu0 %v119
  %681 = vmatmul.mubr.bf16.gmra.mxu0 %v118
  %v682 = vpop.f32.mrf.mxu0
  %v683 = vadd.f32 0.0, %v682
  %v684 = vpop.f32.mrf.mxu0
  %v685 = vadd.f32 0.0, %v684
  %v686 = vpop.f32.mrf.mxu0
  %v687 = vadd.f32 0.0, %v686
  %v688 = vpop.f32.mrf.mxu0
  %v689 = vadd.f32 0.0, %v688
  %690 = vmatprep.mubr.bf16.mxu0 %v121
  %691 = vmatmul.mubr.bf16.gmra.mxu0 %v120
  %v692 = vpop.f32.mrf.mxu0
  %v693 = vadd.f32 0.0, %v692
  %v694 = vpop.f32.mrf.mxu0
  %v695 = vadd.f32 0.0, %v694
  %v696 = vpop.f32.mrf.mxu0
  %v697 = vadd.f32 0.0, %v696
  %v698 = vpop.f32.mrf.mxu0
  %v699 = vadd.f32 0.0, %v698
  %700 = vmatprep.mubr.bf16.mxu0 %v123
  %701 = vmatmul.mubr.bf16.gmra.mxu0 %v122
  %v702 = vpop.f32.mrf.mxu0
  %v703 = vadd.f32 0.0, %v702
  %v704 = vpop.f32.mrf.mxu0
  %v705 = vadd.f32 0.0, %v704
  %v706 = vpop.f32.mrf.mxu0
  %v707 = vadd.f32 0.0, %v706
  %v708 = vpop.f32.mrf.mxu0
  %v709 = vadd.f32 0.0, %v708
  %710 = vmatprep.mubr.bf16.mxu0 %v125
  %711 = vmatmul.mubr.bf16.gmra.mxu0 %v124
  %v712 = vpop.f32.mrf.mxu0
  %v713 = vadd.f32 0.0, %v712
  %v714 = vpop.f32.mrf.mxu0
  %v715 = vadd.f32 0.0, %v714
  %v716 = vpop.f32.mrf.mxu0
  %v717 = vadd.f32 0.0, %v716
  %v718 = vpop.f32.mrf.mxu0
  %v719 = vadd.f32 0.0, %v718
  %720 = vdwg.mxu0
  %s721 = scalar_lea.vmem %s1, 512
  %v722 = vld [vmem:[%s721] sm:$0xff]
  %v723 = vld [vmem:[%s721 + $0x8] sm:$0xff]
  %v724 = vld [vmem:[%s721 + $0x10] sm:$0xff]
  %v725 = vld [vmem:[%s721 + $0x18] sm:$0xff]
  %v726 = vld [vmem:[%s721 + $0x20] sm:$0xff]
  %v727 = vld [vmem:[%s721 + $0x28] sm:$0xff]
  %v728 = vld [vmem:[%s721 + $0x30] sm:$0xff]
  %v729 = vld [vmem:[%s721 + $0x38] sm:$0xff]
  %v730 = vld [vmem:[%s721 + $0x40] sm:$0xff]
  %v731 = vld [vmem:[%s721 + $0x48] sm:$0xff]
  %v732 = vld [vmem:[%s721 + $0x50] sm:$0xff]
  %v733 = vld [vmem:[%s721 + $0x58] sm:$0xff]
  %v734 = vld [vmem:[%s721 + $0x60] sm:$0xff]
  %v735 = vld [vmem:[%s721 + $0x68] sm:$0xff]
  %v736 = vld [vmem:[%s721 + $0x70] sm:$0xff]
  %v737 = vld [vmem:[%s721 + $0x78] sm:$0xff]
  %v738 = vld [vmem:[%s721 + $0x80] sm:$0xff]
  %v739 = vld [vmem:[%s721 + $0x88] sm:$0xff]
  %v740 = vld [vmem:[%s721 + $0x90] sm:$0xff]
  %v741 = vld [vmem:[%s721 + $0x98] sm:$0xff]
  %v742 = vld [vmem:[%s721 + $0xa0] sm:$0xff]
  %v743 = vld [vmem:[%s721 + $0xa8] sm:$0xff]
  %v744 = vld [vmem:[%s721 + $0xb0] sm:$0xff]
  %v745 = vld [vmem:[%s721 + $0xb8] sm:$0xff]
  %v746 = vld [vmem:[%s721 + $0xc0] sm:$0xff]
  %v747 = vld [vmem:[%s721 + $0xc8] sm:$0xff]
  %v748 = vld [vmem:[%s721 + $0xd0] sm:$0xff]
  %v749 = vld [vmem:[%s721 + $0xd8] sm:$0xff]
  %v750 = vld [vmem:[%s721 + $0xe0] sm:$0xff]
  %v751 = vld [vmem:[%s721 + $0xe8] sm:$0xff]
  %v752 = vld [vmem:[%s721 + $0xf0] sm:$0xff]
  %v753 = vld [vmem:[%s721 + $0xf8] sm:$0xff]
  %v786 = vunpack.c.l.b16 %v722
  %v787 = vunpack.c.h.b16 %v722
  %v788 = vunpack.c.l.b16 %v723
  %v789 = vunpack.c.h.b16 %v723
  %v790 = vunpack.c.l.b16 %v724
  %v791 = vunpack.c.h.b16 %v724
  %v792 = vunpack.c.l.b16 %v725
  %v793 = vunpack.c.h.b16 %v725
  %v794 = vunpack.c.l.b16 %v726
  %v795 = vunpack.c.h.b16 %v726
  %v796 = vunpack.c.l.b16 %v727
  %v797 = vunpack.c.h.b16 %v727
  %v798 = vunpack.c.l.b16 %v728
  %v799 = vunpack.c.h.b16 %v728
  %v800 = vunpack.c.l.b16 %v729
  %v801 = vunpack.c.h.b16 %v729
  %v802 = vunpack.c.l.b16 %v730
  %v803 = vunpack.c.h.b16 %v730
  %v804 = vunpack.c.l.b16 %v731
  %v805 = vunpack.c.h.b16 %v731
  %v806 = vunpack.c.l.b16 %v732
  %v807 = vunpack.c.h.b16 %v732
  %v808 = vunpack.c.l.b16 %v733
  %v809 = vunpack.c.h.b16 %v733
  %v810 = vunpack.c.l.b16 %v734
  %v811 = vunpack.c.h.b16 %v734
  %v812 = vunpack.c.l.b16 %v735
  %v813 = vunpack.c.h.b16 %v735
  %v814 = vunpack.c.l.b16 %v736
  %v815 = vunpack.c.h.b16 %v736
  %v816 = vunpack.c.l.b16 %v737
  %v817 = vunpack.c.h.b16 %v737
  %v818 = vunpack.c.l.b16 %v738
  %v819 = vunpack.c.h.b16 %v738
  %v820 = vunpack.c.l.b16 %v739
  %v821 = vunpack.c.h.b16 %v739
  %v822 = vunpack.c.l.b16 %v740
  %v823 = vunpack.c.h.b16 %v740
  %v824 = vunpack.c.l.b16 %v741
  %v825 = vunpack.c.h.b16 %v741
  %v826 = vunpack.c.l.b16 %v742
  %v827 = vunpack.c.h.b16 %v742
  %v828 = vunpack.c.l.b16 %v743
  %v829 = vunpack.c.h.b16 %v743
  %v830 = vunpack.c.l.b16 %v744
  %v831 = vunpack.c.h.b16 %v744
  %v832 = vunpack.c.l.b16 %v745
  %v833 = vunpack.c.h.b16 %v745
  %v834 = vunpack.c.l.b16 %v746
  %v835 = vunpack.c.h.b16 %v746
  %v836 = vunpack.c.l.b16 %v747
  %v837 = vunpack.c.h.b16 %v747
  %v838 = vunpack.c.l.b16 %v748
  %v839 = vunpack.c.h.b16 %v748
  %v840 = vunpack.c.l.b16 %v749
  %v841 = vunpack.c.h.b16 %v749
  %v842 = vunpack.c.l.b16 %v750
  %v843 = vunpack.c.h.b16 %v750
  %v844 = vunpack.c.l.b16 %v751
  %v845 = vunpack.c.h.b16 %v751
  %v846 = vunpack.c.l.b16 %v752
  %v847 = vunpack.c.h.b16 %v752
  %v848 = vunpack.c.l.b16 %v753
  %v849 = vunpack.c.h.b16 %v753
  %v850 = vpack.c.b16 %v788, %v786
  %v851 = vpack.c.b16 %v789, %v787
  %v852 = vpack.c.b16 %v792, %v790
  %v853 = vpack.c.b16 %v793, %v791
  %v854 = vpack.c.b16 %v796, %v794
  %v855 = vpack.c.b16 %v797, %v795
  %v856 = vpack.c.b16 %v800, %v798
  %v857 = vpack.c.b16 %v801, %v799
  %v858 = vpack.c.b16 %v804, %v802
  %v859 = vpack.c.b16 %v805, %v803
  %v860 = vpack.c.b16 %v808, %v806
  %v861 = vpack.c.b16 %v809, %v807
  %v862 = vpack.c.b16 %v812, %v810
  %v863 = vpack.c.b16 %v813, %v811
  %v864 = vpack.c.b16 %v816, %v814
  %v865 = vpack.c.b16 %v817, %v815
  %v866 = vpack.c.b16 %v820, %v818
  %v867 = vpack.c.b16 %v821, %v819
  %v868 = vpack.c.b16 %v824, %v822
  %v869 = vpack.c.b16 %v825, %v823
  %v870 = vpack.c.b16 %v828, %v826
  %v871 = vpack.c.b16 %v829, %v827
  %v872 = vpack.c.b16 %v832, %v830
  %v873 = vpack.c.b16 %v833, %v831
  %v874 = vpack.c.b16 %v836, %v834
  %v875 = vpack.c.b16 %v837, %v835
  %v876 = vpack.c.b16 %v840, %v838
  %v877 = vpack.c.b16 %v841, %v839
  %v878 = vpack.c.b16 %v844, %v842
  %v879 = vpack.c.b16 %v845, %v843
  %v880 = vpack.c.b16 %v848, %v846
  %v881 = vpack.c.b16 %v849, %v847
  %914 = vmatprep.subr.bf16.mxu0 %v865
  %915 = vmatpush1.bf16.msra.mxu0 %v864
  %916 = vmatprep.subr.bf16.mxu0 %v863
  %917 = vmatpush1.bf16.msra.mxu0 %v862
  %918 = vmatprep.subr.bf16.mxu0 %v861
  %919 = vmatpush1.bf16.msra.mxu0 %v860
  %920 = vmatprep.subr.bf16.mxu0 %v859
  %921 = vmatpush1.bf16.msra.mxu0 %v858
  %922 = vmatprep.subr.bf16.mxu0 %v857
  %923 = vmatpush1.bf16.msra.mxu0 %v856
  %924 = vmatprep.subr.bf16.mxu0 %v855
  %925 = vmatpush1.bf16.msra.mxu0 %v854
  %926 = vmatprep.subr.bf16.mxu0 %v853
  %927 = vmatpush1.bf16.msra.mxu0 %v852
  %928 = vmatprep.subr.bf16.mxu0 %v851
  %929 = vmatpush1.bf16.msra.mxu0 %v850
  %930 = vmatprep.subr.bf16.mxu0 %v881
  %931 = vmatpush2.bf16.msra.mxu0 %v880
  %932 = vmatprep.subr.bf16.mxu0 %v879
  %933 = vmatpush2.bf16.msra.mxu0 %v878
  %934 = vmatprep.subr.bf16.mxu0 %v877
  %935 = vmatpush2.bf16.msra.mxu0 %v876
  %936 = vmatprep.subr.bf16.mxu0 %v875
  %937 = vmatpush2.bf16.msra.mxu0 %v874
  %938 = vmatprep.subr.bf16.mxu0 %v873
  %939 = vmatpush2.bf16.msra.mxu0 %v872
  %940 = vmatprep.subr.bf16.mxu0 %v871
  %941 = vmatpush2.bf16.msra.mxu0 %v870
  %942 = vmatprep.subr.bf16.mxu0 %v869
  %943 = vmatpush2.bf16.msra.mxu0 %v868
  %944 = vmatprep.subr.bf16.mxu0 %v867
  %945 = vmatpush2.bf16.msra.mxu0 %v866
  %946 = vmatprep.mubr.bf16.mxu0 %v111
  %947 = vmatmul.mubr.bf16.gmra.mxu0 %v110
  %v948 = vpop.f32.mrf.mxu0
  %v949 = vadd.f32 0.0, %v948
  %v950 = vpop.f32.mrf.mxu0
  %v951 = vadd.f32 0.0, %v950
  %v952 = vpop.f32.mrf.mxu0
  %v953 = vadd.f32 0.0, %v952
  %v954 = vpop.f32.mrf.mxu0
  %v955 = vadd.f32 0.0, %v954
  %956 = vmatprep.mubr.bf16.mxu0 %v113
  %957 = vmatmul.mubr.bf16.gmra.mxu0 %v112
  %v958 = vpop.f32.mrf.mxu0
  %v959 = vadd.f32 0.0, %v958
  %v960 = vpop.f32.mrf.mxu0
  %v961 = vadd.f32 0.0, %v960
  %v962 = vpop.f32.mrf.mxu0
  %v963 = vadd.f32 0.0, %v962
  %v964 = vpop.f32.mrf.mxu0
  %v965 = vadd.f32 0.0, %v964
  %966 = vmatprep.mubr.bf16.mxu0 %v115
  %967 = vmatmul.mubr.bf16.gmra.mxu0 %v114
  %v968 = vpop.f32.mrf.mxu0
  %v969 = vadd.f32 0.0, %v968
  %v970 = vpop.f32.mrf.mxu0
  %v971 = vadd.f32 0.0, %v970
  %v972 = vpop.f32.mrf.mxu0
  %v973 = vadd.f32 0.0, %v972
  %v974 = vpop.f32.mrf.mxu0
  %v975 = vadd.f32 0.0, %v974
  %976 = vmatprep.mubr.bf16.mxu0 %v117
  %977 = vmatmul.mubr.bf16.gmra.mxu0 %v116
  %v978 = vpop.f32.mrf.mxu0
  %v979 = vadd.f32 0.0, %v978
  %v980 = vpop.f32.mrf.mxu0
  %v981 = vadd.f32 0.0, %v980
  %v982 = vpop.f32.mrf.mxu0
  %v983 = vadd.f32 0.0, %v982
  %v984 = vpop.f32.mrf.mxu0
  %v985 = vadd.f32 0.0, %v984
  %986 = vmatprep.mubr.bf16.mxu0 %v119
  %987 = vmatmul.mubr.bf16.gmra.mxu0 %v118
  %v988 = vpop.f32.mrf.mxu0
  %v989 = vadd.f32 0.0, %v988
  %v990 = vpop.f32.mrf.mxu0
  %v991 = vadd.f32 0.0, %v990
  %v992 = vpop.f32.mrf.mxu0
  %v993 = vadd.f32 0.0, %v992
  %v994 = vpop.f32.mrf.mxu0
  %v995 = vadd.f32 0.0, %v994
  %996 = vmatprep.mubr.bf16.mxu0 %v121
  %997 = vmatmul.mubr.bf16.gmra.mxu0 %v120
  %v998 = vpop.f32.mrf.mxu0
  %v999 = vadd.f32 0.0, %v998
  %v1000 = vpop.f32.mrf.mxu0
  %v1001 = vadd.f32 0.0, %v1000
  %v1002 = vpop.f32.mrf.mxu0
  %v1003 = vadd.f32 0.0, %v1002
  %v1004 = vpop.f32.mrf.mxu0
  %v1005 = vadd.f32 0.0, %v1004
  %1006 = vmatprep.mubr.bf16.mxu0 %v123
  %1007 = vmatmul.mubr.bf16.gmra.mxu0 %v122
  %v1008 = vpop.f32.mrf.mxu0
  %v1009 = vadd.f32 0.0, %v1008
  %v1010 = vpop.f32.mrf.mxu0
  %v1011 = vadd.f32 0.0, %v1010
  %v1012 = vpop.f32.mrf.mxu0
  %v1013 = vadd.f32 0.0, %v1012
  %v1014 = vpop.f32.mrf.mxu0
  %v1015 = vadd.f32 0.0, %v1014
  %1016 = vmatprep.mubr.bf16.mxu0 %v125
  %1017 = vmatmul.mubr.bf16.gmra.mxu0 %v124
  %v1018 = vpop.f32.mrf.mxu0
  %v1019 = vadd.f32 0.0, %v1018
  %v1020 = vpop.f32.mrf.mxu0
  %v1021 = vadd.f32 0.0, %v1020
  %v1022 = vpop.f32.mrf.mxu0
  %v1023 = vadd.f32 0.0, %v1022
  %v1024 = vpop.f32.mrf.mxu0
  %v1025 = vadd.f32 0.0, %v1024
  %1026 = vdwg.mxu0
  %v1027 = vld [vmem:[%s2] sm:$0x3]
  %v1029 = vlaneseq
  %v1030 = vshrl.u32 %v1029, 7
  %v1031 = vsub.s32 0, %v1030
  %v1032 = vrot.slane %v1027, %v1031
  %v1033 = vlaneseq
  %v1034 = vshrl.u32 %v1033, 7
  %v1035 = vsub.s32 1, %v1034
  %v1036 = vrot.slane %v1027, %v1035
  %v1071 = vrot.slane %v341, 7
  %vm1072 = vcmask 1041409
  %v1073 = vsel %vm1072, %v1071, %v337
  %v1074 = vrot.slane %v347, 6
  %vm1075 = vcmask 1042434
  %v1076 = vsel %vm1075, %v1074, %v1073
  %v1077 = vrot.slane %v351, 5
  %vm1078 = vcmask 1043459
  %v1079 = vsel %vm1078, %v1077, %v1076
  %v1080 = vrot.slane %v357, 4
  %vm1081 = vcmask 1044484
  %v1082 = vsel %vm1081, %v1080, %v1079
  %v1083 = vrot.slane %v361, 3
  %vm1084 = vcmask 1045509
  %v1085 = vsel %vm1084, %v1083, %v1082
  %v1086 = vrot.slane %v367, 2
  %vm1087 = vcmask 1046534
  %v1088 = vsel %vm1087, %v1086, %v1085
  %v1089 = vrot.slane %v371, 1
  %vm1090 = vcmask 1047559
  %v1091 = vsel %vm1090, %v1089, %v1088
  %v1092 = vrot.slane %v343, 7
  %v1093 = vsel %vm1072, %v1092, %v339
  %v1094 = vrot.slane %v349, 6
  %v1095 = vsel %vm1075, %v1094, %v1093
  %v1096 = vrot.slane %v353, 5
  %v1097 = vsel %vm1078, %v1096, %v1095
  %v1098 = vrot.slane %v359, 4
  %v1099 = vsel %vm1081, %v1098, %v1097
  %v1100 = vrot.slane %v363, 3
  %v1101 = vsel %vm1084, %v1100, %v1099
  %v1102 = vrot.slane %v369, 2
  %v1103 = vsel %vm1087, %v1102, %v1101
  %v1104 = vrot.slane %v373, 1
  %v1105 = vsel %vm1090, %v1104, %v1103
  %v1106 = vrot.slane %v381, 7
  %v1107 = vsel %vm1072, %v1106, %v377
  %v1108 = vrot.slane %v387, 6
  %v1109 = vsel %vm1075, %v1108, %v1107
  %v1110 = vrot.slane %v391, 5
  %v1111 = vsel %vm1078, %v1110, %v1109
  %v1112 = vrot.slane %v397, 4
  %v1113 = vsel %vm1081, %v1112, %v1111
  %v1114 = vrot.slane %v401, 3
  %v1115 = vsel %vm1084, %v1114, %v1113
  %v1116 = vrot.slane %v407, 2
  %v1117 = vsel %vm1087, %v1116, %v1115
  %v1118 = vrot.slane %v411, 1
  %v1119 = vsel %vm1090, %v1118, %v1117
  %v1120 = vrot.slane %v383, 7
  %v1121 = vsel %vm1072, %v1120, %v379
  %v1122 = vrot.slane %v389, 6
  %v1123 = vsel %vm1075, %v1122, %v1121
  %v1124 = vrot.slane %v393, 5
  %v1125 = vsel %vm1078, %v1124, %v1123
  %v1126 = vrot.slane %v399, 4
  %v1127 = vsel %vm1081, %v1126, %v1125
  %v1128 = vrot.slane %v403, 3
  %v1129 = vsel %vm1084, %v1128, %v1127
  %v1130 = vrot.slane %v409, 2
  %v1131 = vsel %vm1087, %v1130, %v1129
  %v1132 = vrot.slane %v413, 1
  %v1133 = vsel %vm1090, %v1132, %v1131
  %v1138 = vadd.f32 %v1032, %v1091
  %v1139 = vadd.f32 %v1036, %v1105
  %v1140 = vadd.f32 %v1032, %v1119
  %v1141 = vadd.f32 %v1036, %v1133
  %v1174 = vrot.slane %v643, 1
  %v1175 = vsel %vm1072, %v647, %v1174
  %v1176 = vrot.slane %v653, 7
  %v1177 = vsel %vm1075, %v1176, %v1175
  %v1178 = vrot.slane %v657, 6
  %v1179 = vsel %vm1078, %v1178, %v1177
  %v1180 = vrot.slane %v663, 5
  %v1181 = vsel %vm1081, %v1180, %v1179
  %v1182 = vrot.slane %v667, 4
  %v1183 = vsel %vm1084, %v1182, %v1181
  %v1184 = vrot.slane %v673, 3
  %v1185 = vsel %vm1087, %v1184, %v1183
  %v1186 = vrot.slane %v677, 2
  %v1187 = vsel %vm1090, %v1186, %v1185
  %v1188 = vrot.slane %v645, 1
  %v1189 = vsel %vm1072, %v649, %v1188
  %v1190 = vrot.slane %v655, 7
  %v1191 = vsel %vm1075, %v1190, %v1189
  %v1192 = vrot.slane %v659, 6
  %v1193 = vsel %vm1078, %v1192, %v1191
  %v1194 = vrot.slane %v665, 5
  %v1195 = vsel %vm1081, %v1194, %v1193
  %v1196 = vrot.slane %v669, 4
  %v1197 = vsel %vm1084, %v1196, %v1195
  %v1198 = vrot.slane %v675, 3
  %v1199 = vsel %vm1087, %v1198, %v1197
  %v1200 = vrot.slane %v679, 2
  %v1201 = vsel %vm1090, %v1200, %v1199
  %v1202 = vrot.slane %v683, 1
  %v1203 = vsel %vm1072, %v687, %v1202
  %v1204 = vrot.slane %v693, 7
  %v1205 = vsel %vm1075, %v1204, %v1203
  %v1206 = vrot.slane %v697, 6
  %v1207 = vsel %vm1078, %v1206, %v1205
  %v1208 = vrot.slane %v703, 5
  %v1209 = vsel %vm1081, %v1208, %v1207
  %v1210 = vrot.slane %v707, 4
  %v1211 = vsel %vm1084, %v1210, %v1209
  %v1212 = vrot.slane %v713, 3
  %v1213 = vsel %vm1087, %v1212, %v1211
  %v1214 = vrot.slane %v717, 2
  %v1215 = vsel %vm1090, %v1214, %v1213
  %v1216 = vrot.slane %v685, 1
  %v1217 = vsel %vm1072, %v689, %v1216
  %v1218 = vrot.slane %v695, 7
  %v1219 = vsel %vm1075, %v1218, %v1217
  %v1220 = vrot.slane %v699, 6
  %v1221 = vsel %vm1078, %v1220, %v1219
  %v1222 = vrot.slane %v705, 5
  %v1223 = vsel %vm1081, %v1222, %v1221
  %v1224 = vrot.slane %v709, 4
  %v1225 = vsel %vm1084, %v1224, %v1223
  %v1226 = vrot.slane %v715, 3
  %v1227 = vsel %vm1087, %v1226, %v1225
  %v1228 = vrot.slane %v719, 2
  %v1229 = vsel %vm1090, %v1228, %v1227
  %v1234 = vadd.f32 %v1138, %v1187
  %v1235 = vadd.f32 %v1139, %v1201
  %v1236 = vadd.f32 %v1140, %v1215
  %v1237 = vadd.f32 %v1141, %v1229
  %v1270 = vrot.slane %v949, 2
  %v1271 = vrot.slane %v953, 1
  %v1272 = vsel %vm1072, %v1271, %v1270
  %v1273 = vsel %vm1075, %v959, %v1272
  %v1274 = vrot.slane %v963, 7
  %v1275 = vsel %vm1078, %v1274, %v1273
  %v1276 = vrot.slane %v969, 6
  %v1277 = vsel %vm1081, %v1276, %v1275
  %v1278 = vrot.slane %v973, 5
  %v1279 = vsel %vm1084, %v1278, %v1277
  %v1280 = vrot.slane %v979, 4
  %v1281 = vsel %vm1087, %v1280, %v1279
  %v1282 = vrot.slane %v983, 3
  %v1283 = vsel %vm1090, %v1282, %v1281
  %v1284 = vrot.slane %v951, 2
  %v1285 = vrot.slane %v955, 1
  %v1286 = vsel %vm1072, %v1285, %v1284
  %v1287 = vsel %vm1075, %v961, %v1286
  %v1288 = vrot.slane %v965, 7
  %v1289 = vsel %vm1078, %v1288, %v1287
  %v1290 = vrot.slane %v971, 6
  %v1291 = vsel %vm1081, %v1290, %v1289
  %v1292 = vrot.slane %v975, 5
  %v1293 = vsel %vm1084, %v1292, %v1291
  %v1294 = vrot.slane %v981, 4
  %v1295 = vsel %vm1087, %v1294, %v1293
  %v1296 = vrot.slane %v985, 3
  %v1297 = vsel %vm1090, %v1296, %v1295
  %v1298 = vrot.slane %v989, 2
  %v1299 = vrot.slane %v993, 1
  %v1300 = vsel %vm1072, %v1299, %v1298
  %v1301 = vsel %vm1075, %v999, %v1300
  %v1302 = vrot.slane %v1003, 7
  %v1303 = vsel %vm1078, %v1302, %v1301
  %v1304 = vrot.slane %v1009, 6
  %v1305 = vsel %vm1081, %v1304, %v1303
  %v1306 = vrot.slane %v1013, 5
  %v1307 = vsel %vm1084, %v1306, %v1305
  %v1308 = vrot.slane %v1019, 4
  %v1309 = vsel %vm1087, %v1308, %v1307
  %v1310 = vrot.slane %v1023, 3
  %v1311 = vsel %vm1090, %v1310, %v1309
  %v1312 = vrot.slane %v991, 2
  %v1313 = vrot.slane %v995, 1
  %v1314 = vsel %vm1072, %v1313, %v1312
  %v1315 = vsel %vm1075, %v1001, %v1314
  %v1316 = vrot.slane %v1005, 7
  %v1317 = vsel %vm1078, %v1316, %v1315
  %v1318 = vrot.slane %v1011, 6
  %v1319 = vsel %vm1081, %v1318, %v1317
  %v1320 = vrot.slane %v1015, 5
  %v1321 = vsel %vm1084, %v1320, %v1319
  %v1322 = vrot.slane %v1021, 4
  %v1323 = vsel %vm1087, %v1322, %v1321
  %v1324 = vrot.slane %v1025, 3
  %v1325 = vsel %vm1090, %v1324, %v1323
  %v1330 = vadd.f32 %v1234, %v1283
  %v1331 = vadd.f32 %v1235, %v1297
  %v1332 = vadd.f32 %v1236, %v1311
  %v1333 = vadd.f32 %v1237, %v1325
  %v1334 = vmax.f32 %v1330, 0.0
  %v1335 = vmax.f32 %v1331, 0.0
  %v1336 = vmax.f32 %v1332, 0.0
  %v1337 = vmax.f32 %v1333, 0.0
  %v1338 = vrot.slane %v337, 1
  %v1339 = vsel %vm1072, %v341, %v1338
  %v1340 = vrot.slane %v347, 7
  %v1341 = vsel %vm1075, %v1340, %v1339
  %v1342 = vrot.slane %v351, 6
  %v1343 = vsel %vm1078, %v1342, %v1341
  %v1344 = vrot.slane %v357, 5
  %v1345 = vsel %vm1081, %v1344, %v1343
  %v1346 = vrot.slane %v361, 4
  %v1347 = vsel %vm1084, %v1346, %v1345
  %v1348 = vrot.slane %v367, 3
  %v1349 = vsel %vm1087, %v1348, %v1347
  %v1350 = vrot.slane %v371, 2
  %v1351 = vsel %vm1090, %v1350, %v1349
  %v1352 = vrot.slane %v339, 1
  %v1353 = vsel %vm1072, %v343, %v1352
  %v1354 = vrot.slane %v349, 7
  %v1355 = vsel %vm1075, %v1354, %v1353
  %v1356 = vrot.slane %v353, 6
  %v1357 = vsel %vm1078, %v1356, %v1355
  %v1358 = vrot.slane %v359, 5
  %v1359 = vsel %vm1081, %v1358, %v1357
  %v1360 = vrot.slane %v363, 4
  %v1361 = vsel %vm1084, %v1360, %v1359
  %v1362 = vrot.slane %v369, 3
  %v1363 = vsel %vm1087, %v1362, %v1361
  %v1364 = vrot.slane %v373, 2
  %v1365 = vsel %vm1090, %v1364, %v1363
  %v1366 = vrot.slane %v377, 1
  %v1367 = vsel %vm1072, %v381, %v1366
  %v1368 = vrot.slane %v387, 7
  %v1369 = vsel %vm1075, %v1368, %v1367
  %v1370 = vrot.slane %v391, 6
  %v1371 = vsel %vm1078, %v1370, %v1369
  %v1372 = vrot.slane %v397, 5
  %v1373 = vsel %vm1081, %v1372, %v1371
  %v1374 = vrot.slane %v401, 4
  %v1375 = vsel %vm1084, %v1374, %v1373
  %v1376 = vrot.slane %v407, 3
  %v1377 = vsel %vm1087, %v1376, %v1375
  %v1378 = vrot.slane %v411, 2
  %v1379 = vsel %vm1090, %v1378, %v1377
  %v1380 = vrot.slane %v379, 1
  %v1381 = vsel %vm1072, %v383, %v1380
  %v1382 = vrot.slane %v389, 7
  %v1383 = vsel %vm1075, %v1382, %v1381
  %v1384 = vrot.slane %v393, 6
  %v1385 = vsel %vm1078, %v1384, %v1383
  %v1386 = vrot.slane %v399, 5
  %v1387 = vsel %vm1081, %v1386, %v1385
  %v1388 = vrot.slane %v403, 4
  %v1389 = vsel %vm1084, %v1388, %v1387
  %v1390 = vrot.slane %v409, 3
  %v1391 = vsel %vm1087, %v1390, %v1389
  %v1392 = vrot.slane %v413, 2
  %v1393 = vsel %vm1090, %v1392, %v1391
  %v1398 = vadd.f32 %v1032, %v1351
  %v1399 = vadd.f32 %v1036, %v1365
  %v1400 = vadd.f32 %v1032, %v1379
  %v1401 = vadd.f32 %v1036, %v1393
  %v1402 = vrot.slane %v643, 2
  %v1403 = vrot.slane %v647, 1
  %v1404 = vsel %vm1072, %v1403, %v1402
  %v1405 = vsel %vm1075, %v653, %v1404
  %v1406 = vrot.slane %v657, 7
  %v1407 = vsel %vm1078, %v1406, %v1405
  %v1408 = vrot.slane %v663, 6
  %v1409 = vsel %vm1081, %v1408, %v1407
  %v1410 = vrot.slane %v667, 5
  %v1411 = vsel %vm1084, %v1410, %v1409
  %v1412 = vrot.slane %v673, 4
  %v1413 = vsel %vm1087, %v1412, %v1411
  %v1414 = vrot.slane %v677, 3
  %v1415 = vsel %vm1090, %v1414, %v1413
  %v1416 = vrot.slane %v645, 2
  %v1417 = vrot.slane %v649, 1
  %v1418 = vsel %vm1072, %v1417, %v1416
  %v1419 = vsel %vm1075, %v655, %v1418
  %v1420 = vrot.slane %v659, 7
  %v1421 = vsel %vm1078, %v1420, %v1419
  %v1422 = vrot.slane %v665, 6
  %v1423 = vsel %vm1081, %v1422, %v1421
  %v1424 = vrot.slane %v669, 5
  %v1425 = vsel %vm1084, %v1424, %v1423
  %v1426 = vrot.slane %v675, 4
  %v1427 = vsel %vm1087, %v1426, %v1425
  %v1428 = vrot.slane %v679, 3
  %v1429 = vsel %vm1090, %v1428, %v1427
  %v1430 = vrot.slane %v683, 2
  %v1431 = vrot.slane %v687, 1
  %v1432 = vsel %vm1072, %v1431, %v1430
  %v1433 = vsel %vm1075, %v693, %v1432
  %v1434 = vrot.slane %v697, 7
  %v1435 = vsel %vm1078, %v1434, %v1433
  %v1436 = vrot.slane %v703, 6
  %v1437 = vsel %vm1081, %v1436, %v1435
  %v1438 = vrot.slane %v707, 5
  %v1439 = vsel %vm1084, %v1438, %v1437
  %v1440 = vrot.slane %v713, 4
  %v1441 = vsel %vm1087, %v1440, %v1439
  %v1442 = vrot.slane %v717, 3
  %v1443 = vsel %vm1090, %v1442, %v1441
  %v1444 = vrot.slane %v685, 2
  %v1445 = vrot.slane %v689, 1
  %v1446 = vsel %vm1072, %v1445, %v1444
  %v1447 = vsel %vm1075, %v695, %v1446
  %v1448 = vrot.slane %v699, 7
  %v1449 = vsel %vm1078, %v1448, %v1447
  %v1450 = vrot.slane %v705, 6
  %v1451 = vsel %vm1081, %v1450, %v1449
  %v1452 = vrot.slane %v709, 5
  %v1453 = vsel %vm1084, %v1452, %v1451
  %v1454 = vrot.slane %v715, 4
  %v1455 = vsel %vm1087, %v1454, %v1453
  %v1456 = vrot.slane %v719, 3
  %v1457 = vsel %vm1090, %v1456, %v1455
  %v1462 = vadd.f32 %v1398, %v1415
  %v1463 = vadd.f32 %v1399, %v1429
  %v1464 = vadd.f32 %v1400, %v1443
  %v1465 = vadd.f32 %v1401, %v1457
  %v1466 = vrot.slane %v949, 3
  %v1467 = vrot.slane %v953, 2
  %v1468 = vsel %vm1072, %v1467, %v1466
  %v1469 = vrot.slane %v959, 1
  %v1470 = vsel %vm1075, %v1469, %v1468
  %v1471 = vsel %vm1078, %v963, %v1470
  %v1472 = vrot.slane %v969, 7
  %v1473 = vsel %vm1081, %v1472, %v1471
  %v1474 = vrot.slane %v973, 6
  %v1475 = vsel %vm1084, %v1474, %v1473
  %v1476 = vrot.slane %v979, 5
  %v1477 = vsel %vm1087, %v1476, %v1475
  %v1478 = vrot.slane %v983, 4
  %v1479 = vsel %vm1090, %v1478, %v1477
  %v1480 = vrot.slane %v951, 3
  %v1481 = vrot.slane %v955, 2
  %v1482 = vsel %vm1072, %v1481, %v1480
  %v1483 = vrot.slane %v961, 1
  %v1484 = vsel %vm1075, %v1483, %v1482
  %v1485 = vsel %vm1078, %v965, %v1484
  %v1486 = vrot.slane %v971, 7
  %v1487 = vsel %vm1081, %v1486, %v1485
  %v1488 = vrot.slane %v975, 6
  %v1489 = vsel %vm1084, %v1488, %v1487
  %v1490 = vrot.slane %v981, 5
  %v1491 = vsel %vm1087, %v1490, %v1489
  %v1492 = vrot.slane %v985, 4
  %v1493 = vsel %vm1090, %v1492, %v1491
  %v1494 = vrot.slane %v989, 3
  %v1495 = vrot.slane %v993, 2
  %v1496 = vsel %vm1072, %v1495, %v1494
  %v1497 = vrot.slane %v999, 1
  %v1498 = vsel %vm1075, %v1497, %v1496
  %v1499 = vsel %vm1078, %v1003, %v1498
  %v1500 = vrot.slane %v1009, 7
  %v1501 = vsel %vm1081, %v1500, %v1499
  %v1502 = vrot.slane %v1013, 6
  %v1503 = vsel %vm1084, %v1502, %v1501
  %v1504 = vrot.slane %v1019, 5
  %v1505 = vsel %vm1087, %v1504, %v1503
  %v1506 = vrot.slane %v1023, 4
  %v1507 = vsel %vm1090, %v1506, %v1505
  %v1508 = vrot.slane %v991, 3
  %v1509 = vrot.slane %v995, 2
  %v1510 = vsel %vm1072, %v1509, %v1508
  %v1511 = vrot.slane %v1001, 1
  %v1512 = vsel %vm1075, %v1511, %v1510
  %v1513 = vsel %vm1078, %v1005, %v1512
  %v1514 = vrot.slane %v1011, 7
  %v1515 = vsel %vm1081, %v1514, %v1513
  %v1516 = vrot.slane %v1015, 6
  %v1517 = vsel %vm1084, %v1516, %v1515
  %v1518 = vrot.slane %v1021, 5
  %v1519 = vsel %vm1087, %v1518, %v1517
  %v1520 = vrot.slane %v1025, 4
  %v1521 = vsel %vm1090, %v1520, %v1519
  %v1526 = vadd.f32 %v1462, %v1479
  %v1527 = vadd.f32 %v1463, %v1493
  %v1528 = vadd.f32 %v1464, %v1507
  %v1529 = vadd.f32 %v1465, %v1521
  %v1530 = vmax.f32 %v1526, 0.0
  %v1531 = vmax.f32 %v1527, 0.0
  %v1532 = vmax.f32 %v1528, 0.0
  %v1533 = vmax.f32 %v1529, 0.0
  %v1534 = vmax.f32 %v1334, %v1530
  %v1535 = vmax.f32 %v1335, %v1531
  %v1536 = vmax.f32 %v1336, %v1532
  %v1537 = vmax.f32 %v1337, %v1533
  %v1538 = vrot.slane %v337, 2
  %v1539 = vrot.slane %v341, 1
  %v1540 = vsel %vm1072, %v1539, %v1538
  %v1541 = vsel %vm1075, %v347, %v1540
  %v1542 = vrot.slane %v351, 7
  %v1543 = vsel %vm1078, %v1542, %v1541
  %v1544 = vrot.slane %v357, 6
  %v1545 = vsel %vm1081, %v1544, %v1543
  %v1546 = vrot.slane %v361, 5
  %v1547 = vsel %vm1084, %v1546, %v1545
  %v1548 = vrot.slane %v367, 4
  %v1549 = vsel %vm1087, %v1548, %v1547
  %v1550 = vrot.slane %v371, 3
  %v1551 = vsel %vm1090, %v1550, %v1549
  %v1552 = vrot.slane %v339, 2
  %v1553 = vrot.slane %v343, 1
  %v1554 = vsel %vm1072, %v1553, %v1552
  %v1555 = vsel %vm1075, %v349, %v1554
  %v1556 = vrot.slane %v353, 7
  %v1557 = vsel %vm1078, %v1556, %v1555
  %v1558 = vrot.slane %v359, 6
  %v1559 = vsel %vm1081, %v1558, %v1557
  %v1560 = vrot.slane %v363, 5
  %v1561 = vsel %vm1084, %v1560, %v1559
  %v1562 = vrot.slane %v369, 4
  %v1563 = vsel %vm1087, %v1562, %v1561
  %v1564 = vrot.slane %v373, 3
  %v1565 = vsel %vm1090, %v1564, %v1563
  %v1566 = vrot.slane %v377, 2
  %v1567 = vrot.slane %v381, 1
  %v1568 = vsel %vm1072, %v1567, %v1566
  %v1569 = vsel %vm1075, %v387, %v1568
  %v1570 = vrot.slane %v391, 7
  %v1571 = vsel %vm1078, %v1570, %v1569
  %v1572 = vrot.slane %v397, 6
  %v1573 = vsel %vm1081, %v1572, %v1571
  %v1574 = vrot.slane %v401, 5
  %v1575 = vsel %vm1084, %v1574, %v1573
  %v1576 = vrot.slane %v407, 4
  %v1577 = vsel %vm1087, %v1576, %v1575
  %v1578 = vrot.slane %v411, 3
  %v1579 = vsel %vm1090, %v1578, %v1577
  %v1580 = vrot.slane %v379, 2
  %v1581 = vrot.slane %v383, 1
  %v1582 = vsel %vm1072, %v1581, %v1580
  %v1583 = vsel %vm1075, %v389, %v1582
  %v1584 = vrot.slane %v393, 7
  %v1585 = vsel %vm1078, %v1584, %v1583
  %v1586 = vrot.slane %v399, 6
  %v1587 = vsel %vm1081, %v1586, %v1585
  %v1588 = vrot.slane %v403, 5
  %v1589 = vsel %vm1084, %v1588, %v1587
  %v1590 = vrot.slane %v409, 4
  %v1591 = vsel %vm1087, %v1590, %v1589
  %v1592 = vrot.slane %v413, 3
  %v1593 = vsel %vm1090, %v1592, %v1591
  %v1598 = vadd.f32 %v1032, %v1551
  %v1599 = vadd.f32 %v1036, %v1565
  %v1600 = vadd.f32 %v1032, %v1579
  %v1601 = vadd.f32 %v1036, %v1593
  %v1602 = vrot.slane %v643, 3
  %v1603 = vrot.slane %v647, 2
  %v1604 = vsel %vm1072, %v1603, %v1602
  %v1605 = vrot.slane %v653, 1
  %v1606 = vsel %vm1075, %v1605, %v1604
  %v1607 = vsel %vm1078, %v657, %v1606
  %v1608 = vrot.slane %v663, 7
  %v1609 = vsel %vm1081, %v1608, %v1607
  %v1610 = vrot.slane %v667, 6
  %v1611 = vsel %vm1084, %v1610, %v1609
  %v1612 = vrot.slane %v673, 5
  %v1613 = vsel %vm1087, %v1612, %v1611
  %v1614 = vrot.slane %v677, 4
  %v1615 = vsel %vm1090, %v1614, %v1613
  %v1616 = vrot.slane %v645, 3
  %v1617 = vrot.slane %v649, 2
  %v1618 = vsel %vm1072, %v1617, %v1616
  %v1619 = vrot.slane %v655, 1
  %v1620 = vsel %vm1075, %v1619, %v1618
  %v1621 = vsel %vm1078, %v659, %v1620
  %v1622 = vrot.slane %v665, 7
  %v1623 = vsel %vm1081, %v1622, %v1621
  %v1624 = vrot.slane %v669, 6
  %v1625 = vsel %vm1084, %v1624, %v1623
  %v1626 = vrot.slane %v675, 5
  %v1627 = vsel %vm1087, %v1626, %v1625
  %v1628 = vrot.slane %v679, 4
  %v1629 = vsel %vm1090, %v1628, %v1627
  %v1630 = vrot.slane %v683, 3
  %v1631 = vrot.slane %v687, 2
  %v1632 = vsel %vm1072, %v1631, %v1630
  %v1633 = vrot.slane %v693, 1
  %v1634 = vsel %vm1075, %v1633, %v1632
  %v1635 = vsel %vm1078, %v697, %v1634
  %v1636 = vrot.slane %v703, 7
  %v1637 = vsel %vm1081, %v1636, %v1635
  %v1638 = vrot.slane %v707, 6
  %v1639 = vsel %vm1084, %v1638, %v1637
  %v1640 = vrot.slane %v713, 5
  %v1641 = vsel %vm1087, %v1640, %v1639
  %v1642 = vrot.slane %v717, 4
  %v1643 = vsel %vm1090, %v1642, %v1641
  %v1644 = vrot.slane %v685, 3
  %v1645 = vrot.slane %v689, 2
  %v1646 = vsel %vm1072, %v1645, %v1644
  %v1647 = vrot.slane %v695, 1
  %v1648 = vsel %vm1075, %v1647, %v1646
  %v1649 = vsel %vm1078, %v699, %v1648
  %v1650 = vrot.slane %v705, 7
  %v1651 = vsel %vm1081, %v1650, %v1649
  %v1652 = vrot.slane %v709, 6
  %v1653 = vsel %vm1084, %v1652, %v1651
  %v1654 = vrot.slane %v715, 5
  %v1655 = vsel %vm1087, %v1654, %v1653
  %v1656 = vrot.slane %v719, 4
  %v1657 = vsel %vm1090, %v1656, %v1655
  %v1662 = vadd.f32 %v1598, %v1615
  %v1663 = vadd.f32 %v1599, %v1629
  %v1664 = vadd.f32 %v1600, %v1643
  %v1665 = vadd.f32 %v1601, %v1657
  %v1666 = vrot.slane %v949, 4
  %v1667 = vrot.slane %v953, 3
  %v1668 = vsel %vm1072, %v1667, %v1666
  %v1669 = vrot.slane %v959, 2
  %v1670 = vsel %vm1075, %v1669, %v1668
  %v1671 = vrot.slane %v963, 1
  %v1672 = vsel %vm1078, %v1671, %v1670
  %v1673 = vsel %vm1081, %v969, %v1672
  %v1674 = vrot.slane %v973, 7
  %v1675 = vsel %vm1084, %v1674, %v1673
  %v1676 = vrot.slane %v979, 6
  %v1677 = vsel %vm1087, %v1676, %v1675
  %v1678 = vrot.slane %v983, 5
  %v1679 = vsel %vm1090, %v1678, %v1677
  %v1680 = vrot.slane %v951, 4
  %v1681 = vrot.slane %v955, 3
  %v1682 = vsel %vm1072, %v1681, %v1680
  %v1683 = vrot.slane %v961, 2
  %v1684 = vsel %vm1075, %v1683, %v1682
  %v1685 = vrot.slane %v965, 1
  %v1686 = vsel %vm1078, %v1685, %v1684
  %v1687 = vsel %vm1081, %v971, %v1686
  %v1688 = vrot.slane %v975, 7
  %v1689 = vsel %vm1084, %v1688, %v1687
  %v1690 = vrot.slane %v981, 6
  %v1691 = vsel %vm1087, %v1690, %v1689
  %v1692 = vrot.slane %v985, 5
  %v1693 = vsel %vm1090, %v1692, %v1691
  %v1694 = vrot.slane %v989, 4
  %v1695 = vrot.slane %v993, 3
  %v1696 = vsel %vm1072, %v1695, %v1694
  %v1697 = vrot.slane %v999, 2
  %v1698 = vsel %vm1075, %v1697, %v1696
  %v1699 = vrot.slane %v1003, 1
  %v1700 = vsel %vm1078, %v1699, %v1698
  %v1701 = vsel %vm1081, %v1009, %v1700
  %v1702 = vrot.slane %v1013, 7
  %v1703 = vsel %vm1084, %v1702, %v1701
  %v1704 = vrot.slane %v1019, 6
  %v1705 = vsel %vm1087, %v1704, %v1703
  %v1706 = vrot.slane %v1023, 5
  %v1707 = vsel %vm1090, %v1706, %v1705
  %v1708 = vrot.slane %v991, 4
  %v1709 = vrot.slane %v995, 3
  %v1710 = vsel %vm1072, %v1709, %v1708
  %v1711 = vrot.slane %v1001, 2
  %v1712 = vsel %vm1075, %v1711, %v1710
  %v1713 = vrot.slane %v1005, 1
  %v1714 = vsel %vm1078, %v1713, %v1712
  %v1715 = vsel %vm1081, %v1011, %v1714
  %v1716 = vrot.slane %v1015, 7
  %v1717 = vsel %vm1084, %v1716, %v1715
  %v1718 = vrot.slane %v1021, 6
  %v1719 = vsel %vm1087, %v1718, %v1717
  %v1720 = vrot.slane %v1025, 5
  %v1721 = vsel %vm1090, %v1720, %v1719
  %v1726 = vadd.f32 %v1662, %v1679
  %v1727 = vadd.f32 %v1663, %v1693
  %v1728 = vadd.f32 %v1664, %v1707
  %v1729 = vadd.f32 %v1665, %v1721
  %v1730 = vmax.f32 %v1726, 0.0
  %v1731 = vmax.f32 %v1727, 0.0
  %v1732 = vmax.f32 %v1728, 0.0
  %v1733 = vmax.f32 %v1729, 0.0
  %v1734 = vmax.f32 %v1534, %v1730
  %v1735 = vmax.f32 %v1535, %v1731
  %v1736 = vmax.f32 %v1536, %v1732
  %v1737 = vmax.f32 %v1537, %v1733
  %v1738 = vrot.slane %v337, 3
  %v1739 = vrot.slane %v341, 2
  %v1740 = vsel %vm1072, %v1739, %v1738
  %v1741 = vrot.slane %v347, 1
  %v1742 = vsel %vm1075, %v1741, %v1740
  %v1743 = vsel %vm1078, %v351, %v1742
  %v1744 = vrot.slane %v357, 7
  %v1745 = vsel %vm1081, %v1744, %v1743
  %v1746 = vrot.slane %v361, 6
  %v1747 = vsel %vm1084, %v1746, %v1745
  %v1748 = vrot.slane %v367, 5
  %v1749 = vsel %vm1087, %v1748, %v1747
  %v1750 = vrot.slane %v371, 4
  %v1751 = vsel %vm1090, %v1750, %v1749
  %v1752 = vrot.slane %v339, 3
  %v1753 = vrot.slane %v343, 2
  %v1754 = vsel %vm1072, %v1753, %v1752
  %v1755 = vrot.slane %v349, 1
  %v1756 = vsel %vm1075, %v1755, %v1754
  %v1757 = vsel %vm1078, %v353, %v1756
  %v1758 = vrot.slane %v359, 7
  %v1759 = vsel %vm1081, %v1758, %v1757
  %v1760 = vrot.slane %v363, 6
  %v1761 = vsel %vm1084, %v1760, %v1759
  %v1762 = vrot.slane %v369, 5
  %v1763 = vsel %vm1087, %v1762, %v1761
  %v1764 = vrot.slane %v373, 4
  %v1765 = vsel %vm1090, %v1764, %v1763
  %v1766 = vrot.slane %v377, 3
  %v1767 = vrot.slane %v381, 2
  %v1768 = vsel %vm1072, %v1767, %v1766
  %v1769 = vrot.slane %v387, 1
  %v1770 = vsel %vm1075, %v1769, %v1768
  %v1771 = vsel %vm1078, %v391, %v1770
  %v1772 = vrot.slane %v397, 7
  %v1773 = vsel %vm1081, %v1772, %v1771
  %v1774 = vrot.slane %v401, 6
  %v1775 = vsel %vm1084, %v1774, %v1773
  %v1776 = vrot.slane %v407, 5
  %v1777 = vsel %vm1087, %v1776, %v1775
  %v1778 = vrot.slane %v411, 4
  %v1779 = vsel %vm1090, %v1778, %v1777
  %v1780 = vrot.slane %v379, 3
  %v1781 = vrot.slane %v383, 2
  %v1782 = vsel %vm1072, %v1781, %v1780
  %v1783 = vrot.slane %v389, 1
  %v1784 = vsel %vm1075, %v1783, %v1782
  %v1785 = vsel %vm1078, %v393, %v1784
  %v1786 = vrot.slane %v399, 7
  %v1787 = vsel %vm1081, %v1786, %v1785
  %v1788 = vrot.slane %v403, 6
  %v1789 = vsel %vm1084, %v1788, %v1787
  %v1790 = vrot.slane %v409, 5
  %v1791 = vsel %vm1087, %v1790, %v1789
  %v1792 = vrot.slane %v413, 4
  %v1793 = vsel %vm1090, %v1792, %v1791
  %v1798 = vadd.f32 %v1032, %v1751
  %v1799 = vadd.f32 %v1036, %v1765
  %v1800 = vadd.f32 %v1032, %v1779
  %v1801 = vadd.f32 %v1036, %v1793
  %v1802 = vrot.slane %v643, 4
  %v1803 = vrot.slane %v647, 3
  %v1804 = vsel %vm1072, %v1803, %v1802
  %v1805 = vrot.slane %v653, 2
  %v1806 = vsel %vm1075, %v1805, %v1804
  %v1807 = vrot.slane %v657, 1
  %v1808 = vsel %vm1078, %v1807, %v1806
  %v1809 = vsel %vm1081, %v663, %v1808
  %v1810 = vrot.slane %v667, 7
  %v1811 = vsel %vm1084, %v1810, %v1809
  %v1812 = vrot.slane %v673, 6
  %v1813 = vsel %vm1087, %v1812, %v1811
  %v1814 = vrot.slane %v677, 5
  %v1815 = vsel %vm1090, %v1814, %v1813
  %v1816 = vrot.slane %v645, 4
  %v1817 = vrot.slane %v649, 3
  %v1818 = vsel %vm1072, %v1817, %v1816
  %v1819 = vrot.slane %v655, 2
  %v1820 = vsel %vm1075, %v1819, %v1818
  %v1821 = vrot.slane %v659, 1
  %v1822 = vsel %vm1078, %v1821, %v1820
  %v1823 = vsel %vm1081, %v665, %v1822
  %v1824 = vrot.slane %v669, 7
  %v1825 = vsel %vm1084, %v1824, %v1823
  %v1826 = vrot.slane %v675, 6
  %v1827 = vsel %vm1087, %v1826, %v1825
  %v1828 = vrot.slane %v679, 5
  %v1829 = vsel %vm1090, %v1828, %v1827
  %v1830 = vrot.slane %v683, 4
  %v1831 = vrot.slane %v687, 3
  %v1832 = vsel %vm1072, %v1831, %v1830
  %v1833 = vrot.slane %v693, 2
  %v1834 = vsel %vm1075, %v1833, %v1832
  %v1835 = vrot.slane %v697, 1
  %v1836 = vsel %vm1078, %v1835, %v1834
  %v1837 = vsel %vm1081, %v703, %v1836
  %v1838 = vrot.slane %v707, 7
  %v1839 = vsel %vm1084, %v1838, %v1837
  %v1840 = vrot.slane %v713, 6
  %v1841 = vsel %vm1087, %v1840, %v1839
  %v1842 = vrot.slane %v717, 5
  %v1843 = vsel %vm1090, %v1842, %v1841
  %v1844 = vrot.slane %v685, 4
  %v1845 = vrot.slane %v689, 3
  %v1846 = vsel %vm1072, %v1845, %v1844
  %v1847 = vrot.slane %v695, 2
  %v1848 = vsel %vm1075, %v1847, %v1846
  %v1849 = vrot.slane %v699, 1
  %v1850 = vsel %vm1078, %v1849, %v1848
  %v1851 = vsel %vm1081, %v705, %v1850
  %v1852 = vrot.slane %v709, 7
  %v1853 = vsel %vm1084, %v1852, %v1851
  %v1854 = vrot.slane %v715, 6
  %v1855 = vsel %vm1087, %v1854, %v1853
  %v1856 = vrot.slane %v719, 5
  %v1857 = vsel %vm1090, %v1856, %v1855
  %v1862 = vadd.f32 %v1798, %v1815
  %v1863 = vadd.f32 %v1799, %v1829
  %v1864 = vadd.f32 %v1800, %v1843
  %v1865 = vadd.f32 %v1801, %v1857
  %v1866 = vrot.slane %v949, 5
  %v1867 = vrot.slane %v953, 4
  %v1868 = vsel %vm1072, %v1867, %v1866
  %v1869 = vrot.slane %v959, 3
  %v1870 = vsel %vm1075, %v1869, %v1868
  %v1871 = vrot.slane %v963, 2
  %v1872 = vsel %vm1078, %v1871, %v1870
  %v1873 = vrot.slane %v969, 1
  %v1874 = vsel %vm1081, %v1873, %v1872
  %v1875 = vsel %vm1084, %v973, %v1874
  %v1876 = vrot.slane %v979, 7
  %v1877 = vsel %vm1087, %v1876, %v1875
  %v1878 = vrot.slane %v983, 6
  %v1879 = vsel %vm1090, %v1878, %v1877
  %v1880 = vrot.slane %v951, 5
  %v1881 = vrot.slane %v955, 4
  %v1882 = vsel %vm1072, %v1881, %v1880
  %v1883 = vrot.slane %v961, 3
  %v1884 = vsel %vm1075, %v1883, %v1882
  %v1885 = vrot.slane %v965, 2
  %v1886 = vsel %vm1078, %v1885, %v1884
  %v1887 = vrot.slane %v971, 1
  %v1888 = vsel %vm1081, %v1887, %v1886
  %v1889 = vsel %vm1084, %v975, %v1888
  %v1890 = vrot.slane %v981, 7
  %v1891 = vsel %vm1087, %v1890, %v1889
  %v1892 = vrot.slane %v985, 6
  %v1893 = vsel %vm1090, %v1892, %v1891
  %v1894 = vrot.slane %v989, 5
  %v1895 = vrot.slane %v993, 4
  %v1896 = vsel %vm1072, %v1895, %v1894
  %v1897 = vrot.slane %v999, 3
  %v1898 = vsel %vm1075, %v1897, %v1896
  %v1899 = vrot.slane %v1003, 2
  %v1900 = vsel %vm1078, %v1899, %v1898
  %v1901 = vrot.slane %v1009, 1
  %v1902 = vsel %vm1081, %v1901, %v1900
  %v1903 = vsel %vm1084, %v1013, %v1902
  %v1904 = vrot.slane %v1019, 7
  %v1905 = vsel %vm1087, %v1904, %v1903
  %v1906 = vrot.slane %v1023, 6
  %v1907 = vsel %vm1090, %v1906, %v1905
  %v1908 = vrot.slane %v991, 5
  %v1909 = vrot.slane %v995, 4
  %v1910 = vsel %vm1072, %v1909, %v1908
  %v1911 = vrot.slane %v1001, 3
  %v1912 = vsel %vm1075, %v1911, %v1910
  %v1913 = vrot.slane %v1005, 2
  %v1914 = vsel %vm1078, %v1913, %v1912
  %v1915 = vrot.slane %v1011, 1
  %v1916 = vsel %vm1081, %v1915, %v1914
  %v1917 = vsel %vm1084, %v1015, %v1916
  %v1918 = vrot.slane %v1021, 7
  %v1919 = vsel %vm1087, %v1918, %v1917
  %v1920 = vrot.slane %v1025, 6
  %v1921 = vsel %vm1090, %v1920, %v1919
  %v1926 = vadd.f32 %v1862, %v1879
  %v1927 = vadd.f32 %v1863, %v1893
  %v1928 = vadd.f32 %v1864, %v1907
  %v1929 = vadd.f32 %v1865, %v1921
  %v1930 = vmax.f32 %v1926, 0.0
  %v1931 = vmax.f32 %v1927, 0.0
  %v1932 = vmax.f32 %v1928, 0.0
  %v1933 = vmax.f32 %v1929, 0.0
  %v1934 = vmax.f32 %v1734, %v1930
  %v1935 = vmax.f32 %v1735, %v1931
  %v1936 = vmax.f32 %v1736, %v1932
  %v1937 = vmax.f32 %v1737, %v1933
  %v1938 = vrot.slane %v337, 4
  %v1939 = vrot.slane %v341, 3
  %v1940 = vsel %vm1072, %v1939, %v1938
  %v1941 = vrot.slane %v347, 2
  %v1942 = vsel %vm1075, %v1941, %v1940
  %v1943 = vrot.slane %v351, 1
  %v1944 = vsel %vm1078, %v1943, %v1942
  %v1945 = vsel %vm1081, %v357, %v1944
  %v1946 = vrot.slane %v361, 7
  %v1947 = vsel %vm1084, %v1946, %v1945
  %v1948 = vrot.slane %v367, 6
  %v1949 = vsel %vm1087, %v1948, %v1947
  %v1950 = vrot.slane %v371, 5
  %v1951 = vsel %vm1090, %v1950, %v1949
  %v1952 = vrot.slane %v339, 4
  %v1953 = vrot.slane %v343, 3
  %v1954 = vsel %vm1072, %v1953, %v1952
  %v1955 = vrot.slane %v349, 2
  %v1956 = vsel %vm1075, %v1955, %v1954
  %v1957 = vrot.slane %v353, 1
  %v1958 = vsel %vm1078, %v1957, %v1956
  %v1959 = vsel %vm1081, %v359, %v1958
  %v1960 = vrot.slane %v363, 7
  %v1961 = vsel %vm1084, %v1960, %v1959
  %v1962 = vrot.slane %v369, 6
  %v1963 = vsel %vm1087, %v1962, %v1961
  %v1964 = vrot.slane %v373, 5
  %v1965 = vsel %vm1090, %v1964, %v1963
  %v1966 = vrot.slane %v377, 4
  %v1967 = vrot.slane %v381, 3
  %v1968 = vsel %vm1072, %v1967, %v1966
  %v1969 = vrot.slane %v387, 2
  %v1970 = vsel %vm1075, %v1969, %v1968
  %v1971 = vrot.slane %v391, 1
  %v1972 = vsel %vm1078, %v1971, %v1970
  %v1973 = vsel %vm1081, %v397, %v1972
  %v1974 = vrot.slane %v401, 7
  %v1975 = vsel %vm1084, %v1974, %v1973
  %v1976 = vrot.slane %v407, 6
  %v1977 = vsel %vm1087, %v1976, %v1975
  %v1978 = vrot.slane %v411, 5
  %v1979 = vsel %vm1090, %v1978, %v1977
  %v1980 = vrot.slane %v379, 4
  %v1981 = vrot.slane %v383, 3
  %v1982 = vsel %vm1072, %v1981, %v1980
  %v1983 = vrot.slane %v389, 2
  %v1984 = vsel %vm1075, %v1983, %v1982
  %v1985 = vrot.slane %v393, 1
  %v1986 = vsel %vm1078, %v1985, %v1984
  %v1987 = vsel %vm1081, %v399, %v1986
  %v1988 = vrot.slane %v403, 7
  %v1989 = vsel %vm1084, %v1988, %v1987
  %v1990 = vrot.slane %v409, 6
  %v1991 = vsel %vm1087, %v1990, %v1989
  %v1992 = vrot.slane %v413, 5
  %v1993 = vsel %vm1090, %v1992, %v1991
  %v1998 = vadd.f32 %v1032, %v1951
  %v1999 = vadd.f32 %v1036, %v1965
  %v2000 = vadd.f32 %v1032, %v1979
  %v2001 = vadd.f32 %v1036, %v1993
  %v2002 = vrot.slane %v643, 5
  %v2003 = vrot.slane %v647, 4
  %v2004 = vsel %vm1072, %v2003, %v2002
  %v2005 = vrot.slane %v653, 3
  %v2006 = vsel %vm1075, %v2005, %v2004
  %v2007 = vrot.slane %v657, 2
  %v2008 = vsel %vm1078, %v2007, %v2006
  %v2009 = vrot.slane %v663, 1
  %v2010 = vsel %vm1081, %v2009, %v2008
  %v2011 = vsel %vm1084, %v667, %v2010
  %v2012 = vrot.slane %v673, 7
  %v2013 = vsel %vm1087, %v2012, %v2011
  %v2014 = vrot.slane %v677, 6
  %v2015 = vsel %vm1090, %v2014, %v2013
  %v2016 = vrot.slane %v645, 5
  %v2017 = vrot.slane %v649, 4
  %v2018 = vsel %vm1072, %v2017, %v2016
  %v2019 = vrot.slane %v655, 3
  %v2020 = vsel %vm1075, %v2019, %v2018
  %v2021 = vrot.slane %v659, 2
  %v2022 = vsel %vm1078, %v2021, %v2020
  %v2023 = vrot.slane %v665, 1
  %v2024 = vsel %vm1081, %v2023, %v2022
  %v2025 = vsel %vm1084, %v669, %v2024
  %v2026 = vrot.slane %v675, 7
  %v2027 = vsel %vm1087, %v2026, %v2025
  %v2028 = vrot.slane %v679, 6
  %v2029 = vsel %vm1090, %v2028, %v2027
  %v2030 = vrot.slane %v683, 5
  %v2031 = vrot.slane %v687, 4
  %v2032 = vsel %vm1072, %v2031, %v2030
  %v2033 = vrot.slane %v693, 3
  %v2034 = vsel %vm1075, %v2033, %v2032
  %v2035 = vrot.slane %v697, 2
  %v2036 = vsel %vm1078, %v2035, %v2034
  %v2037 = vrot.slane %v703, 1
  %v2038 = vsel %vm1081, %v2037, %v2036
  %v2039 = vsel %vm1084, %v707, %v2038
  %v2040 = vrot.slane %v713, 7
  %v2041 = vsel %vm1087, %v2040, %v2039
  %v2042 = vrot.slane %v717, 6
  %v2043 = vsel %vm1090, %v2042, %v2041
  %v2044 = vrot.slane %v685, 5
  %v2045 = vrot.slane %v689, 4
  %v2046 = vsel %vm1072, %v2045, %v2044
  %v2047 = vrot.slane %v695, 3
  %v2048 = vsel %vm1075, %v2047, %v2046
  %v2049 = vrot.slane %v699, 2
  %v2050 = vsel %vm1078, %v2049, %v2048
  %v2051 = vrot.slane %v705, 1
  %v2052 = vsel %vm1081, %v2051, %v2050
  %v2053 = vsel %vm1084, %v709, %v2052
  %v2054 = vrot.slane %v715, 7
  %v2055 = vsel %vm1087, %v2054, %v2053
  %v2056 = vrot.slane %v719, 6
  %v2057 = vsel %vm1090, %v2056, %v2055
  %v2062 = vadd.f32 %v1998, %v2015
  %v2063 = vadd.f32 %v1999, %v2029
  %v2064 = vadd.f32 %v2000, %v2043
  %v2065 = vadd.f32 %v2001, %v2057
  %v2066 = vrot.slane %v949, 6
  %v2067 = vrot.slane %v953, 5
  %v2068 = vsel %vm1072, %v2067, %v2066
  %v2069 = vrot.slane %v959, 4
  %v2070 = vsel %vm1075, %v2069, %v2068
  %v2071 = vrot.slane %v963, 3
  %v2072 = vsel %vm1078, %v2071, %v2070
  %v2073 = vrot.slane %v969, 2
  %v2074 = vsel %vm1081, %v2073, %v2072
  %v2075 = vrot.slane %v973, 1
  %v2076 = vsel %vm1084, %v2075, %v2074
  %v2077 = vsel %vm1087, %v979, %v2076
  %v2078 = vrot.slane %v983, 7
  %v2079 = vsel %vm1090, %v2078, %v2077
  %v2080 = vrot.slane %v951, 6
  %v2081 = vrot.slane %v955, 5
  %v2082 = vsel %vm1072, %v2081, %v2080
  %v2083 = vrot.slane %v961, 4
  %v2084 = vsel %vm1075, %v2083, %v2082
  %v2085 = vrot.slane %v965, 3
  %v2086 = vsel %vm1078, %v2085, %v2084
  %v2087 = vrot.slane %v971, 2
  %v2088 = vsel %vm1081, %v2087, %v2086
  %v2089 = vrot.slane %v975, 1
  %v2090 = vsel %vm1084, %v2089, %v2088
  %v2091 = vsel %vm1087, %v981, %v2090
  %v2092 = vrot.slane %v985, 7
  %v2093 = vsel %vm1090, %v2092, %v2091
  %v2094 = vrot.slane %v989, 6
  %v2095 = vrot.slane %v993, 5
  %v2096 = vsel %vm1072, %v2095, %v2094
  %v2097 = vrot.slane %v999, 4
  %v2098 = vsel %vm1075, %v2097, %v2096
  %v2099 = vrot.slane %v1003, 3
  %v2100 = vsel %vm1078, %v2099, %v2098
  %v2101 = vrot.slane %v1009, 2
  %v2102 = vsel %vm1081, %v2101, %v2100
  %v2103 = vrot.slane %v1013, 1
  %v2104 = vsel %vm1084, %v2103, %v2102
  %v2105 = vsel %vm1087, %v1019, %v2104
  %v2106 = vrot.slane %v1023, 7
  %v2107 = vsel %vm1090, %v2106, %v2105
  %v2108 = vrot.slane %v991, 6
  %v2109 = vrot.slane %v995, 5
  %v2110 = vsel %vm1072, %v2109, %v2108
  %v2111 = vrot.slane %v1001, 4
  %v2112 = vsel %vm1075, %v2111, %v2110
  %v2113 = vrot.slane %v1005, 3
  %v2114 = vsel %vm1078, %v2113, %v2112
  %v2115 = vrot.slane %v1011, 2
  %v2116 = vsel %vm1081, %v2115, %v2114
  %v2117 = vrot.slane %v1015, 1
  %v2118 = vsel %vm1084, %v2117, %v2116
  %v2119 = vsel %vm1087, %v1021, %v2118
  %v2120 = vrot.slane %v1025, 7
  %v2121 = vsel %vm1090, %v2120, %v2119
  %v2126 = vadd.f32 %v2062, %v2079
  %v2127 = vadd.f32 %v2063, %v2093
  %v2128 = vadd.f32 %v2064, %v2107
  %v2129 = vadd.f32 %v2065, %v2121
  %v2130 = vmax.f32 %v2126, 0.0
  %v2131 = vmax.f32 %v2127, 0.0
  %v2132 = vmax.f32 %v2128, 0.0
  %v2133 = vmax.f32 %v2129, 0.0
  %v2134 = vmax.f32 %v1934, %v2130
  %v2135 = vmax.f32 %v1935, %v2131
  %v2136 = vmax.f32 %v1936, %v2132
  %v2137 = vmax.f32 %v1937, %v2133
  %v2138 = vrot.slane %v337, 5
  %v2139 = vrot.slane %v341, 4
  %v2140 = vsel %vm1072, %v2139, %v2138
  %v2141 = vrot.slane %v347, 3
  %v2142 = vsel %vm1075, %v2141, %v2140
  %v2143 = vrot.slane %v351, 2
  %v2144 = vsel %vm1078, %v2143, %v2142
  %v2145 = vrot.slane %v357, 1
  %v2146 = vsel %vm1081, %v2145, %v2144
  %v2147 = vsel %vm1084, %v361, %v2146
  %v2148 = vrot.slane %v367, 7
  %v2149 = vsel %vm1087, %v2148, %v2147
  %v2150 = vrot.slane %v371, 6
  %v2151 = vsel %vm1090, %v2150, %v2149
  %v2152 = vrot.slane %v339, 5
  %v2153 = vrot.slane %v343, 4
  %v2154 = vsel %vm1072, %v2153, %v2152
  %v2155 = vrot.slane %v349, 3
  %v2156 = vsel %vm1075, %v2155, %v2154
  %v2157 = vrot.slane %v353, 2
  %v2158 = vsel %vm1078, %v2157, %v2156
  %v2159 = vrot.slane %v359, 1
  %v2160 = vsel %vm1081, %v2159, %v2158
  %v2161 = vsel %vm1084, %v363, %v2160
  %v2162 = vrot.slane %v369, 7
  %v2163 = vsel %vm1087, %v2162, %v2161
  %v2164 = vrot.slane %v373, 6
  %v2165 = vsel %vm1090, %v2164, %v2163
  %v2166 = vrot.slane %v377, 5
  %v2167 = vrot.slane %v381, 4
  %v2168 = vsel %vm1072, %v2167, %v2166
  %v2169 = vrot.slane %v387, 3
  %v2170 = vsel %vm1075, %v2169, %v2168
  %v2171 = vrot.slane %v391, 2
  %v2172 = vsel %vm1078, %v2171, %v2170
  %v2173 = vrot.slane %v397, 1
  %v2174 = vsel %vm1081, %v2173, %v2172
  %v2175 = vsel %vm1084, %v401, %v2174
  %v2176 = vrot.slane %v407, 7
  %v2177 = vsel %vm1087, %v2176, %v2175
  %v2178 = vrot.slane %v411, 6
  %v2179 = vsel %vm1090, %v2178, %v2177
  %v2180 = vrot.slane %v379, 5
  %v2181 = vrot.slane %v383, 4
  %v2182 = vsel %vm1072, %v2181, %v2180
  %v2183 = vrot.slane %v389, 3
  %v2184 = vsel %vm1075, %v2183, %v2182
  %v2185 = vrot.slane %v393, 2
  %v2186 = vsel %vm1078, %v2185, %v2184
  %v2187 = vrot.slane %v399, 1
  %v2188 = vsel %vm1081, %v2187, %v2186
  %v2189 = vsel %vm1084, %v403, %v2188
  %v2190 = vrot.slane %v409, 7
  %v2191 = vsel %vm1087, %v2190, %v2189
  %v2192 = vrot.slane %v413, 6
  %v2193 = vsel %vm1090, %v2192, %v2191
  %v2198 = vadd.f32 %v1032, %v2151
  %v2199 = vadd.f32 %v1036, %v2165
  %v2200 = vadd.f32 %v1032, %v2179
  %v2201 = vadd.f32 %v1036, %v2193
  %v2202 = vrot.slane %v643, 6
  %v2203 = vrot.slane %v647, 5
  %v2204 = vsel %vm1072, %v2203, %v2202
  %v2205 = vrot.slane %v653, 4
  %v2206 = vsel %vm1075, %v2205, %v2204
  %v2207 = vrot.slane %v657, 3
  %v2208 = vsel %vm1078, %v2207, %v2206
  %v2209 = vrot.slane %v663, 2
  %v2210 = vsel %vm1081, %v2209, %v2208
  %v2211 = vrot.slane %v667, 1
  %v2212 = vsel %vm1084, %v2211, %v2210
  %v2213 = vsel %vm1087, %v673, %v2212
  %v2214 = vrot.slane %v677, 7
  %v2215 = vsel %vm1090, %v2214, %v2213
  %v2216 = vrot.slane %v645, 6
  %v2217 = vrot.slane %v649, 5
  %v2218 = vsel %vm1072, %v2217, %v2216
  %v2219 = vrot.slane %v655, 4
  %v2220 = vsel %vm1075, %v2219, %v2218
  %v2221 = vrot.slane %v659, 3
  %v2222 = vsel %vm1078, %v2221, %v2220
  %v2223 = vrot.slane %v665, 2
  %v2224 = vsel %vm1081, %v2223, %v2222
  %v2225 = vrot.slane %v669, 1
  %v2226 = vsel %vm1084, %v2225, %v2224
  %v2227 = vsel %vm1087, %v675, %v2226
  %v2228 = vrot.slane %v679, 7
  %v2229 = vsel %vm1090, %v2228, %v2227
  %v2230 = vrot.slane %v683, 6
  %v2231 = vrot.slane %v687, 5
  %v2232 = vsel %vm1072, %v2231, %v2230
  %v2233 = vrot.slane %v693, 4
  %v2234 = vsel %vm1075, %v2233, %v2232
  %v2235 = vrot.slane %v697, 3
  %v2236 = vsel %vm1078, %v2235, %v2234
  %v2237 = vrot.slane %v703, 2
  %v2238 = vsel %vm1081, %v2237, %v2236
  %v2239 = vrot.slane %v707, 1
  %v2240 = vsel %vm1084, %v2239, %v2238
  %v2241 = vsel %vm1087, %v713, %v2240
  %v2242 = vrot.slane %v717, 7
  %v2243 = vsel %vm1090, %v2242, %v2241
  %v2244 = vrot.slane %v685, 6
  %v2245 = vrot.slane %v689, 5
  %v2246 = vsel %vm1072, %v2245, %v2244
  %v2247 = vrot.slane %v695, 4
  %v2248 = vsel %vm1075, %v2247, %v2246
  %v2249 = vrot.slane %v699, 3
  %v2250 = vsel %vm1078, %v2249, %v2248
  %v2251 = vrot.slane %v705, 2
  %v2252 = vsel %vm1081, %v2251, %v2250
  %v2253 = vrot.slane %v709, 1
  %v2254 = vsel %vm1084, %v2253, %v2252
  %v2255 = vsel %vm1087, %v715, %v2254
  %v2256 = vrot.slane %v719, 7
  %v2257 = vsel %vm1090, %v2256, %v2255
  %v2262 = vadd.f32 %v2198, %v2215
  %v2263 = vadd.f32 %v2199, %v2229
  %v2264 = vadd.f32 %v2200, %v2243
  %v2265 = vadd.f32 %v2201, %v2257
  %v2266 = vrot.slane %v949, 7
  %v2267 = vrot.slane %v953, 6
  %v2268 = vsel %vm1072, %v2267, %v2266
  %v2269 = vrot.slane %v959, 5
  %v2270 = vsel %vm1075, %v2269, %v2268
  %v2271 = vrot.slane %v963, 4
  %v2272 = vsel %vm1078, %v2271, %v2270
  %v2273 = vrot.slane %v969, 3
  %v2274 = vsel %vm1081, %v2273, %v2272
  %v2275 = vrot.slane %v973, 2
  %v2276 = vsel %vm1084, %v2275, %v2274
  %v2277 = vrot.slane %v979, 1
  %v2278 = vsel %vm1087, %v2277, %v2276
  %v2279 = vsel %vm1090, %v983, %v2278
  %v2280 = vrot.slane %v951, 7
  %v2281 = vrot.slane %v955, 6
  %v2282 = vsel %vm1072, %v2281, %v2280
  %v2283 = vrot.slane %v961, 5
  %v2284 = vsel %vm1075, %v2283, %v2282
  %v2285 = vrot.slane %v965, 4
  %v2286 = vsel %vm1078, %v2285, %v2284
  %v2287 = vrot.slane %v971, 3
  %v2288 = vsel %vm1081, %v2287, %v2286
  %v2289 = vrot.slane %v975, 2
  %v2290 = vsel %vm1084, %v2289, %v2288
  %v2291 = vrot.slane %v981, 1
  %v2292 = vsel %vm1087, %v2291, %v2290
  %v2293 = vsel %vm1090, %v985, %v2292
  %v2294 = vrot.slane %v989, 7
  %v2295 = vrot.slane %v993, 6
  %v2296 = vsel %vm1072, %v2295, %v2294
  %v2297 = vrot.slane %v999, 5
  %v2298 = vsel %vm1075, %v2297, %v2296
  %v2299 = vrot.slane %v1003, 4
  %v2300 = vsel %vm1078, %v2299, %v2298
  %v2301 = vrot.slane %v1009, 3
  %v2302 = vsel %vm1081, %v2301, %v2300
  %v2303 = vrot.slane %v1013, 2
  %v2304 = vsel %vm1084, %v2303, %v2302
  %v2305 = vrot.slane %v1019, 1
  %v2306 = vsel %vm1087, %v2305, %v2304
  %v2307 = vsel %vm1090, %v1023, %v2306
  %v2308 = vrot.slane %v991, 7
  %v2309 = vrot.slane %v995, 6
  %v2310 = vsel %vm1072, %v2309, %v2308
  %v2311 = vrot.slane %v1001, 5
  %v2312 = vsel %vm1075, %v2311, %v2310
  %v2313 = vrot.slane %v1005, 4
  %v2314 = vsel %vm1078, %v2313, %v2312
  %v2315 = vrot.slane %v1011, 3
  %v2316 = vsel %vm1081, %v2315, %v2314
  %v2317 = vrot.slane %v1015, 2
  %v2318 = vsel %vm1084, %v2317, %v2316
  %v2319 = vrot.slane %v1021, 1
  %v2320 = vsel %vm1087, %v2319, %v2318
  %v2321 = vsel %vm1090, %v1025, %v2320
  %v2326 = vadd.f32 %v2262, %v2279
  %v2327 = vadd.f32 %v2263, %v2293
  %v2328 = vadd.f32 %v2264, %v2307
  %v2329 = vadd.f32 %v2265, %v2321
  %v2330 = vmax.f32 %v2326, 0.0
  %v2331 = vmax.f32 %v2327, 0.0
  %v2332 = vmax.f32 %v2328, 0.0
  %v2333 = vmax.f32 %v2329, 0.0
  %v2334 = vmax.f32 %v2134, %v2330
  %v2335 = vmax.f32 %v2135, %v2331
  %v2336 = vmax.f32 %v2136, %v2332
  %v2337 = vmax.f32 %v2137, %v2333
  %2338 = vst [vmem:[%s3] sm:$0xff] %v2334
  %2339 = vst [vmem:[%s3 + $0x8] sm:$0xff] %v2335
  %2340 = vst [vmem:[%s3 + $0x10] sm:$0xff] %v2336
  %2341 = vst [vmem:[%s3 + $0x18] sm:$0xff] %v2337
  // Predicated region
  $region14: #{bidaf_forward.24} parent=0 // pred_check
    _
  $region15: #{bidaf_forward.24} parent=0 // pred_check_branch
    %2343 = sbr.rel (0) target = $region17
  $region16: #{bidaf_forward.24} parent=0 // pred_region
    _
  $region17: #{bidaf_forward.24} parent=0 // pred_fallthru
    _
  // Predicated region
  $region18: #{bidaf_forward.24} parent=0 // pred_check
    _
  $region19: #{bidaf_forward.24} parent=0 // pred_check_branch
    %2345 = sbr.rel (0) target = $region21
  $region20: #{bidaf_forward.24} parent=0 // pred_region
    _
  $region21: #{bidaf_forward.24} parent=0 // pred_fallthru
    _

// kernel: bidaf_forward.31
$region0: #{bidaf_forward.31}
  #allocation0 [shape = 'u32[]', space=smem, size = 0x4, offset = 0x4, fixed_abs, tag = 'smem constant byte address 0x4 - core index']
  #allocation1 [shape = 'u32[144,128]{1,0:T(1,128)}', space=vmem, size = 0x12000, scoped, tag = 'internal scratch']
  #allocation2 [shape = 'f32[2,32]{1,0:T(2,128)}', space=vmem, size = 0x400, scoped, tag = 'scratch operand']
  #allocation3 [shape = 'f32[2,32]{1,0:T(2,128)}', space=vmem, size = 0x400, scoped, tag = 'scratch operand']
  #allocation4 [shape = 'f32[2,32]{1,0:T(2,128)}', space=vmem, size = 0x400, scoped, tag = 'scratch operand']
  #allocation5 [shape = 'f32[2,32]{1,0:T(2,128)}', space=vmem, size = 0x400, scoped, tag = 'scratch operand']
  %s0 = inlined_call_operand.vmem [shape: f32[8,2,256], index: 0, kind: input, shape index: {}, may-alias: {0,1}]
  %s1 = inlined_call_operand.vmem [shape: f32[8,2,256], index: 1, kind: input, shape index: {}, may-alias: {0,1}]
  %s2 = inlined_call_operand.vmem [shape: bf16[32,128], index: 2, kind: input, shape index: {}]
  %s3 = inlined_call_operand.vmem [shape: bf16[32,128], index: 3, kind: input, shape index: {}]
  %s4 = inlined_call_operand.vmem [shape: f32[8,2,32], index: 4, kind: output, shape index: {0}]
  %s5 = inlined_call_operand.vmem [shape: f32[8,2,32], index: 5, kind: output, shape index: {1}]
  %6 = xla_tuple %s4, %s5
  %s7 = sld [smem:[#allocation0]]
  $region61: #{bidaf_forward.31} parent=0
    _
  %s9 = ssub.s32 1, %s7
  %s10 = scalar_select 0, %s9, %s7
  loop: start=0, step=1, limit=10
  $region2: #{bidaf_forward.31} parent=0 // loop_pre_header
    _
  $region3: #{bidaf_forward.31} parent=0 // loop_header
    %s12 = sphi 0, %s16
    %p13 = scmp.ge.s32.totalorder %s12, 10
    %s22 = sphi 0, %s24
    %s25 = sphi 0, %s22
    %s26 = sphi 0, %s25
    %s42 = sphi 0, %s26
    %s50 = sphi 0, %s52
    %s53 = sphi 0, %s50
    %s54 = sphi 0, %s53
    %s70 = sphi 0, %s54
    %s74 = sphi 0, %s74
    %s76 = sphi 0, %s74
    %s77 = sphi 0, %s76
    %s91 = sphi 0, %s77
    %s95 = sphi 0, %s95
    %s97 = sphi 0, %s95
    %s98 = sphi 0, %s97
    %s112 = sphi 0, %s98
    %s118 = sphi 0, %s120
    %s121 = sphi 0, %s118
    %s122 = sphi 0, %s121
    %s138 = sphi 0, %s122
    %s146 = sphi 0, %s148
    %s149 = sphi 0, %s146
    %s150 = sphi 0, %s149
    %s166 = sphi 0, %s150
  $region4: #{bidaf_forward.31} parent=0 // loop_header_branch
    %15 = sbr.rel (%p13) target = $region8
  $region5: #{bidaf_forward.31} parent=0 // loop_body
    %s17 = ssub.s32 %s12, 1
    %s18 = ssub.s32 %s12, 2
    %s19 = sadd.s32 %s12, 1
    %s20 = ssub.s32 %s12, %s19
    %p21 = scmp.eq.s32.totalorder %s20, 0
    %s23 = sadd.s32 %s22, 1
    %s24 = scalar_select %p21, %s22, %s23
    %p27 = pneg %p21
    %p28 = scmp.eq.s32.totalorder %s12, 7
    %p29 = por %p27, %p28
    %p30 = scmp.ne.s32.totalorder %s22, %s25
    %p31 = scmp.eq.s32.totalorder %s12, 0
    %p32 = por %p30, %p31
    %p33 = scmp.ne.s32.totalorder %s22, %s25
    %p34 = scmp.eq.s32.totalorder %s17, 7
    %p35 = por %p33, %p34
    %p36 = scmp.ne.s32.totalorder %s25, %s26
    %p37 = scmp.eq.s32.totalorder %s17, 0
    %p38 = por %p36, %p37
    %p39 = scmp.ne.s32.totalorder %s25, %s26
    %p40 = scmp.eq.s32.totalorder %s18, 7
    %p41 = por %p39, %p40
    %p43 = scmp.ne.s32.totalorder %s26, %s42
    %p44 = scmp.eq.s32.totalorder %s18, 0
    %p45 = por %p43, %p44
    %s46 = ssub.s32 7, %s12
    %s47 = ssub.s32 7, %s19
    %s48 = ssub.s32 %s46, %s47
    %p49 = scmp.eq.s32.totalorder %s48, 0
    %s51 = sadd.s32 %s50, 1
    %s52 = scalar_select %p49, %s50, %s51
    %p55 = pneg %p49
    %p56 = scmp.eq.s32.totalorder %s12, 7
    %p57 = por %p55, %p56
    %p58 = scmp.ne.s32.totalorder %s50, %s53
    %p59 = scmp.eq.s32.totalorder %s12, 0
    %p60 = por %p58, %p59
    %p61 = scmp.ne.s32.totalorder %s50, %s53
    %p62 = scmp.eq.s32.totalorder %s17, 7
    %p63 = por %p61, %p62
    %p64 = scmp.ne.s32.totalorder %s53, %s54
    %p65 = scmp.eq.s32.totalorder %s17, 0
    %p66 = por %p64, %p65
    %p67 = scmp.ne.s32.totalorder %s53, %s54
    %p68 = scmp.eq.s32.totalorder %s18, 7
    %p69 = por %p67, %p68
    %p71 = scmp.ne.s32.totalorder %s54, %s70
    %p72 = scmp.eq.s32.totalorder %s18, 0
    %p73 = por %p71, %p72
    %s75 = sadd.s32 %s74, 1
    %p78 = scmp.eq.s32.totalorder %s12, 7
    %p79 = scmp.ne.s32.totalorder %s74, %s76
    %p80 = scmp.eq.s32.totalorder %s12, 0
    %p81 = por %p79, %p80
    %p82 = scmp.ne.s32.totalorder %s74, %s76
    %p83 = scmp.eq.s32.totalorder %s17, 7
    %p84 = por %p82, %p83
    %p85 = scmp.ne.s32.totalorder %s76, %s77
    %p86 = scmp.eq.s32.totalorder %s17, 0
    %p87 = por %p85, %p86
    %p88 = scmp.ne.s32.totalorder %s76, %s77
    %p89 = scmp.eq.s32.totalorder %s18, 7
    %p90 = por %p88, %p89
    %p92 = scmp.ne.s32.totalorder %s77, %s91
    %p93 = scmp.eq.s32.totalorder %s18, 0
    %p94 = por %p92, %p93
    %s96 = sadd.s32 %s95, 1
    %p99 = scmp.eq.s32.totalorder %s12, 7
    %p100 = scmp.ne.s32.totalorder %s95, %s97
    %p101 = scmp.eq.s32.totalorder %s12, 0
    %p102 = por %p100, %p101
    %p103 = scmp.ne.s32.totalorder %s95, %s97
    %p104 = scmp.eq.s32.totalorder %s17, 7
    %p105 = por %p103, %p104
    %p106 = scmp.ne.s32.totalorder %s97, %s98
    %p107 = scmp.eq.s32.totalorder %s17, 0
    %p108 = por %p106, %p107
    %p109 = scmp.ne.s32.totalorder %s97, %s98
    %p110 = scmp.eq.s32.totalorder %s18, 7
    %p111 = por %p109, %p110
    %p113 = scmp.ne.s32.totalorder %s98, %s112
    %p114 = scmp.eq.s32.totalorder %s18, 0
    %p115 = por %p113, %p114
    %s116 = ssub.s32 %s12, %s19
    %p117 = scmp.eq.s32.totalorder %s116, 0
    %s119 = sadd.s32 %s118, 1
    %s120 = scalar_select %p117, %s118, %s119
    %p123 = pneg %p117
    %p124 = scmp.eq.s32.totalorder %s12, 7
    %p125 = por %p123, %p124
    %p126 = scmp.ne.s32.totalorder %s118, %s121
    %p127 = scmp.eq.s32.totalorder %s12, 0
    %p128 = por %p126, %p127
    %p129 = scmp.ne.s32.totalorder %s118, %s121
    %p130 = scmp.eq.s32.totalorder %s17, 7
    %p131 = por %p129, %p130
    %p132 = scmp.ne.s32.totalorder %s121, %s122
    %p133 = scmp.eq.s32.totalorder %s17, 0
    %p134 = por %p132, %p133
    %p135 = scmp.ne.s32.totalorder %s121, %s122
    %p136 = scmp.eq.s32.totalorder %s18, 7
    %p137 = por %p135, %p136
    %p139 = scmp.ne.s32.totalorder %s122, %s138
    %p140 = scmp.eq.s32.totalorder %s18, 0
    %p141 = por %p139, %p140
    %s142 = ssub.s32 7, %s12
    %s143 = ssub.s32 7, %s19
    %s144 = ssub.s32 %s142, %s143
    %p145 = scmp.eq.s32.totalorder %s144, 0
    %s147 = sadd.s32 %s146, 1
    %s148 = scalar_select %p145, %s146, %s147
    %p151 = pneg %p145
    %p152 = scmp.eq.s32.totalorder %s12, 7
    %p153 = por %p151, %p152
    %p154 = scmp.ne.s32.totalorder %s146, %s149
    %p155 = scmp.eq.s32.totalorder %s12, 0
    %p156 = por %p154, %p155
    %p157 = scmp.ne.s32.totalorder %s146, %s149
    %p158 = scmp.eq.s32.totalorder %s17, 7
    %p159 = por %p157, %p158
    %p160 = scmp.ne.s32.totalorder %s149, %s150
    %p161 = scmp.eq.s32.totalorder %s17, 0
    %p162 = por %p160, %p161
    %p163 = scmp.ne.s32.totalorder %s149, %s150
    %p164 = scmp.eq.s32.totalorder %s18, 7
    %p165 = por %p163, %p164
    %p167 = scmp.ne.s32.totalorder %s150, %s166
    %p168 = scmp.eq.s32.totalorder %s18, 0
    %p169 = por %p167, %p168
    %p170 = scmp.le.s32.totalorder 1, %s12
    %p171 = scmp.lt.s32.totalorder %s12, 9
    %p172 = pnand %p170, %p171
    %p173 = pneg %p172
    // Predicated region
    $region9: #{bidaf_forward.31} parent=5 // pred_check
      _
    $region10: #{bidaf_forward.31} parent=5 // pred_check_branch
      %175 = sbr.rel (%p172) target = $region12
    $region11: #{bidaf_forward.31} parent=5 // pred_region
      %s176 = ssub.s32 %s12, 1
      // Predicated region
      $region13: #{bidaf_forward.31} parent=11 // pred_check
        %p177 = pneg %p87
      $region14: #{bidaf_forward.31} parent=11 // pred_check_branch
        %179 = sbr.rel (%p177) target = $region16
      $region15: #{bidaf_forward.31} parent=11 // pred_region
        _
      $region16: #{bidaf_forward.31} parent=11 // pred_fallthru
        _
      // Predicated region
      $region17: #{bidaf_forward.31} parent=11 // pred_check
        %p180 = pneg %p108
      $region18: #{bidaf_forward.31} parent=11 // pred_check_branch
        %182 = sbr.rel (%p180) target = $region20
      $region19: #{bidaf_forward.31} parent=11 // pred_region
        _
      $region20: #{bidaf_forward.31} parent=11 // pred_fallthru
        _
    $region12: #{bidaf_forward.31} parent=5 // pred_fallthru
      _
    %p183 = scmp.lt.s32.totalorder %s12, 8
    // Predicated region
    $region21: #{bidaf_forward.31} parent=5 // pred_check
      %p184 = pneg %p183
    $region22: #{bidaf_forward.31} parent=5 // pred_check_branch
      %186 = sbr.rel (%p184) target = $region24
    $region23: #{bidaf_forward.31} parent=5 // pred_region
      // Predicated region
      $region25: #{bidaf_forward.31} parent=23 // pred_check
        %p187 = pneg %p32
      $region26: #{bidaf_forward.31} parent=23 // pred_check_branch
        %189 = sbr.rel (%p187) target = $region28
      $region27: #{bidaf_forward.31} parent=23 // pred_region
        %p190 = scmp.lt.s32.totalorder %s12, 7
        %s191 = scalar_select %p190, %s12, 7
        %s192 = smul.addr %s191, 2
        %s193 = smul.addr %s192, 2
        %s194 = scalar_lea.vmem %s0, %s193
      $region28: #{bidaf_forward.31} parent=23 // pred_fallthru
        _
      // Predicated region
      $region29: #{bidaf_forward.31} parent=23 // pred_check
        %p195 = pneg %p60
      $region30: #{bidaf_forward.31} parent=23 // pred_check_branch
        %197 = sbr.rel (%p195) target = $region32
      $region31: #{bidaf_forward.31} parent=23 // pred_region
        %s198 = ssub.s32 7, %s12
        %p199 = scmp.lt.s32.totalorder %s198, 7
        %s200 = scalar_select %p199, %s198, 7
        %s201 = smul.addr %s200, 2
        %s202 = sadd.s32 1, %s201
        %s203 = smul.addr %s202, 2
        %s204 = scalar_lea.vmem %s1, %s203
        %s205 = ssub.s32 7, %s12
      $region32: #{bidaf_forward.31} parent=23 // pred_fallthru
        _
    $region24: #{bidaf_forward.31} parent=5 // pred_fallthru
      _
    %p206 = scmp.le.s32.totalorder 1, %s12
    %p207 = scmp.lt.s32.totalorder %s12, 9
    %p208 = pnand %p206, %p207
    %p209 = pneg %p208
    // Predicated region
    $region33: #{bidaf_forward.31} parent=5 // pred_check
      _
    $region34: #{bidaf_forward.31} parent=5 // pred_check_branch
      %211 = sbr.rel (%p208) target = $region36
    $region35: #{bidaf_forward.31} parent=5 // pred_region
      %s212 = ssub.s32 %s12, 1
      %p213 = scmp.lt.s32.totalorder %s17, 7
      %s214 = scalar_select %p213, %s17, 7
      %s215 = smul.addr %s214, 2
      %s216 = smul.addr %s215, 2
      %s217 = scalar_lea.vmem %s0, %s216
      %p218 = pneg %p38
      %p219 = pneg %p35
      %s220 = ssub.s32 7, %s17
      %p221 = scmp.lt.s32.totalorder %s220, 7
      %s222 = scalar_select %p221, %s220, 7
      %s223 = smul.addr %s222, 2
      %s224 = sadd.s32 1, %s223
      %s225 = smul.addr %s224, 2
      %s226 = scalar_lea.vmem %s1, %s225
      %p227 = pneg %p66
      %p228 = pneg %p63
      %p229 = pneg %p87
      %p230 = pneg %p84
      %p231 = pneg %p108
      %p232 = pneg %p105
      %p233 = pneg %p134
      %p234 = pneg %p131
      %p235 = scmp.lt.s32.totalorder %s17, 7
      %s236 = scalar_select %p235, %s17, 7
      %s237 = smul.addr %s236, 2
      %s238 = scalar_lea.vmem %s4, %s237
      %p239 = pneg %p162
      %p240 = pneg %p159
      %s241 = ssub.s32 7, %s17
      %p242 = scmp.lt.s32.totalorder %s241, 7
      %s243 = scalar_select %p242, %s241, 7
      %s244 = smul.addr %s243, 2
      %s245 = scalar_lea.vmem %s5, %s244
      %p246 = scmp.lt.s32.totalorder %s17, 7
      %s247 = scalar_select %p246, %s17, 7
      %s248 = smul.addr %s247, 2
      %s249 = smul.addr %s248, 2
      %s250 = scalar_lea.vmem %s0, %s249
      %s251 = ssub.s32 7, %s17
      %p252 = scmp.lt.s32.totalorder %s251, 7
      %s253 = scalar_select %p252, %s251, 7
      %s254 = smul.addr %s253, 2
      %s255 = sadd.s32 1, %s254
      %s256 = smul.addr %s255, 2
      %s257 = scalar_lea.vmem %s1, %s256
      %s258 = ssub.s32 7, %s17
      %p259 = scmp.lt.s32.totalorder %s17, 7
      %s260 = scalar_select %p259, %s17, 7
      %s261 = smul.addr %s260, 2
      %s262 = scalar_lea.vmem %s4, %s261
      %s263 = ssub.s32 7, %s17
      %p264 = scmp.lt.s32.totalorder %s263, 7
      %s265 = scalar_select %p264, %s263, 7
      %s266 = smul.addr %s265, 2
      %s267 = scalar_lea.vmem %s5, %s266
      %s268 = ssub.s32 7, %s17
      %p270 = scmp.eq.s32.totalorder %s17, 0
      // Predicated region
      $region37: #{bidaf_forward.31} parent=35 // pred_check
        %p271 = pneg %p270
      $region38: #{bidaf_forward.31} parent=35 // pred_check_branch
        %273 = sbr.rel (%p271) target = $region40
      $region39: #{bidaf_forward.31} parent=35 // pred_region
        %vm274 = vcmask 254976
        %275 = vst.msk [vmem:[#allocation2] sm:$0x3] %vm274, 0.0
        %276 = vst.msk [vmem:[#allocation3] sm:$0x3] %vm274, 0.0
        %277 = vst.msk [vmem:[#allocation4] sm:$0x3] %vm274, 0.0
        %278 = vst.msk [vmem:[#allocation5] sm:$0x3] %vm274, 0.0
      $region40: #{bidaf_forward.31} parent=35 // pred_fallthru
        _
      %v279 = vld [vmem:[%s250] sm:$0x3]
      %v280 = vld [vmem:[#allocation2] sm:$0x3]
      %v281 = vpack.c.bf16 %v280, %v280
      %v282 = vld [vmem:[%s2] sm:$0xf]
      %v283 = vld [vmem:[%s2 + $0x4] sm:$0xf]
      %v284 = vld [vmem:[%s2 + $0x8] sm:$0xf]
      %v285 = vld [vmem:[%s2 + $0xc] sm:$0xf]
      %v290 = vunpack.c.l.b16 %v282
      %v291 = vunpack.c.l.b16 %v283
      %v292 = vunpack.c.l.b16 %v284
      %v293 = vunpack.c.l.b16 %v285
      %v294 = vpack.c.b16 %v291, %v290
      %v295 = vpack.c.b16 %v293, %v292
      %vm298 = vcmask 261120
      %v300 = vsel %vm298, %v281, 0
      %302 = vmatprep.subr.bf16.mxu0 0
      %303 = vmatpush1.bf16.msra.mxu0 0
      %304 = vmatprep.subr.bf16.mxu0 0
      %305 = vmatpush1.bf16.msra.mxu0 0
      %306 = vmatprep.subr.bf16.mxu0 0
      %307 = vmatpush1.bf16.msra.mxu0 0
      %308 = vmatprep.subr.bf16.mxu0 0
      %309 = vmatpush1.bf16.msra.mxu0 0
      %310 = vmatprep.subr.bf16.mxu0 0
      %311 = vmatpush1.bf16.msra.mxu0 0
      %312 = vmatprep.subr.bf16.mxu0 0
      %313 = vmatpush1.bf16.msra.mxu0 0
      %314 = vmatprep.subr.bf16.mxu0 0
      %315 = vmatpush1.bf16.msra.mxu0 %v295
      %316 = vmatprep.subr.bf16.mxu0 0
      %317 = vmatpush1.bf16.msra.mxu0 %v294
      %318 = vmatprep.subr.bf16.mxu0 0
      %319 = vmatpush2.bf16.msra.mxu0 0
      %320 = vmatprep.subr.bf16.mxu0 0
      %321 = vmatpush2.bf16.msra.mxu0 0
      %322 = vmatprep.subr.bf16.mxu0 0
      %323 = vmatpush2.bf16.msra.mxu0 0
      %324 = vmatprep.subr.bf16.mxu0 0
      %325 = vmatpush2.bf16.msra.mxu0 0
      %326 = vmatprep.subr.bf16.mxu0 0
      %327 = vmatpush2.bf16.msra.mxu0 0
      %328 = vmatprep.subr.bf16.mxu0 0
      %329 = vmatpush2.bf16.msra.mxu0 0
      %330 = vmatprep.subr.bf16.mxu0 0
      %331 = vmatpush2.bf16.msra.mxu0 0
      %332 = vmatprep.subr.bf16.mxu0 0
      %333 = vmatpush2.bf16.msra.mxu0 0
      %334 = vmatprep.mubr.bf16.mxu0 0
      %335 = vmatmul.mubr.bf16.gmra.mxu0 %v300
      %v336 = vpop.f32.mrf.mxu0
      %v337 = vadd.f32 0.0, %v336
      %v338 = vpop.f32.mrf.mxu0
      %v339 = vpop.f32.mrf.mxu0
      %v340 = vpop.f32.mrf.mxu0
      %341 = vdwg.mxu0
      %v342 = vadd.f32 %v279, %v337
      %v343 = vxor.u32 %v342, 2147483648
      %v344 = vmul.f32 %v343, 1.442695
      %v345 = vpow.pop %v344
      %v346 = vadd.f32 %v345, 1.0
      %v347 = vrcp.pop %v346
      %v348 = vmul.f32 1.0, %v347
      %v349 = vtanh.pop %v342
      %v350 = vld [vmem:[#allocation3] sm:$0x3]
      %352 = vrot.lane.b32.xlu0 %v350, 32
      %v353 = vpop.permute.xlu0 %352
      %v355 = vmul.f32 %v348, %v353
      %357 = vrot.lane.b32.xlu0 %v349, 64
      %v358 = vpop.permute.xlu0 %357
      %v360 = vmul.f32 %v348, %v358
      %362 = vrot.lane.b32.xlu0 %v360, 32
      %v363 = vpop.permute.xlu0 %362
      %v365 = vadd.f32 %v355, %v363
      %v366 = vtanh.pop %v365
      %368 = vrot.lane.b32.xlu0 %v366, 64
      %v369 = vpop.permute.xlu0 %368
      %v371 = vmul.f32 %v348, %v369
      %373 = vrot.lane.b32.xlu0 %v365, 96
      %v374 = vpop.permute.xlu0 %373
      %vm376 = vcmask 254976
      %377 = vst.msk [vmem:[#allocation3] sm:$0x3] %vm376, %v374
      %379 = vrot.lane.b32.xlu0 %v371, 32
      %v380 = vpop.permute.xlu0 %379
      %382 = vst.msk [vmem:[#allocation2] sm:$0x3] %vm376, %v380
      %383 = vst.msk [vmem:[%s262] sm:$0x3] %vm376, %v380
      %v384 = vld [vmem:[%s257] sm:$0x3]
      %v385 = vld [vmem:[#allocation4] sm:$0x3]
      %v386 = vpack.c.bf16 %v385, %v385
      %v387 = vld [vmem:[%s3] sm:$0xf]
      %v388 = vld [vmem:[%s3 + $0x4] sm:$0xf]
      %v389 = vld [vmem:[%s3 + $0x8] sm:$0xf]
      %v390 = vld [vmem:[%s3 + $0xc] sm:$0xf]
      %v395 = vunpack.c.l.b16 %v387
      %v396 = vunpack.c.l.b16 %v388
      %v397 = vunpack.c.l.b16 %v389
      %v398 = vunpack.c.l.b16 %v390
      %v399 = vpack.c.b16 %v396, %v395
      %v400 = vpack.c.b16 %v398, %v397
      %v404 = vsel %vm298, %v386, 0
      %406 = vmatprep.subr.bf16.mxu0 0
      %407 = vmatpush1.bf16.msra.mxu0 0
      %408 = vmatprep.subr.bf16.mxu0 0
      %409 = vmatpush1.bf16.msra.mxu0 0
      %410 = vmatprep.subr.bf16.mxu0 0
      %411 = vmatpush1.bf16.msra.mxu0 0
      %412 = vmatprep.subr.bf16.mxu0 0
      %413 = vmatpush1.bf16.msra.mxu0 0
      %414 = vmatprep.subr.bf16.mxu0 0
      %415 = vmatpush1.bf16.msra.mxu0 0
      %416 = vmatprep.subr.bf16.mxu0 0
      %417 = vmatpush1.bf16.msra.mxu0 0
      %418 = vmatprep.subr.bf16.mxu0 0
      %419 = vmatpush1.bf16.msra.mxu0 %v400
      %420 = vmatprep.subr.bf16.mxu0 0
      %421 = vmatpush1.bf16.msra.mxu0 %v399
      %422 = vmatprep.subr.bf16.mxu0 0
      %423 = vmatpush2.bf16.msra.mxu0 0
      %424 = vmatprep.subr.bf16.mxu0 0
      %425 = vmatpush2.bf16.msra.mxu0 0
      %426 = vmatprep.subr.bf16.mxu0 0
      %427 = vmatpush2.bf16.msra.mxu0 0
      %428 = vmatprep.subr.bf16.mxu0 0
      %429 = vmatpush2.bf16.msra.mxu0 0
      %430 = vmatprep.subr.bf16.mxu0 0
      %431 = vmatpush2.bf16.msra.mxu0 0
      %432 = vmatprep.subr.bf16.mxu0 0
      %433 = vmatpush2.bf16.msra.mxu0 0
      %434 = vmatprep.subr.bf16.mxu0 0
      %435 = vmatpush2.bf16.msra.mxu0 0
      %436 = vmatprep.subr.bf16.mxu0 0
      %437 = vmatpush2.bf16.msra.mxu0 0
      %438 = vmatprep.mubr.bf16.mxu0 0
      %439 = vmatmul.mubr.bf16.gmra.mxu0 %v404
      %v440 = vpop.f32.mrf.mxu0
      %v441 = vadd.f32 0.0, %v440
      %v442 = vpop.f32.mrf.mxu0
      %v443 = vpop.f32.mrf.mxu0
      %v444 = vpop.f32.mrf.mxu0
      %445 = vdwg.mxu0
      %v446 = vadd.f32 %v384, %v441
      %v447 = vxor.u32 %v446, 2147483648
      %v448 = vmul.f32 %v447, 1.442695
      %v449 = vpow.pop %v448
      %v450 = vadd.f32 %v449, 1.0
      %v451 = vrcp.pop %v450
      %v452 = vmul.f32 1.0, %v451
      %v453 = vtanh.pop %v446
      %v454 = vld [vmem:[#allocation5] sm:$0x3]
      %456 = vrot.lane.b32.xlu0 %v454, 32
      %v457 = vpop.permute.xlu0 %456
      %v459 = vmul.f32 %v452, %v457
      %461 = vrot.lane.b32.xlu0 %v453, 64
      %v462 = vpop.permute.xlu0 %461
      %v464 = vmul.f32 %v452, %v462
      %466 = vrot.lane.b32.xlu0 %v464, 32
      %v467 = vpop.permute.xlu0 %466
      %v469 = vadd.f32 %v459, %v467
      %v470 = vtanh.pop %v469
      %472 = vrot.lane.b32.xlu0 %v470, 64
      %v473 = vpop.permute.xlu0 %472
      %v475 = vmul.f32 %v452, %v473
      %477 = vrot.lane.b32.xlu0 %v469, 96
      %v478 = vpop.permute.xlu0 %477
      %480 = vst.msk [vmem:[#allocation5] sm:$0x3] %vm376, %v478
      %482 = vrot.lane.b32.xlu0 %v475, 32
      %v483 = vpop.permute.xlu0 %482
      %485 = vst.msk [vmem:[#allocation4] sm:$0x3] %vm376, %v483
      %486 = vst.msk [vmem:[%s267] sm:$0x3] %vm376, %v483
      %p487 = scmp.lt.s32.totalorder %s17, 7
      %s488 = scalar_select %p487, %s17, 7
      %s489 = smul.addr %s488, 2
      %s490 = scalar_lea.vmem %s4, %s489
      %s491 = ssub.s32 7, %s17
      %p492 = scmp.lt.s32.totalorder %s491, 7
      %s493 = scalar_select %p492, %s491, 7
      %s494 = smul.addr %s493, 2
      %s495 = scalar_lea.vmem %s5, %s494
      // Predicated region
      $region41: #{bidaf_forward.31} parent=35 // pred_check
        %p496 = pneg %p131
      $region42: #{bidaf_forward.31} parent=35 // pred_check_branch
        %498 = sbr.rel (%p496) target = $region44
      $region43: #{bidaf_forward.31} parent=35 // pred_region
        _
      $region44: #{bidaf_forward.31} parent=35 // pred_fallthru
        _
      // Predicated region
      $region45: #{bidaf_forward.31} parent=35 // pred_check
        %p499 = pneg %p159
      $region46: #{bidaf_forward.31} parent=35 // pred_check_branch
        %501 = sbr.rel (%p499) target = $region48
      $region47: #{bidaf_forward.31} parent=35 // pred_region
        %s502 = ssub.s32 7, %s17
      $region48: #{bidaf_forward.31} parent=35 // pred_fallthru
        _
    $region36: #{bidaf_forward.31} parent=5 // pred_fallthru
      _
    %p503 = scmp.le.s32.totalorder 2, %s12
    // Predicated region
    $region49: #{bidaf_forward.31} parent=5 // pred_check
      %p504 = pneg %p503
    $region50: #{bidaf_forward.31} parent=5 // pred_check_branch
      %506 = sbr.rel (%p504) target = $region52
    $region51: #{bidaf_forward.31} parent=5 // pred_region
      %s507 = ssub.s32 %s12, 2
      // Predicated region
      $region53: #{bidaf_forward.31} parent=51 // pred_check
        %p508 = pneg %p137
      $region54: #{bidaf_forward.31} parent=51 // pred_check_branch
        %510 = sbr.rel (%p508) target = $region56
      $region55: #{bidaf_forward.31} parent=51 // pred_region
        %p511 = scmp.lt.s32.totalorder %s18, 7
        %s512 = scalar_select %p511, %s18, 7
        %s513 = smul.addr %s512, 2
        %s514 = scalar_lea.vmem %s4, %s513
      $region56: #{bidaf_forward.31} parent=51 // pred_fallthru
        _
      // Predicated region
      $region57: #{bidaf_forward.31} parent=51 // pred_check
        %p515 = pneg %p165
      $region58: #{bidaf_forward.31} parent=51 // pred_check_branch
        %517 = sbr.rel (%p515) target = $region60
      $region59: #{bidaf_forward.31} parent=51 // pred_region
        %s518 = ssub.s32 7, %s18
        %p519 = scmp.lt.s32.totalorder %s518, 7
        %s520 = scalar_select %p519, %s518, 7
        %s521 = smul.addr %s520, 2
        %s522 = scalar_lea.vmem %s5, %s521
      $region60: #{bidaf_forward.31} parent=51 // pred_fallthru
        _
    $region52: #{bidaf_forward.31} parent=5 // pred_fallthru
      _
  $region6: #{bidaf_forward.31} parent=0 // loop_footer
    %s16 = sadd.s32 1, %s12
  $region7: #{bidaf_forward.31} parent=0 // loop_footer_branch
    %11 = sbr.rel target = $region3
  $region8: #{bidaf_forward.31} parent=0 // loop_exit
    _

// kernel: bidaf_forward.32
$region0: #{bidaf_forward.32}
  #allocation0 [shape = 'u32[]', space=smem, size = 0x4, offset = 0x4, fixed_abs, tag = 'smem constant byte address 0x4 - core index']
  #allocation1 [shape = 'u32[144,128]{1,0:T(1,128)}', space=vmem, size = 0x12000, scoped, tag = 'internal scratch']
  #allocation2 [shape = 'f32[1,1]{1,0:T(1,128)S(1)}', space=vmem, size = 0x200, scoped, tag = 'scoped memory for bidaf_forward.32']
  %s0 = inlined_call_operand.vmem [shape: f32[2,16,64], index: 0, kind: input, shape index: {}]
  %s1 = inlined_call_operand.vmem [shape: f32[2,8,64], index: 1, kind: input, shape index: {}]
  %s2 = inlined_call_operand.vmem [shape: f32[2,16,1], index: 2, kind: input, shape index: {}]
  %s3 = inlined_call_operand.vmem [shape: f32[2,1,8], index: 3, kind: input, shape index: {}]
  %s4 = inlined_call_operand.vmem [shape: f32[1,64], index: 4, kind: input, shape index: {}]
  %s5 = inlined_call_operand.vmem [shape: f32[1,64], index: 5, kind: input, shape index: {}]
  %s6 = inlined_call_operand.vmem [shape: f32[1,64], index: 6, kind: input, shape index: {}]
  %s7 = inlined_call_operand.<no memory space> [shape: f32[1,1], index: 7, kind: input, shape index: {}]
  %s8 = inlined_call_operand.vmem [shape: bf16[2,256], index: 8, kind: input, shape index: {}]
  %s9 = inlined_call_operand.vmem [shape: f32[2,16,256], index: 9, kind: output, shape index: {0}]
  %s10 = inlined_call_operand.vmem [shape: f32[2,2,16], index: 10, kind: output, shape index: {1}]
  %11 = xla_tuple %s9, %s10
  %s12 = sld [smem:[#allocation0]]
  $region77: #{bidaf_forward.32} parent=0
    _
  %s14 = ssub.s32 1, %s12
  %s15 = scalar_select 0, %s14, %s12
  %v16 = vstv %s7
  %17 = vst [vmem:[#allocation2] sm:$0x1] %v16
  loop: start=0, step=1, limit=4
  $region2: #{bidaf_forward.32} parent=0 // loop_pre_header
    _
  $region3: #{bidaf_forward.32} parent=0 // loop_header
    %s19 = sphi 0, %s23
    %p20 = scmp.ge.s32.totalorder %s19, 4
    %s29 = sphi 0, %s31
    %s32 = sphi 0, %s29
    %s33 = sphi 0, %s32
    %s49 = sphi 0, %s33
    %s55 = sphi 0, %s57
    %s58 = sphi 0, %s55
    %s59 = sphi 0, %s58
    %s75 = sphi 0, %s59
    %s81 = sphi 0, %s83
    %s84 = sphi 0, %s81
    %s85 = sphi 0, %s84
    %s101 = sphi 0, %s85
    %s107 = sphi 0, %s109
    %s110 = sphi 0, %s107
    %s111 = sphi 0, %s110
    %s127 = sphi 0, %s111
    %s131 = sphi 0, %s131
    %s133 = sphi 0, %s131
    %s134 = sphi 0, %s133
    %s148 = sphi 0, %s134
    %s152 = sphi 0, %s152
    %s154 = sphi 0, %s152
    %s155 = sphi 0, %s154
    %s169 = sphi 0, %s155
    %s173 = sphi 0, %s173
    %s175 = sphi 0, %s173
    %s176 = sphi 0, %s175
    %s190 = sphi 0, %s176
    %s194 = sphi 0, %s194
    %s196 = sphi 0, %s194
    %s197 = sphi 0, %s196
    %s211 = sphi 0, %s197
    %s215 = sphi 0, %s215
    %s217 = sphi 0, %s215
    %s218 = sphi 0, %s217
    %s232 = sphi 0, %s218
    %s238 = sphi 0, %s240
    %s241 = sphi 0, %s238
    %s242 = sphi 0, %s241
    %s258 = sphi 0, %s242
    %s264 = sphi 0, %s266
    %s267 = sphi 0, %s264
    %s268 = sphi 0, %s267
    %s284 = sphi 0, %s268
  $region4: #{bidaf_forward.32} parent=0 // loop_header_branch
    %22 = sbr.rel (%p20) target = $region8
  $region5: #{bidaf_forward.32} parent=0 // loop_body
    %s24 = ssub.s32 %s19, 1
    %s25 = ssub.s32 %s19, 2
    %s26 = sadd.s32 %s19, 1
    %s27 = ssub.s32 %s19, %s26
    %p28 = scmp.eq.s32.totalorder %s27, 0
    %s30 = sadd.s32 %s29, 1
    %s31 = scalar_select %p28, %s29, %s30
    %p34 = pneg %p28
    %p35 = scmp.eq.s32.totalorder %s19, 1
    %p36 = por %p34, %p35
    %p37 = scmp.ne.s32.totalorder %s29, %s32
    %p38 = scmp.eq.s32.totalorder %s19, 0
    %p39 = por %p37, %p38
    %p40 = scmp.ne.s32.totalorder %s29, %s32
    %p41 = scmp.eq.s32.totalorder %s24, 1
    %p42 = por %p40, %p41
    %p43 = scmp.ne.s32.totalorder %s32, %s33
    %p44 = scmp.eq.s32.totalorder %s24, 0
    %p45 = por %p43, %p44
    %p46 = scmp.ne.s32.totalorder %s32, %s33
    %p47 = scmp.eq.s32.totalorder %s25, 1
    %p48 = por %p46, %p47
    %p50 = scmp.ne.s32.totalorder %s33, %s49
    %p51 = scmp.eq.s32.totalorder %s25, 0
    %p52 = por %p50, %p51
    %s53 = ssub.s32 %s19, %s26
    %p54 = scmp.eq.s32.totalorder %s53, 0
    %s56 = sadd.s32 %s55, 1
    %s57 = scalar_select %p54, %s55, %s56
    %p60 = pneg %p54
    %p61 = scmp.eq.s32.totalorder %s19, 1
    %p62 = por %p60, %p61
    %p63 = scmp.ne.s32.totalorder %s55, %s58
    %p64 = scmp.eq.s32.totalorder %s19, 0
    %p65 = por %p63, %p64
    %p66 = scmp.ne.s32.totalorder %s55, %s58
    %p67 = scmp.eq.s32.totalorder %s24, 1
    %p68 = por %p66, %p67
    %p69 = scmp.ne.s32.totalorder %s58, %s59
    %p70 = scmp.eq.s32.totalorder %s24, 0
    %p71 = por %p69, %p70
    %p72 = scmp.ne.s32.totalorder %s58, %s59
    %p73 = scmp.eq.s32.totalorder %s25, 1
    %p74 = por %p72, %p73
    %p76 = scmp.ne.s32.totalorder %s59, %s75
    %p77 = scmp.eq.s32.totalorder %s25, 0
    %p78 = por %p76, %p77
    %s79 = ssub.s32 %s19, %s26
    %p80 = scmp.eq.s32.totalorder %s79, 0
    %s82 = sadd.s32 %s81, 1
    %s83 = scalar_select %p80, %s81, %s82
    %p86 = pneg %p80
    %p87 = scmp.eq.s32.totalorder %s19, 1
    %p88 = por %p86, %p87
    %p89 = scmp.ne.s32.totalorder %s81, %s84
    %p90 = scmp.eq.s32.totalorder %s19, 0
    %p91 = por %p89, %p90
    %p92 = scmp.ne.s32.totalorder %s81, %s84
    %p93 = scmp.eq.s32.totalorder %s24, 1
    %p94 = por %p92, %p93
    %p95 = scmp.ne.s32.totalorder %s84, %s85
    %p96 = scmp.eq.s32.totalorder %s24, 0
    %p97 = por %p95, %p96
    %p98 = scmp.ne.s32.totalorder %s84, %s85
    %p99 = scmp.eq.s32.totalorder %s25, 1
    %p100 = por %p98, %p99
    %p102 = scmp.ne.s32.totalorder %s85, %s101
    %p103 = scmp.eq.s32.totalorder %s25, 0
    %p104 = por %p102, %p103
    %s105 = ssub.s32 %s19, %s26
    %p106 = scmp.eq.s32.totalorder %s105, 0
    %s108 = sadd.s32 %s107, 1
    %s109 = scalar_select %p106, %s107, %s108
    %p112 = pneg %p106
    %p113 = scmp.eq.s32.totalorder %s19, 1
    %p114 = por %p112, %p113
    %p115 = scmp.ne.s32.totalorder %s107, %s110
    %p116 = scmp.eq.s32.totalorder %s19, 0
    %p117 = por %p115, %p116
    %p118 = scmp.ne.s32.totalorder %s107, %s110
    %p119 = scmp.eq.s32.totalorder %s24, 1
    %p120 = por %p118, %p119
    %p121 = scmp.ne.s32.totalorder %s110, %s111
    %p122 = scmp.eq.s32.totalorder %s24, 0
    %p123 = por %p121, %p122
    %p124 = scmp.ne.s32.totalorder %s110, %s111
    %p125 = scmp.eq.s32.totalorder %s25, 1
    %p126 = por %p124, %p125
    %p128 = scmp.ne.s32.totalorder %s111, %s127
    %p129 = scmp.eq.s32.totalorder %s25, 0
    %p130 = por %p128, %p129
    %s132 = sadd.s32 %s131, 1
    %p135 = scmp.eq.s32.totalorder %s19, 1
    %p136 = scmp.ne.s32.totalorder %s131, %s133
    %p137 = scmp.eq.s32.totalorder %s19, 0
    %p138 = por %p136, %p137
    %p139 = scmp.ne.s32.totalorder %s131, %s133
    %p140 = scmp.eq.s32.totalorder %s24, 1
    %p141 = por %p139, %p140
    %p142 = scmp.ne.s32.totalorder %s133, %s134
    %p143 = scmp.eq.s32.totalorder %s24, 0
    %p144 = por %p142, %p143
    %p145 = scmp.ne.s32.totalorder %s133, %s134
    %p146 = scmp.eq.s32.totalorder %s25, 1
    %p147 = por %p145, %p146
    %p149 = scmp.ne.s32.totalorder %s134, %s148
    %p150 = scmp.eq.s32.totalorder %s25, 0
    %p151 = por %p149, %p150
    %s153 = sadd.s32 %s152, 1
    %p156 = scmp.eq.s32.totalorder %s19, 1
    %p157 = scmp.ne.s32.totalorder %s152, %s154
    %p158 = scmp.eq.s32.totalorder %s19, 0
    %p159 = por %p157, %p158
    %p160 = scmp.ne.s32.totalorder %s152, %s154
    %p161 = scmp.eq.s32.totalorder %s24, 1
    %p162 = por %p160, %p161
    %p163 = scmp.ne.s32.totalorder %s154, %s155
    %p164 = scmp.eq.s32.totalorder %s24, 0
    %p165 = por %p163, %p164
    %p166 = scmp.ne.s32.totalorder %s154, %s155
    %p167 = scmp.eq.s32.totalorder %s25, 1
    %p168 = por %p166, %p167
    %p170 = scmp.ne.s32.totalorder %s155, %s169
    %p171 = scmp.eq.s32.totalorder %s25, 0
    %p172 = por %p170, %p171
    %s174 = sadd.s32 %s173, 1
    %p177 = scmp.eq.s32.totalorder %s19, 1
    %p178 = scmp.ne.s32.totalorder %s173, %s175
    %p179 = scmp.eq.s32.totalorder %s19, 0
    %p180 = por %p178, %p179
    %p181 = scmp.ne.s32.totalorder %s173, %s175
    %p182 = scmp.eq.s32.totalorder %s24, 1
    %p183 = por %p181, %p182
    %p184 = scmp.ne.s32.totalorder %s175, %s176
    %p185 = scmp.eq.s32.totalorder %s24, 0
    %p186 = por %p184, %p185
    %p187 = scmp.ne.s32.totalorder %s175, %s176
    %p188 = scmp.eq.s32.totalorder %s25, 1
    %p189 = por %p187, %p188
    %p191 = scmp.ne.s32.totalorder %s176, %s190
    %p192 = scmp.eq.s32.totalorder %s25, 0
    %p193 = por %p191, %p192
    %s195 = sadd.s32 %s194, 1
    %p198 = scmp.eq.s32.totalorder %s19, 1
    %p199 = scmp.ne.s32.totalorder %s194, %s196
    %p200 = scmp.eq.s32.totalorder %s19, 0
    %p201 = por %p199, %p200
    %p202 = scmp.ne.s32.totalorder %s194, %s196
    %p203 = scmp.eq.s32.totalorder %s24, 1
    %p204 = por %p202, %p203
    %p205 = scmp.ne.s32.totalorder %s196, %s197
    %p206 = scmp.eq.s32.totalorder %s24, 0
    %p207 = por %p205, %p206
    %p208 = scmp.ne.s32.totalorder %s196, %s197
    %p209 = scmp.eq.s32.totalorder %s25, 1
    %p210 = por %p208, %p209
    %p212 = scmp.ne.s32.totalorder %s197, %s211
    %p213 = scmp.eq.s32.totalorder %s25, 0
    %p214 = por %p212, %p213
    %s216 = sadd.s32 %s215, 1
    %p219 = scmp.eq.s32.totalorder %s19, 1
    %p220 = scmp.ne.s32.totalorder %s215, %s217
    %p221 = scmp.eq.s32.totalorder %s19, 0
    %p222 = por %p220, %p221
    %p223 = scmp.ne.s32.totalorder %s215, %s217
    %p224 = scmp.eq.s32.totalorder %s24, 1
    %p225 = por %p223, %p224
    %p226 = scmp.ne.s32.totalorder %s217, %s218
    %p227 = scmp.eq.s32.totalorder %s24, 0
    %p228 = por %p226, %p227
    %p229 = scmp.ne.s32.totalorder %s217, %s218
    %p230 = scmp.eq.s32.totalorder %s25, 1
    %p231 = por %p229, %p230
    %p233 = scmp.ne.s32.totalorder %s218, %s232
    %p234 = scmp.eq.s32.totalorder %s25, 0
    %p235 = por %p233, %p234
    %s236 = ssub.s32 %s19, %s26
    %p237 = scmp.eq.s32.totalorder %s236, 0
    %s239 = sadd.s32 %s238, 1
    %s240 = scalar_select %p237, %s238, %s239
    %p243 = pneg %p237
    %p244 = scmp.eq.s32.totalorder %s19, 1
    %p245 = por %p243, %p244
    %p246 = scmp.ne.s32.totalorder %s238, %s241
    %p247 = scmp.eq.s32.totalorder %s19, 0
    %p248 = por %p246, %p247
    %p249 = scmp.ne.s32.totalorder %s238, %s241
    %p250 = scmp.eq.s32.totalorder %s24, 1
    %p251 = por %p249, %p250
    %p252 = scmp.ne.s32.totalorder %s241, %s242
    %p253 = scmp.eq.s32.totalorder %s24, 0
    %p254 = por %p252, %p253
    %p255 = scmp.ne.s32.totalorder %s241, %s242
    %p256 = scmp.eq.s32.totalorder %s25, 1
    %p257 = por %p255, %p256
    %p259 = scmp.ne.s32.totalorder %s242, %s258
    %p260 = scmp.eq.s32.totalorder %s25, 0
    %p261 = por %p259, %p260
    %s262 = ssub.s32 %s19, %s26
    %p263 = scmp.eq.s32.totalorder %s262, 0
    %s265 = sadd.s32 %s264, 1
    %s266 = scalar_select %p263, %s264, %s265
    %p269 = pneg %p263
    %p270 = scmp.eq.s32.totalorder %s19, 1
    %p271 = por %p269, %p270
    %p272 = scmp.ne.s32.totalorder %s264, %s267
    %p273 = scmp.eq.s32.totalorder %s19, 0
    %p274 = por %p272, %p273
    %p275 = scmp.ne.s32.totalorder %s264, %s267
    %p276 = scmp.eq.s32.totalorder %s24, 1
    %p277 = por %p275, %p276
    %p278 = scmp.ne.s32.totalorder %s267, %s268
    %p279 = scmp.eq.s32.totalorder %s24, 0
    %p280 = por %p278, %p279
    %p281 = scmp.ne.s32.totalorder %s267, %s268
    %p282 = scmp.eq.s32.totalorder %s25, 1
    %p283 = por %p281, %p282
    %p285 = scmp.ne.s32.totalorder %s268, %s284
    %p286 = scmp.eq.s32.totalorder %s25, 0
    %p287 = por %p285, %p286
    %p288 = scmp.le.s32.totalorder 1, %s19
    %p289 = scmp.lt.s32.totalorder %s19, 3
    %p290 = pnand %p288, %p289
    %p291 = pneg %p290
    // Predicated region
    $region9: #{bidaf_forward.32} parent=5 // pred_check
      _
    $region10: #{bidaf_forward.32} parent=5 // pred_check_branch
      %293 = sbr.rel (%p290) target = $region12
    $region11: #{bidaf_forward.32} parent=5 // pred_region
      %s294 = ssub.s32 %s19, 1
      // Predicated region
      $region13: #{bidaf_forward.32} parent=11 // pred_check
        %p295 = pneg %p144
      $region14: #{bidaf_forward.32} parent=11 // pred_check_branch
        %297 = sbr.rel (%p295) target = $region16
      $region15: #{bidaf_forward.32} parent=11 // pred_region
        _
      $region16: #{bidaf_forward.32} parent=11 // pred_fallthru
        _
      // Predicated region
      $region17: #{bidaf_forward.32} parent=11 // pred_check
        %p298 = pneg %p165
      $region18: #{bidaf_forward.32} parent=11 // pred_check_branch
        %300 = sbr.rel (%p298) target = $region20
      $region19: #{bidaf_forward.32} parent=11 // pred_region
        _
      $region20: #{bidaf_forward.32} parent=11 // pred_fallthru
        _
      // Predicated region
      $region21: #{bidaf_forward.32} parent=11 // pred_check
        %p301 = pneg %p186
      $region22: #{bidaf_forward.32} parent=11 // pred_check_branch
        %303 = sbr.rel (%p301) target = $region24
      $region23: #{bidaf_forward.32} parent=11 // pred_region
        _
      $region24: #{bidaf_forward.32} parent=11 // pred_fallthru
        _
      // Predicated region
      $region25: #{bidaf_forward.32} parent=11 // pred_check
        %p304 = pneg %p207
      $region26: #{bidaf_forward.32} parent=11 // pred_check_branch
        %306 = sbr.rel (%p304) target = $region28
      $region27: #{bidaf_forward.32} parent=11 // pred_region
        _
      $region28: #{bidaf_forward.32} parent=11 // pred_fallthru
        _
      // Predicated region
      $region29: #{bidaf_forward.32} parent=11 // pred_check
        %p307 = pneg %p228
      $region30: #{bidaf_forward.32} parent=11 // pred_check_branch
        %309 = sbr.rel (%p307) target = $region32
      $region31: #{bidaf_forward.32} parent=11 // pred_region
        _
      $region32: #{bidaf_forward.32} parent=11 // pred_fallthru
        _
    $region12: #{bidaf_forward.32} parent=5 // pred_fallthru
      _
    %p310 = scmp.lt.s32.totalorder %s19, 2
    // Predicated region
    $region33: #{bidaf_forward.32} parent=5 // pred_check
      %p311 = pneg %p310
    $region34: #{bidaf_forward.32} parent=5 // pred_check_branch
      %313 = sbr.rel (%p311) target = $region36
    $region35: #{bidaf_forward.32} parent=5 // pred_region
      // Predicated region
      $region37: #{bidaf_forward.32} parent=35 // pred_check
        %p314 = pneg %p39
      $region38: #{bidaf_forward.32} parent=35 // pred_check_branch
        %316 = sbr.rel (%p314) target = $region40
      $region39: #{bidaf_forward.32} parent=35 // pred_region
        %p317 = scmp.lt.s32.totalorder %s19, 1
        %s318 = scalar_select %p317, %s19, 1
        %s319 = smul.addr %s318, 2
        %s320 = smul.addr %s319, 8
        %s321 = scalar_lea.vmem %s0, %s320
      $region40: #{bidaf_forward.32} parent=35 // pred_fallthru
        _
      // Predicated region
      $region41: #{bidaf_forward.32} parent=35 // pred_check
        %p322 = pneg %p65
      $region42: #{bidaf_forward.32} parent=35 // pred_check_branch
        %324 = sbr.rel (%p322) target = $region44
      $region43: #{bidaf_forward.32} parent=35 // pred_region
        %p325 = scmp.lt.s32.totalorder %s19, 1
        %s326 = scalar_select %p325, %s19, 1
        %s327 = smul.addr %s326, 8
        %s328 = scalar_lea.vmem %s1, %s327
      $region44: #{bidaf_forward.32} parent=35 // pred_fallthru
        _
      // Predicated region
      $region45: #{bidaf_forward.32} parent=35 // pred_check
        %p329 = pneg %p91
      $region46: #{bidaf_forward.32} parent=35 // pred_check_branch
        %331 = sbr.rel (%p329) target = $region48
      $region47: #{bidaf_forward.32} parent=35 // pred_region
        %p332 = scmp.lt.s32.totalorder %s19, 1
        %s333 = scalar_select %p332, %s19, 1
        %s334 = smul.addr %s333, 2
        %s335 = smul.addr %s334, 8
        %s336 = scalar_lea.vmem %s2, %s335
      $region48: #{bidaf_forward.32} parent=35 // pred_fallthru
        _
      // Predicated region
      $region49: #{bidaf_forward.32} parent=35 // pred_check
        %p337 = pneg %p117
      $region50: #{bidaf_forward.32} parent=35 // pred_check_branch
        %339 = sbr.rel (%p337) target = $region52
      $region51: #{bidaf_forward.32} parent=35 // pred_region
        %p340 = scmp.lt.s32.totalorder %s19, 1
        %s341 = scalar_select %p340, %s19, 1
        %s342 = scalar_lea.vmem %s3, %s341
      $region52: #{bidaf_forward.32} parent=35 // pred_fallthru
        _
    $region36: #{bidaf_forward.32} parent=5 // pred_fallthru
      _
    %p343 = scmp.le.s32.totalorder 1, %s19
    %p344 = scmp.lt.s32.totalorder %s19, 3
    %p345 = pnand %p343, %p344
    %p346 = pneg %p345
    // Predicated region
    $region53: #{bidaf_forward.32} parent=5 // pred_check
      _
    $region54: #{bidaf_forward.32} parent=5 // pred_check_branch
      %348 = sbr.rel (%p345) target = $region56
    $region55: #{bidaf_forward.32} parent=5 // pred_region
      %s349 = ssub.s32 %s19, 1
      %p350 = scmp.lt.s32.totalorder %s24, 1
      %s351 = scalar_select %p350, %s24, 1
      %s352 = smul.addr %s351, 2
      %s353 = smul.addr %s352, 8
      %s354 = scalar_lea.vmem %s0, %s353
      %p355 = pneg %p45
      %p356 = pneg %p42
      %p357 = scmp.lt.s32.totalorder %s24, 1
      %s358 = scalar_select %p357, %s24, 1
      %s359 = smul.addr %s358, 8
      %s360 = scalar_lea.vmem %s1, %s359
      %p361 = pneg %p71
      %p362 = pneg %p68
      %p363 = scmp.lt.s32.totalorder %s24, 1
      %s364 = scalar_select %p363, %s24, 1
      %s365 = smul.addr %s364, 2
      %s366 = smul.addr %s365, 8
      %s367 = scalar_lea.vmem %s2, %s366
      %p368 = pneg %p97
      %p369 = pneg %p94
      %p370 = scmp.lt.s32.totalorder %s24, 1
      %s371 = scalar_select %p370, %s24, 1
      %s372 = scalar_lea.vmem %s3, %s371
      %p373 = pneg %p123
      %p374 = pneg %p120
      %p375 = pneg %p144
      %p376 = pneg %p141
      %p377 = pneg %p165
      %p378 = pneg %p162
      %p379 = pneg %p186
      %p380 = pneg %p183
      %p381 = pneg %p207
      %p382 = pneg %p204
      %p383 = pneg %p228
      %p384 = pneg %p225
      %p385 = pneg %p254
      %p386 = pneg %p251
      %p387 = scmp.lt.s32.totalorder %s24, 1
      %s388 = scalar_select %p387, %s24, 1
      %s389 = smul.addr %s388, 4
      %s390 = smul.addr %s389, 8
      %s391 = scalar_lea.vmem %s9, %s390
      %p392 = pneg %p280
      %p393 = pneg %p277
      %p394 = scmp.lt.s32.totalorder %s24, 1
      %s395 = scalar_select %p394, %s24, 1
      %s396 = smul.addr %s395, 2
      %s397 = scalar_lea.vmem %s10, %s396
      %p398 = scmp.lt.s32.totalorder %s24, 1
      %s399 = scalar_select %p398, %s24, 1
      %s400 = smul.addr %s399, 2
      %s401 = smul.addr %s400, 8
      %s402 = scalar_lea.vmem %s0, %s401
      %p403 = scmp.lt.s32.totalorder %s24, 1
      %s404 = scalar_select %p403, %s24, 1
      %s405 = smul.addr %s404, 8
      %s406 = scalar_lea.vmem %s1, %s405
      %p407 = scmp.lt.s32.totalorder %s24, 1
      %s408 = scalar_select %p407, %s24, 1
      %s409 = smul.addr %s408, 2
      %s410 = smul.addr %s409, 8
      %s411 = scalar_lea.vmem %s2, %s410
      %p412 = scmp.lt.s32.totalorder %s24, 1
      %s413 = scalar_select %p412, %s24, 1
      %s414 = scalar_lea.vmem %s3, %s413
      %p415 = scmp.lt.s32.totalorder %s24, 1
      %s416 = scalar_select %p415, %s24, 1
      %s417 = smul.addr %s416, 4
      %s418 = smul.addr %s417, 8
      %s419 = scalar_lea.vmem %s9, %s418
      %p420 = scmp.lt.s32.totalorder %s24, 1
      %s421 = scalar_select %p420, %s24, 1
      %s422 = smul.addr %s421, 2
      %s423 = scalar_lea.vmem %s10, %s422
      %v425 = vld [vmem:[%s402] sm:$0xff]
      %v426 = vld [vmem:[%s402 + $0x8] sm:$0xff]
      %v427 = vld [vmem:[%s406] sm:$0xff]
      %v428 = vpack.c.bf16 %v426, %v425
      %v429 = vpack.c.bf16 %v427, %v427
      %v430 = vld [vmem:[%s4] sm:$0x1]
      %v432 = vlaneseq
      %v433 = vshrl.u32 %v432, 7
      %v434 = vsub.s32 0, %v433
      %v435 = vrot.slane %v430, %v434
      %v437 = vmul.f32 %v425, %v435
      %v438 = vmul.f32 %v426, %v435
      %vm439 = vcmask 523264
      %v440 = vsel %vm439, %v437, 0.0
      %441 = vadd.xlane.f32.xlu0 %v440
      %v442 = vpop.xlane.xlu0 %441
      %v443 = vsel %vm439, %v438, 0.0
      %444 = vadd.xlane.f32.xlu0 %v443
      %v445 = vpop.xlane.xlu0 %444
      %v446 = vld [vmem:[%s5] sm:$0x1]
      %v447 = vpack.c.bf16 %v446, %v446
      %v449 = vsel %vm439, %v447, 0
      %v452 = vsel %vm439, %v429, 0
      %454 = vmatprep.subr.bf16.mxu0 0
      %455 = vmatpush1.bf16.xpose.msra.mxu0 0
      %456 = vmatprep.subr.bf16.mxu0 0
      %457 = vmatpush1.bf16.xpose.msra.mxu0 0
      %458 = vmatprep.subr.bf16.mxu0 0
      %459 = vmatpush1.bf16.xpose.msra.mxu0 0
      %460 = vmatprep.subr.bf16.mxu0 0
      %461 = vmatpush1.bf16.xpose.msra.mxu0 0
      %462 = vmatprep.subr.bf16.mxu0 0
      %463 = vmatpush1.bf16.xpose.msra.mxu0 0
      %464 = vmatprep.subr.bf16.mxu0 0
      %465 = vmatpush1.bf16.xpose.msra.mxu0 0
      %466 = vmatprep.subr.bf16.mxu0 0
      %467 = vmatpush1.bf16.xpose.msra.mxu0 0
      %468 = vmatprep.subr.bf16.mxu0 0
      %469 = vmatpush1.bf16.xpose.msra.mxu0 %v452
      %470 = vmatprep.subr.bf16.mxu0 0
      %471 = vmatpush2.bf16.xpose.msra.mxu0 0
      %472 = vmatprep.subr.bf16.mxu0 0
      %473 = vmatpush2.bf16.xpose.msra.mxu0 0
      %474 = vmatprep.subr.bf16.mxu0 0
      %475 = vmatpush2.bf16.xpose.msra.mxu0 0
      %476 = vmatprep.subr.bf16.mxu0 0
      %477 = vmatpush2.bf16.xpose.msra.mxu0 0
      %478 = vmatprep.subr.bf16.mxu0 0
      %479 = vmatpush2.bf16.xpose.msra.mxu0 0
      %480 = vmatprep.subr.bf16.mxu0 0
      %481 = vmatpush2.bf16.xpose.msra.mxu0 0
      %482 = vmatprep.subr.bf16.mxu0 0
      %483 = vmatpush2.bf16.xpose.msra.mxu0 0
      %484 = vmatprep.subr.bf16.mxu0 0
      %485 = vmatpush2.bf16.xpose.msra.mxu0 0
      %486 = vmatprep.mubr.bf16.mxu0 0
      %487 = vmatmul.mubr.bf16.gmra.mxu0 %v449
      %v488 = vpop.f32.mrf.mxu0
      %v489 = vadd.f32 0.0, %v488
      %v490 = vpop.f32.mrf.mxu0
      %v491 = vpop.f32.mrf.mxu0
      %v492 = vpop.f32.mrf.mxu0
      %493 = vdwg.mxu0
      %v494 = vld [vmem:[%s6] sm:$0x1]
      %v496 = vlaneseq
      %v497 = vshrl.u32 %v496, 7
      %v498 = vsub.s32 0, %v497
      %v499 = vrot.slane %v494, %v498
      %v501 = vmul.f32 %v425, %v499
      %v502 = vmul.f32 %v426, %v499
      %v503 = vpack.c.bf16 %v502, %v501
      %v505 = vsel %vm439, %v503, 0
      %507 = vmatprep.subr.bf16.mxu0 0
      %508 = vmatpush1.bf16.xpose.msra.mxu0 0
      %509 = vmatprep.subr.bf16.mxu0 0
      %510 = vmatpush1.bf16.xpose.msra.mxu0 0
      %511 = vmatprep.subr.bf16.mxu0 0
      %512 = vmatpush1.bf16.xpose.msra.mxu0 0
      %513 = vmatprep.subr.bf16.mxu0 0
      %514 = vmatpush1.bf16.xpose.msra.mxu0 0
      %515 = vmatprep.subr.bf16.mxu0 0
      %516 = vmatpush1.bf16.xpose.msra.mxu0 0
      %517 = vmatprep.subr.bf16.mxu0 0
      %518 = vmatpush1.bf16.xpose.msra.mxu0 0
      %519 = vmatprep.subr.bf16.mxu0 0
      %520 = vmatpush1.bf16.xpose.msra.mxu0 0
      %521 = vmatprep.subr.bf16.mxu0 0
      %522 = vmatpush1.bf16.xpose.msra.mxu0 %v452
      %523 = vmatprep.subr.bf16.mxu0 0
      %524 = vmatpush2.bf16.xpose.msra.mxu0 0
      %525 = vmatprep.subr.bf16.mxu0 0
      %526 = vmatpush2.bf16.xpose.msra.mxu0 0
      %527 = vmatprep.subr.bf16.mxu0 0
      %528 = vmatpush2.bf16.xpose.msra.mxu0 0
      %529 = vmatprep.subr.bf16.mxu0 0
      %530 = vmatpush2.bf16.xpose.msra.mxu0 0
      %531 = vmatprep.subr.bf16.mxu0 0
      %532 = vmatpush2.bf16.xpose.msra.mxu0 0
      %533 = vmatprep.subr.bf16.mxu0 0
      %534 = vmatpush2.bf16.xpose.msra.mxu0 0
      %535 = vmatprep.subr.bf16.mxu0 0
      %536 = vmatpush2.bf16.xpose.msra.mxu0 0
      %537 = vmatprep.subr.bf16.mxu0 0
      %538 = vmatpush2.bf16.xpose.msra.mxu0 0
      %539 = vmatprep.mubr.bf16.mxu0 0
      %540 = vmatmul.mubr.bf16.gmra.mxu0 %v505
      %v541 = vpop.f32.mrf.mxu0
      %v542 = vadd.f32 %v442, %v541
      %v543 = vpop.f32.mrf.mxu0
      %v544 = vpop.f32.mrf.mxu0
      %v545 = vadd.f32 %v445, %v544
      %v546 = vpop.f32.mrf.mxu0
      %547 = vdwg.mxu0
      %v548 = vlaneseq
      %v549 = vshrl.u32 %v548, 7
      %v550 = vsub.s32 0, %v549
      %v551 = vrot.slane %v489, %v550
      %v552 = vadd.f32 %v542, %v551
      %v553 = vadd.f32 %v545, %v551
      %v554 = vld [vmem:[#allocation2] sm:$0x1]
      %v556 = vlaneseq
      %v557 = vshrl.u32 %v556, 7
      %v558 = vsub.s32 0, %v557
      %v559 = vrot.slane %v554, %v558
      %560 = vset.pattern.permute.xlu0 0
      %561 = vperm.xlu0 %560, %v559
      %v562 = vpop.permute.xlu0 %561
      %v564 = vadd.f32 %v552, %v562
      %v565 = vadd.f32 %v553, %v562
      %v566 = vld [vmem:[%s414] sm:$0x1]
      %v568 = vlaneseq
      %v569 = vshrl.u32 %v568, 7
      %v570 = vsub.s32 0, %v569
      %v571 = vrot.slane %v566, %v570
      %v573 = vadd.f32 %v564, %v571
      %v574 = vadd.f32 %v565, %v571
      %vm575 = vcmask 64512
      %v576 = vsel %vm575, %v573, -inf
      %577 = vmax.xlane.f32.xlu0 %v576
      %v578 = vpop.xlane.xlu0 %577
      %v579 = vsel %vm575, %v574, -inf
      %580 = vmax.xlane.f32.xlu0 %v579
      %v581 = vpop.xlane.xlu0 %580
      %v582 = vsub.f32 %v573, %v578
      %v583 = vsub.f32 %v574, %v581
      %v584 = vmul.f32 %v582, 1.442695
      %v585 = vpow.pop %v584
      %v586 = vmul.f32 %v583, 1.442695
      %v587 = vpow.pop %v586
      %v588 = vsel %vm575, %v585, 0.0
      %589 = vadd.xlane.f32.xlu0 %v588
      %v590 = vpop.xlane.xlu0 %589
      %v591 = vsel %vm575, %v587, 0.0
      %592 = vadd.xlane.f32.xlu0 %v591
      %v593 = vpop.xlane.xlu0 %592
      %v594 = vrcp.pop %v590
      %v595 = vrcp.pop %v593
      %v596 = vmul.f32 %v585, %v594
      %v597 = vmul.f32 %v587, %v595
      %v598 = vld [vmem:[%s411] sm:$0xff]
      %v599 = vld [vmem:[%s411 + $0x8] sm:$0xff]
      %601 = vset.pattern.permute.xlu0 0
      %602 = vperm.xlu0 %601, %v598
      %v603 = vpop.permute.xlu0 %602
      %606 = vset.pattern.permute.xlu0 0
      %607 = vperm.xlu0 %606, %v599
      %v608 = vpop.permute.xlu0 %607
      %v610 = vadd.f32 %v564, %v603
      %v611 = vadd.f32 %v565, %v608
      %v612 = vsel %vm575, %v610, -inf
      %v613 = vsel %vm575, %v611, -inf
      %v614 = vmax.f32 %v612, %v613
      %v615 = vrot.slane %v614, 4
      %v616 = vmax.f32 %v614, %v615
      %v617 = vrot.slane %v616, 2
      %v618 = vmax.f32 %v616, %v617
      %v619 = vrot.slane %v618, 1
      %v620 = vmax.f32 %v618, %v619
      %v621 = vsub.f32 %v610, %v620
      %v622 = vsub.f32 %v611, %v620
      %v623 = vmul.f32 %v621, 1.442695
      %v624 = vpow.pop %v623
      %v625 = vmul.f32 %v622, 1.442695
      %v626 = vpow.pop %v625
      %v627 = vsel %vm575, %v624, 0.0
      %v628 = vsel %vm575, %v626, 0.0
      %v629 = vadd.f32 %v627, %v628
      %v630 = vrot.slane %v629, 4
      %v631 = vadd.f32 %v629, %v630
      %v632 = vrot.slane %v631, 2
      %v633 = vadd.f32 %v631, %v632
      %v634 = vrot.slane %v633, 1
      %v635 = vadd.f32 %v633, %v634
      %v636 = vrcp.pop %v635
      %v637 = vmul.f32 %v624, %v636
      %v638 = vmul.f32 %v626, %v636
      %v639 = vpack.c.bf16 %v597, %v596
      %v641 = vsel %vm575, %v639, 0
      %vm643 = vcmask 1043456
      %v644 = vsel %vm643, %v429, 0
      %646 = vmatprep.subr.bf16.mxu0 0
      %647 = vmatpush1.bf16.msra.mxu0 0
      %648 = vmatprep.subr.bf16.mxu0 0
      %649 = vmatpush1.bf16.msra.mxu0 0
      %650 = vmatprep.subr.bf16.mxu0 0
      %651 = vmatpush1.bf16.msra.mxu0 0
      %652 = vmatprep.subr.bf16.mxu0 0
      %653 = vmatpush1.bf16.msra.mxu0 0
      %654 = vmatprep.subr.bf16.mxu0 0
      %655 = vmatpush1.bf16.msra.mxu0 0
      %656 = vmatprep.subr.bf16.mxu0 0
      %657 = vmatpush1.bf16.msra.mxu0 0
      %658 = vmatprep.subr.bf16.mxu0 0
      %659 = vmatpush1.bf16.msra.mxu0 0
      %660 = vmatprep.subr.bf16.mxu0 0
      %661 = vmatpush1.bf16.msra.mxu0 %v644
      %662 = vmatprep.subr.bf16.mxu0 0
      %663 = vmatpush2.bf16.msra.mxu0 0
      %664 = vmatprep.subr.bf16.mxu0 0
      %665 = vmatpush2.bf16.msra.mxu0 0
      %666 = vmatprep.subr.bf16.mxu0 0
      %667 = vmatpush2.bf16.msra.mxu0 0
      %668 = vmatprep.subr.bf16.mxu0 0
      %669 = vmatpush2.bf16.msra.mxu0 0
      %670 = vmatprep.subr.bf16.mxu0 0
      %671 = vmatpush2.bf16.msra.mxu0 0
      %672 = vmatprep.subr.bf16.mxu0 0
      %673 = vmatpush2.bf16.msra.mxu0 0
      %674 = vmatprep.subr.bf16.mxu0 0
      %675 = vmatpush2.bf16.msra.mxu0 0
      %676 = vmatprep.subr.bf16.mxu0 0
      %677 = vmatpush2.bf16.msra.mxu0 0
      %678 = vmatprep.mubr.bf16.mxu0 0
      %679 = vmatmul.mubr.bf16.gmra.mxu0 %v641
      %v680 = vpop.f32.mrf.mxu0
      %v681 = vadd.f32 0.0, %v680
      %v682 = vpop.f32.mrf.mxu0
      %v683 = vpop.f32.mrf.mxu0
      %v684 = vadd.f32 0.0, %v683
      %v685 = vpop.f32.mrf.mxu0
      %686 = vdwg.mxu0
      %v687 = vpack.c.bf16 %v638, %v637
      %688 = vxpose.xlu0.c.b16.start [1/8] %v687, 128
      %689 = vxpose.xlu0.c.b16.cont [2/8] 0, 128
      %690 = vxpose.xlu0.c.b16.cont [3/8] 0, 128
      %691 = vxpose.xlu0.c.b16.cont [4/8] 0, 128
      %692 = vxpose.xlu0.c.b16.cont [5/8] 0, 128
      %693 = vxpose.xlu0.c.b16.cont [6/8] 0, 128
      %694 = vxpose.xlu0.c.b16.cont [7/8] 0, 128
      %695 = vxpose.xlu0.c.b16.end [8/8] 0, 128
      %v696 = vpop.trf.xlu0
      %v697 = vpop.trf.xlu0
      %v698 = vpop.trf.xlu0
      %v699 = vpop.trf.xlu0
      %v700 = vpop.trf.xlu0
      %v701 = vpop.trf.xlu0
      %v702 = vpop.trf.xlu0
      %v703 = vpop.trf.xlu0
      %vm704 = vcmask 130048
      %v706 = vsel %vm704, %v696, 0
      %708 = vmatprep.subr.bf16.mxu0 0
      %709 = vmatpush1.bf16.msra.mxu0 0
      %710 = vmatprep.subr.bf16.mxu0 0
      %711 = vmatpush1.bf16.msra.mxu0 0
      %712 = vmatprep.subr.bf16.mxu0 0
      %713 = vmatpush1.bf16.msra.mxu0 0
      %714 = vmatprep.subr.bf16.mxu0 0
      %715 = vmatpush1.bf16.msra.mxu0 0
      %716 = vmatprep.subr.bf16.mxu0 0
      %717 = vmatpush1.bf16.msra.mxu0 0
      %718 = vmatprep.subr.bf16.mxu0 0
      %719 = vmatpush1.bf16.msra.mxu0 0
      %720 = vmatprep.subr.bf16.mxu0 0
      %721 = vmatpush1.bf16.msra.mxu0 0
      %722 = vmatprep.subr.bf16.mxu0 0
      %723 = vmatpush1.bf16.msra.mxu0 %v428
      %724 = vmatprep.subr.bf16.mxu0 0
      %725 = vmatpush2.bf16.msra.mxu0 0
      %726 = vmatprep.subr.bf16.mxu0 0
      %727 = vmatpush2.bf16.msra.mxu0 0
      %728 = vmatprep.subr.bf16.mxu0 0
      %729 = vmatpush2.bf16.msra.mxu0 0
      %730 = vmatprep.subr.bf16.mxu0 0
      %731 = vmatpush2.bf16.msra.mxu0 0
      %732 = vmatprep.subr.bf16.mxu0 0
      %733 = vmatpush2.bf16.msra.mxu0 0
      %734 = vmatprep.subr.bf16.mxu0 0
      %735 = vmatpush2.bf16.msra.mxu0 0
      %736 = vmatprep.subr.bf16.mxu0 0
      %737 = vmatpush2.bf16.msra.mxu0 0
      %738 = vmatprep.subr.bf16.mxu0 0
      %739 = vmatpush2.bf16.msra.mxu0 0
      %740 = vmatprep.mubr.bf16.mxu0 0
      %741 = vmatmul.mubr.bf16.gmra.mxu0 %v706
      %v742 = vpop.f32.mrf.mxu0
      %v743 = vadd.f32 0.0, %v742
      %v744 = vpop.f32.mrf.mxu0
      %v745 = vpop.f32.mrf.mxu0
      %v746 = vpop.f32.mrf.mxu0
      %747 = vdwg.mxu0
      %v748 = vpack.c.bf16 %v743, %v743
      %v750 = vsel %vm643, %v748, 0
      %752 = vmatprep.subr.bf16.mxu0 0
      %753 = vmatpush1.bf16.msra.mxu0 0
      %754 = vmatprep.subr.bf16.mxu0 0
      %755 = vmatpush1.bf16.msra.mxu0 0
      %756 = vmatprep.subr.bf16.mxu0 0
      %757 = vmatpush1.bf16.msra.mxu0 0
      %758 = vmatprep.subr.bf16.mxu0 0
      %759 = vmatpush1.bf16.msra.mxu0 0
      %760 = vmatprep.subr.bf16.mxu0 0
      %761 = vmatpush1.bf16.msra.mxu0 0
      %762 = vmatprep.subr.bf16.mxu0 0
      %763 = vmatpush1.bf16.msra.mxu0 0
      %764 = vmatprep.subr.bf16.mxu0 0
      %765 = vmatpush1.bf16.msra.mxu0 0
      %766 = vmatprep.subr.bf16.mxu0 0
      %767 = vmatpush1.bf16.msra.mxu0 %v750
      %768 = vmatprep.subr.bf16.mxu0 0
      %769 = vmatpush2.bf16.msra.mxu0 0
      %770 = vmatprep.subr.bf16.mxu0 0
      %771 = vmatpush2.bf16.msra.mxu0 0
      %772 = vmatprep.subr.bf16.mxu0 0
      %773 = vmatpush2.bf16.msra.mxu0 0
      %774 = vmatprep.subr.bf16.mxu0 0
      %775 = vmatpush2.bf16.msra.mxu0 0
      %776 = vmatprep.subr.bf16.mxu0 0
      %777 = vmatpush2.bf16.msra.mxu0 0
      %778 = vmatprep.subr.bf16.mxu0 0
      %779 = vmatpush2.bf16.msra.mxu0 0
      %780 = vmatprep.subr.bf16.mxu0 0
      %781 = vmatpush2.bf16.msra.mxu0 0
      %782 = vmatprep.subr.bf16.mxu0 0
      %783 = vmatpush2.bf16.msra.mxu0 0
      %784 = vmatprep.mubr.bf16.mxu0 0
      %785 = vmatmul.mubr.bf16.gmra.mxu0 %v641
      %v786 = vpop.f32.mrf.mxu0
      %v787 = vadd.f32 0.0, %v786
      %v788 = vpop.f32.mrf.mxu0
      %v789 = vpop.f32.mrf.mxu0
      %v790 = vadd.f32 0.0, %v789
      %v791 = vpop.f32.mrf.mxu0
      %792 = vdwg.mxu0
      %v793 = vmul.f32 %v425, %v681
      %v794 = vmul.f32 %v426, %v684
      %v795 = vmul.f32 %v425, %v787
      %v796 = vmul.f32 %v426, %v790
      %799 = vrot.lane.b32.xlu0 %v681, 64
      %v800 = vpop.permute.xlu0 %799
      %801 = vrot.lane.b32.xlu0 %v684, 64
      %v802 = vpop.permute.xlu0 %801
      %807 = vrot.lane.b32.xlu0 %v795, 64
      %v808 = vpop.permute.xlu0 %807
      %809 = vrot.lane.b32.xlu0 %v796, 64
      %v810 = vpop.permute.xlu0 %809
      %v813 = vsel %vm439, %v425, %v800
      %v814 = vsel %vm439, %v426, %v802
      %v815 = vsel %vm439, %v793, %v808
      %v816 = vsel %vm439, %v794, %v810
      %817 = vst [vmem:[%s419] sm:$0xff] %v813
      %818 = vst [vmem:[%s419 + $0x8] sm:$0xff] %v815
      %819 = vst [vmem:[%s419 + $0x10] sm:$0xff] %v814
      %820 = vst [vmem:[%s419 + $0x18] sm:$0xff] %v816
      %v821 = vld [vmem:[%s8] sm:$0x3]
      %v822 = vpack.c.bf16 %v814, %v813
      %v823 = vpack.c.bf16 %v816, %v815
      %v826 = vunpack.c.l.s4 1966171168
      %v827 = vunpack.c.0.s8 %v826
      %v828 = vlaneseq
      %v829 = vshrl.u32 %v828, 7
      %v830 = vsub.s32 %v827, %v829
      %v831 = vrot.slane %v821, %v830
      %v832 = vcombine.high %v831, %v831
      %v834 = vunpack.c.l.s4 1966171168
      %v835 = vunpack.c.0.s8 %v834
      %v836 = vlaneseq
      %v837 = vshrl.u32 %v836, 7
      %v838 = vsub.s32 %v835, %v837
      %v839 = vrot.slane %v831, %v838
      %v841 = vunpack.c.l.s4 1966171168
      %v842 = vunpack.c.0.s8 %v841
      %v843 = vlaneseq
      %v844 = vshrl.u32 %v843, 7
      %v845 = vsub.s32 %v842, %v844
      %v846 = vrot.slane %v832, %v845
      %849 = vmatprep.subr.bf16.mxu0 0
      %850 = vmatpush1.bf16.xpose.msra.mxu0 0
      %851 = vmatprep.subr.bf16.mxu0 0
      %852 = vmatpush1.bf16.xpose.msra.mxu0 0
      %853 = vmatprep.subr.bf16.mxu0 0
      %854 = vmatpush1.bf16.xpose.msra.mxu0 0
      %855 = vmatprep.subr.bf16.mxu0 0
      %856 = vmatpush1.bf16.xpose.msra.mxu0 0
      %857 = vmatprep.subr.bf16.mxu0 0
      %858 = vmatpush1.bf16.xpose.msra.mxu0 0
      %859 = vmatprep.subr.bf16.mxu0 0
      %860 = vmatpush1.bf16.xpose.msra.mxu0 0
      %861 = vmatprep.subr.bf16.mxu0 0
      %862 = vmatpush1.bf16.xpose.msra.mxu0 0
      %863 = vmatprep.subr.bf16.mxu0 %v823
      %864 = vmatpush1.bf16.xpose.msra.mxu0 %v822
      %865 = vmatprep.subr.bf16.mxu0 0
      %866 = vmatpush2.bf16.xpose.msra.mxu0 0
      %867 = vmatprep.subr.bf16.mxu0 0
      %868 = vmatpush2.bf16.xpose.msra.mxu0 0
      %869 = vmatprep.subr.bf16.mxu0 0
      %870 = vmatpush2.bf16.xpose.msra.mxu0 0
      %871 = vmatprep.subr.bf16.mxu0 0
      %872 = vmatpush2.bf16.xpose.msra.mxu0 0
      %873 = vmatprep.subr.bf16.mxu0 0
      %874 = vmatpush2.bf16.xpose.msra.mxu0 0
      %875 = vmatprep.subr.bf16.mxu0 0
      %876 = vmatpush2.bf16.xpose.msra.mxu0 0
      %877 = vmatprep.subr.bf16.mxu0 0
      %878 = vmatpush2.bf16.xpose.msra.mxu0 0
      %879 = vmatprep.subr.bf16.mxu0 0
      %880 = vmatpush2.bf16.xpose.msra.mxu0 0
      %881 = vmatprep.mubr.bf16.mxu0 %v846
      %882 = vmatmul.mubr.bf16.gmra.mxu0 %v839
      %v883 = vpop.f32.mrf.mxu0
      %v884 = vadd.f32 0.0, %v883
      %v885 = vpop.f32.mrf.mxu0
      %v886 = vpop.f32.mrf.mxu0
      %v887 = vpop.f32.mrf.mxu0
      %888 = vdwg.mxu0
      %vm889 = vcmask 123904
      %890 = vst.msk [vmem:[%s423] sm:$0x3] %vm889, %v884
      %p891 = scmp.lt.s32.totalorder %s24, 1
      %s892 = scalar_select %p891, %s24, 1
      %s893 = smul.addr %s892, 4
      %s894 = smul.addr %s893, 8
      %s895 = scalar_lea.vmem %s9, %s894
      %p896 = scmp.lt.s32.totalorder %s24, 1
      %s897 = scalar_select %p896, %s24, 1
      %s898 = smul.addr %s897, 2
      %s899 = scalar_lea.vmem %s10, %s898
      // Predicated region
      $region57: #{bidaf_forward.32} parent=55 // pred_check
        %p900 = pneg %p251
      $region58: #{bidaf_forward.32} parent=55 // pred_check_branch
        %902 = sbr.rel (%p900) target = $region60
      $region59: #{bidaf_forward.32} parent=55 // pred_region
        _
      $region60: #{bidaf_forward.32} parent=55 // pred_fallthru
        _
      // Predicated region
      $region61: #{bidaf_forward.32} parent=55 // pred_check
        %p903 = pneg %p277
      $region62: #{bidaf_forward.32} parent=55 // pred_check_branch
        %905 = sbr.rel (%p903) target = $region64
      $region63: #{bidaf_forward.32} parent=55 // pred_region
        _
      $region64: #{bidaf_forward.32} parent=55 // pred_fallthru
        _
    $region56: #{bidaf_forward.32} parent=5 // pred_fallthru
      _
    %p906 = scmp.le.s32.totalorder 2, %s19
    // Predicated region
    $region65: #{bidaf_forward.32} parent=5 // pred_check
      %p907 = pneg %p906
    $region66: #{bidaf_forward.32} parent=5 // pred_check_branch
      %909 = sbr.rel (%p907) target = $region68
    $region67: #{bidaf_forward.32} parent=5 // pred_region
      %s910 = ssub.s32 %s19, 2
      // Predicated region
      $region69: #{bidaf_forward.32} parent=67 // pred_check
        %p911 = pneg %p257
      $region70: #{bidaf_forward.32} parent=67 // pred_check_branch
        %913 = sbr.rel (%p911) target = $region72
      $region71: #{bidaf_forward.32} parent=67 // pred_region
        %p914 = scmp.lt.s32.totalorder %s25, 1
        %s915 = scalar_select %p914, %s25, 1
        %s916 = smul.addr %s915, 4
        %s917 = smul.addr %s916, 8
        %s918 = scalar_lea.vmem %s9, %s917
      $region72: #{bidaf_forward.32} parent=67 // pred_fallthru
        _
      // Predicated region
      $region73: #{bidaf_forward.32} parent=67 // pred_check
        %p919 = pneg %p283
      $region74: #{bidaf_forward.32} parent=67 // pred_check_branch
        %921 = sbr.rel (%p919) target = $region76
      $region75: #{bidaf_forward.32} parent=67 // pred_region
        %p922 = scmp.lt.s32.totalorder %s25, 1
        %s923 = scalar_select %p922, %s25, 1
        %s924 = smul.addr %s923, 2
        %s925 = scalar_lea.vmem %s10, %s924
      $region76: #{bidaf_forward.32} parent=67 // pred_fallthru
        _
    $region68: #{bidaf_forward.32} parent=5 // pred_fallthru
      _
  $region6: #{bidaf_forward.32} parent=0 // loop_footer
    %s23 = sadd.s32 1, %s19
  $region7: #{bidaf_forward.32} parent=0 // loop_footer_branch
    %18 = sbr.rel target = $region3
  $region8: #{bidaf_forward.32} parent=0 // loop_exit
    _

// kernel: bidaf_forward.35
$region0: #{bidaf_forward.35}
  #allocation0 [shape = 'u32[]', space=smem, size = 0x4, offset = 0x4, fixed_abs, tag = 'smem constant byte address 0x4 - core index']
  #allocation1 [shape = 'u32[144,128]{1,0:T(1,128)}', space=vmem, size = 0x12000, scoped, tag = 'internal scratch']
  %s0 = inlined_call_operand.vmem [shape: f32[32,64], index: 0, kind: input, shape index: {}]
  %s1 = inlined_call_operand.vmem [shape: bf16[64,256], index: 1, kind: input, shape index: {}]
  %s2 = inlined_call_operand.vmem [shape: f32[1,256], index: 2, kind: input, shape index: {}]
  %s3 = inlined_call_operand.vmem [shape: f32[32,256], index: 3, kind: output, shape index: {}]
  %s4 = sld [smem:[#allocation0]]
  $region22: #{bidaf_forward.35} parent=0
    _
  %s6 = ssub.s32 1, %s4
  %s7 = scalar_select 0, %s6, %s4
  // Predicated region
  $region2: #{bidaf_forward.35} parent=0 // pred_check
    _
  $region3: #{bidaf_forward.35} parent=0 // pred_check_branch
    %9 = sbr.rel (0) target = $region5
  $region4: #{bidaf_forward.35} parent=0 // pred_region
    _
  $region5: #{bidaf_forward.35} parent=0 // pred_fallthru
    _
  // Predicated region
  $region6: #{bidaf_forward.35} parent=0 // pred_check
    _
  $region7: #{bidaf_forward.35} parent=0 // pred_check_branch
    %11 = sbr.rel (0) target = $region9
  $region8: #{bidaf_forward.35} parent=0 // pred_region
    _
  $region9: #{bidaf_forward.35} parent=0 // pred_fallthru
    _
  // Predicated region
  $region10: #{bidaf_forward.35} parent=0 // pred_check
    _
  $region11: #{bidaf_forward.35} parent=0 // pred_check_branch
    %13 = sbr.rel (0) target = $region13
  $region12: #{bidaf_forward.35} parent=0 // pred_region
    _
  $region13: #{bidaf_forward.35} parent=0 // pred_fallthru
    _
  %v15 = vld [vmem:[%s0] sm:$0xff]
  %v16 = vld [vmem:[%s0 + $0x8] sm:$0xff]
  %v17 = vld [vmem:[%s0 + $0x10] sm:$0xff]
  %v18 = vld [vmem:[%s0 + $0x18] sm:$0xff]
  %v19 = vpack.c.bf16 %v16, %v15
  %v20 = vpack.c.bf16 %v18, %v17
  %v21 = vld [vmem:[%s1] sm:$0xff]
  %v22 = vld [vmem:[%s1 + $0x8] sm:$0xff]
  %v23 = vld [vmem:[%s1 + $0x10] sm:$0xff]
  %v24 = vld [vmem:[%s1 + $0x18] sm:$0xff]
  %v25 = vld [vmem:[%s1 + $0x20] sm:$0xff]
  %v26 = vld [vmem:[%s1 + $0x28] sm:$0xff]
  %v27 = vld [vmem:[%s1 + $0x30] sm:$0xff]
  %v28 = vld [vmem:[%s1 + $0x38] sm:$0xff]
  %v29 = vld [vmem:[%s2] sm:$0x3]
  %v31 = vlaneseq
  %v32 = vshrl.u32 %v31, 7
  %v33 = vsub.s32 0, %v32
  %v34 = vrot.slane %v29, %v33
  %v35 = vlaneseq
  %v36 = vshrl.u32 %v35, 7
  %v37 = vsub.s32 1, %v36
  %v38 = vrot.slane %v29, %v37
  %v49 = vunpack.c.l.b16 %v21
  %v50 = vunpack.c.h.b16 %v21
  %v51 = vunpack.c.l.b16 %v22
  %v52 = vunpack.c.h.b16 %v22
  %v53 = vunpack.c.l.b16 %v23
  %v54 = vunpack.c.h.b16 %v23
  %v55 = vunpack.c.l.b16 %v24
  %v56 = vunpack.c.h.b16 %v24
  %v57 = vunpack.c.l.b16 %v25
  %v58 = vunpack.c.h.b16 %v25
  %v59 = vunpack.c.l.b16 %v26
  %v60 = vunpack.c.h.b16 %v26
  %v61 = vunpack.c.l.b16 %v27
  %v62 = vunpack.c.h.b16 %v27
  %v63 = vunpack.c.l.b16 %v28
  %v64 = vunpack.c.h.b16 %v28
  %v65 = vpack.c.b16 %v51, %v49
  %v66 = vpack.c.b16 %v52, %v50
  %v67 = vpack.c.b16 %v55, %v53
  %v68 = vpack.c.b16 %v56, %v54
  %v69 = vpack.c.b16 %v59, %v57
  %v70 = vpack.c.b16 %v60, %v58
  %v71 = vpack.c.b16 %v63, %v61
  %v72 = vpack.c.b16 %v64, %v62
  %vm81 = vcmask 523264
  %v83 = vsel %vm81, %v19, 0
  %v86 = vsel %vm81, %v20, 0
  %88 = vmatprep.subr.bf16.mxu0 0
  %89 = vmatpush1.bf16.msra.mxu0 0
  %90 = vmatprep.subr.bf16.mxu0 0
  %91 = vmatpush1.bf16.msra.mxu0 0
  %92 = vmatprep.subr.bf16.mxu0 0
  %93 = vmatpush1.bf16.msra.mxu0 0
  %94 = vmatprep.subr.bf16.mxu0 0
  %95 = vmatpush1.bf16.msra.mxu0 0
  %96 = vmatprep.subr.bf16.mxu0 %v72
  %97 = vmatpush1.bf16.msra.mxu0 %v71
  %98 = vmatprep.subr.bf16.mxu0 %v70
  %99 = vmatpush1.bf16.msra.mxu0 %v69
  %100 = vmatprep.subr.bf16.mxu0 %v68
  %101 = vmatpush1.bf16.msra.mxu0 %v67
  %102 = vmatprep.subr.bf16.mxu0 %v66
  %103 = vmatpush1.bf16.msra.mxu0 %v65
  %104 = vmatprep.subr.bf16.mxu0 0
  %105 = vmatpush2.bf16.msra.mxu0 0
  %106 = vmatprep.subr.bf16.mxu0 0
  %107 = vmatpush2.bf16.msra.mxu0 0
  %108 = vmatprep.subr.bf16.mxu0 0
  %109 = vmatpush2.bf16.msra.mxu0 0
  %110 = vmatprep.subr.bf16.mxu0 0
  %111 = vmatpush2.bf16.msra.mxu0 0
  %112 = vmatprep.subr.bf16.mxu0 0
  %113 = vmatpush2.bf16.msra.mxu0 0
  %114 = vmatprep.subr.bf16.mxu0 0
  %115 = vmatpush2.bf16.msra.mxu0 0
  %116 = vmatprep.subr.bf16.mxu0 0
  %117 = vmatpush2.bf16.msra.mxu0 0
  %118 = vmatprep.subr.bf16.mxu0 0
  %119 = vmatpush2.bf16.msra.mxu0 0
  %120 = vmatprep.mubr.bf16.mxu0 0
  %121 = vmatmul.mubr.bf16.gmra.mxu0 %v83
  %v122 = vpop.f32.mrf.mxu0
  %v123 = vadd.f32 %v34, %v122
  %v124 = vpop.f32.mrf.mxu0
  %v125 = vadd.f32 %v38, %v124
  %v126 = vpop.f32.mrf.mxu0
  %v127 = vadd.f32 %v34, %v126
  %v128 = vpop.f32.mrf.mxu0
  %v129 = vadd.f32 %v38, %v128
  %130 = vmatprep.mubr.bf16.mxu0 0
  %131 = vmatmul.mubr.bf16.gmra.mxu0 %v86
  %v132 = vpop.f32.mrf.mxu0
  %v133 = vadd.f32 %v34, %v132
  %v134 = vpop.f32.mrf.mxu0
  %v135 = vadd.f32 %v38, %v134
  %v136 = vpop.f32.mrf.mxu0
  %v137 = vadd.f32 %v34, %v136
  %v138 = vpop.f32.mrf.mxu0
  %v139 = vadd.f32 %v38, %v138
  %140 = vdwg.mxu0
  %141 = vst [vmem:[%s3] sm:$0xff] %v123
  %142 = vst [vmem:[%s3 + $0x8] sm:$0xff] %v125
  %143 = vst [vmem:[%s3 + $0x10] sm:$0xff] %v127
  %144 = vst [vmem:[%s3 + $0x18] sm:$0xff] %v129
  %145 = vst [vmem:[%s3 + $0x20] sm:$0xff] %v133
  %146 = vst [vmem:[%s3 + $0x28] sm:$0xff] %v135
  %147 = vst [vmem:[%s3 + $0x30] sm:$0xff] %v137
  %148 = vst [vmem:[%s3 + $0x38] sm:$0xff] %v139
  // Predicated region
  $region14: #{bidaf_forward.35} parent=0 // pred_check
    _
  $region15: #{bidaf_forward.35} parent=0 // pred_check_branch
    %150 = sbr.rel (0) target = $region17
  $region16: #{bidaf_forward.35} parent=0 // pred_region
    _
  $region17: #{bidaf_forward.35} parent=0 // pred_fallthru
    _
  // Predicated region
  $region18: #{bidaf_forward.35} parent=0 // pred_check
    _
  $region19: #{bidaf_forward.35} parent=0 // pred_check_branch
    %152 = sbr.rel (0) target = $region21
  $region20: #{bidaf_forward.35} parent=0 // pred_region
    _
  $region21: #{bidaf_forward.35} parent=0 // pred_fallthru
    _

// kernel: bidaf_forward.33
$region0: #{bidaf_forward.33}
  #allocation0 [shape = 'u32[]', space=smem, size = 0x4, offset = 0x4, fixed_abs, tag = 'smem constant byte address 0x4 - core index']
  #allocation1 [shape = 'u32[144,128]{1,0:T(1,128)}', space=vmem, size = 0x12000, scoped, tag = 'internal scratch']
  %s0 = inlined_call_operand.vmem [shape: f32[32,256], index: 0, kind: input, shape index: {}]
  %s1 = inlined_call_operand.vmem [shape: bf16[256,256], index: 1, kind: input, shape index: {}]
  %s2 = inlined_call_operand.vmem [shape: f32[1,256], index: 2, kind: input, shape index: {}]
  %s3 = inlined_call_operand.vmem [shape: f32[32,256], index: 3, kind: output, shape index: {}]
  %s4 = sld [smem:[#allocation0]]
  $region22: #{bidaf_forward.33} parent=0
    _
  %s6 = ssub.s32 1, %s4
  %s7 = scalar_select 0, %s6, %s4
  // Predicated region
  $region2: #{bidaf_forward.33} parent=0 // pred_check
    _
  $region3: #{bidaf_forward.33} parent=0 // pred_check_branch
    %9 = sbr.rel (0) target = $region5
  $region4: #{bidaf_forward.33} parent=0 // pred_region
    _
  $region5: #{bidaf_forward.33} parent=0 // pred_fallthru
    _
  // Predicated region
  $region6: #{bidaf_forward.33} parent=0 // pred_check
    _
  $region7: #{bidaf_forward.33} parent=0 // pred_check_branch
    %11 = sbr.rel (0) target = $region9
  $region8: #{bidaf_forward.33} parent=0 // pred_region
    _
  $region9: #{bidaf_forward.33} parent=0 // pred_fallthru
    _
  // Predicated region
  $region10: #{bidaf_forward.33} parent=0 // pred_check
    _
  $region11: #{bidaf_forward.33} parent=0 // pred_check_branch
    %13 = sbr.rel (0) target = $region13
  $region12: #{bidaf_forward.33} parent=0 // pred_region
    _
  $region13: #{bidaf_forward.33} parent=0 // pred_fallthru
    _
  %v14 = vld [vmem:[%s0] sm:$0xff]
  %v15 = vld [vmem:[%s0 + $0x8] sm:$0xff]
  %v16 = vld [vmem:[%s0 + $0x10] sm:$0xff]
  %v17 = vld [vmem:[%s0 + $0x18] sm:$0xff]
  %v18 = vld [vmem:[%s0 + $0x20] sm:$0xff]
  %v19 = vld [vmem:[%s0 + $0x28] sm:$0xff]
  %v20 = vld [vmem:[%s0 + $0x30] sm:$0xff]
  %v21 = vld [vmem:[%s0 + $0x38] sm:$0xff]
  %v22 = vpack.c.bf16 %v16, %v14
  %v23 = vpack.c.bf16 %v17, %v15
  %v24 = vpack.c.bf16 %v20, %v18
  %v25 = vpack.c.bf16 %v21, %v19
  %v26 = vld [vmem:[%s1] sm:$0xff]
  %v27 = vld [vmem:[%s1 + $0x8] sm:$0xff]
  %v28 = vld [vmem:[%s1 + $0x10] sm:$0xff]
  %v29 = vld [vmem:[%s1 + $0x18] sm:$0xff]
  %v30 = vld [vmem:[%s1 + $0x20] sm:$0xff]
  %v31 = vld [vmem:[%s1 + $0x28] sm:$0xff]
  %v32 = vld [vmem:[%s1 + $0x30] sm:$0xff]
  %v33 = vld [vmem:[%s1 + $0x38] sm:$0xff]
  %v34 = vld [vmem:[%s1 + $0x40] sm:$0xff]
  %v35 = vld [vmem:[%s1 + $0x48] sm:$0xff]
  %v36 = vld [vmem:[%s1 + $0x50] sm:$0xff]
  %v37 = vld [vmem:[%s1 + $0x58] sm:$0xff]
  %v38 = vld [vmem:[%s1 + $0x60] sm:$0xff]
  %v39 = vld [vmem:[%s1 + $0x68] sm:$0xff]
  %v40 = vld [vmem:[%s1 + $0x70] sm:$0xff]
  %v41 = vld [vmem:[%s1 + $0x78] sm:$0xff]
  %v42 = vld [vmem:[%s1 + $0x80] sm:$0xff]
  %v43 = vld [vmem:[%s1 + $0x88] sm:$0xff]
  %v44 = vld [vmem:[%s1 + $0x90] sm:$0xff]
  %v45 = vld [vmem:[%s1 + $0x98] sm:$0xff]
  %v46 = vld [vmem:[%s1 + $0xa0] sm:$0xff]
  %v47 = vld [vmem:[%s1 + $0xa8] sm:$0xff]
  %v48 = vld [vmem:[%s1 + $0xb0] sm:$0xff]
  %v49 = vld [vmem:[%s1 + $0xb8] sm:$0xff]
  %v50 = vld [vmem:[%s1 + $0xc0] sm:$0xff]
  %v51 = vld [vmem:[%s1 + $0xc8] sm:$0xff]
  %v52 = vld [vmem:[%s1 + $0xd0] sm:$0xff]
  %v53 = vld [vmem:[%s1 + $0xd8] sm:$0xff]
  %v54 = vld [vmem:[%s1 + $0xe0] sm:$0xff]
  %v55 = vld [vmem:[%s1 + $0xe8] sm:$0xff]
  %v56 = vld [vmem:[%s1 + $0xf0] sm:$0xff]
  %v57 = vld [vmem:[%s1 + $0xf8] sm:$0xff]
  %v58 = vld [vmem:[%s2] sm:$0x3]
  %v60 = vlaneseq
  %v61 = vshrl.u32 %v60, 7
  %v62 = vsub.s32 0, %v61
  %v63 = vrot.slane %v58, %v62
  %v64 = vlaneseq
  %v65 = vshrl.u32 %v64, 7
  %v66 = vsub.s32 1, %v65
  %v67 = vrot.slane %v58, %v66
  %v102 = vunpack.c.l.b16 %v26
  %v103 = vunpack.c.h.b16 %v26
  %v104 = vunpack.c.l.b16 %v27
  %v105 = vunpack.c.h.b16 %v27
  %v106 = vunpack.c.l.b16 %v28
  %v107 = vunpack.c.h.b16 %v28
  %v108 = vunpack.c.l.b16 %v29
  %v109 = vunpack.c.h.b16 %v29
  %v110 = vunpack.c.l.b16 %v30
  %v111 = vunpack.c.h.b16 %v30
  %v112 = vunpack.c.l.b16 %v31
  %v113 = vunpack.c.h.b16 %v31
  %v114 = vunpack.c.l.b16 %v32
  %v115 = vunpack.c.h.b16 %v32
  %v116 = vunpack.c.l.b16 %v33
  %v117 = vunpack.c.h.b16 %v33
  %v118 = vunpack.c.l.b16 %v34
  %v119 = vunpack.c.h.b16 %v34
  %v120 = vunpack.c.l.b16 %v35
  %v121 = vunpack.c.h.b16 %v35
  %v122 = vunpack.c.l.b16 %v36
  %v123 = vunpack.c.h.b16 %v36
  %v124 = vunpack.c.l.b16 %v37
  %v125 = vunpack.c.h.b16 %v37
  %v126 = vunpack.c.l.b16 %v38
  %v127 = vunpack.c.h.b16 %v38
  %v128 = vunpack.c.l.b16 %v39
  %v129 = vunpack.c.h.b16 %v39
  %v130 = vunpack.c.l.b16 %v40
  %v131 = vunpack.c.h.b16 %v40
  %v132 = vunpack.c.l.b16 %v41
  %v133 = vunpack.c.h.b16 %v41
  %v134 = vunpack.c.l.b16 %v42
  %v135 = vunpack.c.h.b16 %v42
  %v136 = vunpack.c.l.b16 %v43
  %v137 = vunpack.c.h.b16 %v43
  %v138 = vunpack.c.l.b16 %v44
  %v139 = vunpack.c.h.b16 %v44
  %v140 = vunpack.c.l.b16 %v45
  %v141 = vunpack.c.h.b16 %v45
  %v142 = vunpack.c.l.b16 %v46
  %v143 = vunpack.c.h.b16 %v46
  %v144 = vunpack.c.l.b16 %v47
  %v145 = vunpack.c.h.b16 %v47
  %v146 = vunpack.c.l.b16 %v48
  %v147 = vunpack.c.h.b16 %v48
  %v148 = vunpack.c.l.b16 %v49
  %v149 = vunpack.c.h.b16 %v49
  %v150 = vunpack.c.l.b16 %v50
  %v151 = vunpack.c.h.b16 %v50
  %v152 = vunpack.c.l.b16 %v51
  %v153 = vunpack.c.h.b16 %v51
  %v154 = vunpack.c.l.b16 %v52
  %v155 = vunpack.c.h.b16 %v52
  %v156 = vunpack.c.l.b16 %v53
  %v157 = vunpack.c.h.b16 %v53
  %v158 = vunpack.c.l.b16 %v54
  %v159 = vunpack.c.h.b16 %v54
  %v160 = vunpack.c.l.b16 %v55
  %v161 = vunpack.c.h.b16 %v55
  %v162 = vunpack.c.l.b16 %v56
  %v163 = vunpack.c.h.b16 %v56
  %v164 = vunpack.c.l.b16 %v57
  %v165 = vunpack.c.h.b16 %v57
  %v166 = vpack.c.b16 %v104, %v102
  %v167 = vpack.c.b16 %v105, %v103
  %v168 = vpack.c.b16 %v108, %v106
  %v169 = vpack.c.b16 %v109, %v107
  %v170 = vpack.c.b16 %v112, %v110
  %v171 = vpack.c.b16 %v113, %v111
  %v172 = vpack.c.b16 %v116, %v114
  %v173 = vpack.c.b16 %v117, %v115
  %v174 = vpack.c.b16 %v120, %v118
  %v175 = vpack.c.b16 %v121, %v119
  %v176 = vpack.c.b16 %v124, %v122
  %v177 = vpack.c.b16 %v125, %v123
  %v178 = vpack.c.b16 %v128, %v126
  %v179 = vpack.c.b16 %v129, %v127
  %v180 = vpack.c.b16 %v132, %v130
  %v181 = vpack.c.b16 %v133, %v131
  %v182 = vpack.c.b16 %v136, %v134
  %v183 = vpack.c.b16 %v137, %v135
  %v184 = vpack.c.b16 %v140, %v138
  %v185 = vpack.c.b16 %v141, %v139
  %v186 = vpack.c.b16 %v144, %v142
  %v187 = vpack.c.b16 %v145, %v143
  %v188 = vpack.c.b16 %v148, %v146
  %v189 = vpack.c.b16 %v149, %v147
  %v190 = vpack.c.b16 %v152, %v150
  %v191 = vpack.c.b16 %v153, %v151
  %v192 = vpack.c.b16 %v156, %v154
  %v193 = vpack.c.b16 %v157, %v155
  %v194 = vpack.c.b16 %v160, %v158
  %v195 = vpack.c.b16 %v161, %v159
  %v196 = vpack.c.b16 %v164, %v162
  %v197 = vpack.c.b16 %v165, %v163
  %230 = vmatprep.subr.bf16.mxu0 %v181
  %231 = vmatpush1.bf16.msra.mxu0 %v180
  %232 = vmatprep.subr.bf16.mxu0 %v179
  %233 = vmatpush1.bf16.msra.mxu0 %v178
  %234 = vmatprep.subr.bf16.mxu0 %v177
  %235 = vmatpush1.bf16.msra.mxu0 %v176
  %236 = vmatprep.subr.bf16.mxu0 %v175
  %237 = vmatpush1.bf16.msra.mxu0 %v174
  %238 = vmatprep.subr.bf16.mxu0 %v173
  %239 = vmatpush1.bf16.msra.mxu0 %v172
  %240 = vmatprep.subr.bf16.mxu0 %v171
  %241 = vmatpush1.bf16.msra.mxu0 %v170
  %242 = vmatprep.subr.bf16.mxu0 %v169
  %243 = vmatpush1.bf16.msra.mxu0 %v168
  %244 = vmatprep.subr.bf16.mxu0 %v167
  %245 = vmatpush1.bf16.msra.mxu0 %v166
  %246 = vmatprep.subr.bf16.mxu0 %v197
  %247 = vmatpush2.bf16.msra.mxu0 %v196
  %248 = vmatprep.subr.bf16.mxu0 %v195
  %249 = vmatpush2.bf16.msra.mxu0 %v194
  %250 = vmatprep.subr.bf16.mxu0 %v193
  %251 = vmatpush2.bf16.msra.mxu0 %v192
  %252 = vmatprep.subr.bf16.mxu0 %v191
  %253 = vmatpush2.bf16.msra.mxu0 %v190
  %254 = vmatprep.subr.bf16.mxu0 %v189
  %255 = vmatpush2.bf16.msra.mxu0 %v188
  %256 = vmatprep.subr.bf16.mxu0 %v187
  %257 = vmatpush2.bf16.msra.mxu0 %v186
  %258 = vmatprep.subr.bf16.mxu0 %v185
  %259 = vmatpush2.bf16.msra.mxu0 %v184
  %260 = vmatprep.subr.bf16.mxu0 %v183
  %261 = vmatpush2.bf16.msra.mxu0 %v182
  %262 = vmatprep.mubr.bf16.mxu0 %v23
  %263 = vmatmul.mubr.bf16.gmra.mxu0 %v22
  %v264 = vpop.f32.mrf.mxu0
  %v265 = vadd.f32 %v63, %v264
  %v266 = vpop.f32.mrf.mxu0
  %v267 = vadd.f32 %v67, %v266
  %v268 = vpop.f32.mrf.mxu0
  %v269 = vadd.f32 %v63, %v268
  %v270 = vpop.f32.mrf.mxu0
  %v271 = vadd.f32 %v67, %v270
  %272 = vmatprep.mubr.bf16.mxu0 %v25
  %273 = vmatmul.mubr.bf16.gmra.mxu0 %v24
  %v274 = vpop.f32.mrf.mxu0
  %v275 = vadd.f32 %v63, %v274
  %v276 = vpop.f32.mrf.mxu0
  %v277 = vadd.f32 %v67, %v276
  %v278 = vpop.f32.mrf.mxu0
  %v279 = vadd.f32 %v63, %v278
  %v280 = vpop.f32.mrf.mxu0
  %v281 = vadd.f32 %v67, %v280
  %282 = vdwg.mxu0
  %283 = vst [vmem:[%s3] sm:$0xff] %v265
  %284 = vst [vmem:[%s3 + $0x8] sm:$0xff] %v267
  %285 = vst [vmem:[%s3 + $0x10] sm:$0xff] %v269
  %286 = vst [vmem:[%s3 + $0x18] sm:$0xff] %v271
  %287 = vst [vmem:[%s3 + $0x20] sm:$0xff] %v275
  %288 = vst [vmem:[%s3 + $0x28] sm:$0xff] %v277
  %289 = vst [vmem:[%s3 + $0x30] sm:$0xff] %v279
  %290 = vst [vmem:[%s3 + $0x38] sm:$0xff] %v281
  // Predicated region
  $region14: #{bidaf_forward.33} parent=0 // pred_check
    _
  $region15: #{bidaf_forward.33} parent=0 // pred_check_branch
    %292 = sbr.rel (0) target = $region17
  $region16: #{bidaf_forward.33} parent=0 // pred_region
    _
  $region17: #{bidaf_forward.33} parent=0 // pred_fallthru
    _
  // Predicated region
  $region18: #{bidaf_forward.33} parent=0 // pred_check
    _
  $region19: #{bidaf_forward.33} parent=0 // pred_check_branch
    %294 = sbr.rel (0) target = $region21
  $region20: #{bidaf_forward.33} parent=0 // pred_region
    _
  $region21: #{bidaf_forward.33} parent=0 // pred_fallthru
    _

// kernel: bidaf_forward.39
$region0: #{bidaf_forward.39}
  #allocation0 [shape = 'u32[]', space=smem, size = 0x4, offset = 0x4, fixed_abs, tag = 'smem constant byte address 0x4 - core index']
  #allocation1 [shape = 'u32[144,128]{1,0:T(1,128)}', space=vmem, size = 0x12000, scoped, tag = 'internal scratch']
  %s0 = inlined_call_operand.vmem [shape: f32[2,2,16], index: 0, kind: input, shape index: {}]
  %s1 = inlined_call_operand.vmem [shape: f32[2,16,64], index: 1, kind: input, shape index: {}]
  %s2 = inlined_call_operand.vmem [shape: f32[2,16,64], index: 2, kind: input, shape index: {}]
  %s3 = inlined_call_operand.vmem [shape: f32[2,1,16], index: 3, kind: input, shape index: {}]
  %s4 = inlined_call_operand.vmem [shape: bf16[1,64], index: 4, kind: input, shape index: {}]
  %s5 = inlined_call_operand.vmem [shape: bf16[1,64], index: 5, kind: input, shape index: {}]
  %s6 = inlined_call_operand.vmem [shape: f32[2,1], index: 6, kind: input, shape index: {}]
  %s7 = inlined_call_operand.vmem [shape: f32[2,2,16], index: 7, kind: output, shape index: {}]
  %s8 = sld [smem:[#allocation0]]
  $region61: #{bidaf_forward.39} parent=0
    _
  %s10 = ssub.s32 1, %s8
  %s11 = scalar_select 0, %s10, %s8
  loop: start=0, step=1, limit=4
  $region2: #{bidaf_forward.39} parent=0 // loop_pre_header
    _
  $region3: #{bidaf_forward.39} parent=0 // loop_header
    %s13 = sphi 0, %s17
    %p14 = scmp.ge.s32.totalorder %s13, 4
    %s23 = sphi 0, %s25
    %s26 = sphi 0, %s23
    %s27 = sphi 0, %s26
    %s43 = sphi 0, %s27
    %s49 = sphi 0, %s51
    %s52 = sphi 0, %s49
    %s53 = sphi 0, %s52
    %s69 = sphi 0, %s53
    %s75 = sphi 0, %s77
    %s78 = sphi 0, %s75
    %s79 = sphi 0, %s78
    %s95 = sphi 0, %s79
    %s101 = sphi 0, %s103
    %s104 = sphi 0, %s101
    %s105 = sphi 0, %s104
    %s121 = sphi 0, %s105
    %s125 = sphi 0, %s125
    %s127 = sphi 0, %s125
    %s128 = sphi 0, %s127
    %s142 = sphi 0, %s128
    %s146 = sphi 0, %s146
    %s148 = sphi 0, %s146
    %s149 = sphi 0, %s148
    %s163 = sphi 0, %s149
    %s167 = sphi 0, %s167
    %s169 = sphi 0, %s167
    %s170 = sphi 0, %s169
    %s184 = sphi 0, %s170
    %s190 = sphi 0, %s192
    %s193 = sphi 0, %s190
    %s194 = sphi 0, %s193
    %s210 = sphi 0, %s194
  $region4: #{bidaf_forward.39} parent=0 // loop_header_branch
    %16 = sbr.rel (%p14) target = $region8
  $region5: #{bidaf_forward.39} parent=0 // loop_body
    %s18 = ssub.s32 %s13, 1
    %s19 = ssub.s32 %s13, 2
    %s20 = sadd.s32 %s13, 1
    %s21 = ssub.s32 %s13, %s20
    %p22 = scmp.eq.s32.totalorder %s21, 0
    %s24 = sadd.s32 %s23, 1
    %s25 = scalar_select %p22, %s23, %s24
    %p28 = pneg %p22
    %p29 = scmp.eq.s32.totalorder %s13, 1
    %p30 = por %p28, %p29
    %p31 = scmp.ne.s32.totalorder %s23, %s26
    %p32 = scmp.eq.s32.totalorder %s13, 0
    %p33 = por %p31, %p32
    %p34 = scmp.ne.s32.totalorder %s23, %s26
    %p35 = scmp.eq.s32.totalorder %s18, 1
    %p36 = por %p34, %p35
    %p37 = scmp.ne.s32.totalorder %s26, %s27
    %p38 = scmp.eq.s32.totalorder %s18, 0
    %p39 = por %p37, %p38
    %p40 = scmp.ne.s32.totalorder %s26, %s27
    %p41 = scmp.eq.s32.totalorder %s19, 1
    %p42 = por %p40, %p41
    %p44 = scmp.ne.s32.totalorder %s27, %s43
    %p45 = scmp.eq.s32.totalorder %s19, 0
    %p46 = por %p44, %p45
    %s47 = ssub.s32 %s13, %s20
    %p48 = scmp.eq.s32.totalorder %s47, 0
    %s50 = sadd.s32 %s49, 1
    %s51 = scalar_select %p48, %s49, %s50
    %p54 = pneg %p48
    %p55 = scmp.eq.s32.totalorder %s13, 1
    %p56 = por %p54, %p55
    %p57 = scmp.ne.s32.totalorder %s49, %s52
    %p58 = scmp.eq.s32.totalorder %s13, 0
    %p59 = por %p57, %p58
    %p60 = scmp.ne.s32.totalorder %s49, %s52
    %p61 = scmp.eq.s32.totalorder %s18, 1
    %p62 = por %p60, %p61
    %p63 = scmp.ne.s32.totalorder %s52, %s53
    %p64 = scmp.eq.s32.totalorder %s18, 0
    %p65 = por %p63, %p64
    %p66 = scmp.ne.s32.totalorder %s52, %s53
    %p67 = scmp.eq.s32.totalorder %s19, 1
    %p68 = por %p66, %p67
    %p70 = scmp.ne.s32.totalorder %s53, %s69
    %p71 = scmp.eq.s32.totalorder %s19, 0
    %p72 = por %p70, %p71
    %s73 = ssub.s32 %s13, %s20
    %p74 = scmp.eq.s32.totalorder %s73, 0
    %s76 = sadd.s32 %s75, 1
    %s77 = scalar_select %p74, %s75, %s76
    %p80 = pneg %p74
    %p81 = scmp.eq.s32.totalorder %s13, 1
    %p82 = por %p80, %p81
    %p83 = scmp.ne.s32.totalorder %s75, %s78
    %p84 = scmp.eq.s32.totalorder %s13, 0
    %p85 = por %p83, %p84
    %p86 = scmp.ne.s32.totalorder %s75, %s78
    %p87 = scmp.eq.s32.totalorder %s18, 1
    %p88 = por %p86, %p87
    %p89 = scmp.ne.s32.totalorder %s78, %s79
    %p90 = scmp.eq.s32.totalorder %s18, 0
    %p91 = por %p89, %p90
    %p92 = scmp.ne.s32.totalorder %s78, %s79
    %p93 = scmp.eq.s32.totalorder %s19, 1
    %p94 = por %p92, %p93
    %p96 = scmp.ne.s32.totalorder %s79, %s95
    %p97 = scmp.eq.s32.totalorder %s19, 0
    %p98 = por %p96, %p97
    %s99 = ssub.s32 %s13, %s20
    %p100 = scmp.eq.s32.totalorder %s99, 0
    %s102 = sadd.s32 %s101, 1
    %s103 = scalar_select %p100, %s101, %s102
    %p106 = pneg %p100
    %p107 = scmp.eq.s32.totalorder %s13, 1
    %p108 = por %p106, %p107
    %p109 = scmp.ne.s32.totalorder %s101, %s104
    %p110 = scmp.eq.s32.totalorder %s13, 0
    %p111 = por %p109, %p110
    %p112 = scmp.ne.s32.totalorder %s101, %s104
    %p113 = scmp.eq.s32.totalorder %s18, 1
    %p114 = por %p112, %p113
    %p115 = scmp.ne.s32.totalorder %s104, %s105
    %p116 = scmp.eq.s32.totalorder %s18, 0
    %p117 = por %p115, %p116
    %p118 = scmp.ne.s32.totalorder %s104, %s105
    %p119 = scmp.eq.s32.totalorder %s19, 1
    %p120 = por %p118, %p119
    %p122 = scmp.ne.s32.totalorder %s105, %s121
    %p123 = scmp.eq.s32.totalorder %s19, 0
    %p124 = por %p122, %p123
    %s126 = sadd.s32 %s125, 1
    %p129 = scmp.eq.s32.totalorder %s13, 1
    %p130 = scmp.ne.s32.totalorder %s125, %s127
    %p131 = scmp.eq.s32.totalorder %s13, 0
    %p132 = por %p130, %p131
    %p133 = scmp.ne.s32.totalorder %s125, %s127
    %p134 = scmp.eq.s32.totalorder %s18, 1
    %p135 = por %p133, %p134
    %p136 = scmp.ne.s32.totalorder %s127, %s128
    %p137 = scmp.eq.s32.totalorder %s18, 0
    %p138 = por %p136, %p137
    %p139 = scmp.ne.s32.totalorder %s127, %s128
    %p140 = scmp.eq.s32.totalorder %s19, 1
    %p141 = por %p139, %p140
    %p143 = scmp.ne.s32.totalorder %s128, %s142
    %p144 = scmp.eq.s32.totalorder %s19, 0
    %p145 = por %p143, %p144
    %s147 = sadd.s32 %s146, 1
    %p150 = scmp.eq.s32.totalorder %s13, 1
    %p151 = scmp.ne.s32.totalorder %s146, %s148
    %p152 = scmp.eq.s32.totalorder %s13, 0
    %p153 = por %p151, %p152
    %p154 = scmp.ne.s32.totalorder %s146, %s148
    %p155 = scmp.eq.s32.totalorder %s18, 1
    %p156 = por %p154, %p155
    %p157 = scmp.ne.s32.totalorder %s148, %s149
    %p158 = scmp.eq.s32.totalorder %s18, 0
    %p159 = por %p157, %p158
    %p160 = scmp.ne.s32.totalorder %s148, %s149
    %p161 = scmp.eq.s32.totalorder %s19, 1
    %p162 = por %p160, %p161
    %p164 = scmp.ne.s32.totalorder %s149, %s163
    %p165 = scmp.eq.s32.totalorder %s19, 0
    %p166 = por %p164, %p165
    %s168 = sadd.s32 %s167, 1
    %p171 = scmp.eq.s32.totalorder %s13, 1
    %p172 = scmp.ne.s32.totalorder %s167, %s169
    %p173 = scmp.eq.s32.totalorder %s13, 0
    %p174 = por %p172, %p173
    %p175 = scmp.ne.s32.totalorder %s167, %s169
    %p176 = scmp.eq.s32.totalorder %s18, 1
    %p177 = por %p175, %p176
    %p178 = scmp.ne.s32.totalorder %s169, %s170
    %p179 = scmp.eq.s32.totalorder %s18, 0
    %p180 = por %p178, %p179
    %p181 = scmp.ne.s32.totalorder %s169, %s170
    %p182 = scmp.eq.s32.totalorder %s19, 1
    %p183 = por %p181, %p182
    %p185 = scmp.ne.s32.totalorder %s170, %s184
    %p186 = scmp.eq.s32.totalorder %s19, 0
    %p187 = por %p185, %p186
    %s188 = ssub.s32 %s13, %s20
    %p189 = scmp.eq.s32.totalorder %s188, 0
    %s191 = sadd.s32 %s190, 1
    %s192 = scalar_select %p189, %s190, %s191
    %p195 = pneg %p189
    %p196 = scmp.eq.s32.totalorder %s13, 1
    %p197 = por %p195, %p196
    %p198 = scmp.ne.s32.totalorder %s190, %s193
    %p199 = scmp.eq.s32.totalorder %s13, 0
    %p200 = por %p198, %p199
    %p201 = scmp.ne.s32.totalorder %s190, %s193
    %p202 = scmp.eq.s32.totalorder %s18, 1
    %p203 = por %p201, %p202
    %p204 = scmp.ne.s32.totalorder %s193, %s194
    %p205 = scmp.eq.s32.totalorder %s18, 0
    %p206 = por %p204, %p205
    %p207 = scmp.ne.s32.totalorder %s193, %s194
    %p208 = scmp.eq.s32.totalorder %s19, 1
    %p209 = por %p207, %p208
    %p211 = scmp.ne.s32.totalorder %s194, %s210
    %p212 = scmp.eq.s32.totalorder %s19, 0
    %p213 = por %p211, %p212
    %p214 = scmp.le.s32.totalorder 1, %s13
    %p215 = scmp.lt.s32.totalorder %s13, 3
    %p216 = pnand %p214, %p215
    %p217 = pneg %p216
    // Predicated region
    $region9: #{bidaf_forward.39} parent=5 // pred_check
      _
    $region10: #{bidaf_forward.39} parent=5 // pred_check_branch
      %219 = sbr.rel (%p216) target = $region12
    $region11: #{bidaf_forward.39} parent=5 // pred_region
      %s220 = ssub.s32 %s13, 1
      // Predicated region
      $region13: #{bidaf_forward.39} parent=11 // pred_check
        %p221 = pneg %p138
      $region14: #{bidaf_forward.39} parent=11 // pred_check_branch
        %223 = sbr.rel (%p221) target = $region16
      $region15: #{bidaf_forward.39} parent=11 // pred_region
        _
      $region16: #{bidaf_forward.39} parent=11 // pred_fallthru
        _
      // Predicated region
      $region17: #{bidaf_forward.39} parent=11 // pred_check
        %p224 = pneg %p159
      $region18: #{bidaf_forward.39} parent=11 // pred_check_branch
        %226 = sbr.rel (%p224) target = $region20
      $region19: #{bidaf_forward.39} parent=11 // pred_region
        _
      $region20: #{bidaf_forward.39} parent=11 // pred_fallthru
        _
      // Predicated region
      $region21: #{bidaf_forward.39} parent=11 // pred_check
        %p227 = pneg %p180
      $region22: #{bidaf_forward.39} parent=11 // pred_check_branch
        %229 = sbr.rel (%p227) target = $region24
      $region23: #{bidaf_forward.39} parent=11 // pred_region
        _
      $region24: #{bidaf_forward.39} parent=11 // pred_fallthru
        _
    $region12: #{bidaf_forward.39} parent=5 // pred_fallthru
      _
    %p230 = scmp.lt.s32.totalorder %s13, 2
    // Predicated region
    $region25: #{bidaf_forward.39} parent=5 // pred_check
      %p231 = pneg %p230
    $region26: #{bidaf_forward.39} parent=5 // pred_check_branch
      %233 = sbr.rel (%p231) target = $region28
    $region27: #{bidaf_forward.39} parent=5 // pred_region
      // Predicated region
      $region29: #{bidaf_forward.39} parent=27 // pred_check
        %p234 = pneg %p33
      $region30: #{bidaf_forward.39} parent=27 // pred_check_branch
        %236 = sbr.rel (%p234) target = $region32
      $region31: #{bidaf_forward.39} parent=27 // pred_region
        %p237 = scmp.lt.s32.totalorder %s13, 1
        %s238 = scalar_select %p237, %s13, 1
        %s239 = smul.addr %s238, 2
        %s240 = scalar_lea.vmem %s0, %s239
      $region32: #{bidaf_forward.39} parent=27 // pred_fallthru
        _
      // Predicated region
      $region33: #{bidaf_forward.39} parent=27 // pred_check
        %p241 = pneg %p59
      $region34: #{bidaf_forward.39} parent=27 // pred_check_branch
        %243 = sbr.rel (%p241) target = $region36
      $region35: #{bidaf_forward.39} parent=27 // pred_region
        %p244 = scmp.lt.s32.totalorder %s13, 1
        %s245 = scalar_select %p244, %s13, 1
        %s246 = smul.addr %s245, 2
        %s247 = smul.addr %s246, 8
        %s248 = scalar_lea.vmem %s1, %s247
      $region36: #{bidaf_forward.39} parent=27 // pred_fallthru
        _
      // Predicated region
      $region37: #{bidaf_forward.39} parent=27 // pred_check
        %p249 = pneg %p85
      $region38: #{bidaf_forward.39} parent=27 // pred_check_branch
        %251 = sbr.rel (%p249) target = $region40
      $region39: #{bidaf_forward.39} parent=27 // pred_region
        %p252 = scmp.lt.s32.totalorder %s13, 1
        %s253 = scalar_select %p252, %s13, 1
        %s254 = smul.addr %s253, 2
        %s255 = smul.addr %s254, 8
        %s256 = scalar_lea.vmem %s2, %s255
      $region40: #{bidaf_forward.39} parent=27 // pred_fallthru
        _
      // Predicated region
      $region41: #{bidaf_forward.39} parent=27 // pred_check
        %p257 = pneg %p111
      $region42: #{bidaf_forward.39} parent=27 // pred_check_branch
        %259 = sbr.rel (%p257) target = $region44
      $region43: #{bidaf_forward.39} parent=27 // pred_region
        %p260 = scmp.lt.s32.totalorder %s13, 1
        %s261 = scalar_select %p260, %s13, 1
        %s262 = scalar_lea.vmem %s3, %s261
      $region44: #{bidaf_forward.39} parent=27 // pred_fallthru
        _
    $region28: #{bidaf_forward.39} parent=5 // pred_fallthru
      _
    %p263 = scmp.le.s32.totalorder 1, %s13
    %p264 = scmp.lt.s32.totalorder %s13, 3
    %p265 = pnand %p263, %p264
    %p266 = pneg %p265
    // Predicated region
    $region45: #{bidaf_forward.39} parent=5 // pred_check
      _
    $region46: #{bidaf_forward.39} parent=5 // pred_check_branch
      %268 = sbr.rel (%p265) target = $region48
    $region47: #{bidaf_forward.39} parent=5 // pred_region
      %s269 = ssub.s32 %s13, 1
      %p270 = scmp.lt.s32.totalorder %s18, 1
      %s271 = scalar_select %p270, %s18, 1
      %s272 = smul.addr %s271, 2
      %s273 = scalar_lea.vmem %s0, %s272
      %p274 = pneg %p39
      %p275 = pneg %p36
      %p276 = scmp.lt.s32.totalorder %s18, 1
      %s277 = scalar_select %p276, %s18, 1
      %s278 = smul.addr %s277, 2
      %s279 = smul.addr %s278, 8
      %s280 = scalar_lea.vmem %s1, %s279
      %p281 = pneg %p65
      %p282 = pneg %p62
      %p283 = scmp.lt.s32.totalorder %s18, 1
      %s284 = scalar_select %p283, %s18, 1
      %s285 = smul.addr %s284, 2
      %s286 = smul.addr %s285, 8
      %s287 = scalar_lea.vmem %s2, %s286
      %p288 = pneg %p91
      %p289 = pneg %p88
      %p290 = scmp.lt.s32.totalorder %s18, 1
      %s291 = scalar_select %p290, %s18, 1
      %s292 = scalar_lea.vmem %s3, %s291
      %p293 = pneg %p117
      %p294 = pneg %p114
      %p295 = pneg %p138
      %p296 = pneg %p135
      %p297 = pneg %p159
      %p298 = pneg %p156
      %p299 = pneg %p180
      %p300 = pneg %p177
      %p301 = pneg %p206
      %p302 = pneg %p203
      %p303 = scmp.lt.s32.totalorder %s18, 1
      %s304 = scalar_select %p303, %s18, 1
      %s305 = smul.addr %s304, 2
      %s306 = scalar_lea.vmem %s7, %s305
      %p307 = scmp.lt.s32.totalorder %s18, 1
      %s308 = scalar_select %p307, %s18, 1
      %s309 = smul.addr %s308, 2
      %s310 = scalar_lea.vmem %s0, %s309
      %p311 = scmp.lt.s32.totalorder %s18, 1
      %s312 = scalar_select %p311, %s18, 1
      %s313 = smul.addr %s312, 2
      %s314 = smul.addr %s313, 8
      %s315 = scalar_lea.vmem %s1, %s314
      %p316 = scmp.lt.s32.totalorder %s18, 1
      %s317 = scalar_select %p316, %s18, 1
      %s318 = smul.addr %s317, 2
      %s319 = smul.addr %s318, 8
      %s320 = scalar_lea.vmem %s2, %s319
      %p321 = scmp.lt.s32.totalorder %s18, 1
      %s322 = scalar_select %p321, %s18, 1
      %s323 = scalar_lea.vmem %s3, %s322
      %p324 = scmp.lt.s32.totalorder %s18, 1
      %s325 = scalar_select %p324, %s18, 1
      %s326 = smul.addr %s325, 2
      %s327 = scalar_lea.vmem %s7, %s326
      %v329 = vld [vmem:[%s315] sm:$0xff]
      %v330 = vld [vmem:[%s315 + $0x8] sm:$0xff]
      %v331 = vpack.c.bf16 %v330, %v329
      %v332 = vld [vmem:[%s320] sm:$0xff]
      %v333 = vld [vmem:[%s320 + $0x8] sm:$0xff]
      %v334 = vpack.c.bf16 %v333, %v332
      %v335 = vld [vmem:[%s323] sm:$0x1]
      %v336 = vld [vmem:[%s310] sm:$0x3]
      %v337 = vld [vmem:[%s6] sm:$0x3]
      %v338 = vld [vmem:[%s4] sm:$0x1]
      %vm339 = vcmask 523264
      %v341 = vsel %vm339, %v338, 0
      %v344 = vsel %vm339, %v331, 0
      %346 = vmatprep.subr.bf16.mxu0 0
      %347 = vmatpush1.bf16.xpose.msra.mxu0 0
      %348 = vmatprep.subr.bf16.mxu0 0
      %349 = vmatpush1.bf16.xpose.msra.mxu0 0
      %350 = vmatprep.subr.bf16.mxu0 0
      %351 = vmatpush1.bf16.xpose.msra.mxu0 0
      %352 = vmatprep.subr.bf16.mxu0 0
      %353 = vmatpush1.bf16.xpose.msra.mxu0 0
      %354 = vmatprep.subr.bf16.mxu0 0
      %355 = vmatpush1.bf16.xpose.msra.mxu0 0
      %356 = vmatprep.subr.bf16.mxu0 0
      %357 = vmatpush1.bf16.xpose.msra.mxu0 0
      %358 = vmatprep.subr.bf16.mxu0 0
      %359 = vmatpush1.bf16.xpose.msra.mxu0 0
      %360 = vmatprep.subr.bf16.mxu0 0
      %361 = vmatpush1.bf16.xpose.msra.mxu0 %v344
      %362 = vmatprep.subr.bf16.mxu0 0
      %363 = vmatpush2.bf16.xpose.msra.mxu0 0
      %364 = vmatprep.subr.bf16.mxu0 0
      %365 = vmatpush2.bf16.xpose.msra.mxu0 0
      %366 = vmatprep.subr.bf16.mxu0 0
      %367 = vmatpush2.bf16.xpose.msra.mxu0 0
      %368 = vmatprep.subr.bf16.mxu0 0
      %369 = vmatpush2.bf16.xpose.msra.mxu0 0
      %370 = vmatprep.subr.bf16.mxu0 0
      %371 = vmatpush2.bf16.xpose.msra.mxu0 0
      %372 = vmatprep.subr.bf16.mxu0 0
      %373 = vmatpush2.bf16.xpose.msra.mxu0 0
      %374 = vmatprep.subr.bf16.mxu0 0
      %375 = vmatpush2.bf16.xpose.msra.mxu0 0
      %376 = vmatprep.subr.bf16.mxu0 0
      %377 = vmatpush2.bf16.xpose.msra.mxu0 0
      %378 = vmatprep.mubr.bf16.mxu0 0
      %379 = vmatmul.mubr.bf16.gmra.mxu0 %v341
      %v380 = vpop.f32.mrf.mxu0
      %v381 = vadd.f32 0.0, %v380
      %v382 = vpop.f32.mrf.mxu0
      %v383 = vpop.f32.mrf.mxu0
      %v384 = vpop.f32.mrf.mxu0
      %385 = vdwg.mxu0
      %v386 = vadd.f32 %v336, %v381
      %388 = vset.pattern.permute.xlu0 0
      %389 = vperm.xlu0 %388, %v337
      %v390 = vpop.permute.xlu0 %389
      %v392 = vadd.f32 %v386, %v390
      %v393 = vadd.f32 %v392, %v335
      %v394 = vld [vmem:[%s5] sm:$0x1]
      %v396 = vsel %vm339, %v394, 0
      %v399 = vsel %vm339, %v334, 0
      %401 = vmatprep.subr.bf16.mxu0 0
      %402 = vmatpush1.bf16.xpose.msra.mxu0 0
      %403 = vmatprep.subr.bf16.mxu0 0
      %404 = vmatpush1.bf16.xpose.msra.mxu0 0
      %405 = vmatprep.subr.bf16.mxu0 0
      %406 = vmatpush1.bf16.xpose.msra.mxu0 0
      %407 = vmatprep.subr.bf16.mxu0 0
      %408 = vmatpush1.bf16.xpose.msra.mxu0 0
      %409 = vmatprep.subr.bf16.mxu0 0
      %410 = vmatpush1.bf16.xpose.msra.mxu0 0
      %411 = vmatprep.subr.bf16.mxu0 0
      %412 = vmatpush1.bf16.xpose.msra.mxu0 0
      %413 = vmatprep.subr.bf16.mxu0 0
      %414 = vmatpush1.bf16.xpose.msra.mxu0 0
      %415 = vmatprep.subr.bf16.mxu0 0
      %416 = vmatpush1.bf16.xpose.msra.mxu0 %v399
      %417 = vmatprep.subr.bf16.mxu0 0
      %418 = vmatpush2.bf16.xpose.msra.mxu0 0
      %419 = vmatprep.subr.bf16.mxu0 0
      %420 = vmatpush2.bf16.xpose.msra.mxu0 0
      %421 = vmatprep.subr.bf16.mxu0 0
      %422 = vmatpush2.bf16.xpose.msra.mxu0 0
      %423 = vmatprep.subr.bf16.mxu0 0
      %424 = vmatpush2.bf16.xpose.msra.mxu0 0
      %425 = vmatprep.subr.bf16.mxu0 0
      %426 = vmatpush2.bf16.xpose.msra.mxu0 0
      %427 = vmatprep.subr.bf16.mxu0 0
      %428 = vmatpush2.bf16.xpose.msra.mxu0 0
      %429 = vmatprep.subr.bf16.mxu0 0
      %430 = vmatpush2.bf16.xpose.msra.mxu0 0
      %431 = vmatprep.subr.bf16.mxu0 0
      %432 = vmatpush2.bf16.xpose.msra.mxu0 0
      %433 = vmatprep.mubr.bf16.mxu0 0
      %434 = vmatmul.mubr.bf16.gmra.mxu0 %v396
      %v435 = vpop.f32.mrf.mxu0
      %v436 = vadd.f32 0.0, %v435
      %v437 = vpop.f32.mrf.mxu0
      %v438 = vpop.f32.mrf.mxu0
      %v439 = vpop.f32.mrf.mxu0
      %440 = vdwg.mxu0
      %v442 = vrot.slane %v436, 7
      %v444 = vadd.f32 %v336, %v442
      %v445 = vadd.f32 %v444, %v390
      %v447 = vlaneseq
      %v448 = vshrl.u32 %v447, 7
      %v449 = vsub.s32 0, %v448
      %v450 = vrot.slane %v335, %v449
      %v452 = vadd.f32 %v445, %v450
      %vm453 = vcmask 1040384
      %v454 = vsel %vm453, %v393, %v452
      %vm455 = vcmask 123904
      %v456 = vsel %vm455, %v454, -inf
      %457 = vmax.xlane.f32.xlu0 %v456
      %v458 = vpop.xlane.xlu0 %457
      %v459 = vsub.f32 %v454, %v458
      %v460 = vmul.f32 %v459, 1.442695
      %v461 = vpow.pop %v460
      %v462 = vsel %vm455, %v461, 0.0
      %463 = vadd.xlane.f32.xlu0 %v462
      %v464 = vpop.xlane.xlu0 %463
      %v465 = vlog2.pop %v464
      %v466 = vmul.f32 %v465, 0.6931472
      %v467 = vadd.f32 %v458, %v466
      %v468 = vsub.f32 %v454, %v467
      %469 = vst.msk [vmem:[%s327] sm:$0x3] %vm455, %v468
      %p470 = scmp.lt.s32.totalorder %s18, 1
      %s471 = scalar_select %p470, %s18, 1
      %s472 = smul.addr %s471, 2
      %s473 = scalar_lea.vmem %s7, %s472
      // Predicated region
      $region49: #{bidaf_forward.39} parent=47 // pred_check
        %p474 = pneg %p203
      $region50: #{bidaf_forward.39} parent=47 // pred_check_branch
        %476 = sbr.rel (%p474) target = $region52
      $region51: #{bidaf_forward.39} parent=47 // pred_region
        _
      $region52: #{bidaf_forward.39} parent=47 // pred_fallthru
        _
    $region48: #{bidaf_forward.39} parent=5 // pred_fallthru
      _
    %p477 = scmp.le.s32.totalorder 2, %s13
    // Predicated region
    $region53: #{bidaf_forward.39} parent=5 // pred_check
      %p478 = pneg %p477
    $region54: #{bidaf_forward.39} parent=5 // pred_check_branch
      %480 = sbr.rel (%p478) target = $region56
    $region55: #{bidaf_forward.39} parent=5 // pred_region
      %s481 = ssub.s32 %s13, 2
      // Predicated region
      $region57: #{bidaf_forward.39} parent=55 // pred_check
        %p482 = pneg %p209
      $region58: #{bidaf_forward.39} parent=55 // pred_check_branch
        %484 = sbr.rel (%p482) target = $region60
      $region59: #{bidaf_forward.39} parent=55 // pred_region
        %p485 = scmp.lt.s32.totalorder %s19, 1
        %s486 = scalar_select %p485, %s19, 1
        %s487 = smul.addr %s486, 2
        %s488 = scalar_lea.vmem %s7, %s487
      $region60: #{bidaf_forward.39} parent=55 // pred_fallthru
        _
    $region56: #{bidaf_forward.39} parent=5 // pred_fallthru
      _
  $region6: #{bidaf_forward.39} parent=0 // loop_footer
    %s17 = sadd.s32 1, %s13
  $region7: #{bidaf_forward.39} parent=0 // loop_footer_branch
    %12 = sbr.rel target = $region3
  $region8: #{bidaf_forward.39} parent=0 // loop_exit
    _

</llo_original>
